<compile_context>
chip_gen: v7x
topology: tpu7x:2x2x1
jax: 0.10.0
libtpu: 0.0.40
codegen_flags: <defaults>
</compile_context>

<pallas_src>
import math
import functools

import jax
import jax.numpy as jnp
from jax.experimental import pallas as pl
from jax.experimental.pallas import tpu as pltpu


def _round_up(x, m):
    return -(-x // m) * m


# ----------------------------------------------------------------------------
# Tiled fused linear (+ optional relu):  out = act(x @ W + b)
#   grid = (M_tiles, N_tiles, K_tiles), K innermost ("arbitrary"), f32 acc.
# ----------------------------------------------------------------------------
def _linear_kernel(x_ref, w_ref, b_ref, o_ref, acc_ref, *, activation):
    @pl.when(pl.program_id(2) == 0)
    def _():
        acc_ref[...] = jnp.zeros_like(acc_ref)

    acc_ref[...] += jnp.dot(x_ref[...], w_ref[...],
                            preferred_element_type=jnp.float32)

    @pl.when(pl.program_id(2) == pl.num_programs(2) - 1)
    def _():
        y = acc_ref[...] + b_ref[...]
        if activation == "relu":
            y = jnp.maximum(y, 0.0)
        o_ref[...] = y.astype(o_ref.dtype)


def linear(x, w, b, activation=None, *, tm=256, tn=256, tk=512):
    """act(x @ w + b); x:(M,K), w:(K,N), b:(N,) -> (M,N).

    M/N/K are zero-padded up to tile multiples (numerically exact), so ragged
    sizes (e.g. a ~9k vocab) keep small pipelined tiles instead of collapsing
    to a full-dimension block (which blows VMEM and kills pipelining).
    """
    M, K = x.shape
    N = w.shape[1]
    tm = min(tm, _round_up(M, 8))
    tn = min(tn, _round_up(N, 128))
    tk = min(tk, _round_up(K, 128))
    Mp, Np, Kp = _round_up(M, tm), _round_up(N, tn), _round_up(K, tk)
    if (Mp, Kp) != (M, K):
        x = jnp.pad(x, ((0, Mp - M), (0, Kp - K)))
    if (Kp, Np) != (K, N):
        w = jnp.pad(w, ((0, Kp - K), (0, Np - N)))
    b2 = jnp.pad(b.astype(jnp.float32), (0, Np - N)).reshape(1, Np)

    out = pl.pallas_call(
        functools.partial(_linear_kernel, activation=activation),
        out_shape=jax.ShapeDtypeStruct((Mp, Np), jnp.float32),
        grid_spec=pltpu.PrefetchScalarGridSpec(
            num_scalar_prefetch=0,
            grid=(Mp // tm, Np // tn, Kp // tk),
            in_specs=[
                pl.BlockSpec((tm, tk), lambda i, j, k: (i, k)),
                pl.BlockSpec((tk, tn), lambda i, j, k: (k, j)),
                pl.BlockSpec((1, tn), lambda i, j, k: (0, j)),
            ],
            out_specs=pl.BlockSpec((tm, tn), lambda i, j, k: (i, j)),
            scratch_shapes=[pltpu.VMEM((tm, tn), jnp.float32)],
        ),
        compiler_params=pltpu.CompilerParams(
            dimension_semantics=("parallel", "parallel", "arbitrary"),
            vmem_limit_bytes=64 * 1024 * 1024),
    )(x, w, b2)
    return out[:M, :N]


# ----------------------------------------------------------------------------
# Fused "conv layer 0 + attention" kernel, batch folded into the M dimension.
# All batch-independent GEMMs run on M = TB*T rows; only the attention
# score/context bmms keep a batch axis.
# ----------------------------------------------------------------------------
def _layer0_kernel(xi_ref, we_ref, yimg_ref, yfeat_ref,
                   wc_ref, wcb_ref, bc_ref,
                   wrt_ref, wrb_ref, br_ref,
                   win_ref, bin_ref,
                   wout_ref, bout_ref,
                   xout_ref, attn_ref, *, ksize, s_real):
    TB, T, F_ = we_ref.shape
    M = TB * T
    KF = xi_ref.shape[-1]
    two_f = 2 * F_

    we = we_ref[...].reshape(M, F_)               # unshifted wordemb rows
    yimg = yimg_ref[...].reshape(TB, F_)          # projected image feature

    def wdot(x, w_ref):
        # Cast the activation to the (possibly bf16) weight dtype; f32 acc.
        w = w_ref[...]
        return jnp.dot(x.astype(w.dtype), w, preferred_element_type=jnp.float32)

    # residual = [wordemb | img] @ W_res + b, with the 2F rows split in halves
    # so the broadcast x_cat is never materialized.
    residual = (wdot(we, wrt_ref).reshape(TB, T, F_)
                + wdot(yimg, wrb_ref)[:, None, :]
                + br_ref[...]).reshape(M, F_)

    # Causal conv, wordemb half: ONE im2col GEMM with reduction depth K*F
    # (the slab was pre-sliced in the wrapper from the padded wordemb stream).
    conv = wdot(xi_ref[...].reshape(M, KF), wc_ref)                 # (M, 2F)

    # Causal conv, image half: tap-invariant, so a single (TB,F)x(F,K*2F) GEMM
    # plus suffix sums over taps; position t gets suffix[max(K-1-t, 0)],
    # assembled from static slices (no per-tap selects).
    bots = wdot(yimg, wcb_ref).reshape(TB, ksize, two_f)            # (TB,K,2F)
    suffix = [None] * ksize
    suffix[ksize - 1] = bots[:, ksize - 1, :]
    for k in range(ksize - 2, -1, -1):
        suffix[k] = suffix[k + 1] + bots[:, k, :]
    h = min(ksize - 1, T)
    parts = [suffix[ksize - 1 - t][:, None, :] for t in range(h)]
    if T > h:
        parts.append(jnp.broadcast_to(suffix[0][:, None, :], (TB, T - h, two_f)))
    img_c = jnp.concatenate(parts, axis=1).reshape(M, two_f)

    conv = conv + img_c + bc_ref[...]

    # GLU along the channel dim.
    glu = conv[:, :F_] * jax.nn.sigmoid(conv[:, F_:])               # (M, F)

    # Attention.
    xa = (wdot(glu, win_ref) + bin_ref[...] + we) * math.sqrt(0.5)
    xa3 = xa.reshape(TB, T, F_)
    yf = yfeat_ref[...]                                             # (TB,S_pad,F)
    scores = jnp.einsum("btf,bsf->bts", xa3, yf,
                        preferred_element_type=jnp.float32)
    s_idx = jax.lax.broadcasted_iota(jnp.int32, scores.shape, 2)
    scores = jnp.where(s_idx < s_real, scores, -1e30)               # lane padding
    scores = scores - jnp.max(scores, axis=-1, keepdims=True)
    e = jnp.exp(scores)
    attn = e / jnp.sum(e, axis=-1, keepdims=True)                   # exact softmax
    ctx = jnp.einsum("bts,bsf->btf", attn, yf,
                     preferred_element_type=jnp.float32) * math.sqrt(s_real)
    out_a = (wdot(ctx.reshape(M, F_), wout_ref) + bout_ref[...] + glu) \
        * math.sqrt(0.5)

    xout_ref[...] = (out_a + residual).reshape(TB, T, F_).astype(xout_ref.dtype)
    attn_ref[...] = attn.astype(attn_ref.dtype)


def convcap_forward(params, imgsfeats, imgsfc7, wordclass, *,
                    weights_dtype=jnp.float32, transpose_logits=True):
    B, T = wordclass.shape
    F_ = params["emb"].shape[1]
    K = params["w_conv"].shape[0]
    V = params["w_cls"].shape[1]
    wd = weights_dtype

    # Embedding lookup (gather) stays in XLA glue.
    wordemb = params["emb"][wordclass]                               # (B, T, F)

    # imgproj + relu: deep (4096) reduction, 2 K-steps, streaming dtype = wd.
    y_img = linear(imgsfc7.astype(wd), params["w_imgproj"].astype(wd),
                   params["b_imgproj"], activation="relu", tk=2048)  # (B, F)
    y_img3 = y_img.reshape(B, 1, F_)

    # Causal im2col slab (B, T, K*F) built once from the front-padded stream.
    wordemb_pad = jnp.pad(wordemb, ((0, 0), (K - 1, 0), (0, 0)))
    x_im2col = jnp.concatenate(
        [wordemb_pad[:, k:k + T, :] for k in range(K)], axis=-1)     # (B,T,K*F)

    # Image grid features channels-last; spatial axis padded lane-dense.
    fh, fw = imgsfeats.shape[2], imgsfeats.shape[3]
    S = fh * fw
    yf = jnp.transpose(imgsfeats.reshape(B, F_, S), (0, 2, 1))       # (B, S, F)
    S_pad = max(128, _round_up(S, 128))
    yf_pad = jnp.pad(yf, ((0, 0), (0, S_pad - S), (0, 0)))           # (B,S_pad,F)

    # Split the 2F-row weights into wordemb / image halves and flatten for the
    # single-GEMM formulations; streaming weights cast to `weights_dtype`.
    w_res_t = params["w_res"][:F_].astype(wd)                        # (F, F)
    w_res_b = params["w_res"][F_:].astype(wd)                        # (F, F)
    w_conv_t = params["w_conv"][:, :F_, :].reshape(K * F_, 2 * F_).astype(wd)
    w_conv_b = jnp.transpose(params["w_conv"][:, F_:, :],
                             (1, 0, 2)).reshape(F_, K * 2 * F_).astype(wd)
    w_attn_in = params["w_attn_in"].astype(wd)
    w_attn_out = params["w_attn_out"].astype(wd)

    # grid >= 2 when B is even so v7x's second TensorCore gets work and the
    # per-batch activation DMA overlaps compute.
    TB = B // 2 if (B % 2 == 0 and B >= 2) else B

    x_layer, attn_p = pl.pallas_call(
        functools.partial(_layer0_kernel, ksize=K, s_real=S),
        out_shape=(jax.ShapeDtypeStruct((B, T, F_), jnp.float32),
                   jax.ShapeDtypeStruct((B, T, S_pad), jnp.float32)),
        grid_spec=pl.GridSpec(
            grid=(B // TB,),
            in_specs=[
                pl.BlockSpec((TB, T, K * F_), lambda b: (b, 0, 0)),   # im2col
                pl.BlockSpec((TB, T, F_), lambda b: (b, 0, 0)),       # wordemb
                pl.BlockSpec((TB, 1, F_), lambda b: (b, 0, 0)),       # y_img
                pl.BlockSpec((TB, S_pad, F_), lambda b: (b, 0, 0)),   # img feats
                pl.BlockSpec((K * F_, 2 * F_), lambda b: (0, 0)),     # conv (word)
                pl.BlockSpec((F_, K * 2 * F_), lambda b: (0, 0)),     # conv (img)
                pl.BlockSpec((1, 2 * F_), lambda b: (0, 0)),          # b_conv
                pl.BlockSpec((F_, F_), lambda b: (0, 0)),             # res (word)
                pl.BlockSpec((F_, F_), lambda b: (0, 0)),             # res (img)
                pl.BlockSpec((1, F_), lambda b: (0, 0)),              # b_res
                pl.BlockSpec((F_, F_), lambda b: (0, 0)),             # attn in
                pl.BlockSpec((1, F_), lambda b: (0, 0)),
                pl.BlockSpec((F_, F_), lambda b: (0, 0)),             # attn out
                pl.BlockSpec((1, F_), lambda b: (0, 0)),
            ],
            out_specs=(pl.BlockSpec((TB, T, F_), lambda b: (b, 0, 0)),
                       pl.BlockSpec((TB, T, S_pad), lambda b: (b, 0, 0))),
        ),
        compiler_params=pltpu.CompilerParams(
            dimension_semantics=("parallel",),
            vmem_limit_bytes=64 * 1024 * 1024),
    )(x_im2col, wordemb, y_img3, yf_pad,
      w_conv_t, w_conv_b, params["b_conv"].reshape(1, -1),
      w_res_t, w_res_b, params["b_res"].reshape(1, -1),
      w_attn_in, params["b_attn_in"].reshape(1, -1),
      w_attn_out, params["b_attn_out"].reshape(1, -1))

    attn = attn_p[..., :S]                                           # drop padding

    # Classifier: tiled over (padded) vocab and the F reduction.
    logits = linear(x_layer.reshape(B * T, F_).astype(wd),
                    params["w_cls"].astype(wd), params["b_cls"],
                    tm=256, tn=256, tk=512).reshape(B, T, V)
    if transpose_logits:
        # PyTorch (B, V, T) output compat; pure layout traffic -- consumers
        # that accept (B, T, V) should pass transpose_logits=False.
        logits = jnp.transpose(logits, (0, 2, 1))
    return logits, attn


# ----------------------------------------------------------------------------
# Pure-JAX reference for correctness checking
# ----------------------------------------------------------------------------
def reference_forward(params, imgsfeats, imgsfc7, wordclass):
    B, T = wordclass.shape
    F_ = params["emb"].shape[1]
    K = params["w_conv"].shape[0]
    wordemb = params["emb"][wordclass]
    y_img = jax.nn.relu(imgsfc7 @ params["w_imgproj"] + params["b_imgproj"])
    x = jnp.concatenate(
        [wordemb, jnp.broadcast_to(y_img[:, None, :], (B, T, F_))], axis=-1)
    residual = x @ params["w_res"] + params["b_res"]
    xpad = jnp.pad(x, ((0, 0), (K - 1, 0), (0, 0)))
    conv = jnp.zeros((B, T, 2 * F_), jnp.float32) + params["b_conv"]
    for k in range(K):
        conv = conv + xpad[:, k:k + T, :] @ params["w_conv"][k]
    glu = conv[..., :F_] * jax.nn.sigmoid(conv[..., F_:])
    res_a = glu
    xa = (glu @ params["w_attn_in"] + params["b_attn_in"] + wordemb) * math.sqrt(0.5)
    yf = imgsfeats.reshape(B, F_, -1)
    S = yf.shape[-1]
    scores = jnp.einsum("btf,bfs->bts", xa, yf)
    attn = jax.nn.softmax(scores, axis=-1)
    ctx = jnp.einsum("bts,bsf->btf", attn, jnp.transpose(yf, (0, 2, 1))) * math.sqrt(S)
    out_a = (ctx @ params["w_attn_out"] + params["b_attn_out"] + res_a) * math.sqrt(0.5)
    xl = out_a + residual
    logits = xl @ params["w_cls"] + params["b_cls"]
    return jnp.transpose(logits, (0, 2, 1)), attn


if __name__ == "__main__":
    # Compare kernel and reference under full-precision matmuls so default
    # bf16-pass f32 dots cannot create spurious mismatches.
    jax.config.update("jax_default_matmul_precision", "highest")

    # Small, module-consistent shapes
    B, T = 2, 8            # batch, maxtokens
    F_ = 64                # nfeats (hidden)
    V = 128                # num_wordclass
    NIMG = 4096            # self.nimgfeats (fc7 dim)
    FH = FW = 4            # image feature grid -> S = 16
    K = 5                  # conv kernel size
    dropout = 0.1

    key = jax.random.PRNGKey(0)
    keys = jax.random.split(key, 12)

    def nrm(k, shape, std):
        return (std * jax.random.normal(k, shape)).astype(jnp.float32)

    emb = nrm(keys[0], (V, F_), 0.1).at[0].set(0.0)   # padding_idx=0
    params = dict(
        emb=emb,
        w_imgproj=nrm(keys[1], (NIMG, F_), math.sqrt((1 - dropout) / NIMG)),
        b_imgproj=jnp.zeros((F_,), jnp.float32),
        w_res=nrm(keys[2], (2 * F_, F_), math.sqrt((1 - dropout) / (2 * F_))),
        b_res=jnp.zeros((F_,), jnp.float32),
        # conv weight per-tap (K, C_in=2F, C_out=2F); tap k multiplies x[t-(K-1)+k]
        w_conv=nrm(keys[3], (K, 2 * F_, 2 * F_),
                   math.sqrt(4 * (1 - dropout) / (K * 2 * F_))),
        b_conv=jnp.zeros((2 * F_,), jnp.float32),
        w_attn_in=nrm(keys[4], (F_, F_), math.sqrt(1.0 / F_)),
        b_attn_in=jnp.zeros((F_,), jnp.float32),
        w_attn_out=nrm(keys[5], (F_, F_), math.sqrt(1.0 / F_)),
        b_attn_out=jnp.zeros((F_,), jnp.float32),
        w_cls=nrm(keys[6], (F_, V), math.sqrt(1.0 / F_)),
        b_cls=jnp.zeros((V,), jnp.float32),
    )

    imgsfeats = jax.random.normal(keys[7], (B, F_, FH, FW), jnp.float32)
    imgsfc7 = jax.random.normal(keys[8], (B, NIMG), jnp.float32)
    wordclass = jax.random.randint(keys[9], (B, T), 0, V, jnp.int32)

    ref_logits, ref_attn = reference_forward(params, imgsfeats, imgsfc7, wordclass)

    # f32 path (exact weights).
    logits, attn = convcap_forward(params, imgsfeats, imgsfc7, wordclass)
    logits = jax.block_until_ready(logits)
    attn = jax.block_until_ready(attn)
    assert logits.shape == (B, V, T), logits.shape
    assert attn.shape == (B, T, FH * FW), attn.shape
    assert jnp.allclose(logits, ref_logits, atol=2e-2, rtol=2e-2)
    assert jnp.allclose(attn, ref_attn, atol=2e-2, rtol=2e-2)

    # bf16 streaming-weight path (production perf config): looser tolerance,
    # also exercises transpose_logits=False (no extra HBM layout pass).
    logits_bf, attn_bf = convcap_forward(params, imgsfeats, imgsfc7, wordclass,
                                         weights_dtype=jnp.bfloat16,
                                         transpose_logits=False)
    logits_bf = jax.block_until_ready(logits_bf)
    attn_bf = jax.block_until_ready(attn_bf)
    assert logits_bf.shape == (B, T, V), logits_bf.shape
    assert jnp.allclose(logits_bf, jnp.transpose(ref_logits, (0, 2, 1)),
                        atol=1.5e-1, rtol=1.5e-1)
    assert jnp.allclose(attn_bf, ref_attn, atol=1e-1, rtol=1e-1)

    print("KERNEL_OK")
</pallas_src>

<mosaic_0001>
module attributes {stable_mosaic.version = 11 : i64} {
  func.func @_linear_kernel(%arg0: i32, %arg1: i32, %arg2: i32, %arg3: memref<8x2048xf32, #tpu.memory_space<vmem>>, %arg4: memref<2048x128xf32, #tpu.memory_space<vmem>>, %arg5: memref<1x128xf32, #tpu.memory_space<vmem>>, %arg6: memref<8x128xf32, #tpu.memory_space<vmem>>, %arg7: memref<8x128xf32, #tpu.memory_space<vmem>>) attributes {dimension_semantics = [#tpu.dimension_semantics<parallel>, #tpu.dimension_semantics<parallel>, #tpu.dimension_semantics<arbitrary>], iteration_bounds = array<i64: 1, 1, 2>, scalar_prefetch = 0 : i64, scratch_operands = 1 : i64, tpu.core_type = #tpu.core_type<tc>, window_params = [{transform_indices = @transform_0, window_bounds = array<i64: 8, 2048>}, {transform_indices = @transform_1, window_bounds = array<i64: 2048, 128>}, {transform_indices = @transform_2, window_bounds = array<i64: 1, 128>}, {transform_indices = @transform_3, window_bounds = array<i64: 8, 128>}]} {
    %c0_i32 = arith.constant 0 : i32
    %0 = arith.cmpi eq, %arg2, %c0_i32 : i32
    %1 = arith.extui %0 : i1 to i32
    %c0_i32_0 = arith.constant 0 : i32
    %2 = arith.cmpi ne, %1, %c0_i32_0 : i32
    scf.if %2 {
      %cst_9 = arith.constant 0.000000e+00 : f32
      %12 = vector.broadcast %cst_9 : f32 to vector<8x128xf32>
      %c0_10 = arith.constant 0 : index
      %c0_11 = arith.constant 0 : index
      %13 = vector.load %arg7[%c0_10, %c0_11] : memref<8x128xf32, #tpu.memory_space<vmem>>, vector<8x128xf32>
      tpu.vector_store %arg7[%c0_10, %c0_11], %12 {strides = array<i32>} : memref<8x128xf32, #tpu.memory_space<vmem>>, vector<8x128xf32>,
    } else {
    }
    %c0 = arith.constant 0 : index
    %c0_1 = arith.constant 0 : index
    %3 = vector.load %arg7[%c0, %c0_1] : memref<8x128xf32, #tpu.memory_space<vmem>>, vector<8x128xf32>
    %c0_2 = arith.constant 0 : index
    %c0_3 = arith.constant 0 : index
    %4 = vector.load %arg3[%c0_2, %c0_3] : memref<8x2048xf32, #tpu.memory_space<vmem>>, vector<8x2048xf32>
    %c0_4 = arith.constant 0 : index
    %c0_5 = arith.constant 0 : index
    %5 = vector.load %arg4[%c0_4, %c0_5] : memref<2048x128xf32, #tpu.memory_space<vmem>>, vector<2048x128xf32>
    %cst = arith.constant dense<0.000000e+00> : vector<8x128xf32>
    %6 = tpu.matmul %4, %5, %cst {dimension_numbers = #tpu.dot_dimension_numbers<[1], [0], [0], [1], [0, 0, 1, 1], [], []>, precision = #tpu.contract_precision<fp32>} : vector<8x2048xf32>, vector<2048x128xf32>, vector<8x128xf32> -> vector<8x128xf32>
    %7 = arith.addf %3, %6 : vector<8x128xf32>
    %c0_6 = arith.constant 0 : index
    %c0_7 = arith.constant 0 : index
    %8 = vector.load %arg7[%c0_6, %c0_7] : memref<8x128xf32, #tpu.memory_space<vmem>>, vector<8x128xf32>
    tpu.vector_store %arg7[%c0_6, %c0_7], %7 {strides = array<i32>} : memref<8x128xf32, #tpu.memory_space<vmem>>, vector<8x128xf32>,
    %c1_i32 = arith.constant 1 : i32
    %9 = arith.cmpi eq, %arg2, %c1_i32 : i32
    %10 = arith.extui %9 : i1 to i32
    %c0_i32_8 = arith.constant 0 : i32
    %11 = arith.cmpi ne, %10, %c0_i32_8 : i32
    scf.if %11 {
      %c0_9 = arith.constant 0 : index
      %c0_10 = arith.constant 0 : index
      %12 = vector.load %arg7[%c0_9, %c0_10] : memref<8x128xf32, #tpu.memory_space<vmem>>, vector<8x128xf32>
      %c0_11 = arith.constant 0 : index
      %c0_12 = arith.constant 0 : index
      %13 = vector.load %arg5[%c0_11, %c0_12] : memref<1x128xf32, #tpu.memory_space<vmem>>, vector<1x128xf32>
      %14 = vector.broadcast %13 : vector<1x128xf32> to vector<8x128xf32>
      %15 = arith.addf %12, %14 : vector<8x128xf32>
      %cst_13 = arith.constant 0.000000e+00 : f32
      %16 = vector.broadcast %cst_13 : f32 to vector<8x128xf32>
      %17 = arith.maximumf %15, %16 : vector<8x128xf32>
      %c0_14 = arith.constant 0 : index
      %c0_15 = arith.constant 0 : index
      %18 = vector.load %arg6[%c0_14, %c0_15] : memref<8x128xf32, #tpu.memory_space<vmem>>, vector<8x128xf32>
      tpu.vector_store %arg6[%c0_14, %c0_15], %17 {strides = array<i32>} : memref<8x128xf32, #tpu.memory_space<vmem>>, vector<8x128xf32>,
    } else {
    }
    return
  }
  func.func @transform_0(%arg0: i32, %arg1: i32, %arg2: i32) -> (i32, i32) {
    %c0_i32 = arith.constant 0 : i32
    return %arg0, %arg2 : i32, i32
  }
  func.func @transform_1(%arg0: i32, %arg1: i32, %arg2: i32) -> (i32, i32) {
    %c0_i32 = arith.constant 0 : i32
    return %arg2, %arg1 : i32, i32
  }
  func.func @transform_2(%arg0: i32, %arg1: i32, %arg2: i32) -> (i32, i32) {
    %c0_i32 = arith.constant 0 : i32
    %c0_i32_0 = arith.constant 0 : i32
    return %c0_i32, %arg1 : i32, i32
  }
  func.func @transform_3(%arg0: i32, %arg1: i32, %arg2: i32) -> (i32, i32) {
    %c0_i32 = arith.constant 0 : i32
    return %arg0, %arg1 : i32, i32
  }
}

</mosaic_0001>

<llo_original>
// kernel: tpu_custom_call.1
$region0: #{tpu_custom_call.1}
  #allocation0 [shape = 'u32[]', space=smem, size = 0x4, offset = 0x4, fixed_abs, tag = 'smem constant byte address 0x4 - core index']
  #allocation1 [shape = 'u32[144,128]{1,0:T(1,128)}', space=vmem, size = 0x12000, scoped, tag = 'internal scratch']
  #allocation2 [shape = 'f32[8,128]{1,0:T(8,128)}', space=vmem, size = 0x1000, scoped, tag = 'scratch operand']
  %s0 = inlined_call_operand.hbm [shape: f32[8,4096], index: 0, kind: input, shape index: {}]
  %s1 = inlined_call_operand.hbm [shape: f32[4096,128], index: 1, kind: input, shape index: {}]
  %s2 = inlined_call_operand.hbm [shape: f32[1,128], index: 2, kind: input, shape index: {}]
  %s3 = inlined_call_operand.hbm [shape: f32[8,128], index: 3, kind: output, shape index: {}]
  %s4 = sld [smem:[#allocation0]]
  $region65: #{tpu_custom_call.1} parent=0
    _
  %s6 = ssub.s32 1, %s4
  %s7 = scalar_select 0, %s6, %s4
  $region1: #{tpu_custom_call.1} parent=0
    #allocation3 [shape = 'u8[131072]{0}', space=vmem, size = 0x20000, scoped, tag = 'input window, operand 0']
    #allocation4 [shape = 's32[2]{0}', space=sflag, size = 0x8, scoped, tag = 'scoped memory for tpu_custom_call.1']
    #allocation5 [shape = 's32[2]{0}', space=sflag, size = 0x8, scoped, tag = 'scoped memory for tpu_custom_call.1']
    #allocation6 [shape = 'u8[2097152]{0}', space=vmem, size = 0x200000, scoped, tag = 'input window, operand 1']
    #allocation7 [shape = 's32[2]{0}', space=sflag, size = 0x8, scoped, tag = 'scoped memory for tpu_custom_call.1']
    #allocation8 [shape = 'u8[512]{0}', space=vmem, size = 0x400, scoped, tag = 'input window, operand 2, single buffered']
    #allocation9 [shape = 'u8[4096]{0}', space=vmem, size = 0x1000, scoped, tag = 'output window, operand 0, single buffered']
    %8 = vsyncpa [#allocation4], 0
    %s9 = scalar_lea.sflag [#allocation4], 1
    %10 = vsyncpa %s9, 0
    %11 = vsyncpa [#allocation7], 0
    %s12 = scalar_lea.sflag [#allocation7], 1
    %13 = vsyncpa %s12, 0
    %14 = vsyncpa [#allocation5], 0
    loop: start=0, step=1, limit=4
    $region2: #{tpu_custom_call.1} parent=1 // loop_pre_header
      _
    $region3: #{tpu_custom_call.1} parent=1 // loop_header
      %s16 = sphi 0, %s20
      %p17 = scmp.ge.s32.totalorder %s16, 4
      %s23 = sphi 0, %s42
      %s24 = sphi 0, %s38
      %s25 = sphi 0, %s34
      %s26 = sphi 0, %s23
      %s27 = sphi 0, %s24
      %s28 = sphi 0, %s25
      %s29 = sphi 0, %s26
      %s30 = sphi 0, %s27
      %s31 = sphi 0, %s28
      %s47 = sphi 0, %s49
      %s50 = sphi 0, %s47
      %s51 = sphi 0, %s50
      %s67 = sphi 0, %s51
      %s75 = sphi 0, %s77
      %s78 = sphi 0, %s75
      %s79 = sphi 0, %s78
      %s95 = sphi 0, %s79
      %s101 = sphi 0, %s103
      %s104 = sphi 0, %s101
      %s105 = sphi 0, %s104
      %s121 = sphi 0, %s105
      %s129 = sphi 0, %s131
      %s132 = sphi 0, %s129
      %s133 = sphi 0, %s132
      %s149 = sphi 0, %s133
    $region4: #{tpu_custom_call.1} parent=1 // loop_header_branch
      %19 = sbr.rel (%p17) target = $region8
    $region5: #{tpu_custom_call.1} parent=1 // loop_body
      %s21 = ssub.s32 %s16, 1
      %s22 = ssub.s32 %s16, 2
      %s32 = sadd.s32 1, %s25
      %p33 = scmp.ge.s32.totalorder %s32, 2
      %s34 = scalar_select %p33, 0, %s32
      %s35 = sadd.s32 1, %s24
      %s36 = scalar_select %p33, %s35, %s24
      %p37 = scmp.ge.s32.totalorder %s36, 1
      %s38 = scalar_select %p37, 0, %s36
      %s39 = sadd.s32 1, %s23
      %s40 = scalar_select %p37, %s39, %s23
      %p41 = scmp.ge.s32.totalorder %s40, 1
      %s42 = scalar_select %p41, 0, %s40
      %s43 = ssub.s32 %s23, %s42
      %s44 = ssub.s32 %s25, %s34
      %s45 = sor.u32 %s43, %s44
      %p46 = scmp.eq.s32.totalorder %s45, 0
      %s48 = sadd.s32 %s47, 1
      %s49 = scalar_select %p46, %s47, %s48
      %p52 = pneg %p46
      %p53 = scmp.eq.s32.totalorder %s16, 1
      %p54 = por %p52, %p53
      %p55 = scmp.ne.s32.totalorder %s47, %s50
      %p56 = scmp.eq.s32.totalorder %s16, 0
      %p57 = por %p55, %p56
      %p58 = scmp.ne.s32.totalorder %s47, %s50
      %p59 = scmp.eq.s32.totalorder %s21, 1
      %p60 = por %p58, %p59
      %p61 = scmp.ne.s32.totalorder %s50, %s51
      %p62 = scmp.eq.s32.totalorder %s21, 0
      %p63 = por %p61, %p62
      %p64 = scmp.ne.s32.totalorder %s50, %s51
      %p65 = scmp.eq.s32.totalorder %s22, 1
      %p66 = por %p64, %p65
      %p68 = scmp.ne.s32.totalorder %s51, %s67
      %p69 = scmp.eq.s32.totalorder %s22, 0
      %p70 = por %p68, %p69
      %s71 = ssub.s32 %s25, %s34
      %s72 = ssub.s32 %s24, %s38
      %s73 = sor.u32 %s71, %s72
      %p74 = scmp.eq.s32.totalorder %s73, 0
      %s76 = sadd.s32 %s75, 1
      %s77 = scalar_select %p74, %s75, %s76
      %p80 = pneg %p74
      %p81 = scmp.eq.s32.totalorder %s16, 1
      %p82 = por %p80, %p81
      %p83 = scmp.ne.s32.totalorder %s75, %s78
      %p84 = scmp.eq.s32.totalorder %s16, 0
      %p85 = por %p83, %p84
      %p86 = scmp.ne.s32.totalorder %s75, %s78
      %p87 = scmp.eq.s32.totalorder %s21, 1
      %p88 = por %p86, %p87
      %p89 = scmp.ne.s32.totalorder %s78, %s79
      %p90 = scmp.eq.s32.totalorder %s21, 0
      %p91 = por %p89, %p90
      %p92 = scmp.ne.s32.totalorder %s78, %s79
      %p93 = scmp.eq.s32.totalorder %s22, 1
      %p94 = por %p92, %p93
      %p96 = scmp.ne.s32.totalorder %s79, %s95
      %p97 = scmp.eq.s32.totalorder %s22, 0
      %p98 = por %p96, %p97
      %s99 = ssub.s32 %s24, %s38
      %p100 = scmp.eq.s32.totalorder %s99, 0
      %s102 = sadd.s32 %s101, 1
      %s103 = scalar_select %p100, %s101, %s102
      %p106 = pneg %p100
      %p107 = scmp.eq.s32.totalorder %s16, 1
      %p108 = por %p106, %p107
      %p109 = scmp.ne.s32.totalorder %s101, %s104
      %p110 = scmp.eq.s32.totalorder %s16, 0
      %p111 = por %p109, %p110
      %p112 = scmp.ne.s32.totalorder %s101, %s104
      %p113 = scmp.eq.s32.totalorder %s21, 1
      %p114 = por %p112, %p113
      %p115 = scmp.ne.s32.totalorder %s104, %s105
      %p116 = scmp.eq.s32.totalorder %s21, 0
      %p117 = por %p115, %p116
      %p118 = scmp.ne.s32.totalorder %s104, %s105
      %p119 = scmp.eq.s32.totalorder %s22, 1
      %p120 = por %p118, %p119
      %p122 = scmp.ne.s32.totalorder %s105, %s121
      %p123 = scmp.eq.s32.totalorder %s22, 0
      %p124 = por %p122, %p123
      %s125 = ssub.s32 %s23, %s42
      %s126 = ssub.s32 %s24, %s38
      %s127 = sor.u32 %s125, %s126
      %p128 = scmp.eq.s32.totalorder %s127, 0
      %s130 = sadd.s32 %s129, 1
      %s131 = scalar_select %p128, %s129, %s130
      %p134 = pneg %p128
      %p135 = scmp.eq.s32.totalorder %s16, 1
      %p136 = por %p134, %p135
      %p137 = scmp.ne.s32.totalorder %s129, %s132
      %p138 = scmp.eq.s32.totalorder %s16, 0
      %p139 = por %p137, %p138
      %p140 = scmp.ne.s32.totalorder %s129, %s132
      %p141 = scmp.eq.s32.totalorder %s21, 1
      %p142 = por %p140, %p141
      %p143 = scmp.ne.s32.totalorder %s132, %s133
      %p144 = scmp.eq.s32.totalorder %s21, 0
      %p145 = por %p143, %p144
      %p146 = scmp.ne.s32.totalorder %s132, %s133
      %p147 = scmp.eq.s32.totalorder %s22, 1
      %p148 = por %p146, %p147
      %p150 = scmp.ne.s32.totalorder %s133, %s149
      %p151 = scmp.eq.s32.totalorder %s22, 0
      %p152 = por %p150, %p151
      %p153 = scmp.le.s32.totalorder 1, %s16
      %p154 = scmp.lt.s32.totalorder %s16, 3
      %p155 = pnand %p153, %p154
      %p156 = pneg %p155
      // Predicated region
      $region9: #{tpu_custom_call.1} parent=5 // pred_check
        _
      $region10: #{tpu_custom_call.1} parent=5 // pred_check_branch
        %158 = sbr.rel (%p155) target = $region12
      $region11: #{tpu_custom_call.1} parent=5 // pred_region
        %s159 = ssub.s32 %s16, 1
        // Predicated region
        $region13: #{tpu_custom_call.1} parent=11 // pred_check
          %p160 = pneg %p117
        $region14: #{tpu_custom_call.1} parent=11 // pred_check_branch
          %162 = sbr.rel (%p160) target = $region16
        $region15: #{tpu_custom_call.1} parent=11 // pred_region
          %s164 = ssub.s32 16, 16
          %165 = vsyncadd [#allocation7], %s164
          %s166 = smul.addr %s27, 16
          %s167 = scalar_lea.hbm %s2, %s166
          %s169 = sshll.u32 [#allocation8], 4
          %s170 = int_to_ptr.vmem [resolvable:$true] %s169
          %172 = dma.hbm_to_vmem [thread:$0]  %s167, 16, %s170, [#allocation7]
        $region16: #{tpu_custom_call.1} parent=11 // pred_fallthru
          _
      $region12: #{tpu_custom_call.1} parent=5 // pred_fallthru
        _
      %p173 = scmp.lt.s32.totalorder %s16, 2
      // Predicated region
      $region17: #{tpu_custom_call.1} parent=5 // pred_check
        %p174 = pneg %p173
      $region18: #{tpu_custom_call.1} parent=5 // pred_check_branch
        %176 = sbr.rel (%p174) target = $region20
      $region19: #{tpu_custom_call.1} parent=5 // pred_region
        // Predicated region
        $region21: #{tpu_custom_call.1} parent=19 // pred_check
          %p177 = pneg %p57
        $region22: #{tpu_custom_call.1} parent=19 // pred_check_branch
          %179 = sbr.rel (%p177) target = $region24
        $region23: #{tpu_custom_call.1} parent=19 // pred_region
          %s180 = sand.u32 %s47, 1
          %s181 = scalar_lea.sflag [#allocation4], %s180
          %s182 = sand.u32 %s47, 1
          %s183 = smul.addr %s182, 128
          %s184 = scalar_lea.vmem [#allocation3], %s183
          %s185 = smul.u32 16, %s25
          %s187 = ssub.s32 2048, 2048
          %188 = vsyncadd %s181, %s187
          %s189 = smul.addr %s23, 32
          %s190 = sadd.s32 %s185, %s189
          %s191 = smul.addr %s190, 128
          %s192 = scalar_lea.hbm %s0, %s191
          %s194 = sshll.u32 %s184, 4
          %s195 = int_to_ptr.vmem [resolvable:$true] %s194
          %197 = dma.hbm_to_vmem [thread:$0]  %s192, 2048, %s195, %s181
        $region24: #{tpu_custom_call.1} parent=19 // pred_fallthru
          _
        // Predicated region
        $region25: #{tpu_custom_call.1} parent=19 // pred_check
          %p198 = pneg %p85
        $region26: #{tpu_custom_call.1} parent=19 // pred_check_branch
          %200 = sbr.rel (%p198) target = $region28
        $region27: #{tpu_custom_call.1} parent=19 // pred_region
          %s201 = sand.u32 %s16, 1
          %s202 = scalar_lea.sflag [#allocation7], %s201
          %s203 = sand.u32 %s75, 1
          %s204 = smul.addr %s203, 2048
          %s205 = scalar_lea.vmem [#allocation6], %s204
          %s206 = smul.u32 256, %s25
          %s208 = ssub.s32 32768, 32768
          %209 = vsyncadd %s202, %s208
          %s210 = sadd.s32 %s24, %s206
          %s211 = smul.addr %s210, 128
          %s212 = scalar_lea.hbm %s1, %s211
          %s213 = sshll.u32 %s205, 4
          %s214 = int_to_ptr.vmem [resolvable:$true] %s213
          %219 = dma.hbm_to_vmem [thread:$0]  %s212, 32768, %s214, %s202, 128, 128, 8
        $region28: #{tpu_custom_call.1} parent=19 // pred_fallthru
          _
      $region20: #{tpu_custom_call.1} parent=5 // pred_fallthru
        _
      %p220 = scmp.le.s32.totalorder 1, %s16
      %p221 = scmp.lt.s32.totalorder %s16, 3
      %p222 = pnand %p220, %p221
      %p223 = pneg %p222
      // Predicated region
      $region29: #{tpu_custom_call.1} parent=5 // pred_check
        _
      $region30: #{tpu_custom_call.1} parent=5 // pred_check_branch
        %225 = sbr.rel (%p222) target = $region32
      $region31: #{tpu_custom_call.1} parent=5 // pred_region
        %s226 = ssub.s32 %s16, 1
        %s227 = sand.u32 %s50, 1
        %s228 = scalar_lea.sflag [#allocation4], %s227
        %s229 = sand.u32 %s50, 1
        %s230 = smul.addr %s229, 128
        %s231 = scalar_lea.vmem [#allocation3], %s230
        // Predicated region
        $region33: #{tpu_custom_call.1} parent=31 // pred_check
          %p232 = pneg %p63
        $region34: #{tpu_custom_call.1} parent=31 // pred_check_branch
          %234 = sbr.rel (%p232) target = $region36
        $region35: #{tpu_custom_call.1} parent=31 // pred_region
          %235 = dma.done %s228, 2048
        $region36: #{tpu_custom_call.1} parent=31 // pred_fallthru
          _
        %s236 = sand.u32 %s21, 1
        %s237 = scalar_lea.sflag [#allocation7], %s236
        %s238 = sand.u32 %s78, 1
        %s239 = smul.addr %s238, 2048
        %s240 = scalar_lea.vmem [#allocation6], %s239
        // Predicated region
        $region37: #{tpu_custom_call.1} parent=31 // pred_check
          %p241 = pneg %p91
        $region38: #{tpu_custom_call.1} parent=31 // pred_check_branch
          %243 = sbr.rel (%p241) target = $region40
        $region39: #{tpu_custom_call.1} parent=31 // pred_region
          %244 = dma.done %s237, 32768
        $region40: #{tpu_custom_call.1} parent=31 // pred_fallthru
          _
        // Predicated region
        $region41: #{tpu_custom_call.1} parent=31 // pred_check
          %p245 = pneg %p117
        $region42: #{tpu_custom_call.1} parent=31 // pred_check_branch
          %247 = sbr.rel (%p245) target = $region44
        $region43: #{tpu_custom_call.1} parent=31 // pred_region
          %248 = dma.done [#allocation7], 16
        $region44: #{tpu_custom_call.1} parent=31 // pred_fallthru
          _
        %s249 = sand.u32 %s50, 1
        %s250 = scalar_lea.sflag [#allocation4], %s249
        %s251 = sand.u32 %s50, 1
        %s252 = smul.addr %s251, 128
        %s253 = scalar_lea.vmem [#allocation3], %s252
        %p254 = pneg %p63
        %p255 = pneg %p60
        %s256 = sand.u32 %s21, 1
        %s257 = scalar_lea.sflag [#allocation7], %s256
        %s258 = sand.u32 %s78, 1
        %s259 = smul.addr %s258, 2048
        %s260 = scalar_lea.vmem [#allocation6], %s259
        %p261 = pneg %p91
        %p262 = pneg %p88
        %p263 = pneg %p117
        %p264 = pneg %p114
        %p265 = pneg %p145
        %p266 = pneg %p142
        %s267 = smul.u32 16, %s28
        %s268 = smul.u32 256, %s28
        %p269 = scmp.eq.s32.totalorder %s28, 0
        // Predicated region
        $region45: #{tpu_custom_call.1} parent=31 // pred_check
          %p270 = pneg %p269
        $region46: #{tpu_custom_call.1} parent=31 // pred_check_branch
          %272 = sbr.rel (%p270) target = $region48
        $region47: #{tpu_custom_call.1} parent=31 // pred_region
          %273 = vst [vmem:[#allocation2] sm:$0xff] 0.0
        $region48: #{tpu_custom_call.1} parent=31 // pred_fallthru
          _
        %v274 = vld [vmem:[#allocation2] sm:$0xff]
        %v275 = vld [vmem:[%s231] sm:$0xff]
        %v276 = vld [vmem:[%s231 + $0x8] sm:$0xff]
        %v277 = vld [vmem:[%s231 + $0x10] sm:$0xff]
        %v278 = vld [vmem:[%s231 + $0x18] sm:$0xff]
        %v279 = vld [vmem:[%s231 + $0x20] sm:$0xff]
        %v280 = vld [vmem:[%s231 + $0x28] sm:$0xff]
        %v281 = vld [vmem:[%s231 + $0x30] sm:$0xff]
        %v282 = vld [vmem:[%s231 + $0x38] sm:$0xff]
        %v283 = vld [vmem:[%s231 + $0x40] sm:$0xff]
        %v284 = vld [vmem:[%s231 + $0x48] sm:$0xff]
        %v285 = vld [vmem:[%s231 + $0x50] sm:$0xff]
        %v286 = vld [vmem:[%s231 + $0x58] sm:$0xff]
        %v287 = vld [vmem:[%s231 + $0x60] sm:$0xff]
        %v288 = vld [vmem:[%s231 + $0x68] sm:$0xff]
        %v289 = vld [vmem:[%s231 + $0x70] sm:$0xff]
        %v290 = vld [vmem:[%s231 + $0x78] sm:$0xff]
        %v291 = vld [vmem:[%s240] sm:$0xff]
        %v292 = vld [vmem:[%s240 + $0x8] sm:$0xff]
        %v293 = vld [vmem:[%s240 + $0x10] sm:$0xff]
        %v294 = vld [vmem:[%s240 + $0x18] sm:$0xff]
        %v295 = vld [vmem:[%s240 + $0x20] sm:$0xff]
        %v296 = vld [vmem:[%s240 + $0x28] sm:$0xff]
        %v297 = vld [vmem:[%s240 + $0x30] sm:$0xff]
        %v298 = vld [vmem:[%s240 + $0x38] sm:$0xff]
        %v299 = vld [vmem:[%s240 + $0x40] sm:$0xff]
        %v300 = vld [vmem:[%s240 + $0x48] sm:$0xff]
        %v301 = vld [vmem:[%s240 + $0x50] sm:$0xff]
        %v302 = vld [vmem:[%s240 + $0x58] sm:$0xff]
        %v303 = vld [vmem:[%s240 + $0x60] sm:$0xff]
        %v304 = vld [vmem:[%s240 + $0x68] sm:$0xff]
        %v305 = vld [vmem:[%s240 + $0x70] sm:$0xff]
        %v306 = vld [vmem:[%s240 + $0x78] sm:$0xff]
        %v307 = vld [vmem:[%s240 + $0x80] sm:$0xff]
        %v308 = vld [vmem:[%s240 + $0x88] sm:$0xff]
        %v309 = vld [vmem:[%s240 + $0x90] sm:$0xff]
        %v310 = vld [vmem:[%s240 + $0x98] sm:$0xff]
        %v311 = vld [vmem:[%s240 + $0xa0] sm:$0xff]
        %v312 = vld [vmem:[%s240 + $0xa8] sm:$0xff]
        %v313 = vld [vmem:[%s240 + $0xb0] sm:$0xff]
        %v314 = vld [vmem:[%s240 + $0xb8] sm:$0xff]
        %v315 = vld [vmem:[%s240 + $0xc0] sm:$0xff]
        %v316 = vld [vmem:[%s240 + $0xc8] sm:$0xff]
        %v317 = vld [vmem:[%s240 + $0xd0] sm:$0xff]
        %v318 = vld [vmem:[%s240 + $0xd8] sm:$0xff]
        %v319 = vld [vmem:[%s240 + $0xe0] sm:$0xff]
        %v320 = vld [vmem:[%s240 + $0xe8] sm:$0xff]
        %v321 = vld [vmem:[%s240 + $0xf0] sm:$0xff]
        %v322 = vld [vmem:[%s240 + $0xf8] sm:$0xff]
        %v323 = vld [vmem:[%s240 + $0x100] sm:$0xff]
        %v324 = vld [vmem:[%s240 + $0x108] sm:$0xff]
        %v325 = vld [vmem:[%s240 + $0x110] sm:$0xff]
        %v326 = vld [vmem:[%s240 + $0x118] sm:$0xff]
        %v327 = vld [vmem:[%s240 + $0x120] sm:$0xff]
        %v328 = vld [vmem:[%s240 + $0x128] sm:$0xff]
        %v329 = vld [vmem:[%s240 + $0x130] sm:$0xff]
        %v330 = vld [vmem:[%s240 + $0x138] sm:$0xff]
        %v331 = vld [vmem:[%s240 + $0x140] sm:$0xff]
        %v332 = vld [vmem:[%s240 + $0x148] sm:$0xff]
        %v333 = vld [vmem:[%s240 + $0x150] sm:$0xff]
        %v334 = vld [vmem:[%s240 + $0x158] sm:$0xff]
        %v335 = vld [vmem:[%s240 + $0x160] sm:$0xff]
        %v336 = vld [vmem:[%s240 + $0x168] sm:$0xff]
        %v337 = vld [vmem:[%s240 + $0x170] sm:$0xff]
        %v338 = vld [vmem:[%s240 + $0x178] sm:$0xff]
        %v339 = vld [vmem:[%s240 + $0x180] sm:$0xff]
        %v340 = vld [vmem:[%s240 + $0x188] sm:$0xff]
        %v341 = vld [vmem:[%s240 + $0x190] sm:$0xff]
        %v342 = vld [vmem:[%s240 + $0x198] sm:$0xff]
        %v343 = vld [vmem:[%s240 + $0x1a0] sm:$0xff]
        %v344 = vld [vmem:[%s240 + $0x1a8] sm:$0xff]
        %v345 = vld [vmem:[%s240 + $0x1b0] sm:$0xff]
        %v346 = vld [vmem:[%s240 + $0x1b8] sm:$0xff]
        %v347 = vld [vmem:[%s240 + $0x1c0] sm:$0xff]
        %v348 = vld [vmem:[%s240 + $0x1c8] sm:$0xff]
        %v349 = vld [vmem:[%s240 + $0x1d0] sm:$0xff]
        %v350 = vld [vmem:[%s240 + $0x1d8] sm:$0xff]
        %v351 = vld [vmem:[%s240 + $0x1e0] sm:$0xff]
        %v352 = vld [vmem:[%s240 + $0x1e8] sm:$0xff]
        %v353 = vld [vmem:[%s240 + $0x1f0] sm:$0xff]
        %v354 = vld [vmem:[%s240 + $0x1f8] sm:$0xff]
        %v355 = vld [vmem:[%s240 + $0x200] sm:$0xff]
        %v356 = vld [vmem:[%s240 + $0x208] sm:$0xff]
        %v357 = vld [vmem:[%s240 + $0x210] sm:$0xff]
        %v358 = vld [vmem:[%s240 + $0x218] sm:$0xff]
        %v359 = vld [vmem:[%s240 + $0x220] sm:$0xff]
        %v360 = vld [vmem:[%s240 + $0x228] sm:$0xff]
        %v361 = vld [vmem:[%s240 + $0x230] sm:$0xff]
        %v362 = vld [vmem:[%s240 + $0x238] sm:$0xff]
        %v363 = vld [vmem:[%s240 + $0x240] sm:$0xff]
        %v364 = vld [vmem:[%s240 + $0x248] sm:$0xff]
        %v365 = vld [vmem:[%s240 + $0x250] sm:$0xff]
        %v366 = vld [vmem:[%s240 + $0x258] sm:$0xff]
        %v367 = vld [vmem:[%s240 + $0x260] sm:$0xff]
        %v368 = vld [vmem:[%s240 + $0x268] sm:$0xff]
        %v369 = vld [vmem:[%s240 + $0x270] sm:$0xff]
        %v370 = vld [vmem:[%s240 + $0x278] sm:$0xff]
        %v371 = vld [vmem:[%s240 + $0x280] sm:$0xff]
        %v372 = vld [vmem:[%s240 + $0x288] sm:$0xff]
        %v373 = vld [vmem:[%s240 + $0x290] sm:$0xff]
        %v374 = vld [vmem:[%s240 + $0x298] sm:$0xff]
        %v375 = vld [vmem:[%s240 + $0x2a0] sm:$0xff]
        %v376 = vld [vmem:[%s240 + $0x2a8] sm:$0xff]
        %v377 = vld [vmem:[%s240 + $0x2b0] sm:$0xff]
        %v378 = vld [vmem:[%s240 + $0x2b8] sm:$0xff]
        %v379 = vld [vmem:[%s240 + $0x2c0] sm:$0xff]
        %v380 = vld [vmem:[%s240 + $0x2c8] sm:$0xff]
        %v381 = vld [vmem:[%s240 + $0x2d0] sm:$0xff]
        %v382 = vld [vmem:[%s240 + $0x2d8] sm:$0xff]
        %v383 = vld [vmem:[%s240 + $0x2e0] sm:$0xff]
        %v384 = vld [vmem:[%s240 + $0x2e8] sm:$0xff]
        %v385 = vld [vmem:[%s240 + $0x2f0] sm:$0xff]
        %v386 = vld [vmem:[%s240 + $0x2f8] sm:$0xff]
        %v387 = vld [vmem:[%s240 + $0x300] sm:$0xff]
        %v388 = vld [vmem:[%s240 + $0x308] sm:$0xff]
        %v389 = vld [vmem:[%s240 + $0x310] sm:$0xff]
        %v390 = vld [vmem:[%s240 + $0x318] sm:$0xff]
        %v391 = vld [vmem:[%s240 + $0x320] sm:$0xff]
        %v392 = vld [vmem:[%s240 + $0x328] sm:$0xff]
        %v393 = vld [vmem:[%s240 + $0x330] sm:$0xff]
        %v394 = vld [vmem:[%s240 + $0x338] sm:$0xff]
        %v395 = vld [vmem:[%s240 + $0x340] sm:$0xff]
        %v396 = vld [vmem:[%s240 + $0x348] sm:$0xff]
        %v397 = vld [vmem:[%s240 + $0x350] sm:$0xff]
        %v398 = vld [vmem:[%s240 + $0x358] sm:$0xff]
        %v399 = vld [vmem:[%s240 + $0x360] sm:$0xff]
        %v400 = vld [vmem:[%s240 + $0x368] sm:$0xff]
        %v401 = vld [vmem:[%s240 + $0x370] sm:$0xff]
        %v402 = vld [vmem:[%s240 + $0x378] sm:$0xff]
        %v403 = vld [vmem:[%s240 + $0x380] sm:$0xff]
        %v404 = vld [vmem:[%s240 + $0x388] sm:$0xff]
        %v405 = vld [vmem:[%s240 + $0x390] sm:$0xff]
        %v406 = vld [vmem:[%s240 + $0x398] sm:$0xff]
        %v407 = vld [vmem:[%s240 + $0x3a0] sm:$0xff]
        %v408 = vld [vmem:[%s240 + $0x3a8] sm:$0xff]
        %v409 = vld [vmem:[%s240 + $0x3b0] sm:$0xff]
        %v410 = vld [vmem:[%s240 + $0x3b8] sm:$0xff]
        %v411 = vld [vmem:[%s240 + $0x3c0] sm:$0xff]
        %v412 = vld [vmem:[%s240 + $0x3c8] sm:$0xff]
        %v413 = vld [vmem:[%s240 + $0x3d0] sm:$0xff]
        %v414 = vld [vmem:[%s240 + $0x3d8] sm:$0xff]
        %v415 = vld [vmem:[%s240 + $0x3e0] sm:$0xff]
        %v416 = vld [vmem:[%s240 + $0x3e8] sm:$0xff]
        %v417 = vld [vmem:[%s240 + $0x3f0] sm:$0xff]
        %v418 = vld [vmem:[%s240 + $0x3f8] sm:$0xff]
        %v419 = vld [vmem:[%s240 + $0x400] sm:$0xff]
        %v420 = vld [vmem:[%s240 + $0x408] sm:$0xff]
        %v421 = vld [vmem:[%s240 + $0x410] sm:$0xff]
        %v422 = vld [vmem:[%s240 + $0x418] sm:$0xff]
        %v423 = vld [vmem:[%s240 + $0x420] sm:$0xff]
        %v424 = vld [vmem:[%s240 + $0x428] sm:$0xff]
        %v425 = vld [vmem:[%s240 + $0x430] sm:$0xff]
        %v426 = vld [vmem:[%s240 + $0x438] sm:$0xff]
        %v427 = vld [vmem:[%s240 + $0x440] sm:$0xff]
        %v428 = vld [vmem:[%s240 + $0x448] sm:$0xff]
        %v429 = vld [vmem:[%s240 + $0x450] sm:$0xff]
        %v430 = vld [vmem:[%s240 + $0x458] sm:$0xff]
        %v431 = vld [vmem:[%s240 + $0x460] sm:$0xff]
        %v432 = vld [vmem:[%s240 + $0x468] sm:$0xff]
        %v433 = vld [vmem:[%s240 + $0x470] sm:$0xff]
        %v434 = vld [vmem:[%s240 + $0x478] sm:$0xff]
        %v435 = vld [vmem:[%s240 + $0x480] sm:$0xff]
        %v436 = vld [vmem:[%s240 + $0x488] sm:$0xff]
        %v437 = vld [vmem:[%s240 + $0x490] sm:$0xff]
        %v438 = vld [vmem:[%s240 + $0x498] sm:$0xff]
        %v439 = vld [vmem:[%s240 + $0x4a0] sm:$0xff]
        %v440 = vld [vmem:[%s240 + $0x4a8] sm:$0xff]
        %v441 = vld [vmem:[%s240 + $0x4b0] sm:$0xff]
        %v442 = vld [vmem:[%s240 + $0x4b8] sm:$0xff]
        %v443 = vld [vmem:[%s240 + $0x4c0] sm:$0xff]
        %v444 = vld [vmem:[%s240 + $0x4c8] sm:$0xff]
        %v445 = vld [vmem:[%s240 + $0x4d0] sm:$0xff]
        %v446 = vld [vmem:[%s240 + $0x4d8] sm:$0xff]
        %v447 = vld [vmem:[%s240 + $0x4e0] sm:$0xff]
        %v448 = vld [vmem:[%s240 + $0x4e8] sm:$0xff]
        %v449 = vld [vmem:[%s240 + $0x4f0] sm:$0xff]
        %v450 = vld [vmem:[%s240 + $0x4f8] sm:$0xff]
        %v451 = vld [vmem:[%s240 + $0x500] sm:$0xff]
        %v452 = vld [vmem:[%s240 + $0x508] sm:$0xff]
        %v453 = vld [vmem:[%s240 + $0x510] sm:$0xff]
        %v454 = vld [vmem:[%s240 + $0x518] sm:$0xff]
        %v455 = vld [vmem:[%s240 + $0x520] sm:$0xff]
        %v456 = vld [vmem:[%s240 + $0x528] sm:$0xff]
        %v457 = vld [vmem:[%s240 + $0x530] sm:$0xff]
        %v458 = vld [vmem:[%s240 + $0x538] sm:$0xff]
        %v459 = vld [vmem:[%s240 + $0x540] sm:$0xff]
        %v460 = vld [vmem:[%s240 + $0x548] sm:$0xff]
        %v461 = vld [vmem:[%s240 + $0x550] sm:$0xff]
        %v462 = vld [vmem:[%s240 + $0x558] sm:$0xff]
        %v463 = vld [vmem:[%s240 + $0x560] sm:$0xff]
        %v464 = vld [vmem:[%s240 + $0x568] sm:$0xff]
        %v465 = vld [vmem:[%s240 + $0x570] sm:$0xff]
        %v466 = vld [vmem:[%s240 + $0x578] sm:$0xff]
        %v467 = vld [vmem:[%s240 + $0x580] sm:$0xff]
        %v468 = vld [vmem:[%s240 + $0x588] sm:$0xff]
        %v469 = vld [vmem:[%s240 + $0x590] sm:$0xff]
        %v470 = vld [vmem:[%s240 + $0x598] sm:$0xff]
        %v471 = vld [vmem:[%s240 + $0x5a0] sm:$0xff]
        %v472 = vld [vmem:[%s240 + $0x5a8] sm:$0xff]
        %v473 = vld [vmem:[%s240 + $0x5b0] sm:$0xff]
        %v474 = vld [vmem:[%s240 + $0x5b8] sm:$0xff]
        %v475 = vld [vmem:[%s240 + $0x5c0] sm:$0xff]
        %v476 = vld [vmem:[%s240 + $0x5c8] sm:$0xff]
        %v477 = vld [vmem:[%s240 + $0x5d0] sm:$0xff]
        %v478 = vld [vmem:[%s240 + $0x5d8] sm:$0xff]
        %v479 = vld [vmem:[%s240 + $0x5e0] sm:$0xff]
        %v480 = vld [vmem:[%s240 + $0x5e8] sm:$0xff]
        %v481 = vld [vmem:[%s240 + $0x5f0] sm:$0xff]
        %v482 = vld [vmem:[%s240 + $0x5f8] sm:$0xff]
        %v483 = vld [vmem:[%s240 + $0x600] sm:$0xff]
        %v484 = vld [vmem:[%s240 + $0x608] sm:$0xff]
        %v485 = vld [vmem:[%s240 + $0x610] sm:$0xff]
        %v486 = vld [vmem:[%s240 + $0x618] sm:$0xff]
        %v487 = vld [vmem:[%s240 + $0x620] sm:$0xff]
        %v488 = vld [vmem:[%s240 + $0x628] sm:$0xff]
        %v489 = vld [vmem:[%s240 + $0x630] sm:$0xff]
        %v490 = vld [vmem:[%s240 + $0x638] sm:$0xff]
        %v491 = vld [vmem:[%s240 + $0x640] sm:$0xff]
        %v492 = vld [vmem:[%s240 + $0x648] sm:$0xff]
        %v493 = vld [vmem:[%s240 + $0x650] sm:$0xff]
        %v494 = vld [vmem:[%s240 + $0x658] sm:$0xff]
        %v495 = vld [vmem:[%s240 + $0x660] sm:$0xff]
        %v496 = vld [vmem:[%s240 + $0x668] sm:$0xff]
        %v497 = vld [vmem:[%s240 + $0x670] sm:$0xff]
        %v498 = vld [vmem:[%s240 + $0x678] sm:$0xff]
        %v499 = vld [vmem:[%s240 + $0x680] sm:$0xff]
        %v500 = vld [vmem:[%s240 + $0x688] sm:$0xff]
        %v501 = vld [vmem:[%s240 + $0x690] sm:$0xff]
        %v502 = vld [vmem:[%s240 + $0x698] sm:$0xff]
        %v503 = vld [vmem:[%s240 + $0x6a0] sm:$0xff]
        %v504 = vld [vmem:[%s240 + $0x6a8] sm:$0xff]
        %v505 = vld [vmem:[%s240 + $0x6b0] sm:$0xff]
        %v506 = vld [vmem:[%s240 + $0x6b8] sm:$0xff]
        %v507 = vld [vmem:[%s240 + $0x6c0] sm:$0xff]
        %v508 = vld [vmem:[%s240 + $0x6c8] sm:$0xff]
        %v509 = vld [vmem:[%s240 + $0x6d0] sm:$0xff]
        %v510 = vld [vmem:[%s240 + $0x6d8] sm:$0xff]
        %v511 = vld [vmem:[%s240 + $0x6e0] sm:$0xff]
        %v512 = vld [vmem:[%s240 + $0x6e8] sm:$0xff]
        %v513 = vld [vmem:[%s240 + $0x6f0] sm:$0xff]
        %v514 = vld [vmem:[%s240 + $0x6f8] sm:$0xff]
        %v515 = vld [vmem:[%s240 + $0x700] sm:$0xff]
        %v516 = vld [vmem:[%s240 + $0x708] sm:$0xff]
        %v517 = vld [vmem:[%s240 + $0x710] sm:$0xff]
        %v518 = vld [vmem:[%s240 + $0x718] sm:$0xff]
        %v519 = vld [vmem:[%s240 + $0x720] sm:$0xff]
        %v520 = vld [vmem:[%s240 + $0x728] sm:$0xff]
        %v521 = vld [vmem:[%s240 + $0x730] sm:$0xff]
        %v522 = vld [vmem:[%s240 + $0x738] sm:$0xff]
        %v523 = vld [vmem:[%s240 + $0x740] sm:$0xff]
        %v524 = vld [vmem:[%s240 + $0x748] sm:$0xff]
        %v525 = vld [vmem:[%s240 + $0x750] sm:$0xff]
        %v526 = vld [vmem:[%s240 + $0x758] sm:$0xff]
        %v527 = vld [vmem:[%s240 + $0x760] sm:$0xff]
        %v528 = vld [vmem:[%s240 + $0x768] sm:$0xff]
        %v529 = vld [vmem:[%s240 + $0x770] sm:$0xff]
        %v530 = vld [vmem:[%s240 + $0x778] sm:$0xff]
        %v531 = vld [vmem:[%s240 + $0x780] sm:$0xff]
        %v532 = vld [vmem:[%s240 + $0x788] sm:$0xff]
        %v533 = vld [vmem:[%s240 + $0x790] sm:$0xff]
        %v534 = vld [vmem:[%s240 + $0x798] sm:$0xff]
        %v535 = vld [vmem:[%s240 + $0x7a0] sm:$0xff]
        %v536 = vld [vmem:[%s240 + $0x7a8] sm:$0xff]
        %v537 = vld [vmem:[%s240 + $0x7b0] sm:$0xff]
        %v538 = vld [vmem:[%s240 + $0x7b8] sm:$0xff]
        %v539 = vld [vmem:[%s240 + $0x7c0] sm:$0xff]
        %v540 = vld [vmem:[%s240 + $0x7c8] sm:$0xff]
        %v541 = vld [vmem:[%s240 + $0x7d0] sm:$0xff]
        %v542 = vld [vmem:[%s240 + $0x7d8] sm:$0xff]
        %v543 = vld [vmem:[%s240 + $0x7e0] sm:$0xff]
        %v544 = vld [vmem:[%s240 + $0x7e8] sm:$0xff]
        %v545 = vld [vmem:[%s240 + $0x7f0] sm:$0xff]
        %v546 = vld [vmem:[%s240 + $0x7f8] sm:$0xff]
        %547 = vmatprep.subr.mxu0 0.0
        %v548 = vand.u32 %v291, 4294901760
        %549 = vmatpush1.msra.mxu0 %v548
        %550 = vmatprep.subr.mxu0 0.0
        %v551 = vand.u32 %v292, 4294901760
        %552 = vmatpush1.msra.mxu0 %v551
        %553 = vmatprep.subr.mxu0 0.0
        %v554 = vand.u32 %v293, 4294901760
        %555 = vmatpush1.msra.mxu0 %v554
        %556 = vmatprep.subr.mxu0 0.0
        %v557 = vand.u32 %v294, 4294901760
        %558 = vmatpush1.msra.mxu0 %v557
        %559 = vmatprep.subr.mxu0 0.0
        %v560 = vand.u32 %v295, 4294901760
        %561 = vmatpush1.msra.mxu0 %v560
        %562 = vmatprep.subr.mxu0 0.0
        %v563 = vand.u32 %v296, 4294901760
        %564 = vmatpush1.msra.mxu0 %v563
        %565 = vmatprep.subr.mxu0 0.0
        %v566 = vand.u32 %v297, 4294901760
        %567 = vmatpush1.msra.mxu0 %v566
        %568 = vmatprep.subr.mxu0 0.0
        %v569 = vand.u32 %v298, 4294901760
        %570 = vmatpush1.msra.mxu0 %v569
        %571 = vmatprep.subr.mxu0 0.0
        %v572 = vand.u32 %v299, 4294901760
        %573 = vmatpush1.msra.mxu0 %v572
        %574 = vmatprep.subr.mxu0 0.0
        %v575 = vand.u32 %v300, 4294901760
        %576 = vmatpush1.msra.mxu0 %v575
        %577 = vmatprep.subr.mxu0 0.0
        %v578 = vand.u32 %v301, 4294901760
        %579 = vmatpush1.msra.mxu0 %v578
        %580 = vmatprep.subr.mxu0 0.0
        %v581 = vand.u32 %v302, 4294901760
        %582 = vmatpush1.msra.mxu0 %v581
        %583 = vmatprep.subr.mxu0 0.0
        %v584 = vand.u32 %v303, 4294901760
        %585 = vmatpush1.msra.mxu0 %v584
        %586 = vmatprep.subr.mxu0 0.0
        %v587 = vand.u32 %v304, 4294901760
        %588 = vmatpush1.msra.mxu0 %v587
        %589 = vmatprep.subr.mxu0 0.0
        %v590 = vand.u32 %v305, 4294901760
        %591 = vmatpush1.msra.mxu0 %v590
        %592 = vmatprep.subr.mxu0 0.0
        %v593 = vand.u32 %v306, 4294901760
        %594 = vmatpush1.msra.mxu0 %v593
        %595 = vmatprep.subr.mxu0 0.0
        %v596 = vand.u32 %v307, 4294901760
        %597 = vmatpush1.msra.mxu0 %v596
        %598 = vmatprep.subr.mxu0 0.0
        %v599 = vand.u32 %v308, 4294901760
        %600 = vmatpush1.msra.mxu0 %v599
        %601 = vmatprep.subr.mxu0 0.0
        %v602 = vand.u32 %v309, 4294901760
        %603 = vmatpush1.msra.mxu0 %v602
        %604 = vmatprep.subr.mxu0 0.0
        %v605 = vand.u32 %v310, 4294901760
        %606 = vmatpush1.msra.mxu0 %v605
        %607 = vmatprep.subr.mxu0 0.0
        %v608 = vand.u32 %v311, 4294901760
        %609 = vmatpush1.msra.mxu0 %v608
        %610 = vmatprep.subr.mxu0 0.0
        %v611 = vand.u32 %v312, 4294901760
        %612 = vmatpush1.msra.mxu0 %v611
        %613 = vmatprep.subr.mxu0 0.0
        %v614 = vand.u32 %v313, 4294901760
        %615 = vmatpush1.msra.mxu0 %v614
        %616 = vmatprep.subr.mxu0 0.0
        %v617 = vand.u32 %v314, 4294901760
        %618 = vmatpush1.msra.mxu0 %v617
        %619 = vmatprep.subr.mxu0 0.0
        %v620 = vand.u32 %v315, 4294901760
        %621 = vmatpush1.msra.mxu0 %v620
        %622 = vmatprep.subr.mxu0 0.0
        %v623 = vand.u32 %v316, 4294901760
        %624 = vmatpush1.msra.mxu0 %v623
        %625 = vmatprep.subr.mxu0 0.0
        %v626 = vand.u32 %v317, 4294901760
        %627 = vmatpush1.msra.mxu0 %v626
        %628 = vmatprep.subr.mxu0 0.0
        %v629 = vand.u32 %v318, 4294901760
        %630 = vmatpush1.msra.mxu0 %v629
        %631 = vmatprep.subr.mxu0 0.0
        %v632 = vand.u32 %v319, 4294901760
        %633 = vmatpush1.msra.mxu0 %v632
        %634 = vmatprep.subr.mxu0 0.0
        %v635 = vand.u32 %v320, 4294901760
        %636 = vmatpush1.msra.mxu0 %v635
        %637 = vmatprep.subr.mxu0 0.0
        %v638 = vand.u32 %v321, 4294901760
        %639 = vmatpush1.msra.mxu0 %v638
        %640 = vmatprep.subr.mxu0 0.0
        %v641 = vand.u32 %v322, 4294901760
        %642 = vmatpush1.msra.mxu0 %v641
        %v643 = vand.u32 %v276, 4294901760
        %v644 = vsub.f32 %v276, %v643
        %v645 = vand.u32 %v644, 4294901760
        %v646 = vsub.f32 %v644, %v645
        %v647 = vand.u32 %v646, 4294901760
        %648 = vmatprep.mubr.f32.mxu0 %v647
        %v649 = vand.u32 %v275, 4294901760
        %v650 = vsub.f32 %v275, %v649
        %v651 = vand.u32 %v650, 4294901760
        %v652 = vsub.f32 %v650, %v651
        %v653 = vand.u32 %v652, 4294901760
        %654 = vmatmul.mubr.f32.gmra.mrb[0].mxu0 %v653
        %v655 = vpop.f32.mrb[0].mxu0
        %v656 = vadd.f32 0.0, %v655
        %v657 = vpop.f32.mrb[0].mxu0
        %658 = vdwg.mxu0
        %659 = vmatprep.subr.mxu0 0.0
        %v660 = vand.u32 %v291, 4294901760
        %v661 = vsub.f32 %v291, %v660
        %v662 = vand.u32 %v661, 4294901760
        %v663 = vsub.f32 %v661, %v662
        %v664 = vand.u32 %v663, 4294901760
        %665 = vmatpush1.msra.mxu0 %v664
        %666 = vmatprep.subr.mxu0 0.0
        %v667 = vand.u32 %v292, 4294901760
        %v668 = vsub.f32 %v292, %v667
        %v669 = vand.u32 %v668, 4294901760
        %v670 = vsub.f32 %v668, %v669
        %v671 = vand.u32 %v670, 4294901760
        %672 = vmatpush1.msra.mxu0 %v671
        %673 = vmatprep.subr.mxu0 0.0
        %v674 = vand.u32 %v293, 4294901760
        %v675 = vsub.f32 %v293, %v674
        %v676 = vand.u32 %v675, 4294901760
        %v677 = vsub.f32 %v675, %v676
        %v678 = vand.u32 %v677, 4294901760
        %679 = vmatpush1.msra.mxu0 %v678
        %680 = vmatprep.subr.mxu0 0.0
        %v681 = vand.u32 %v294, 4294901760
        %v682 = vsub.f32 %v294, %v681
        %v683 = vand.u32 %v682, 4294901760
        %v684 = vsub.f32 %v682, %v683
        %v685 = vand.u32 %v684, 4294901760
        %686 = vmatpush1.msra.mxu0 %v685
        %687 = vmatprep.subr.mxu0 0.0
        %v688 = vand.u32 %v295, 4294901760
        %v689 = vsub.f32 %v295, %v688
        %v690 = vand.u32 %v689, 4294901760
        %v691 = vsub.f32 %v689, %v690
        %v692 = vand.u32 %v691, 4294901760
        %693 = vmatpush1.msra.mxu0 %v692
        %694 = vmatprep.subr.mxu0 0.0
        %v695 = vand.u32 %v296, 4294901760
        %v696 = vsub.f32 %v296, %v695
        %v697 = vand.u32 %v696, 4294901760
        %v698 = vsub.f32 %v696, %v697
        %v699 = vand.u32 %v698, 4294901760
        %700 = vmatpush1.msra.mxu0 %v699
        %701 = vmatprep.subr.mxu0 0.0
        %v702 = vand.u32 %v297, 4294901760
        %v703 = vsub.f32 %v297, %v702
        %v704 = vand.u32 %v703, 4294901760
        %v705 = vsub.f32 %v703, %v704
        %v706 = vand.u32 %v705, 4294901760
        %707 = vmatpush1.msra.mxu0 %v706
        %708 = vmatprep.subr.mxu0 0.0
        %v709 = vand.u32 %v298, 4294901760
        %v710 = vsub.f32 %v298, %v709
        %v711 = vand.u32 %v710, 4294901760
        %v712 = vsub.f32 %v710, %v711
        %v713 = vand.u32 %v712, 4294901760
        %714 = vmatpush1.msra.mxu0 %v713
        %715 = vmatprep.subr.mxu0 0.0
        %v716 = vand.u32 %v299, 4294901760
        %v717 = vsub.f32 %v299, %v716
        %v718 = vand.u32 %v717, 4294901760
        %v719 = vsub.f32 %v717, %v718
        %v720 = vand.u32 %v719, 4294901760
        %721 = vmatpush1.msra.mxu0 %v720
        %722 = vmatprep.subr.mxu0 0.0
        %v723 = vand.u32 %v300, 4294901760
        %v724 = vsub.f32 %v300, %v723
        %v725 = vand.u32 %v724, 4294901760
        %v726 = vsub.f32 %v724, %v725
        %v727 = vand.u32 %v726, 4294901760
        %728 = vmatpush1.msra.mxu0 %v727
        %729 = vmatprep.subr.mxu0 0.0
        %v730 = vand.u32 %v301, 4294901760
        %v731 = vsub.f32 %v301, %v730
        %v732 = vand.u32 %v731, 4294901760
        %v733 = vsub.f32 %v731, %v732
        %v734 = vand.u32 %v733, 4294901760
        %735 = vmatpush1.msra.mxu0 %v734
        %736 = vmatprep.subr.mxu0 0.0
        %v737 = vand.u32 %v302, 4294901760
        %v738 = vsub.f32 %v302, %v737
        %v739 = vand.u32 %v738, 4294901760
        %v740 = vsub.f32 %v738, %v739
        %v741 = vand.u32 %v740, 4294901760
        %742 = vmatpush1.msra.mxu0 %v741
        %743 = vmatprep.subr.mxu0 0.0
        %v744 = vand.u32 %v303, 4294901760
        %v745 = vsub.f32 %v303, %v744
        %v746 = vand.u32 %v745, 4294901760
        %v747 = vsub.f32 %v745, %v746
        %v748 = vand.u32 %v747, 4294901760
        %749 = vmatpush1.msra.mxu0 %v748
        %750 = vmatprep.subr.mxu0 0.0
        %v751 = vand.u32 %v304, 4294901760
        %v752 = vsub.f32 %v304, %v751
        %v753 = vand.u32 %v752, 4294901760
        %v754 = vsub.f32 %v752, %v753
        %v755 = vand.u32 %v754, 4294901760
        %756 = vmatpush1.msra.mxu0 %v755
        %757 = vmatprep.subr.mxu0 0.0
        %v758 = vand.u32 %v305, 4294901760
        %v759 = vsub.f32 %v305, %v758
        %v760 = vand.u32 %v759, 4294901760
        %v761 = vsub.f32 %v759, %v760
        %v762 = vand.u32 %v761, 4294901760
        %763 = vmatpush1.msra.mxu0 %v762
        %764 = vmatprep.subr.mxu0 0.0
        %v765 = vand.u32 %v306, 4294901760
        %v766 = vsub.f32 %v306, %v765
        %v767 = vand.u32 %v766, 4294901760
        %v768 = vsub.f32 %v766, %v767
        %v769 = vand.u32 %v768, 4294901760
        %770 = vmatpush1.msra.mxu0 %v769
        %771 = vmatprep.subr.mxu0 0.0
        %v772 = vand.u32 %v307, 4294901760
        %v773 = vsub.f32 %v307, %v772
        %v774 = vand.u32 %v773, 4294901760
        %v775 = vsub.f32 %v773, %v774
        %v776 = vand.u32 %v775, 4294901760
        %777 = vmatpush1.msra.mxu0 %v776
        %778 = vmatprep.subr.mxu0 0.0
        %v779 = vand.u32 %v308, 4294901760
        %v780 = vsub.f32 %v308, %v779
        %v781 = vand.u32 %v780, 4294901760
        %v782 = vsub.f32 %v780, %v781
        %v783 = vand.u32 %v782, 4294901760
        %784 = vmatpush1.msra.mxu0 %v783
        %785 = vmatprep.subr.mxu0 0.0
        %v786 = vand.u32 %v309, 4294901760
        %v787 = vsub.f32 %v309, %v786
        %v788 = vand.u32 %v787, 4294901760
        %v789 = vsub.f32 %v787, %v788
        %v790 = vand.u32 %v789, 4294901760
        %791 = vmatpush1.msra.mxu0 %v790
        %792 = vmatprep.subr.mxu0 0.0
        %v793 = vand.u32 %v310, 4294901760
        %v794 = vsub.f32 %v310, %v793
        %v795 = vand.u32 %v794, 4294901760
        %v796 = vsub.f32 %v794, %v795
        %v797 = vand.u32 %v796, 4294901760
        %798 = vmatpush1.msra.mxu0 %v797
        %799 = vmatprep.subr.mxu0 0.0
        %v800 = vand.u32 %v311, 4294901760
        %v801 = vsub.f32 %v311, %v800
        %v802 = vand.u32 %v801, 4294901760
        %v803 = vsub.f32 %v801, %v802
        %v804 = vand.u32 %v803, 4294901760
        %805 = vmatpush1.msra.mxu0 %v804
        %806 = vmatprep.subr.mxu0 0.0
        %v807 = vand.u32 %v312, 4294901760
        %v808 = vsub.f32 %v312, %v807
        %v809 = vand.u32 %v808, 4294901760
        %v810 = vsub.f32 %v808, %v809
        %v811 = vand.u32 %v810, 4294901760
        %812 = vmatpush1.msra.mxu0 %v811
        %813 = vmatprep.subr.mxu0 0.0
        %v814 = vand.u32 %v313, 4294901760
        %v815 = vsub.f32 %v313, %v814
        %v816 = vand.u32 %v815, 4294901760
        %v817 = vsub.f32 %v815, %v816
        %v818 = vand.u32 %v817, 4294901760
        %819 = vmatpush1.msra.mxu0 %v818
        %820 = vmatprep.subr.mxu0 0.0
        %v821 = vand.u32 %v314, 4294901760
        %v822 = vsub.f32 %v314, %v821
        %v823 = vand.u32 %v822, 4294901760
        %v824 = vsub.f32 %v822, %v823
        %v825 = vand.u32 %v824, 4294901760
        %826 = vmatpush1.msra.mxu0 %v825
        %827 = vmatprep.subr.mxu0 0.0
        %v828 = vand.u32 %v315, 4294901760
        %v829 = vsub.f32 %v315, %v828
        %v830 = vand.u32 %v829, 4294901760
        %v831 = vsub.f32 %v829, %v830
        %v832 = vand.u32 %v831, 4294901760
        %833 = vmatpush1.msra.mxu0 %v832
        %834 = vmatprep.subr.mxu0 0.0
        %v835 = vand.u32 %v316, 4294901760
        %v836 = vsub.f32 %v316, %v835
        %v837 = vand.u32 %v836, 4294901760
        %v838 = vsub.f32 %v836, %v837
        %v839 = vand.u32 %v838, 4294901760
        %840 = vmatpush1.msra.mxu0 %v839
        %841 = vmatprep.subr.mxu0 0.0
        %v842 = vand.u32 %v317, 4294901760
        %v843 = vsub.f32 %v317, %v842
        %v844 = vand.u32 %v843, 4294901760
        %v845 = vsub.f32 %v843, %v844
        %v846 = vand.u32 %v845, 4294901760
        %847 = vmatpush1.msra.mxu0 %v846
        %848 = vmatprep.subr.mxu0 0.0
        %v849 = vand.u32 %v318, 4294901760
        %v850 = vsub.f32 %v318, %v849
        %v851 = vand.u32 %v850, 4294901760
        %v852 = vsub.f32 %v850, %v851
        %v853 = vand.u32 %v852, 4294901760
        %854 = vmatpush1.msra.mxu0 %v853
        %855 = vmatprep.subr.mxu0 0.0
        %v856 = vand.u32 %v319, 4294901760
        %v857 = vsub.f32 %v319, %v856
        %v858 = vand.u32 %v857, 4294901760
        %v859 = vsub.f32 %v857, %v858
        %v860 = vand.u32 %v859, 4294901760
        %861 = vmatpush1.msra.mxu0 %v860
        %862 = vmatprep.subr.mxu0 0.0
        %v863 = vand.u32 %v320, 4294901760
        %v864 = vsub.f32 %v320, %v863
        %v865 = vand.u32 %v864, 4294901760
        %v866 = vsub.f32 %v864, %v865
        %v867 = vand.u32 %v866, 4294901760
        %868 = vmatpush1.msra.mxu0 %v867
        %869 = vmatprep.subr.mxu0 0.0
        %v870 = vand.u32 %v321, 4294901760
        %v871 = vsub.f32 %v321, %v870
        %v872 = vand.u32 %v871, 4294901760
        %v873 = vsub.f32 %v871, %v872
        %v874 = vand.u32 %v873, 4294901760
        %875 = vmatpush1.msra.mxu0 %v874
        %876 = vmatprep.subr.mxu0 0.0
        %v877 = vand.u32 %v322, 4294901760
        %v878 = vsub.f32 %v322, %v877
        %v879 = vand.u32 %v878, 4294901760
        %v880 = vsub.f32 %v878, %v879
        %v881 = vand.u32 %v880, 4294901760
        %882 = vmatpush1.msra.mxu0 %v881
        %v883 = vand.u32 %v276, 4294901760
        %884 = vmatprep.mubr.f32.mxu0 %v883
        %v885 = vand.u32 %v275, 4294901760
        %886 = vmatmul.mubr.f32.gmra.mrb[0].mxu0 %v885
        %v887 = vpop.f32.mrb[0].mxu0
        %v888 = vadd.f32 %v656, %v887
        %v889 = vpop.f32.mrb[0].mxu0
        %890 = vdwg.mxu0
        %891 = vmatprep.subr.mxu0 0.0
        %v892 = vand.u32 %v291, 4294901760
        %v893 = vsub.f32 %v291, %v892
        %894 = vmatpush1.msra.mxu0 %v893
        %895 = vmatprep.subr.mxu0 0.0
        %v896 = vand.u32 %v292, 4294901760
        %v897 = vsub.f32 %v292, %v896
        %898 = vmatpush1.msra.mxu0 %v897
        %899 = vmatprep.subr.mxu0 0.0
        %v900 = vand.u32 %v293, 4294901760
        %v901 = vsub.f32 %v293, %v900
        %902 = vmatpush1.msra.mxu0 %v901
        %903 = vmatprep.subr.mxu0 0.0
        %v904 = vand.u32 %v294, 4294901760
        %v905 = vsub.f32 %v294, %v904
        %906 = vmatpush1.msra.mxu0 %v905
        %907 = vmatprep.subr.mxu0 0.0
        %v908 = vand.u32 %v295, 4294901760
        %v909 = vsub.f32 %v295, %v908
        %910 = vmatpush1.msra.mxu0 %v909
        %911 = vmatprep.subr.mxu0 0.0
        %v912 = vand.u32 %v296, 4294901760
        %v913 = vsub.f32 %v296, %v912
        %914 = vmatpush1.msra.mxu0 %v913
        %915 = vmatprep.subr.mxu0 0.0
        %v916 = vand.u32 %v297, 4294901760
        %v917 = vsub.f32 %v297, %v916
        %918 = vmatpush1.msra.mxu0 %v917
        %919 = vmatprep.subr.mxu0 0.0
        %v920 = vand.u32 %v298, 4294901760
        %v921 = vsub.f32 %v298, %v920
        %922 = vmatpush1.msra.mxu0 %v921
        %923 = vmatprep.subr.mxu0 0.0
        %v924 = vand.u32 %v299, 4294901760
        %v925 = vsub.f32 %v299, %v924
        %926 = vmatpush1.msra.mxu0 %v925
        %927 = vmatprep.subr.mxu0 0.0
        %v928 = vand.u32 %v300, 4294901760
        %v929 = vsub.f32 %v300, %v928
        %930 = vmatpush1.msra.mxu0 %v929
        %931 = vmatprep.subr.mxu0 0.0
        %v932 = vand.u32 %v301, 4294901760
        %v933 = vsub.f32 %v301, %v932
        %934 = vmatpush1.msra.mxu0 %v933
        %935 = vmatprep.subr.mxu0 0.0
        %v936 = vand.u32 %v302, 4294901760
        %v937 = vsub.f32 %v302, %v936
        %938 = vmatpush1.msra.mxu0 %v937
        %939 = vmatprep.subr.mxu0 0.0
        %v940 = vand.u32 %v303, 4294901760
        %v941 = vsub.f32 %v303, %v940
        %942 = vmatpush1.msra.mxu0 %v941
        %943 = vmatprep.subr.mxu0 0.0
        %v944 = vand.u32 %v304, 4294901760
        %v945 = vsub.f32 %v304, %v944
        %946 = vmatpush1.msra.mxu0 %v945
        %947 = vmatprep.subr.mxu0 0.0
        %v948 = vand.u32 %v305, 4294901760
        %v949 = vsub.f32 %v305, %v948
        %950 = vmatpush1.msra.mxu0 %v949
        %951 = vmatprep.subr.mxu0 0.0
        %v952 = vand.u32 %v306, 4294901760
        %v953 = vsub.f32 %v306, %v952
        %954 = vmatpush1.msra.mxu0 %v953
        %955 = vmatprep.subr.mxu0 0.0
        %v956 = vand.u32 %v307, 4294901760
        %v957 = vsub.f32 %v307, %v956
        %958 = vmatpush1.msra.mxu0 %v957
        %959 = vmatprep.subr.mxu0 0.0
        %v960 = vand.u32 %v308, 4294901760
        %v961 = vsub.f32 %v308, %v960
        %962 = vmatpush1.msra.mxu0 %v961
        %963 = vmatprep.subr.mxu0 0.0
        %v964 = vand.u32 %v309, 4294901760
        %v965 = vsub.f32 %v309, %v964
        %966 = vmatpush1.msra.mxu0 %v965
        %967 = vmatprep.subr.mxu0 0.0
        %v968 = vand.u32 %v310, 4294901760
        %v969 = vsub.f32 %v310, %v968
        %970 = vmatpush1.msra.mxu0 %v969
        %971 = vmatprep.subr.mxu0 0.0
        %v972 = vand.u32 %v311, 4294901760
        %v973 = vsub.f32 %v311, %v972
        %974 = vmatpush1.msra.mxu0 %v973
        %975 = vmatprep.subr.mxu0 0.0
        %v976 = vand.u32 %v312, 4294901760
        %v977 = vsub.f32 %v312, %v976
        %978 = vmatpush1.msra.mxu0 %v977
        %979 = vmatprep.subr.mxu0 0.0
        %v980 = vand.u32 %v313, 4294901760
        %v981 = vsub.f32 %v313, %v980
        %982 = vmatpush1.msra.mxu0 %v981
        %983 = vmatprep.subr.mxu0 0.0
        %v984 = vand.u32 %v314, 4294901760
        %v985 = vsub.f32 %v314, %v984
        %986 = vmatpush1.msra.mxu0 %v985
        %987 = vmatprep.subr.mxu0 0.0
        %v988 = vand.u32 %v315, 4294901760
        %v989 = vsub.f32 %v315, %v988
        %990 = vmatpush1.msra.mxu0 %v989
        %991 = vmatprep.subr.mxu0 0.0
        %v992 = vand.u32 %v316, 4294901760
        %v993 = vsub.f32 %v316, %v992
        %994 = vmatpush1.msra.mxu0 %v993
        %995 = vmatprep.subr.mxu0 0.0
        %v996 = vand.u32 %v317, 4294901760
        %v997 = vsub.f32 %v317, %v996
        %998 = vmatpush1.msra.mxu0 %v997
        %999 = vmatprep.subr.mxu0 0.0
        %v1000 = vand.u32 %v318, 4294901760
        %v1001 = vsub.f32 %v318, %v1000
        %1002 = vmatpush1.msra.mxu0 %v1001
        %1003 = vmatprep.subr.mxu0 0.0
        %v1004 = vand.u32 %v319, 4294901760
        %v1005 = vsub.f32 %v319, %v1004
        %1006 = vmatpush1.msra.mxu0 %v1005
        %1007 = vmatprep.subr.mxu0 0.0
        %v1008 = vand.u32 %v320, 4294901760
        %v1009 = vsub.f32 %v320, %v1008
        %1010 = vmatpush1.msra.mxu0 %v1009
        %1011 = vmatprep.subr.mxu0 0.0
        %v1012 = vand.u32 %v321, 4294901760
        %v1013 = vsub.f32 %v321, %v1012
        %1014 = vmatpush1.msra.mxu0 %v1013
        %1015 = vmatprep.subr.mxu0 0.0
        %v1016 = vand.u32 %v322, 4294901760
        %v1017 = vsub.f32 %v322, %v1016
        %1018 = vmatpush1.msra.mxu0 %v1017
        %v1019 = vand.u32 %v276, 4294901760
        %v1020 = vsub.f32 %v276, %v1019
        %1021 = vmatprep.mubr.f32.mxu0 %v1020
        %v1022 = vand.u32 %v275, 4294901760
        %v1023 = vsub.f32 %v275, %v1022
        %1024 = vmatmul.mubr.f32.gmra.mrb[0].mxu0 %v1023
        %v1025 = vpop.f32.mrb[0].mxu0
        %v1026 = vadd.f32 %v888, %v1025
        %v1027 = vpop.f32.mrb[0].mxu0
        %1028 = vdwg.mxu0
        %1029 = vmatprep.subr.mxu0 0.0
        %v1030 = vand.u32 %v291, 4294901760
        %1031 = vmatpush1.msra.mxu0 %v1030
        %1032 = vmatprep.subr.mxu0 0.0
        %v1033 = vand.u32 %v292, 4294901760
        %1034 = vmatpush1.msra.mxu0 %v1033
        %1035 = vmatprep.subr.mxu0 0.0
        %v1036 = vand.u32 %v293, 4294901760
        %1037 = vmatpush1.msra.mxu0 %v1036
        %1038 = vmatprep.subr.mxu0 0.0
        %v1039 = vand.u32 %v294, 4294901760
        %1040 = vmatpush1.msra.mxu0 %v1039
        %1041 = vmatprep.subr.mxu0 0.0
        %v1042 = vand.u32 %v295, 4294901760
        %1043 = vmatpush1.msra.mxu0 %v1042
        %1044 = vmatprep.subr.mxu0 0.0
        %v1045 = vand.u32 %v296, 4294901760
        %1046 = vmatpush1.msra.mxu0 %v1045
        %1047 = vmatprep.subr.mxu0 0.0
        %v1048 = vand.u32 %v297, 4294901760
        %1049 = vmatpush1.msra.mxu0 %v1048
        %1050 = vmatprep.subr.mxu0 0.0
        %v1051 = vand.u32 %v298, 4294901760
        %1052 = vmatpush1.msra.mxu0 %v1051
        %1053 = vmatprep.subr.mxu0 0.0
        %v1054 = vand.u32 %v299, 4294901760
        %1055 = vmatpush1.msra.mxu0 %v1054
        %1056 = vmatprep.subr.mxu0 0.0
        %v1057 = vand.u32 %v300, 4294901760
        %1058 = vmatpush1.msra.mxu0 %v1057
        %1059 = vmatprep.subr.mxu0 0.0
        %v1060 = vand.u32 %v301, 4294901760
        %1061 = vmatpush1.msra.mxu0 %v1060
        %1062 = vmatprep.subr.mxu0 0.0
        %v1063 = vand.u32 %v302, 4294901760
        %1064 = vmatpush1.msra.mxu0 %v1063
        %1065 = vmatprep.subr.mxu0 0.0
        %v1066 = vand.u32 %v303, 4294901760
        %1067 = vmatpush1.msra.mxu0 %v1066
        %1068 = vmatprep.subr.mxu0 0.0
        %v1069 = vand.u32 %v304, 4294901760
        %1070 = vmatpush1.msra.mxu0 %v1069
        %1071 = vmatprep.subr.mxu0 0.0
        %v1072 = vand.u32 %v305, 4294901760
        %1073 = vmatpush1.msra.mxu0 %v1072
        %1074 = vmatprep.subr.mxu0 0.0
        %v1075 = vand.u32 %v306, 4294901760
        %1076 = vmatpush1.msra.mxu0 %v1075
        %1077 = vmatprep.subr.mxu0 0.0
        %v1078 = vand.u32 %v307, 4294901760
        %1079 = vmatpush1.msra.mxu0 %v1078
        %1080 = vmatprep.subr.mxu0 0.0
        %v1081 = vand.u32 %v308, 4294901760
        %1082 = vmatpush1.msra.mxu0 %v1081
        %1083 = vmatprep.subr.mxu0 0.0
        %v1084 = vand.u32 %v309, 4294901760
        %1085 = vmatpush1.msra.mxu0 %v1084
        %1086 = vmatprep.subr.mxu0 0.0
        %v1087 = vand.u32 %v310, 4294901760
        %1088 = vmatpush1.msra.mxu0 %v1087
        %1089 = vmatprep.subr.mxu0 0.0
        %v1090 = vand.u32 %v311, 4294901760
        %1091 = vmatpush1.msra.mxu0 %v1090
        %1092 = vmatprep.subr.mxu0 0.0
        %v1093 = vand.u32 %v312, 4294901760
        %1094 = vmatpush1.msra.mxu0 %v1093
        %1095 = vmatprep.subr.mxu0 0.0
        %v1096 = vand.u32 %v313, 4294901760
        %1097 = vmatpush1.msra.mxu0 %v1096
        %1098 = vmatprep.subr.mxu0 0.0
        %v1099 = vand.u32 %v314, 4294901760
        %1100 = vmatpush1.msra.mxu0 %v1099
        %1101 = vmatprep.subr.mxu0 0.0
        %v1102 = vand.u32 %v315, 4294901760
        %1103 = vmatpush1.msra.mxu0 %v1102
        %1104 = vmatprep.subr.mxu0 0.0
        %v1105 = vand.u32 %v316, 4294901760
        %1106 = vmatpush1.msra.mxu0 %v1105
        %1107 = vmatprep.subr.mxu0 0.0
        %v1108 = vand.u32 %v317, 4294901760
        %1109 = vmatpush1.msra.mxu0 %v1108
        %1110 = vmatprep.subr.mxu0 0.0
        %v1111 = vand.u32 %v318, 4294901760
        %1112 = vmatpush1.msra.mxu0 %v1111
        %1113 = vmatprep.subr.mxu0 0.0
        %v1114 = vand.u32 %v319, 4294901760
        %1115 = vmatpush1.msra.mxu0 %v1114
        %1116 = vmatprep.subr.mxu0 0.0
        %v1117 = vand.u32 %v320, 4294901760
        %1118 = vmatpush1.msra.mxu0 %v1117
        %1119 = vmatprep.subr.mxu0 0.0
        %v1120 = vand.u32 %v321, 4294901760
        %1121 = vmatpush1.msra.mxu0 %v1120
        %1122 = vmatprep.subr.mxu0 0.0
        %v1123 = vand.u32 %v322, 4294901760
        %1124 = vmatpush1.msra.mxu0 %v1123
        %v1125 = vand.u32 %v276, 4294901760
        %v1126 = vsub.f32 %v276, %v1125
        %v1127 = vand.u32 %v1126, 4294901760
        %1128 = vmatprep.mubr.f32.mxu0 %v1127
        %v1129 = vand.u32 %v275, 4294901760
        %v1130 = vsub.f32 %v275, %v1129
        %v1131 = vand.u32 %v1130, 4294901760
        %1132 = vmatmul.mubr.f32.gmra.mrb[0].mxu0 %v1131
        %v1133 = vpop.f32.mrb[0].mxu0
        %v1134 = vadd.f32 %v1026, %v1133
        %v1135 = vpop.f32.mrb[0].mxu0
        %1136 = vdwg.mxu0
        %1137 = vmatprep.subr.mxu0 0.0
        %v1138 = vand.u32 %v291, 4294901760
        %v1139 = vsub.f32 %v291, %v1138
        %v1140 = vand.u32 %v1139, 4294901760
        %1141 = vmatpush1.msra.mxu0 %v1140
        %1142 = vmatprep.subr.mxu0 0.0
        %v1143 = vand.u32 %v292, 4294901760
        %v1144 = vsub.f32 %v292, %v1143
        %v1145 = vand.u32 %v1144, 4294901760
        %1146 = vmatpush1.msra.mxu0 %v1145
        %1147 = vmatprep.subr.mxu0 0.0
        %v1148 = vand.u32 %v293, 4294901760
        %v1149 = vsub.f32 %v293, %v1148
        %v1150 = vand.u32 %v1149, 4294901760
        %1151 = vmatpush1.msra.mxu0 %v1150
        %1152 = vmatprep.subr.mxu0 0.0
        %v1153 = vand.u32 %v294, 4294901760
        %v1154 = vsub.f32 %v294, %v1153
        %v1155 = vand.u32 %v1154, 4294901760
        %1156 = vmatpush1.msra.mxu0 %v1155
        %1157 = vmatprep.subr.mxu0 0.0
        %v1158 = vand.u32 %v295, 4294901760
        %v1159 = vsub.f32 %v295, %v1158
        %v1160 = vand.u32 %v1159, 4294901760
        %1161 = vmatpush1.msra.mxu0 %v1160
        %1162 = vmatprep.subr.mxu0 0.0
        %v1163 = vand.u32 %v296, 4294901760
        %v1164 = vsub.f32 %v296, %v1163
        %v1165 = vand.u32 %v1164, 4294901760
        %1166 = vmatpush1.msra.mxu0 %v1165
        %1167 = vmatprep.subr.mxu0 0.0
        %v1168 = vand.u32 %v297, 4294901760
        %v1169 = vsub.f32 %v297, %v1168
        %v1170 = vand.u32 %v1169, 4294901760
        %1171 = vmatpush1.msra.mxu0 %v1170
        %1172 = vmatprep.subr.mxu0 0.0
        %v1173 = vand.u32 %v298, 4294901760
        %v1174 = vsub.f32 %v298, %v1173
        %v1175 = vand.u32 %v1174, 4294901760
        %1176 = vmatpush1.msra.mxu0 %v1175
        %1177 = vmatprep.subr.mxu0 0.0
        %v1178 = vand.u32 %v299, 4294901760
        %v1179 = vsub.f32 %v299, %v1178
        %v1180 = vand.u32 %v1179, 4294901760
        %1181 = vmatpush1.msra.mxu0 %v1180
        %1182 = vmatprep.subr.mxu0 0.0
        %v1183 = vand.u32 %v300, 4294901760
        %v1184 = vsub.f32 %v300, %v1183
        %v1185 = vand.u32 %v1184, 4294901760
        %1186 = vmatpush1.msra.mxu0 %v1185
        %1187 = vmatprep.subr.mxu0 0.0
        %v1188 = vand.u32 %v301, 4294901760
        %v1189 = vsub.f32 %v301, %v1188
        %v1190 = vand.u32 %v1189, 4294901760
        %1191 = vmatpush1.msra.mxu0 %v1190
        %1192 = vmatprep.subr.mxu0 0.0
        %v1193 = vand.u32 %v302, 4294901760
        %v1194 = vsub.f32 %v302, %v1193
        %v1195 = vand.u32 %v1194, 4294901760
        %1196 = vmatpush1.msra.mxu0 %v1195
        %1197 = vmatprep.subr.mxu0 0.0
        %v1198 = vand.u32 %v303, 4294901760
        %v1199 = vsub.f32 %v303, %v1198
        %v1200 = vand.u32 %v1199, 4294901760
        %1201 = vmatpush1.msra.mxu0 %v1200
        %1202 = vmatprep.subr.mxu0 0.0
        %v1203 = vand.u32 %v304, 4294901760
        %v1204 = vsub.f32 %v304, %v1203
        %v1205 = vand.u32 %v1204, 4294901760
        %1206 = vmatpush1.msra.mxu0 %v1205
        %1207 = vmatprep.subr.mxu0 0.0
        %v1208 = vand.u32 %v305, 4294901760
        %v1209 = vsub.f32 %v305, %v1208
        %v1210 = vand.u32 %v1209, 4294901760
        %1211 = vmatpush1.msra.mxu0 %v1210
        %1212 = vmatprep.subr.mxu0 0.0
        %v1213 = vand.u32 %v306, 4294901760
        %v1214 = vsub.f32 %v306, %v1213
        %v1215 = vand.u32 %v1214, 4294901760
        %1216 = vmatpush1.msra.mxu0 %v1215
        %1217 = vmatprep.subr.mxu0 0.0
        %v1218 = vand.u32 %v307, 4294901760
        %v1219 = vsub.f32 %v307, %v1218
        %v1220 = vand.u32 %v1219, 4294901760
        %1221 = vmatpush1.msra.mxu0 %v1220
        %1222 = vmatprep.subr.mxu0 0.0
        %v1223 = vand.u32 %v308, 4294901760
        %v1224 = vsub.f32 %v308, %v1223
        %v1225 = vand.u32 %v1224, 4294901760
        %1226 = vmatpush1.msra.mxu0 %v1225
        %1227 = vmatprep.subr.mxu0 0.0
        %v1228 = vand.u32 %v309, 4294901760
        %v1229 = vsub.f32 %v309, %v1228
        %v1230 = vand.u32 %v1229, 4294901760
        %1231 = vmatpush1.msra.mxu0 %v1230
        %1232 = vmatprep.subr.mxu0 0.0
        %v1233 = vand.u32 %v310, 4294901760
        %v1234 = vsub.f32 %v310, %v1233
        %v1235 = vand.u32 %v1234, 4294901760
        %1236 = vmatpush1.msra.mxu0 %v1235
        %1237 = vmatprep.subr.mxu0 0.0
        %v1238 = vand.u32 %v311, 4294901760
        %v1239 = vsub.f32 %v311, %v1238
        %v1240 = vand.u32 %v1239, 4294901760
        %1241 = vmatpush1.msra.mxu0 %v1240
        %1242 = vmatprep.subr.mxu0 0.0
        %v1243 = vand.u32 %v312, 4294901760
        %v1244 = vsub.f32 %v312, %v1243
        %v1245 = vand.u32 %v1244, 4294901760
        %1246 = vmatpush1.msra.mxu0 %v1245
        %1247 = vmatprep.subr.mxu0 0.0
        %v1248 = vand.u32 %v313, 4294901760
        %v1249 = vsub.f32 %v313, %v1248
        %v1250 = vand.u32 %v1249, 4294901760
        %1251 = vmatpush1.msra.mxu0 %v1250
        %1252 = vmatprep.subr.mxu0 0.0
        %v1253 = vand.u32 %v314, 4294901760
        %v1254 = vsub.f32 %v314, %v1253
        %v1255 = vand.u32 %v1254, 4294901760
        %1256 = vmatpush1.msra.mxu0 %v1255
        %1257 = vmatprep.subr.mxu0 0.0
        %v1258 = vand.u32 %v315, 4294901760
        %v1259 = vsub.f32 %v315, %v1258
        %v1260 = vand.u32 %v1259, 4294901760
        %1261 = vmatpush1.msra.mxu0 %v1260
        %1262 = vmatprep.subr.mxu0 0.0
        %v1263 = vand.u32 %v316, 4294901760
        %v1264 = vsub.f32 %v316, %v1263
        %v1265 = vand.u32 %v1264, 4294901760
        %1266 = vmatpush1.msra.mxu0 %v1265
        %1267 = vmatprep.subr.mxu0 0.0
        %v1268 = vand.u32 %v317, 4294901760
        %v1269 = vsub.f32 %v317, %v1268
        %v1270 = vand.u32 %v1269, 4294901760
        %1271 = vmatpush1.msra.mxu0 %v1270
        %1272 = vmatprep.subr.mxu0 0.0
        %v1273 = vand.u32 %v318, 4294901760
        %v1274 = vsub.f32 %v318, %v1273
        %v1275 = vand.u32 %v1274, 4294901760
        %1276 = vmatpush1.msra.mxu0 %v1275
        %1277 = vmatprep.subr.mxu0 0.0
        %v1278 = vand.u32 %v319, 4294901760
        %v1279 = vsub.f32 %v319, %v1278
        %v1280 = vand.u32 %v1279, 4294901760
        %1281 = vmatpush1.msra.mxu0 %v1280
        %1282 = vmatprep.subr.mxu0 0.0
        %v1283 = vand.u32 %v320, 4294901760
        %v1284 = vsub.f32 %v320, %v1283
        %v1285 = vand.u32 %v1284, 4294901760
        %1286 = vmatpush1.msra.mxu0 %v1285
        %1287 = vmatprep.subr.mxu0 0.0
        %v1288 = vand.u32 %v321, 4294901760
        %v1289 = vsub.f32 %v321, %v1288
        %v1290 = vand.u32 %v1289, 4294901760
        %1291 = vmatpush1.msra.mxu0 %v1290
        %1292 = vmatprep.subr.mxu0 0.0
        %v1293 = vand.u32 %v322, 4294901760
        %v1294 = vsub.f32 %v322, %v1293
        %v1295 = vand.u32 %v1294, 4294901760
        %1296 = vmatpush1.msra.mxu0 %v1295
        %v1297 = vand.u32 %v276, 4294901760
        %1298 = vmatprep.mubr.f32.mxu0 %v1297
        %v1299 = vand.u32 %v275, 4294901760
        %1300 = vmatmul.mubr.f32.gmra.mrb[0].mxu0 %v1299
        %v1301 = vpop.f32.mrb[0].mxu0
        %v1302 = vadd.f32 %v1134, %v1301
        %v1303 = vpop.f32.mrb[0].mxu0
        %1304 = vdwg.mxu0
        %1305 = vmatprep.subr.mxu0 0.0
        %v1306 = vand.u32 %v291, 4294901760
        %1307 = vmatpush1.msra.mxu0 %v1306
        %1308 = vmatprep.subr.mxu0 0.0
        %v1309 = vand.u32 %v292, 4294901760
        %1310 = vmatpush1.msra.mxu0 %v1309
        %1311 = vmatprep.subr.mxu0 0.0
        %v1312 = vand.u32 %v293, 4294901760
        %1313 = vmatpush1.msra.mxu0 %v1312
        %1314 = vmatprep.subr.mxu0 0.0
        %v1315 = vand.u32 %v294, 4294901760
        %1316 = vmatpush1.msra.mxu0 %v1315
        %1317 = vmatprep.subr.mxu0 0.0
        %v1318 = vand.u32 %v295, 4294901760
        %1319 = vmatpush1.msra.mxu0 %v1318
        %1320 = vmatprep.subr.mxu0 0.0
        %v1321 = vand.u32 %v296, 4294901760
        %1322 = vmatpush1.msra.mxu0 %v1321
        %1323 = vmatprep.subr.mxu0 0.0
        %v1324 = vand.u32 %v297, 4294901760
        %1325 = vmatpush1.msra.mxu0 %v1324
        %1326 = vmatprep.subr.mxu0 0.0
        %v1327 = vand.u32 %v298, 4294901760
        %1328 = vmatpush1.msra.mxu0 %v1327
        %1329 = vmatprep.subr.mxu0 0.0
        %v1330 = vand.u32 %v299, 4294901760
        %1331 = vmatpush1.msra.mxu0 %v1330
        %1332 = vmatprep.subr.mxu0 0.0
        %v1333 = vand.u32 %v300, 4294901760
        %1334 = vmatpush1.msra.mxu0 %v1333
        %1335 = vmatprep.subr.mxu0 0.0
        %v1336 = vand.u32 %v301, 4294901760
        %1337 = vmatpush1.msra.mxu0 %v1336
        %1338 = vmatprep.subr.mxu0 0.0
        %v1339 = vand.u32 %v302, 4294901760
        %1340 = vmatpush1.msra.mxu0 %v1339
        %1341 = vmatprep.subr.mxu0 0.0
        %v1342 = vand.u32 %v303, 4294901760
        %1343 = vmatpush1.msra.mxu0 %v1342
        %1344 = vmatprep.subr.mxu0 0.0
        %v1345 = vand.u32 %v304, 4294901760
        %1346 = vmatpush1.msra.mxu0 %v1345
        %1347 = vmatprep.subr.mxu0 0.0
        %v1348 = vand.u32 %v305, 4294901760
        %1349 = vmatpush1.msra.mxu0 %v1348
        %1350 = vmatprep.subr.mxu0 0.0
        %v1351 = vand.u32 %v306, 4294901760
        %1352 = vmatpush1.msra.mxu0 %v1351
        %1353 = vmatprep.subr.mxu0 0.0
        %v1354 = vand.u32 %v307, 4294901760
        %1355 = vmatpush1.msra.mxu0 %v1354
        %1356 = vmatprep.subr.mxu0 0.0
        %v1357 = vand.u32 %v308, 4294901760
        %1358 = vmatpush1.msra.mxu0 %v1357
        %1359 = vmatprep.subr.mxu0 0.0
        %v1360 = vand.u32 %v309, 4294901760
        %1361 = vmatpush1.msra.mxu0 %v1360
        %1362 = vmatprep.subr.mxu0 0.0
        %v1363 = vand.u32 %v310, 4294901760
        %1364 = vmatpush1.msra.mxu0 %v1363
        %1365 = vmatprep.subr.mxu0 0.0
        %v1366 = vand.u32 %v311, 4294901760
        %1367 = vmatpush1.msra.mxu0 %v1366
        %1368 = vmatprep.subr.mxu0 0.0
        %v1369 = vand.u32 %v312, 4294901760
        %1370 = vmatpush1.msra.mxu0 %v1369
        %1371 = vmatprep.subr.mxu0 0.0
        %v1372 = vand.u32 %v313, 4294901760
        %1373 = vmatpush1.msra.mxu0 %v1372
        %1374 = vmatprep.subr.mxu0 0.0
        %v1375 = vand.u32 %v314, 4294901760
        %1376 = vmatpush1.msra.mxu0 %v1375
        %1377 = vmatprep.subr.mxu0 0.0
        %v1378 = vand.u32 %v315, 4294901760
        %1379 = vmatpush1.msra.mxu0 %v1378
        %1380 = vmatprep.subr.mxu0 0.0
        %v1381 = vand.u32 %v316, 4294901760
        %1382 = vmatpush1.msra.mxu0 %v1381
        %1383 = vmatprep.subr.mxu0 0.0
        %v1384 = vand.u32 %v317, 4294901760
        %1385 = vmatpush1.msra.mxu0 %v1384
        %1386 = vmatprep.subr.mxu0 0.0
        %v1387 = vand.u32 %v318, 4294901760
        %1388 = vmatpush1.msra.mxu0 %v1387
        %1389 = vmatprep.subr.mxu0 0.0
        %v1390 = vand.u32 %v319, 4294901760
        %1391 = vmatpush1.msra.mxu0 %v1390
        %1392 = vmatprep.subr.mxu0 0.0
        %v1393 = vand.u32 %v320, 4294901760
        %1394 = vmatpush1.msra.mxu0 %v1393
        %1395 = vmatprep.subr.mxu0 0.0
        %v1396 = vand.u32 %v321, 4294901760
        %1397 = vmatpush1.msra.mxu0 %v1396
        %1398 = vmatprep.subr.mxu0 0.0
        %v1399 = vand.u32 %v322, 4294901760
        %1400 = vmatpush1.msra.mxu0 %v1399
        %v1401 = vand.u32 %v276, 4294901760
        %1402 = vmatprep.mubr.f32.mxu0 %v1401
        %v1403 = vand.u32 %v275, 4294901760
        %1404 = vmatmul.mubr.f32.gmra.mrb[0].mxu0 %v1403
        %v1405 = vpop.f32.mrb[0].mxu0
        %v1406 = vadd.f32 %v1302, %v1405
        %v1407 = vpop.f32.mrb[0].mxu0
        %1408 = vdwg.mxu0
        %1409 = vmatprep.subr.mxu0 0.0
        %v1410 = vand.u32 %v323, 4294901760
        %1411 = vmatpush1.msra.mxu0 %v1410
        %1412 = vmatprep.subr.mxu0 0.0
        %v1413 = vand.u32 %v324, 4294901760
        %1414 = vmatpush1.msra.mxu0 %v1413
        %1415 = vmatprep.subr.mxu0 0.0
        %v1416 = vand.u32 %v325, 4294901760
        %1417 = vmatpush1.msra.mxu0 %v1416
        %1418 = vmatprep.subr.mxu0 0.0
        %v1419 = vand.u32 %v326, 4294901760
        %1420 = vmatpush1.msra.mxu0 %v1419
        %1421 = vmatprep.subr.mxu0 0.0
        %v1422 = vand.u32 %v327, 4294901760
        %1423 = vmatpush1.msra.mxu0 %v1422
        %1424 = vmatprep.subr.mxu0 0.0
        %v1425 = vand.u32 %v328, 4294901760
        %1426 = vmatpush1.msra.mxu0 %v1425
        %1427 = vmatprep.subr.mxu0 0.0
        %v1428 = vand.u32 %v329, 4294901760
        %1429 = vmatpush1.msra.mxu0 %v1428
        %1430 = vmatprep.subr.mxu0 0.0
        %v1431 = vand.u32 %v330, 4294901760
        %1432 = vmatpush1.msra.mxu0 %v1431
        %1433 = vmatprep.subr.mxu0 0.0
        %v1434 = vand.u32 %v331, 4294901760
        %1435 = vmatpush1.msra.mxu0 %v1434
        %1436 = vmatprep.subr.mxu0 0.0
        %v1437 = vand.u32 %v332, 4294901760
        %1438 = vmatpush1.msra.mxu0 %v1437
        %1439 = vmatprep.subr.mxu0 0.0
        %v1440 = vand.u32 %v333, 4294901760
        %1441 = vmatpush1.msra.mxu0 %v1440
        %1442 = vmatprep.subr.mxu0 0.0
        %v1443 = vand.u32 %v334, 4294901760
        %1444 = vmatpush1.msra.mxu0 %v1443
        %1445 = vmatprep.subr.mxu0 0.0
        %v1446 = vand.u32 %v335, 4294901760
        %1447 = vmatpush1.msra.mxu0 %v1446
        %1448 = vmatprep.subr.mxu0 0.0
        %v1449 = vand.u32 %v336, 4294901760
        %1450 = vmatpush1.msra.mxu0 %v1449
        %1451 = vmatprep.subr.mxu0 0.0
        %v1452 = vand.u32 %v337, 4294901760
        %1453 = vmatpush1.msra.mxu0 %v1452
        %1454 = vmatprep.subr.mxu0 0.0
        %v1455 = vand.u32 %v338, 4294901760
        %1456 = vmatpush1.msra.mxu0 %v1455
        %1457 = vmatprep.subr.mxu0 0.0
        %v1458 = vand.u32 %v339, 4294901760
        %1459 = vmatpush1.msra.mxu0 %v1458
        %1460 = vmatprep.subr.mxu0 0.0
        %v1461 = vand.u32 %v340, 4294901760
        %1462 = vmatpush1.msra.mxu0 %v1461
        %1463 = vmatprep.subr.mxu0 0.0
        %v1464 = vand.u32 %v341, 4294901760
        %1465 = vmatpush1.msra.mxu0 %v1464
        %1466 = vmatprep.subr.mxu0 0.0
        %v1467 = vand.u32 %v342, 4294901760
        %1468 = vmatpush1.msra.mxu0 %v1467
        %1469 = vmatprep.subr.mxu0 0.0
        %v1470 = vand.u32 %v343, 4294901760
        %1471 = vmatpush1.msra.mxu0 %v1470
        %1472 = vmatprep.subr.mxu0 0.0
        %v1473 = vand.u32 %v344, 4294901760
        %1474 = vmatpush1.msra.mxu0 %v1473
        %1475 = vmatprep.subr.mxu0 0.0
        %v1476 = vand.u32 %v345, 4294901760
        %1477 = vmatpush1.msra.mxu0 %v1476
        %1478 = vmatprep.subr.mxu0 0.0
        %v1479 = vand.u32 %v346, 4294901760
        %1480 = vmatpush1.msra.mxu0 %v1479
        %1481 = vmatprep.subr.mxu0 0.0
        %v1482 = vand.u32 %v347, 4294901760
        %1483 = vmatpush1.msra.mxu0 %v1482
        %1484 = vmatprep.subr.mxu0 0.0
        %v1485 = vand.u32 %v348, 4294901760
        %1486 = vmatpush1.msra.mxu0 %v1485
        %1487 = vmatprep.subr.mxu0 0.0
        %v1488 = vand.u32 %v349, 4294901760
        %1489 = vmatpush1.msra.mxu0 %v1488
        %1490 = vmatprep.subr.mxu0 0.0
        %v1491 = vand.u32 %v350, 4294901760
        %1492 = vmatpush1.msra.mxu0 %v1491
        %1493 = vmatprep.subr.mxu0 0.0
        %v1494 = vand.u32 %v351, 4294901760
        %1495 = vmatpush1.msra.mxu0 %v1494
        %1496 = vmatprep.subr.mxu0 0.0
        %v1497 = vand.u32 %v352, 4294901760
        %1498 = vmatpush1.msra.mxu0 %v1497
        %1499 = vmatprep.subr.mxu0 0.0
        %v1500 = vand.u32 %v353, 4294901760
        %1501 = vmatpush1.msra.mxu0 %v1500
        %1502 = vmatprep.subr.mxu0 0.0
        %v1503 = vand.u32 %v354, 4294901760
        %1504 = vmatpush1.msra.mxu0 %v1503
        %v1505 = vand.u32 %v278, 4294901760
        %v1506 = vsub.f32 %v278, %v1505
        %v1507 = vand.u32 %v1506, 4294901760
        %v1508 = vsub.f32 %v1506, %v1507
        %v1509 = vand.u32 %v1508, 4294901760
        %1510 = vmatprep.mubr.f32.mxu0 %v1509
        %v1511 = vand.u32 %v277, 4294901760
        %v1512 = vsub.f32 %v277, %v1511
        %v1513 = vand.u32 %v1512, 4294901760
        %v1514 = vsub.f32 %v1512, %v1513
        %v1515 = vand.u32 %v1514, 4294901760
        %1516 = vmatmul.mubr.f32.gmra.mrb[0].mxu0 %v1515
        %v1517 = vpop.f32.mrb[0].mxu0
        %v1518 = vadd.f32 %v1406, %v1517
        %v1519 = vpop.f32.mrb[0].mxu0
        %1520 = vdwg.mxu0
        %1521 = vmatprep.subr.mxu0 0.0
        %v1522 = vand.u32 %v323, 4294901760
        %v1523 = vsub.f32 %v323, %v1522
        %v1524 = vand.u32 %v1523, 4294901760
        %v1525 = vsub.f32 %v1523, %v1524
        %v1526 = vand.u32 %v1525, 4294901760
        %1527 = vmatpush1.msra.mxu0 %v1526
        %1528 = vmatprep.subr.mxu0 0.0
        %v1529 = vand.u32 %v324, 4294901760
        %v1530 = vsub.f32 %v324, %v1529
        %v1531 = vand.u32 %v1530, 4294901760
        %v1532 = vsub.f32 %v1530, %v1531
        %v1533 = vand.u32 %v1532, 4294901760
        %1534 = vmatpush1.msra.mxu0 %v1533
        %1535 = vmatprep.subr.mxu0 0.0
        %v1536 = vand.u32 %v325, 4294901760
        %v1537 = vsub.f32 %v325, %v1536
        %v1538 = vand.u32 %v1537, 4294901760
        %v1539 = vsub.f32 %v1537, %v1538
        %v1540 = vand.u32 %v1539, 4294901760
        %1541 = vmatpush1.msra.mxu0 %v1540
        %1542 = vmatprep.subr.mxu0 0.0
        %v1543 = vand.u32 %v326, 4294901760
        %v1544 = vsub.f32 %v326, %v1543
        %v1545 = vand.u32 %v1544, 4294901760
        %v1546 = vsub.f32 %v1544, %v1545
        %v1547 = vand.u32 %v1546, 4294901760
        %1548 = vmatpush1.msra.mxu0 %v1547
        %1549 = vmatprep.subr.mxu0 0.0
        %v1550 = vand.u32 %v327, 4294901760
        %v1551 = vsub.f32 %v327, %v1550
        %v1552 = vand.u32 %v1551, 4294901760
        %v1553 = vsub.f32 %v1551, %v1552
        %v1554 = vand.u32 %v1553, 4294901760
        %1555 = vmatpush1.msra.mxu0 %v1554
        %1556 = vmatprep.subr.mxu0 0.0
        %v1557 = vand.u32 %v328, 4294901760
        %v1558 = vsub.f32 %v328, %v1557
        %v1559 = vand.u32 %v1558, 4294901760
        %v1560 = vsub.f32 %v1558, %v1559
        %v1561 = vand.u32 %v1560, 4294901760
        %1562 = vmatpush1.msra.mxu0 %v1561
        %1563 = vmatprep.subr.mxu0 0.0
        %v1564 = vand.u32 %v329, 4294901760
        %v1565 = vsub.f32 %v329, %v1564
        %v1566 = vand.u32 %v1565, 4294901760
        %v1567 = vsub.f32 %v1565, %v1566
        %v1568 = vand.u32 %v1567, 4294901760
        %1569 = vmatpush1.msra.mxu0 %v1568
        %1570 = vmatprep.subr.mxu0 0.0
        %v1571 = vand.u32 %v330, 4294901760
        %v1572 = vsub.f32 %v330, %v1571
        %v1573 = vand.u32 %v1572, 4294901760
        %v1574 = vsub.f32 %v1572, %v1573
        %v1575 = vand.u32 %v1574, 4294901760
        %1576 = vmatpush1.msra.mxu0 %v1575
        %1577 = vmatprep.subr.mxu0 0.0
        %v1578 = vand.u32 %v331, 4294901760
        %v1579 = vsub.f32 %v331, %v1578
        %v1580 = vand.u32 %v1579, 4294901760
        %v1581 = vsub.f32 %v1579, %v1580
        %v1582 = vand.u32 %v1581, 4294901760
        %1583 = vmatpush1.msra.mxu0 %v1582
        %1584 = vmatprep.subr.mxu0 0.0
        %v1585 = vand.u32 %v332, 4294901760
        %v1586 = vsub.f32 %v332, %v1585
        %v1587 = vand.u32 %v1586, 4294901760
        %v1588 = vsub.f32 %v1586, %v1587
        %v1589 = vand.u32 %v1588, 4294901760
        %1590 = vmatpush1.msra.mxu0 %v1589
        %1591 = vmatprep.subr.mxu0 0.0
        %v1592 = vand.u32 %v333, 4294901760
        %v1593 = vsub.f32 %v333, %v1592
        %v1594 = vand.u32 %v1593, 4294901760
        %v1595 = vsub.f32 %v1593, %v1594
        %v1596 = vand.u32 %v1595, 4294901760
        %1597 = vmatpush1.msra.mxu0 %v1596
        %1598 = vmatprep.subr.mxu0 0.0
        %v1599 = vand.u32 %v334, 4294901760
        %v1600 = vsub.f32 %v334, %v1599
        %v1601 = vand.u32 %v1600, 4294901760
        %v1602 = vsub.f32 %v1600, %v1601
        %v1603 = vand.u32 %v1602, 4294901760
        %1604 = vmatpush1.msra.mxu0 %v1603
        %1605 = vmatprep.subr.mxu0 0.0
        %v1606 = vand.u32 %v335, 4294901760
        %v1607 = vsub.f32 %v335, %v1606
        %v1608 = vand.u32 %v1607, 4294901760
        %v1609 = vsub.f32 %v1607, %v1608
        %v1610 = vand.u32 %v1609, 4294901760
        %1611 = vmatpush1.msra.mxu0 %v1610
        %1612 = vmatprep.subr.mxu0 0.0
        %v1613 = vand.u32 %v336, 4294901760
        %v1614 = vsub.f32 %v336, %v1613
        %v1615 = vand.u32 %v1614, 4294901760
        %v1616 = vsub.f32 %v1614, %v1615
        %v1617 = vand.u32 %v1616, 4294901760
        %1618 = vmatpush1.msra.mxu0 %v1617
        %1619 = vmatprep.subr.mxu0 0.0
        %v1620 = vand.u32 %v337, 4294901760
        %v1621 = vsub.f32 %v337, %v1620
        %v1622 = vand.u32 %v1621, 4294901760
        %v1623 = vsub.f32 %v1621, %v1622
        %v1624 = vand.u32 %v1623, 4294901760
        %1625 = vmatpush1.msra.mxu0 %v1624
        %1626 = vmatprep.subr.mxu0 0.0
        %v1627 = vand.u32 %v338, 4294901760
        %v1628 = vsub.f32 %v338, %v1627
        %v1629 = vand.u32 %v1628, 4294901760
        %v1630 = vsub.f32 %v1628, %v1629
        %v1631 = vand.u32 %v1630, 4294901760
        %1632 = vmatpush1.msra.mxu0 %v1631
        %1633 = vmatprep.subr.mxu0 0.0
        %v1634 = vand.u32 %v339, 4294901760
        %v1635 = vsub.f32 %v339, %v1634
        %v1636 = vand.u32 %v1635, 4294901760
        %v1637 = vsub.f32 %v1635, %v1636
        %v1638 = vand.u32 %v1637, 4294901760
        %1639 = vmatpush1.msra.mxu0 %v1638
        %1640 = vmatprep.subr.mxu0 0.0
        %v1641 = vand.u32 %v340, 4294901760
        %v1642 = vsub.f32 %v340, %v1641
        %v1643 = vand.u32 %v1642, 4294901760
        %v1644 = vsub.f32 %v1642, %v1643
        %v1645 = vand.u32 %v1644, 4294901760
        %1646 = vmatpush1.msra.mxu0 %v1645
        %1647 = vmatprep.subr.mxu0 0.0
        %v1648 = vand.u32 %v341, 4294901760
        %v1649 = vsub.f32 %v341, %v1648
        %v1650 = vand.u32 %v1649, 4294901760
        %v1651 = vsub.f32 %v1649, %v1650
        %v1652 = vand.u32 %v1651, 4294901760
        %1653 = vmatpush1.msra.mxu0 %v1652
        %1654 = vmatprep.subr.mxu0 0.0
        %v1655 = vand.u32 %v342, 4294901760
        %v1656 = vsub.f32 %v342, %v1655
        %v1657 = vand.u32 %v1656, 4294901760
        %v1658 = vsub.f32 %v1656, %v1657
        %v1659 = vand.u32 %v1658, 4294901760
        %1660 = vmatpush1.msra.mxu0 %v1659
        %1661 = vmatprep.subr.mxu0 0.0
        %v1662 = vand.u32 %v343, 4294901760
        %v1663 = vsub.f32 %v343, %v1662
        %v1664 = vand.u32 %v1663, 4294901760
        %v1665 = vsub.f32 %v1663, %v1664
        %v1666 = vand.u32 %v1665, 4294901760
        %1667 = vmatpush1.msra.mxu0 %v1666
        %1668 = vmatprep.subr.mxu0 0.0
        %v1669 = vand.u32 %v344, 4294901760
        %v1670 = vsub.f32 %v344, %v1669
        %v1671 = vand.u32 %v1670, 4294901760
        %v1672 = vsub.f32 %v1670, %v1671
        %v1673 = vand.u32 %v1672, 4294901760
        %1674 = vmatpush1.msra.mxu0 %v1673
        %1675 = vmatprep.subr.mxu0 0.0
        %v1676 = vand.u32 %v345, 4294901760
        %v1677 = vsub.f32 %v345, %v1676
        %v1678 = vand.u32 %v1677, 4294901760
        %v1679 = vsub.f32 %v1677, %v1678
        %v1680 = vand.u32 %v1679, 4294901760
        %1681 = vmatpush1.msra.mxu0 %v1680
        %1682 = vmatprep.subr.mxu0 0.0
        %v1683 = vand.u32 %v346, 4294901760
        %v1684 = vsub.f32 %v346, %v1683
        %v1685 = vand.u32 %v1684, 4294901760
        %v1686 = vsub.f32 %v1684, %v1685
        %v1687 = vand.u32 %v1686, 4294901760
        %1688 = vmatpush1.msra.mxu0 %v1687
        %1689 = vmatprep.subr.mxu0 0.0
        %v1690 = vand.u32 %v347, 4294901760
        %v1691 = vsub.f32 %v347, %v1690
        %v1692 = vand.u32 %v1691, 4294901760
        %v1693 = vsub.f32 %v1691, %v1692
        %v1694 = vand.u32 %v1693, 4294901760
        %1695 = vmatpush1.msra.mxu0 %v1694
        %1696 = vmatprep.subr.mxu0 0.0
        %v1697 = vand.u32 %v348, 4294901760
        %v1698 = vsub.f32 %v348, %v1697
        %v1699 = vand.u32 %v1698, 4294901760
        %v1700 = vsub.f32 %v1698, %v1699
        %v1701 = vand.u32 %v1700, 4294901760
        %1702 = vmatpush1.msra.mxu0 %v1701
        %1703 = vmatprep.subr.mxu0 0.0
        %v1704 = vand.u32 %v349, 4294901760
        %v1705 = vsub.f32 %v349, %v1704
        %v1706 = vand.u32 %v1705, 4294901760
        %v1707 = vsub.f32 %v1705, %v1706
        %v1708 = vand.u32 %v1707, 4294901760
        %1709 = vmatpush1.msra.mxu0 %v1708
        %1710 = vmatprep.subr.mxu0 0.0
        %v1711 = vand.u32 %v350, 4294901760
        %v1712 = vsub.f32 %v350, %v1711
        %v1713 = vand.u32 %v1712, 4294901760
        %v1714 = vsub.f32 %v1712, %v1713
        %v1715 = vand.u32 %v1714, 4294901760
        %1716 = vmatpush1.msra.mxu0 %v1715
        %1717 = vmatprep.subr.mxu0 0.0
        %v1718 = vand.u32 %v351, 4294901760
        %v1719 = vsub.f32 %v351, %v1718
        %v1720 = vand.u32 %v1719, 4294901760
        %v1721 = vsub.f32 %v1719, %v1720
        %v1722 = vand.u32 %v1721, 4294901760
        %1723 = vmatpush1.msra.mxu0 %v1722
        %1724 = vmatprep.subr.mxu0 0.0
        %v1725 = vand.u32 %v352, 4294901760
        %v1726 = vsub.f32 %v352, %v1725
        %v1727 = vand.u32 %v1726, 4294901760
        %v1728 = vsub.f32 %v1726, %v1727
        %v1729 = vand.u32 %v1728, 4294901760
        %1730 = vmatpush1.msra.mxu0 %v1729
        %1731 = vmatprep.subr.mxu0 0.0
        %v1732 = vand.u32 %v353, 4294901760
        %v1733 = vsub.f32 %v353, %v1732
        %v1734 = vand.u32 %v1733, 4294901760
        %v1735 = vsub.f32 %v1733, %v1734
        %v1736 = vand.u32 %v1735, 4294901760
        %1737 = vmatpush1.msra.mxu0 %v1736
        %1738 = vmatprep.subr.mxu0 0.0
        %v1739 = vand.u32 %v354, 4294901760
        %v1740 = vsub.f32 %v354, %v1739
        %v1741 = vand.u32 %v1740, 4294901760
        %v1742 = vsub.f32 %v1740, %v1741
        %v1743 = vand.u32 %v1742, 4294901760
        %1744 = vmatpush1.msra.mxu0 %v1743
        %v1745 = vand.u32 %v278, 4294901760
        %1746 = vmatprep.mubr.f32.mxu0 %v1745
        %v1747 = vand.u32 %v277, 4294901760
        %1748 = vmatmul.mubr.f32.gmra.mrb[0].mxu0 %v1747
        %v1749 = vpop.f32.mrb[0].mxu0
        %v1750 = vadd.f32 %v1518, %v1749
        %v1751 = vpop.f32.mrb[0].mxu0
        %1752 = vdwg.mxu0
        %1753 = vmatprep.subr.mxu0 0.0
        %v1754 = vand.u32 %v323, 4294901760
        %v1755 = vsub.f32 %v323, %v1754
        %1756 = vmatpush1.msra.mxu0 %v1755
        %1757 = vmatprep.subr.mxu0 0.0
        %v1758 = vand.u32 %v324, 4294901760
        %v1759 = vsub.f32 %v324, %v1758
        %1760 = vmatpush1.msra.mxu0 %v1759
        %1761 = vmatprep.subr.mxu0 0.0
        %v1762 = vand.u32 %v325, 4294901760
        %v1763 = vsub.f32 %v325, %v1762
        %1764 = vmatpush1.msra.mxu0 %v1763
        %1765 = vmatprep.subr.mxu0 0.0
        %v1766 = vand.u32 %v326, 4294901760
        %v1767 = vsub.f32 %v326, %v1766
        %1768 = vmatpush1.msra.mxu0 %v1767
        %1769 = vmatprep.subr.mxu0 0.0
        %v1770 = vand.u32 %v327, 4294901760
        %v1771 = vsub.f32 %v327, %v1770
        %1772 = vmatpush1.msra.mxu0 %v1771
        %1773 = vmatprep.subr.mxu0 0.0
        %v1774 = vand.u32 %v328, 4294901760
        %v1775 = vsub.f32 %v328, %v1774
        %1776 = vmatpush1.msra.mxu0 %v1775
        %1777 = vmatprep.subr.mxu0 0.0
        %v1778 = vand.u32 %v329, 4294901760
        %v1779 = vsub.f32 %v329, %v1778
        %1780 = vmatpush1.msra.mxu0 %v1779
        %1781 = vmatprep.subr.mxu0 0.0
        %v1782 = vand.u32 %v330, 4294901760
        %v1783 = vsub.f32 %v330, %v1782
        %1784 = vmatpush1.msra.mxu0 %v1783
        %1785 = vmatprep.subr.mxu0 0.0
        %v1786 = vand.u32 %v331, 4294901760
        %v1787 = vsub.f32 %v331, %v1786
        %1788 = vmatpush1.msra.mxu0 %v1787
        %1789 = vmatprep.subr.mxu0 0.0
        %v1790 = vand.u32 %v332, 4294901760
        %v1791 = vsub.f32 %v332, %v1790
        %1792 = vmatpush1.msra.mxu0 %v1791
        %1793 = vmatprep.subr.mxu0 0.0
        %v1794 = vand.u32 %v333, 4294901760
        %v1795 = vsub.f32 %v333, %v1794
        %1796 = vmatpush1.msra.mxu0 %v1795
        %1797 = vmatprep.subr.mxu0 0.0
        %v1798 = vand.u32 %v334, 4294901760
        %v1799 = vsub.f32 %v334, %v1798
        %1800 = vmatpush1.msra.mxu0 %v1799
        %1801 = vmatprep.subr.mxu0 0.0
        %v1802 = vand.u32 %v335, 4294901760
        %v1803 = vsub.f32 %v335, %v1802
        %1804 = vmatpush1.msra.mxu0 %v1803
        %1805 = vmatprep.subr.mxu0 0.0
        %v1806 = vand.u32 %v336, 4294901760
        %v1807 = vsub.f32 %v336, %v1806
        %1808 = vmatpush1.msra.mxu0 %v1807
        %1809 = vmatprep.subr.mxu0 0.0
        %v1810 = vand.u32 %v337, 4294901760
        %v1811 = vsub.f32 %v337, %v1810
        %1812 = vmatpush1.msra.mxu0 %v1811
        %1813 = vmatprep.subr.mxu0 0.0
        %v1814 = vand.u32 %v338, 4294901760
        %v1815 = vsub.f32 %v338, %v1814
        %1816 = vmatpush1.msra.mxu0 %v1815
        %1817 = vmatprep.subr.mxu0 0.0
        %v1818 = vand.u32 %v339, 4294901760
        %v1819 = vsub.f32 %v339, %v1818
        %1820 = vmatpush1.msra.mxu0 %v1819
        %1821 = vmatprep.subr.mxu0 0.0
        %v1822 = vand.u32 %v340, 4294901760
        %v1823 = vsub.f32 %v340, %v1822
        %1824 = vmatpush1.msra.mxu0 %v1823
        %1825 = vmatprep.subr.mxu0 0.0
        %v1826 = vand.u32 %v341, 4294901760
        %v1827 = vsub.f32 %v341, %v1826
        %1828 = vmatpush1.msra.mxu0 %v1827
        %1829 = vmatprep.subr.mxu0 0.0
        %v1830 = vand.u32 %v342, 4294901760
        %v1831 = vsub.f32 %v342, %v1830
        %1832 = vmatpush1.msra.mxu0 %v1831
        %1833 = vmatprep.subr.mxu0 0.0
        %v1834 = vand.u32 %v343, 4294901760
        %v1835 = vsub.f32 %v343, %v1834
        %1836 = vmatpush1.msra.mxu0 %v1835
        %1837 = vmatprep.subr.mxu0 0.0
        %v1838 = vand.u32 %v344, 4294901760
        %v1839 = vsub.f32 %v344, %v1838
        %1840 = vmatpush1.msra.mxu0 %v1839
        %1841 = vmatprep.subr.mxu0 0.0
        %v1842 = vand.u32 %v345, 4294901760
        %v1843 = vsub.f32 %v345, %v1842
        %1844 = vmatpush1.msra.mxu0 %v1843
        %1845 = vmatprep.subr.mxu0 0.0
        %v1846 = vand.u32 %v346, 4294901760
        %v1847 = vsub.f32 %v346, %v1846
        %1848 = vmatpush1.msra.mxu0 %v1847
        %1849 = vmatprep.subr.mxu0 0.0
        %v1850 = vand.u32 %v347, 4294901760
        %v1851 = vsub.f32 %v347, %v1850
        %1852 = vmatpush1.msra.mxu0 %v1851
        %1853 = vmatprep.subr.mxu0 0.0
        %v1854 = vand.u32 %v348, 4294901760
        %v1855 = vsub.f32 %v348, %v1854
        %1856 = vmatpush1.msra.mxu0 %v1855
        %1857 = vmatprep.subr.mxu0 0.0
        %v1858 = vand.u32 %v349, 4294901760
        %v1859 = vsub.f32 %v349, %v1858
        %1860 = vmatpush1.msra.mxu0 %v1859
        %1861 = vmatprep.subr.mxu0 0.0
        %v1862 = vand.u32 %v350, 4294901760
        %v1863 = vsub.f32 %v350, %v1862
        %1864 = vmatpush1.msra.mxu0 %v1863
        %1865 = vmatprep.subr.mxu0 0.0
        %v1866 = vand.u32 %v351, 4294901760
        %v1867 = vsub.f32 %v351, %v1866
        %1868 = vmatpush1.msra.mxu0 %v1867
        %1869 = vmatprep.subr.mxu0 0.0
        %v1870 = vand.u32 %v352, 4294901760
        %v1871 = vsub.f32 %v352, %v1870
        %1872 = vmatpush1.msra.mxu0 %v1871
        %1873 = vmatprep.subr.mxu0 0.0
        %v1874 = vand.u32 %v353, 4294901760
        %v1875 = vsub.f32 %v353, %v1874
        %1876 = vmatpush1.msra.mxu0 %v1875
        %1877 = vmatprep.subr.mxu0 0.0
        %v1878 = vand.u32 %v354, 4294901760
        %v1879 = vsub.f32 %v354, %v1878
        %1880 = vmatpush1.msra.mxu0 %v1879
        %v1881 = vand.u32 %v278, 4294901760
        %v1882 = vsub.f32 %v278, %v1881
        %1883 = vmatprep.mubr.f32.mxu0 %v1882
        %v1884 = vand.u32 %v277, 4294901760
        %v1885 = vsub.f32 %v277, %v1884
        %1886 = vmatmul.mubr.f32.gmra.mrb[0].mxu0 %v1885
        %v1887 = vpop.f32.mrb[0].mxu0
        %v1888 = vadd.f32 %v1750, %v1887
        %v1889 = vpop.f32.mrb[0].mxu0
        %1890 = vdwg.mxu0
        %1891 = vmatprep.subr.mxu0 0.0
        %v1892 = vand.u32 %v323, 4294901760
        %1893 = vmatpush1.msra.mxu0 %v1892
        %1894 = vmatprep.subr.mxu0 0.0
        %v1895 = vand.u32 %v324, 4294901760
        %1896 = vmatpush1.msra.mxu0 %v1895
        %1897 = vmatprep.subr.mxu0 0.0
        %v1898 = vand.u32 %v325, 4294901760
        %1899 = vmatpush1.msra.mxu0 %v1898
        %1900 = vmatprep.subr.mxu0 0.0
        %v1901 = vand.u32 %v326, 4294901760
        %1902 = vmatpush1.msra.mxu0 %v1901
        %1903 = vmatprep.subr.mxu0 0.0
        %v1904 = vand.u32 %v327, 4294901760
        %1905 = vmatpush1.msra.mxu0 %v1904
        %1906 = vmatprep.subr.mxu0 0.0
        %v1907 = vand.u32 %v328, 4294901760
        %1908 = vmatpush1.msra.mxu0 %v1907
        %1909 = vmatprep.subr.mxu0 0.0
        %v1910 = vand.u32 %v329, 4294901760
        %1911 = vmatpush1.msra.mxu0 %v1910
        %1912 = vmatprep.subr.mxu0 0.0
        %v1913 = vand.u32 %v330, 4294901760
        %1914 = vmatpush1.msra.mxu0 %v1913
        %1915 = vmatprep.subr.mxu0 0.0
        %v1916 = vand.u32 %v331, 4294901760
        %1917 = vmatpush1.msra.mxu0 %v1916
        %1918 = vmatprep.subr.mxu0 0.0
        %v1919 = vand.u32 %v332, 4294901760
        %1920 = vmatpush1.msra.mxu0 %v1919
        %1921 = vmatprep.subr.mxu0 0.0
        %v1922 = vand.u32 %v333, 4294901760
        %1923 = vmatpush1.msra.mxu0 %v1922
        %1924 = vmatprep.subr.mxu0 0.0
        %v1925 = vand.u32 %v334, 4294901760
        %1926 = vmatpush1.msra.mxu0 %v1925
        %1927 = vmatprep.subr.mxu0 0.0
        %v1928 = vand.u32 %v335, 4294901760
        %1929 = vmatpush1.msra.mxu0 %v1928
        %1930 = vmatprep.subr.mxu0 0.0
        %v1931 = vand.u32 %v336, 4294901760
        %1932 = vmatpush1.msra.mxu0 %v1931
        %1933 = vmatprep.subr.mxu0 0.0
        %v1934 = vand.u32 %v337, 4294901760
        %1935 = vmatpush1.msra.mxu0 %v1934
        %1936 = vmatprep.subr.mxu0 0.0
        %v1937 = vand.u32 %v338, 4294901760
        %1938 = vmatpush1.msra.mxu0 %v1937
        %1939 = vmatprep.subr.mxu0 0.0
        %v1940 = vand.u32 %v339, 4294901760
        %1941 = vmatpush1.msra.mxu0 %v1940
        %1942 = vmatprep.subr.mxu0 0.0
        %v1943 = vand.u32 %v340, 4294901760
        %1944 = vmatpush1.msra.mxu0 %v1943
        %1945 = vmatprep.subr.mxu0 0.0
        %v1946 = vand.u32 %v341, 4294901760
        %1947 = vmatpush1.msra.mxu0 %v1946
        %1948 = vmatprep.subr.mxu0 0.0
        %v1949 = vand.u32 %v342, 4294901760
        %1950 = vmatpush1.msra.mxu0 %v1949
        %1951 = vmatprep.subr.mxu0 0.0
        %v1952 = vand.u32 %v343, 4294901760
        %1953 = vmatpush1.msra.mxu0 %v1952
        %1954 = vmatprep.subr.mxu0 0.0
        %v1955 = vand.u32 %v344, 4294901760
        %1956 = vmatpush1.msra.mxu0 %v1955
        %1957 = vmatprep.subr.mxu0 0.0
        %v1958 = vand.u32 %v345, 4294901760
        %1959 = vmatpush1.msra.mxu0 %v1958
        %1960 = vmatprep.subr.mxu0 0.0
        %v1961 = vand.u32 %v346, 4294901760
        %1962 = vmatpush1.msra.mxu0 %v1961
        %1963 = vmatprep.subr.mxu0 0.0
        %v1964 = vand.u32 %v347, 4294901760
        %1965 = vmatpush1.msra.mxu0 %v1964
        %1966 = vmatprep.subr.mxu0 0.0
        %v1967 = vand.u32 %v348, 4294901760
        %1968 = vmatpush1.msra.mxu0 %v1967
        %1969 = vmatprep.subr.mxu0 0.0
        %v1970 = vand.u32 %v349, 4294901760
        %1971 = vmatpush1.msra.mxu0 %v1970
        %1972 = vmatprep.subr.mxu0 0.0
        %v1973 = vand.u32 %v350, 4294901760
        %1974 = vmatpush1.msra.mxu0 %v1973
        %1975 = vmatprep.subr.mxu0 0.0
        %v1976 = vand.u32 %v351, 4294901760
        %1977 = vmatpush1.msra.mxu0 %v1976
        %1978 = vmatprep.subr.mxu0 0.0
        %v1979 = vand.u32 %v352, 4294901760
        %1980 = vmatpush1.msra.mxu0 %v1979
        %1981 = vmatprep.subr.mxu0 0.0
        %v1982 = vand.u32 %v353, 4294901760
        %1983 = vmatpush1.msra.mxu0 %v1982
        %1984 = vmatprep.subr.mxu0 0.0
        %v1985 = vand.u32 %v354, 4294901760
        %1986 = vmatpush1.msra.mxu0 %v1985
        %v1987 = vand.u32 %v278, 4294901760
        %v1988 = vsub.f32 %v278, %v1987
        %v1989 = vand.u32 %v1988, 4294901760
        %1990 = vmatprep.mubr.f32.mxu0 %v1989
        %v1991 = vand.u32 %v277, 4294901760
        %v1992 = vsub.f32 %v277, %v1991
        %v1993 = vand.u32 %v1992, 4294901760
        %1994 = vmatmul.mubr.f32.gmra.mrb[0].mxu0 %v1993
        %v1995 = vpop.f32.mrb[0].mxu0
        %v1996 = vadd.f32 %v1888, %v1995
        %v1997 = vpop.f32.mrb[0].mxu0
        %1998 = vdwg.mxu0
        %1999 = vmatprep.subr.mxu0 0.0
        %v2000 = vand.u32 %v323, 4294901760
        %v2001 = vsub.f32 %v323, %v2000
        %v2002 = vand.u32 %v2001, 4294901760
        %2003 = vmatpush1.msra.mxu0 %v2002
        %2004 = vmatprep.subr.mxu0 0.0
        %v2005 = vand.u32 %v324, 4294901760
        %v2006 = vsub.f32 %v324, %v2005
        %v2007 = vand.u32 %v2006, 4294901760
        %2008 = vmatpush1.msra.mxu0 %v2007
        %2009 = vmatprep.subr.mxu0 0.0
        %v2010 = vand.u32 %v325, 4294901760
        %v2011 = vsub.f32 %v325, %v2010
        %v2012 = vand.u32 %v2011, 4294901760
        %2013 = vmatpush1.msra.mxu0 %v2012
        %2014 = vmatprep.subr.mxu0 0.0
        %v2015 = vand.u32 %v326, 4294901760
        %v2016 = vsub.f32 %v326, %v2015
        %v2017 = vand.u32 %v2016, 4294901760
        %2018 = vmatpush1.msra.mxu0 %v2017
        %2019 = vmatprep.subr.mxu0 0.0
        %v2020 = vand.u32 %v327, 4294901760
        %v2021 = vsub.f32 %v327, %v2020
        %v2022 = vand.u32 %v2021, 4294901760
        %2023 = vmatpush1.msra.mxu0 %v2022
        %2024 = vmatprep.subr.mxu0 0.0
        %v2025 = vand.u32 %v328, 4294901760
        %v2026 = vsub.f32 %v328, %v2025
        %v2027 = vand.u32 %v2026, 4294901760
        %2028 = vmatpush1.msra.mxu0 %v2027
        %2029 = vmatprep.subr.mxu0 0.0
        %v2030 = vand.u32 %v329, 4294901760
        %v2031 = vsub.f32 %v329, %v2030
        %v2032 = vand.u32 %v2031, 4294901760
        %2033 = vmatpush1.msra.mxu0 %v2032
        %2034 = vmatprep.subr.mxu0 0.0
        %v2035 = vand.u32 %v330, 4294901760
        %v2036 = vsub.f32 %v330, %v2035
        %v2037 = vand.u32 %v2036, 4294901760
        %2038 = vmatpush1.msra.mxu0 %v2037
        %2039 = vmatprep.subr.mxu0 0.0
        %v2040 = vand.u32 %v331, 4294901760
        %v2041 = vsub.f32 %v331, %v2040
        %v2042 = vand.u32 %v2041, 4294901760
        %2043 = vmatpush1.msra.mxu0 %v2042
        %2044 = vmatprep.subr.mxu0 0.0
        %v2045 = vand.u32 %v332, 4294901760
        %v2046 = vsub.f32 %v332, %v2045
        %v2047 = vand.u32 %v2046, 4294901760
        %2048 = vmatpush1.msra.mxu0 %v2047
        %2049 = vmatprep.subr.mxu0 0.0
        %v2050 = vand.u32 %v333, 4294901760
        %v2051 = vsub.f32 %v333, %v2050
        %v2052 = vand.u32 %v2051, 4294901760
        %2053 = vmatpush1.msra.mxu0 %v2052
        %2054 = vmatprep.subr.mxu0 0.0
        %v2055 = vand.u32 %v334, 4294901760
        %v2056 = vsub.f32 %v334, %v2055
        %v2057 = vand.u32 %v2056, 4294901760
        %2058 = vmatpush1.msra.mxu0 %v2057
        %2059 = vmatprep.subr.mxu0 0.0
        %v2060 = vand.u32 %v335, 4294901760
        %v2061 = vsub.f32 %v335, %v2060
        %v2062 = vand.u32 %v2061, 4294901760
        %2063 = vmatpush1.msra.mxu0 %v2062
        %2064 = vmatprep.subr.mxu0 0.0
        %v2065 = vand.u32 %v336, 4294901760
        %v2066 = vsub.f32 %v336, %v2065
        %v2067 = vand.u32 %v2066, 4294901760
        %2068 = vmatpush1.msra.mxu0 %v2067
        %2069 = vmatprep.subr.mxu0 0.0
        %v2070 = vand.u32 %v337, 4294901760
        %v2071 = vsub.f32 %v337, %v2070
        %v2072 = vand.u32 %v2071, 4294901760
        %2073 = vmatpush1.msra.mxu0 %v2072
        %2074 = vmatprep.subr.mxu0 0.0
        %v2075 = vand.u32 %v338, 4294901760
        %v2076 = vsub.f32 %v338, %v2075
        %v2077 = vand.u32 %v2076, 4294901760
        %2078 = vmatpush1.msra.mxu0 %v2077
        %2079 = vmatprep.subr.mxu0 0.0
        %v2080 = vand.u32 %v339, 4294901760
        %v2081 = vsub.f32 %v339, %v2080
        %v2082 = vand.u32 %v2081, 4294901760
        %2083 = vmatpush1.msra.mxu0 %v2082
        %2084 = vmatprep.subr.mxu0 0.0
        %v2085 = vand.u32 %v340, 4294901760
        %v2086 = vsub.f32 %v340, %v2085
        %v2087 = vand.u32 %v2086, 4294901760
        %2088 = vmatpush1.msra.mxu0 %v2087
        %2089 = vmatprep.subr.mxu0 0.0
        %v2090 = vand.u32 %v341, 4294901760
        %v2091 = vsub.f32 %v341, %v2090
        %v2092 = vand.u32 %v2091, 4294901760
        %2093 = vmatpush1.msra.mxu0 %v2092
        %2094 = vmatprep.subr.mxu0 0.0
        %v2095 = vand.u32 %v342, 4294901760
        %v2096 = vsub.f32 %v342, %v2095
        %v2097 = vand.u32 %v2096, 4294901760
        %2098 = vmatpush1.msra.mxu0 %v2097
        %2099 = vmatprep.subr.mxu0 0.0
        %v2100 = vand.u32 %v343, 4294901760
        %v2101 = vsub.f32 %v343, %v2100
        %v2102 = vand.u32 %v2101, 4294901760
        %2103 = vmatpush1.msra.mxu0 %v2102
        %2104 = vmatprep.subr.mxu0 0.0
        %v2105 = vand.u32 %v344, 4294901760
        %v2106 = vsub.f32 %v344, %v2105
        %v2107 = vand.u32 %v2106, 4294901760
        %2108 = vmatpush1.msra.mxu0 %v2107
        %2109 = vmatprep.subr.mxu0 0.0
        %v2110 = vand.u32 %v345, 4294901760
        %v2111 = vsub.f32 %v345, %v2110
        %v2112 = vand.u32 %v2111, 4294901760
        %2113 = vmatpush1.msra.mxu0 %v2112
        %2114 = vmatprep.subr.mxu0 0.0
        %v2115 = vand.u32 %v346, 4294901760
        %v2116 = vsub.f32 %v346, %v2115
        %v2117 = vand.u32 %v2116, 4294901760
        %2118 = vmatpush1.msra.mxu0 %v2117
        %2119 = vmatprep.subr.mxu0 0.0
        %v2120 = vand.u32 %v347, 4294901760
        %v2121 = vsub.f32 %v347, %v2120
        %v2122 = vand.u32 %v2121, 4294901760
        %2123 = vmatpush1.msra.mxu0 %v2122
        %2124 = vmatprep.subr.mxu0 0.0
        %v2125 = vand.u32 %v348, 4294901760
        %v2126 = vsub.f32 %v348, %v2125
        %v2127 = vand.u32 %v2126, 4294901760
        %2128 = vmatpush1.msra.mxu0 %v2127
        %2129 = vmatprep.subr.mxu0 0.0
        %v2130 = vand.u32 %v349, 4294901760
        %v2131 = vsub.f32 %v349, %v2130
        %v2132 = vand.u32 %v2131, 4294901760
        %2133 = vmatpush1.msra.mxu0 %v2132
        %2134 = vmatprep.subr.mxu0 0.0
        %v2135 = vand.u32 %v350, 4294901760
        %v2136 = vsub.f32 %v350, %v2135
        %v2137 = vand.u32 %v2136, 4294901760
        %2138 = vmatpush1.msra.mxu0 %v2137
        %2139 = vmatprep.subr.mxu0 0.0
        %v2140 = vand.u32 %v351, 4294901760
        %v2141 = vsub.f32 %v351, %v2140
        %v2142 = vand.u32 %v2141, 4294901760
        %2143 = vmatpush1.msra.mxu0 %v2142
        %2144 = vmatprep.subr.mxu0 0.0
        %v2145 = vand.u32 %v352, 4294901760
        %v2146 = vsub.f32 %v352, %v2145
        %v2147 = vand.u32 %v2146, 4294901760
        %2148 = vmatpush1.msra.mxu0 %v2147
        %2149 = vmatprep.subr.mxu0 0.0
        %v2150 = vand.u32 %v353, 4294901760
        %v2151 = vsub.f32 %v353, %v2150
        %v2152 = vand.u32 %v2151, 4294901760
        %2153 = vmatpush1.msra.mxu0 %v2152
        %2154 = vmatprep.subr.mxu0 0.0
        %v2155 = vand.u32 %v354, 4294901760
        %v2156 = vsub.f32 %v354, %v2155
        %v2157 = vand.u32 %v2156, 4294901760
        %2158 = vmatpush1.msra.mxu0 %v2157
        %v2159 = vand.u32 %v278, 4294901760
        %2160 = vmatprep.mubr.f32.mxu0 %v2159
        %v2161 = vand.u32 %v277, 4294901760
        %2162 = vmatmul.mubr.f32.gmra.mrb[0].mxu0 %v2161
        %v2163 = vpop.f32.mrb[0].mxu0
        %v2164 = vadd.f32 %v1996, %v2163
        %v2165 = vpop.f32.mrb[0].mxu0
        %2166 = vdwg.mxu0
        %2167 = vmatprep.subr.mxu0 0.0
        %v2168 = vand.u32 %v323, 4294901760
        %2169 = vmatpush1.msra.mxu0 %v2168
        %2170 = vmatprep.subr.mxu0 0.0
        %v2171 = vand.u32 %v324, 4294901760
        %2172 = vmatpush1.msra.mxu0 %v2171
        %2173 = vmatprep.subr.mxu0 0.0
        %v2174 = vand.u32 %v325, 4294901760
        %2175 = vmatpush1.msra.mxu0 %v2174
        %2176 = vmatprep.subr.mxu0 0.0
        %v2177 = vand.u32 %v326, 4294901760
        %2178 = vmatpush1.msra.mxu0 %v2177
        %2179 = vmatprep.subr.mxu0 0.0
        %v2180 = vand.u32 %v327, 4294901760
        %2181 = vmatpush1.msra.mxu0 %v2180
        %2182 = vmatprep.subr.mxu0 0.0
        %v2183 = vand.u32 %v328, 4294901760
        %2184 = vmatpush1.msra.mxu0 %v2183
        %2185 = vmatprep.subr.mxu0 0.0
        %v2186 = vand.u32 %v329, 4294901760
        %2187 = vmatpush1.msra.mxu0 %v2186
        %2188 = vmatprep.subr.mxu0 0.0
        %v2189 = vand.u32 %v330, 4294901760
        %2190 = vmatpush1.msra.mxu0 %v2189
        %2191 = vmatprep.subr.mxu0 0.0
        %v2192 = vand.u32 %v331, 4294901760
        %2193 = vmatpush1.msra.mxu0 %v2192
        %2194 = vmatprep.subr.mxu0 0.0
        %v2195 = vand.u32 %v332, 4294901760
        %2196 = vmatpush1.msra.mxu0 %v2195
        %2197 = vmatprep.subr.mxu0 0.0
        %v2198 = vand.u32 %v333, 4294901760
        %2199 = vmatpush1.msra.mxu0 %v2198
        %2200 = vmatprep.subr.mxu0 0.0
        %v2201 = vand.u32 %v334, 4294901760
        %2202 = vmatpush1.msra.mxu0 %v2201
        %2203 = vmatprep.subr.mxu0 0.0
        %v2204 = vand.u32 %v335, 4294901760
        %2205 = vmatpush1.msra.mxu0 %v2204
        %2206 = vmatprep.subr.mxu0 0.0
        %v2207 = vand.u32 %v336, 4294901760
        %2208 = vmatpush1.msra.mxu0 %v2207
        %2209 = vmatprep.subr.mxu0 0.0
        %v2210 = vand.u32 %v337, 4294901760
        %2211 = vmatpush1.msra.mxu0 %v2210
        %2212 = vmatprep.subr.mxu0 0.0
        %v2213 = vand.u32 %v338, 4294901760
        %2214 = vmatpush1.msra.mxu0 %v2213
        %2215 = vmatprep.subr.mxu0 0.0
        %v2216 = vand.u32 %v339, 4294901760
        %2217 = vmatpush1.msra.mxu0 %v2216
        %2218 = vmatprep.subr.mxu0 0.0
        %v2219 = vand.u32 %v340, 4294901760
        %2220 = vmatpush1.msra.mxu0 %v2219
        %2221 = vmatprep.subr.mxu0 0.0
        %v2222 = vand.u32 %v341, 4294901760
        %2223 = vmatpush1.msra.mxu0 %v2222
        %2224 = vmatprep.subr.mxu0 0.0
        %v2225 = vand.u32 %v342, 4294901760
        %2226 = vmatpush1.msra.mxu0 %v2225
        %2227 = vmatprep.subr.mxu0 0.0
        %v2228 = vand.u32 %v343, 4294901760
        %2229 = vmatpush1.msra.mxu0 %v2228
        %2230 = vmatprep.subr.mxu0 0.0
        %v2231 = vand.u32 %v344, 4294901760
        %2232 = vmatpush1.msra.mxu0 %v2231
        %2233 = vmatprep.subr.mxu0 0.0
        %v2234 = vand.u32 %v345, 4294901760
        %2235 = vmatpush1.msra.mxu0 %v2234
        %2236 = vmatprep.subr.mxu0 0.0
        %v2237 = vand.u32 %v346, 4294901760
        %2238 = vmatpush1.msra.mxu0 %v2237
        %2239 = vmatprep.subr.mxu0 0.0
        %v2240 = vand.u32 %v347, 4294901760
        %2241 = vmatpush1.msra.mxu0 %v2240
        %2242 = vmatprep.subr.mxu0 0.0
        %v2243 = vand.u32 %v348, 4294901760
        %2244 = vmatpush1.msra.mxu0 %v2243
        %2245 = vmatprep.subr.mxu0 0.0
        %v2246 = vand.u32 %v349, 4294901760
        %2247 = vmatpush1.msra.mxu0 %v2246
        %2248 = vmatprep.subr.mxu0 0.0
        %v2249 = vand.u32 %v350, 4294901760
        %2250 = vmatpush1.msra.mxu0 %v2249
        %2251 = vmatprep.subr.mxu0 0.0
        %v2252 = vand.u32 %v351, 4294901760
        %2253 = vmatpush1.msra.mxu0 %v2252
        %2254 = vmatprep.subr.mxu0 0.0
        %v2255 = vand.u32 %v352, 4294901760
        %2256 = vmatpush1.msra.mxu0 %v2255
        %2257 = vmatprep.subr.mxu0 0.0
        %v2258 = vand.u32 %v353, 4294901760
        %2259 = vmatpush1.msra.mxu0 %v2258
        %2260 = vmatprep.subr.mxu0 0.0
        %v2261 = vand.u32 %v354, 4294901760
        %2262 = vmatpush1.msra.mxu0 %v2261
        %v2263 = vand.u32 %v278, 4294901760
        %2264 = vmatprep.mubr.f32.mxu0 %v2263
        %v2265 = vand.u32 %v277, 4294901760
        %2266 = vmatmul.mubr.f32.gmra.mrb[0].mxu0 %v2265
        %v2267 = vpop.f32.mrb[0].mxu0
        %v2268 = vadd.f32 %v2164, %v2267
        %v2269 = vpop.f32.mrb[0].mxu0
        %2270 = vdwg.mxu0
        %2271 = vmatprep.subr.mxu0 0.0
        %v2272 = vand.u32 %v355, 4294901760
        %2273 = vmatpush1.msra.mxu0 %v2272
        %2274 = vmatprep.subr.mxu0 0.0
        %v2275 = vand.u32 %v356, 4294901760
        %2276 = vmatpush1.msra.mxu0 %v2275
        %2277 = vmatprep.subr.mxu0 0.0
        %v2278 = vand.u32 %v357, 4294901760
        %2279 = vmatpush1.msra.mxu0 %v2278
        %2280 = vmatprep.subr.mxu0 0.0
        %v2281 = vand.u32 %v358, 4294901760
        %2282 = vmatpush1.msra.mxu0 %v2281
        %2283 = vmatprep.subr.mxu0 0.0
        %v2284 = vand.u32 %v359, 4294901760
        %2285 = vmatpush1.msra.mxu0 %v2284
        %2286 = vmatprep.subr.mxu0 0.0
        %v2287 = vand.u32 %v360, 4294901760
        %2288 = vmatpush1.msra.mxu0 %v2287
        %2289 = vmatprep.subr.mxu0 0.0
        %v2290 = vand.u32 %v361, 4294901760
        %2291 = vmatpush1.msra.mxu0 %v2290
        %2292 = vmatprep.subr.mxu0 0.0
        %v2293 = vand.u32 %v362, 4294901760
        %2294 = vmatpush1.msra.mxu0 %v2293
        %2295 = vmatprep.subr.mxu0 0.0
        %v2296 = vand.u32 %v363, 4294901760
        %2297 = vmatpush1.msra.mxu0 %v2296
        %2298 = vmatprep.subr.mxu0 0.0
        %v2299 = vand.u32 %v364, 4294901760
        %2300 = vmatpush1.msra.mxu0 %v2299
        %2301 = vmatprep.subr.mxu0 0.0
        %v2302 = vand.u32 %v365, 4294901760
        %2303 = vmatpush1.msra.mxu0 %v2302
        %2304 = vmatprep.subr.mxu0 0.0
        %v2305 = vand.u32 %v366, 4294901760
        %2306 = vmatpush1.msra.mxu0 %v2305
        %2307 = vmatprep.subr.mxu0 0.0
        %v2308 = vand.u32 %v367, 4294901760
        %2309 = vmatpush1.msra.mxu0 %v2308
        %2310 = vmatprep.subr.mxu0 0.0
        %v2311 = vand.u32 %v368, 4294901760
        %2312 = vmatpush1.msra.mxu0 %v2311
        %2313 = vmatprep.subr.mxu0 0.0
        %v2314 = vand.u32 %v369, 4294901760
        %2315 = vmatpush1.msra.mxu0 %v2314
        %2316 = vmatprep.subr.mxu0 0.0
        %v2317 = vand.u32 %v370, 4294901760
        %2318 = vmatpush1.msra.mxu0 %v2317
        %2319 = vmatprep.subr.mxu0 0.0
        %v2320 = vand.u32 %v371, 4294901760
        %2321 = vmatpush1.msra.mxu0 %v2320
        %2322 = vmatprep.subr.mxu0 0.0
        %v2323 = vand.u32 %v372, 4294901760
        %2324 = vmatpush1.msra.mxu0 %v2323
        %2325 = vmatprep.subr.mxu0 0.0
        %v2326 = vand.u32 %v373, 4294901760
        %2327 = vmatpush1.msra.mxu0 %v2326
        %2328 = vmatprep.subr.mxu0 0.0
        %v2329 = vand.u32 %v374, 4294901760
        %2330 = vmatpush1.msra.mxu0 %v2329
        %2331 = vmatprep.subr.mxu0 0.0
        %v2332 = vand.u32 %v375, 4294901760
        %2333 = vmatpush1.msra.mxu0 %v2332
        %2334 = vmatprep.subr.mxu0 0.0
        %v2335 = vand.u32 %v376, 4294901760
        %2336 = vmatpush1.msra.mxu0 %v2335
        %2337 = vmatprep.subr.mxu0 0.0
        %v2338 = vand.u32 %v377, 4294901760
        %2339 = vmatpush1.msra.mxu0 %v2338
        %2340 = vmatprep.subr.mxu0 0.0
        %v2341 = vand.u32 %v378, 4294901760
        %2342 = vmatpush1.msra.mxu0 %v2341
        %2343 = vmatprep.subr.mxu0 0.0
        %v2344 = vand.u32 %v379, 4294901760
        %2345 = vmatpush1.msra.mxu0 %v2344
        %2346 = vmatprep.subr.mxu0 0.0
        %v2347 = vand.u32 %v380, 4294901760
        %2348 = vmatpush1.msra.mxu0 %v2347
        %2349 = vmatprep.subr.mxu0 0.0
        %v2350 = vand.u32 %v381, 4294901760
        %2351 = vmatpush1.msra.mxu0 %v2350
        %2352 = vmatprep.subr.mxu0 0.0
        %v2353 = vand.u32 %v382, 4294901760
        %2354 = vmatpush1.msra.mxu0 %v2353
        %2355 = vmatprep.subr.mxu0 0.0
        %v2356 = vand.u32 %v383, 4294901760
        %2357 = vmatpush1.msra.mxu0 %v2356
        %2358 = vmatprep.subr.mxu0 0.0
        %v2359 = vand.u32 %v384, 4294901760
        %2360 = vmatpush1.msra.mxu0 %v2359
        %2361 = vmatprep.subr.mxu0 0.0
        %v2362 = vand.u32 %v385, 4294901760
        %2363 = vmatpush1.msra.mxu0 %v2362
        %2364 = vmatprep.subr.mxu0 0.0
        %v2365 = vand.u32 %v386, 4294901760
        %2366 = vmatpush1.msra.mxu0 %v2365
        %v2367 = vand.u32 %v280, 4294901760
        %v2368 = vsub.f32 %v280, %v2367
        %v2369 = vand.u32 %v2368, 4294901760
        %v2370 = vsub.f32 %v2368, %v2369
        %v2371 = vand.u32 %v2370, 4294901760
        %2372 = vmatprep.mubr.f32.mxu0 %v2371
        %v2373 = vand.u32 %v279, 4294901760
        %v2374 = vsub.f32 %v279, %v2373
        %v2375 = vand.u32 %v2374, 4294901760
        %v2376 = vsub.f32 %v2374, %v2375
        %v2377 = vand.u32 %v2376, 4294901760
        %2378 = vmatmul.mubr.f32.gmra.mrb[0].mxu0 %v2377
        %v2379 = vpop.f32.mrb[0].mxu0
        %v2380 = vadd.f32 %v2268, %v2379
        %v2381 = vpop.f32.mrb[0].mxu0
        %2382 = vdwg.mxu0
        %2383 = vmatprep.subr.mxu0 0.0
        %v2384 = vand.u32 %v355, 4294901760
        %v2385 = vsub.f32 %v355, %v2384
        %v2386 = vand.u32 %v2385, 4294901760
        %v2387 = vsub.f32 %v2385, %v2386
        %v2388 = vand.u32 %v2387, 4294901760
        %2389 = vmatpush1.msra.mxu0 %v2388
        %2390 = vmatprep.subr.mxu0 0.0
        %v2391 = vand.u32 %v356, 4294901760
        %v2392 = vsub.f32 %v356, %v2391
        %v2393 = vand.u32 %v2392, 4294901760
        %v2394 = vsub.f32 %v2392, %v2393
        %v2395 = vand.u32 %v2394, 4294901760
        %2396 = vmatpush1.msra.mxu0 %v2395
        %2397 = vmatprep.subr.mxu0 0.0
        %v2398 = vand.u32 %v357, 4294901760
        %v2399 = vsub.f32 %v357, %v2398
        %v2400 = vand.u32 %v2399, 4294901760
        %v2401 = vsub.f32 %v2399, %v2400
        %v2402 = vand.u32 %v2401, 4294901760
        %2403 = vmatpush1.msra.mxu0 %v2402
        %2404 = vmatprep.subr.mxu0 0.0
        %v2405 = vand.u32 %v358, 4294901760
        %v2406 = vsub.f32 %v358, %v2405
        %v2407 = vand.u32 %v2406, 4294901760
        %v2408 = vsub.f32 %v2406, %v2407
        %v2409 = vand.u32 %v2408, 4294901760
        %2410 = vmatpush1.msra.mxu0 %v2409
        %2411 = vmatprep.subr.mxu0 0.0
        %v2412 = vand.u32 %v359, 4294901760
        %v2413 = vsub.f32 %v359, %v2412
        %v2414 = vand.u32 %v2413, 4294901760
        %v2415 = vsub.f32 %v2413, %v2414
        %v2416 = vand.u32 %v2415, 4294901760
        %2417 = vmatpush1.msra.mxu0 %v2416
        %2418 = vmatprep.subr.mxu0 0.0
        %v2419 = vand.u32 %v360, 4294901760
        %v2420 = vsub.f32 %v360, %v2419
        %v2421 = vand.u32 %v2420, 4294901760
        %v2422 = vsub.f32 %v2420, %v2421
        %v2423 = vand.u32 %v2422, 4294901760
        %2424 = vmatpush1.msra.mxu0 %v2423
        %2425 = vmatprep.subr.mxu0 0.0
        %v2426 = vand.u32 %v361, 4294901760
        %v2427 = vsub.f32 %v361, %v2426
        %v2428 = vand.u32 %v2427, 4294901760
        %v2429 = vsub.f32 %v2427, %v2428
        %v2430 = vand.u32 %v2429, 4294901760
        %2431 = vmatpush1.msra.mxu0 %v2430
        %2432 = vmatprep.subr.mxu0 0.0
        %v2433 = vand.u32 %v362, 4294901760
        %v2434 = vsub.f32 %v362, %v2433
        %v2435 = vand.u32 %v2434, 4294901760
        %v2436 = vsub.f32 %v2434, %v2435
        %v2437 = vand.u32 %v2436, 4294901760
        %2438 = vmatpush1.msra.mxu0 %v2437
        %2439 = vmatprep.subr.mxu0 0.0
        %v2440 = vand.u32 %v363, 4294901760
        %v2441 = vsub.f32 %v363, %v2440
        %v2442 = vand.u32 %v2441, 4294901760
        %v2443 = vsub.f32 %v2441, %v2442
        %v2444 = vand.u32 %v2443, 4294901760
        %2445 = vmatpush1.msra.mxu0 %v2444
        %2446 = vmatprep.subr.mxu0 0.0
        %v2447 = vand.u32 %v364, 4294901760
        %v2448 = vsub.f32 %v364, %v2447
        %v2449 = vand.u32 %v2448, 4294901760
        %v2450 = vsub.f32 %v2448, %v2449
        %v2451 = vand.u32 %v2450, 4294901760
        %2452 = vmatpush1.msra.mxu0 %v2451
        %2453 = vmatprep.subr.mxu0 0.0
        %v2454 = vand.u32 %v365, 4294901760
        %v2455 = vsub.f32 %v365, %v2454
        %v2456 = vand.u32 %v2455, 4294901760
        %v2457 = vsub.f32 %v2455, %v2456
        %v2458 = vand.u32 %v2457, 4294901760
        %2459 = vmatpush1.msra.mxu0 %v2458
        %2460 = vmatprep.subr.mxu0 0.0
        %v2461 = vand.u32 %v366, 4294901760
        %v2462 = vsub.f32 %v366, %v2461
        %v2463 = vand.u32 %v2462, 4294901760
        %v2464 = vsub.f32 %v2462, %v2463
        %v2465 = vand.u32 %v2464, 4294901760
        %2466 = vmatpush1.msra.mxu0 %v2465
        %2467 = vmatprep.subr.mxu0 0.0
        %v2468 = vand.u32 %v367, 4294901760
        %v2469 = vsub.f32 %v367, %v2468
        %v2470 = vand.u32 %v2469, 4294901760
        %v2471 = vsub.f32 %v2469, %v2470
        %v2472 = vand.u32 %v2471, 4294901760
        %2473 = vmatpush1.msra.mxu0 %v2472
        %2474 = vmatprep.subr.mxu0 0.0
        %v2475 = vand.u32 %v368, 4294901760
        %v2476 = vsub.f32 %v368, %v2475
        %v2477 = vand.u32 %v2476, 4294901760
        %v2478 = vsub.f32 %v2476, %v2477
        %v2479 = vand.u32 %v2478, 4294901760
        %2480 = vmatpush1.msra.mxu0 %v2479
        %2481 = vmatprep.subr.mxu0 0.0
        %v2482 = vand.u32 %v369, 4294901760
        %v2483 = vsub.f32 %v369, %v2482
        %v2484 = vand.u32 %v2483, 4294901760
        %v2485 = vsub.f32 %v2483, %v2484
        %v2486 = vand.u32 %v2485, 4294901760
        %2487 = vmatpush1.msra.mxu0 %v2486
        %2488 = vmatprep.subr.mxu0 0.0
        %v2489 = vand.u32 %v370, 4294901760
        %v2490 = vsub.f32 %v370, %v2489
        %v2491 = vand.u32 %v2490, 4294901760
        %v2492 = vsub.f32 %v2490, %v2491
        %v2493 = vand.u32 %v2492, 4294901760
        %2494 = vmatpush1.msra.mxu0 %v2493
        %2495 = vmatprep.subr.mxu0 0.0
        %v2496 = vand.u32 %v371, 4294901760
        %v2497 = vsub.f32 %v371, %v2496
        %v2498 = vand.u32 %v2497, 4294901760
        %v2499 = vsub.f32 %v2497, %v2498
        %v2500 = vand.u32 %v2499, 4294901760
        %2501 = vmatpush1.msra.mxu0 %v2500
        %2502 = vmatprep.subr.mxu0 0.0
        %v2503 = vand.u32 %v372, 4294901760
        %v2504 = vsub.f32 %v372, %v2503
        %v2505 = vand.u32 %v2504, 4294901760
        %v2506 = vsub.f32 %v2504, %v2505
        %v2507 = vand.u32 %v2506, 4294901760
        %2508 = vmatpush1.msra.mxu0 %v2507
        %2509 = vmatprep.subr.mxu0 0.0
        %v2510 = vand.u32 %v373, 4294901760
        %v2511 = vsub.f32 %v373, %v2510
        %v2512 = vand.u32 %v2511, 4294901760
        %v2513 = vsub.f32 %v2511, %v2512
        %v2514 = vand.u32 %v2513, 4294901760
        %2515 = vmatpush1.msra.mxu0 %v2514
        %2516 = vmatprep.subr.mxu0 0.0
        %v2517 = vand.u32 %v374, 4294901760
        %v2518 = vsub.f32 %v374, %v2517
        %v2519 = vand.u32 %v2518, 4294901760
        %v2520 = vsub.f32 %v2518, %v2519
        %v2521 = vand.u32 %v2520, 4294901760
        %2522 = vmatpush1.msra.mxu0 %v2521
        %2523 = vmatprep.subr.mxu0 0.0
        %v2524 = vand.u32 %v375, 4294901760
        %v2525 = vsub.f32 %v375, %v2524
        %v2526 = vand.u32 %v2525, 4294901760
        %v2527 = vsub.f32 %v2525, %v2526
        %v2528 = vand.u32 %v2527, 4294901760
        %2529 = vmatpush1.msra.mxu0 %v2528
        %2530 = vmatprep.subr.mxu0 0.0
        %v2531 = vand.u32 %v376, 4294901760
        %v2532 = vsub.f32 %v376, %v2531
        %v2533 = vand.u32 %v2532, 4294901760
        %v2534 = vsub.f32 %v2532, %v2533
        %v2535 = vand.u32 %v2534, 4294901760
        %2536 = vmatpush1.msra.mxu0 %v2535
        %2537 = vmatprep.subr.mxu0 0.0
        %v2538 = vand.u32 %v377, 4294901760
        %v2539 = vsub.f32 %v377, %v2538
        %v2540 = vand.u32 %v2539, 4294901760
        %v2541 = vsub.f32 %v2539, %v2540
        %v2542 = vand.u32 %v2541, 4294901760
        %2543 = vmatpush1.msra.mxu0 %v2542
        %2544 = vmatprep.subr.mxu0 0.0
        %v2545 = vand.u32 %v378, 4294901760
        %v2546 = vsub.f32 %v378, %v2545
        %v2547 = vand.u32 %v2546, 4294901760
        %v2548 = vsub.f32 %v2546, %v2547
        %v2549 = vand.u32 %v2548, 4294901760
        %2550 = vmatpush1.msra.mxu0 %v2549
        %2551 = vmatprep.subr.mxu0 0.0
        %v2552 = vand.u32 %v379, 4294901760
        %v2553 = vsub.f32 %v379, %v2552
        %v2554 = vand.u32 %v2553, 4294901760
        %v2555 = vsub.f32 %v2553, %v2554
        %v2556 = vand.u32 %v2555, 4294901760
        %2557 = vmatpush1.msra.mxu0 %v2556
        %2558 = vmatprep.subr.mxu0 0.0
        %v2559 = vand.u32 %v380, 4294901760
        %v2560 = vsub.f32 %v380, %v2559
        %v2561 = vand.u32 %v2560, 4294901760
        %v2562 = vsub.f32 %v2560, %v2561
        %v2563 = vand.u32 %v2562, 4294901760
        %2564 = vmatpush1.msra.mxu0 %v2563
        %2565 = vmatprep.subr.mxu0 0.0
        %v2566 = vand.u32 %v381, 4294901760
        %v2567 = vsub.f32 %v381, %v2566
        %v2568 = vand.u32 %v2567, 4294901760
        %v2569 = vsub.f32 %v2567, %v2568
        %v2570 = vand.u32 %v2569, 4294901760
        %2571 = vmatpush1.msra.mxu0 %v2570
        %2572 = vmatprep.subr.mxu0 0.0
        %v2573 = vand.u32 %v382, 4294901760
        %v2574 = vsub.f32 %v382, %v2573
        %v2575 = vand.u32 %v2574, 4294901760
        %v2576 = vsub.f32 %v2574, %v2575
        %v2577 = vand.u32 %v2576, 4294901760
        %2578 = vmatpush1.msra.mxu0 %v2577
        %2579 = vmatprep.subr.mxu0 0.0
        %v2580 = vand.u32 %v383, 4294901760
        %v2581 = vsub.f32 %v383, %v2580
        %v2582 = vand.u32 %v2581, 4294901760
        %v2583 = vsub.f32 %v2581, %v2582
        %v2584 = vand.u32 %v2583, 4294901760
        %2585 = vmatpush1.msra.mxu0 %v2584
        %2586 = vmatprep.subr.mxu0 0.0
        %v2587 = vand.u32 %v384, 4294901760
        %v2588 = vsub.f32 %v384, %v2587
        %v2589 = vand.u32 %v2588, 4294901760
        %v2590 = vsub.f32 %v2588, %v2589
        %v2591 = vand.u32 %v2590, 4294901760
        %2592 = vmatpush1.msra.mxu0 %v2591
        %2593 = vmatprep.subr.mxu0 0.0
        %v2594 = vand.u32 %v385, 4294901760
        %v2595 = vsub.f32 %v385, %v2594
        %v2596 = vand.u32 %v2595, 4294901760
        %v2597 = vsub.f32 %v2595, %v2596
        %v2598 = vand.u32 %v2597, 4294901760
        %2599 = vmatpush1.msra.mxu0 %v2598
        %2600 = vmatprep.subr.mxu0 0.0
        %v2601 = vand.u32 %v386, 4294901760
        %v2602 = vsub.f32 %v386, %v2601
        %v2603 = vand.u32 %v2602, 4294901760
        %v2604 = vsub.f32 %v2602, %v2603
        %v2605 = vand.u32 %v2604, 4294901760
        %2606 = vmatpush1.msra.mxu0 %v2605
        %v2607 = vand.u32 %v280, 4294901760
        %2608 = vmatprep.mubr.f32.mxu0 %v2607
        %v2609 = vand.u32 %v279, 4294901760
        %2610 = vmatmul.mubr.f32.gmra.mrb[0].mxu0 %v2609
        %v2611 = vpop.f32.mrb[0].mxu0
        %v2612 = vadd.f32 %v2380, %v2611
        %v2613 = vpop.f32.mrb[0].mxu0
        %2614 = vdwg.mxu0
        %2615 = vmatprep.subr.mxu0 0.0
        %v2616 = vand.u32 %v355, 4294901760
        %v2617 = vsub.f32 %v355, %v2616
        %2618 = vmatpush1.msra.mxu0 %v2617
        %2619 = vmatprep.subr.mxu0 0.0
        %v2620 = vand.u32 %v356, 4294901760
        %v2621 = vsub.f32 %v356, %v2620
        %2622 = vmatpush1.msra.mxu0 %v2621
        %2623 = vmatprep.subr.mxu0 0.0
        %v2624 = vand.u32 %v357, 4294901760
        %v2625 = vsub.f32 %v357, %v2624
        %2626 = vmatpush1.msra.mxu0 %v2625
        %2627 = vmatprep.subr.mxu0 0.0
        %v2628 = vand.u32 %v358, 4294901760
        %v2629 = vsub.f32 %v358, %v2628
        %2630 = vmatpush1.msra.mxu0 %v2629
        %2631 = vmatprep.subr.mxu0 0.0
        %v2632 = vand.u32 %v359, 4294901760
        %v2633 = vsub.f32 %v359, %v2632
        %2634 = vmatpush1.msra.mxu0 %v2633
        %2635 = vmatprep.subr.mxu0 0.0
        %v2636 = vand.u32 %v360, 4294901760
        %v2637 = vsub.f32 %v360, %v2636
        %2638 = vmatpush1.msra.mxu0 %v2637
        %2639 = vmatprep.subr.mxu0 0.0
        %v2640 = vand.u32 %v361, 4294901760
        %v2641 = vsub.f32 %v361, %v2640
        %2642 = vmatpush1.msra.mxu0 %v2641
        %2643 = vmatprep.subr.mxu0 0.0
        %v2644 = vand.u32 %v362, 4294901760
        %v2645 = vsub.f32 %v362, %v2644
        %2646 = vmatpush1.msra.mxu0 %v2645
        %2647 = vmatprep.subr.mxu0 0.0
        %v2648 = vand.u32 %v363, 4294901760
        %v2649 = vsub.f32 %v363, %v2648
        %2650 = vmatpush1.msra.mxu0 %v2649
        %2651 = vmatprep.subr.mxu0 0.0
        %v2652 = vand.u32 %v364, 4294901760
        %v2653 = vsub.f32 %v364, %v2652
        %2654 = vmatpush1.msra.mxu0 %v2653
        %2655 = vmatprep.subr.mxu0 0.0
        %v2656 = vand.u32 %v365, 4294901760
        %v2657 = vsub.f32 %v365, %v2656
        %2658 = vmatpush1.msra.mxu0 %v2657
        %2659 = vmatprep.subr.mxu0 0.0
        %v2660 = vand.u32 %v366, 4294901760
        %v2661 = vsub.f32 %v366, %v2660
        %2662 = vmatpush1.msra.mxu0 %v2661
        %2663 = vmatprep.subr.mxu0 0.0
        %v2664 = vand.u32 %v367, 4294901760
        %v2665 = vsub.f32 %v367, %v2664
        %2666 = vmatpush1.msra.mxu0 %v2665
        %2667 = vmatprep.subr.mxu0 0.0
        %v2668 = vand.u32 %v368, 4294901760
        %v2669 = vsub.f32 %v368, %v2668
        %2670 = vmatpush1.msra.mxu0 %v2669
        %2671 = vmatprep.subr.mxu0 0.0
        %v2672 = vand.u32 %v369, 4294901760
        %v2673 = vsub.f32 %v369, %v2672
        %2674 = vmatpush1.msra.mxu0 %v2673
        %2675 = vmatprep.subr.mxu0 0.0
        %v2676 = vand.u32 %v370, 4294901760
        %v2677 = vsub.f32 %v370, %v2676
        %2678 = vmatpush1.msra.mxu0 %v2677
        %2679 = vmatprep.subr.mxu0 0.0
        %v2680 = vand.u32 %v371, 4294901760
        %v2681 = vsub.f32 %v371, %v2680
        %2682 = vmatpush1.msra.mxu0 %v2681
        %2683 = vmatprep.subr.mxu0 0.0
        %v2684 = vand.u32 %v372, 4294901760
        %v2685 = vsub.f32 %v372, %v2684
        %2686 = vmatpush1.msra.mxu0 %v2685
        %2687 = vmatprep.subr.mxu0 0.0
        %v2688 = vand.u32 %v373, 4294901760
        %v2689 = vsub.f32 %v373, %v2688
        %2690 = vmatpush1.msra.mxu0 %v2689
        %2691 = vmatprep.subr.mxu0 0.0
        %v2692 = vand.u32 %v374, 4294901760
        %v2693 = vsub.f32 %v374, %v2692
        %2694 = vmatpush1.msra.mxu0 %v2693
        %2695 = vmatprep.subr.mxu0 0.0
        %v2696 = vand.u32 %v375, 4294901760
        %v2697 = vsub.f32 %v375, %v2696
        %2698 = vmatpush1.msra.mxu0 %v2697
        %2699 = vmatprep.subr.mxu0 0.0
        %v2700 = vand.u32 %v376, 4294901760
        %v2701 = vsub.f32 %v376, %v2700
        %2702 = vmatpush1.msra.mxu0 %v2701
        %2703 = vmatprep.subr.mxu0 0.0
        %v2704 = vand.u32 %v377, 4294901760
        %v2705 = vsub.f32 %v377, %v2704
        %2706 = vmatpush1.msra.mxu0 %v2705
        %2707 = vmatprep.subr.mxu0 0.0
        %v2708 = vand.u32 %v378, 4294901760
        %v2709 = vsub.f32 %v378, %v2708
        %2710 = vmatpush1.msra.mxu0 %v2709
        %2711 = vmatprep.subr.mxu0 0.0
        %v2712 = vand.u32 %v379, 4294901760
        %v2713 = vsub.f32 %v379, %v2712
        %2714 = vmatpush1.msra.mxu0 %v2713
        %2715 = vmatprep.subr.mxu0 0.0
        %v2716 = vand.u32 %v380, 4294901760
        %v2717 = vsub.f32 %v380, %v2716
        %2718 = vmatpush1.msra.mxu0 %v2717
        %2719 = vmatprep.subr.mxu0 0.0
        %v2720 = vand.u32 %v381, 4294901760
        %v2721 = vsub.f32 %v381, %v2720
        %2722 = vmatpush1.msra.mxu0 %v2721
        %2723 = vmatprep.subr.mxu0 0.0
        %v2724 = vand.u32 %v382, 4294901760
        %v2725 = vsub.f32 %v382, %v2724
        %2726 = vmatpush1.msra.mxu0 %v2725
        %2727 = vmatprep.subr.mxu0 0.0
        %v2728 = vand.u32 %v383, 4294901760
        %v2729 = vsub.f32 %v383, %v2728
        %2730 = vmatpush1.msra.mxu0 %v2729
        %2731 = vmatprep.subr.mxu0 0.0
        %v2732 = vand.u32 %v384, 4294901760
        %v2733 = vsub.f32 %v384, %v2732
        %2734 = vmatpush1.msra.mxu0 %v2733
        %2735 = vmatprep.subr.mxu0 0.0
        %v2736 = vand.u32 %v385, 4294901760
        %v2737 = vsub.f32 %v385, %v2736
        %2738 = vmatpush1.msra.mxu0 %v2737
        %2739 = vmatprep.subr.mxu0 0.0
        %v2740 = vand.u32 %v386, 4294901760
        %v2741 = vsub.f32 %v386, %v2740
        %2742 = vmatpush1.msra.mxu0 %v2741
        %v2743 = vand.u32 %v280, 4294901760
        %v2744 = vsub.f32 %v280, %v2743
        %2745 = vmatprep.mubr.f32.mxu0 %v2744
        %v2746 = vand.u32 %v279, 4294901760
        %v2747 = vsub.f32 %v279, %v2746
        %2748 = vmatmul.mubr.f32.gmra.mrb[0].mxu0 %v2747
        %v2749 = vpop.f32.mrb[0].mxu0
        %v2750 = vadd.f32 %v2612, %v2749
        %v2751 = vpop.f32.mrb[0].mxu0
        %2752 = vdwg.mxu0
        %2753 = vmatprep.subr.mxu0 0.0
        %v2754 = vand.u32 %v355, 4294901760
        %2755 = vmatpush1.msra.mxu0 %v2754
        %2756 = vmatprep.subr.mxu0 0.0
        %v2757 = vand.u32 %v356, 4294901760
        %2758 = vmatpush1.msra.mxu0 %v2757
        %2759 = vmatprep.subr.mxu0 0.0
        %v2760 = vand.u32 %v357, 4294901760
        %2761 = vmatpush1.msra.mxu0 %v2760
        %2762 = vmatprep.subr.mxu0 0.0
        %v2763 = vand.u32 %v358, 4294901760
        %2764 = vmatpush1.msra.mxu0 %v2763
        %2765 = vmatprep.subr.mxu0 0.0
        %v2766 = vand.u32 %v359, 4294901760
        %2767 = vmatpush1.msra.mxu0 %v2766
        %2768 = vmatprep.subr.mxu0 0.0
        %v2769 = vand.u32 %v360, 4294901760
        %2770 = vmatpush1.msra.mxu0 %v2769
        %2771 = vmatprep.subr.mxu0 0.0
        %v2772 = vand.u32 %v361, 4294901760
        %2773 = vmatpush1.msra.mxu0 %v2772
        %2774 = vmatprep.subr.mxu0 0.0
        %v2775 = vand.u32 %v362, 4294901760
        %2776 = vmatpush1.msra.mxu0 %v2775
        %2777 = vmatprep.subr.mxu0 0.0
        %v2778 = vand.u32 %v363, 4294901760
        %2779 = vmatpush1.msra.mxu0 %v2778
        %2780 = vmatprep.subr.mxu0 0.0
        %v2781 = vand.u32 %v364, 4294901760
        %2782 = vmatpush1.msra.mxu0 %v2781
        %2783 = vmatprep.subr.mxu0 0.0
        %v2784 = vand.u32 %v365, 4294901760
        %2785 = vmatpush1.msra.mxu0 %v2784
        %2786 = vmatprep.subr.mxu0 0.0
        %v2787 = vand.u32 %v366, 4294901760
        %2788 = vmatpush1.msra.mxu0 %v2787
        %2789 = vmatprep.subr.mxu0 0.0
        %v2790 = vand.u32 %v367, 4294901760
        %2791 = vmatpush1.msra.mxu0 %v2790
        %2792 = vmatprep.subr.mxu0 0.0
        %v2793 = vand.u32 %v368, 4294901760
        %2794 = vmatpush1.msra.mxu0 %v2793
        %2795 = vmatprep.subr.mxu0 0.0
        %v2796 = vand.u32 %v369, 4294901760
        %2797 = vmatpush1.msra.mxu0 %v2796
        %2798 = vmatprep.subr.mxu0 0.0
        %v2799 = vand.u32 %v370, 4294901760
        %2800 = vmatpush1.msra.mxu0 %v2799
        %2801 = vmatprep.subr.mxu0 0.0
        %v2802 = vand.u32 %v371, 4294901760
        %2803 = vmatpush1.msra.mxu0 %v2802
        %2804 = vmatprep.subr.mxu0 0.0
        %v2805 = vand.u32 %v372, 4294901760
        %2806 = vmatpush1.msra.mxu0 %v2805
        %2807 = vmatprep.subr.mxu0 0.0
        %v2808 = vand.u32 %v373, 4294901760
        %2809 = vmatpush1.msra.mxu0 %v2808
        %2810 = vmatprep.subr.mxu0 0.0
        %v2811 = vand.u32 %v374, 4294901760
        %2812 = vmatpush1.msra.mxu0 %v2811
        %2813 = vmatprep.subr.mxu0 0.0
        %v2814 = vand.u32 %v375, 4294901760
        %2815 = vmatpush1.msra.mxu0 %v2814
        %2816 = vmatprep.subr.mxu0 0.0
        %v2817 = vand.u32 %v376, 4294901760
        %2818 = vmatpush1.msra.mxu0 %v2817
        %2819 = vmatprep.subr.mxu0 0.0
        %v2820 = vand.u32 %v377, 4294901760
        %2821 = vmatpush1.msra.mxu0 %v2820
        %2822 = vmatprep.subr.mxu0 0.0
        %v2823 = vand.u32 %v378, 4294901760
        %2824 = vmatpush1.msra.mxu0 %v2823
        %2825 = vmatprep.subr.mxu0 0.0
        %v2826 = vand.u32 %v379, 4294901760
        %2827 = vmatpush1.msra.mxu0 %v2826
        %2828 = vmatprep.subr.mxu0 0.0
        %v2829 = vand.u32 %v380, 4294901760
        %2830 = vmatpush1.msra.mxu0 %v2829
        %2831 = vmatprep.subr.mxu0 0.0
        %v2832 = vand.u32 %v381, 4294901760
        %2833 = vmatpush1.msra.mxu0 %v2832
        %2834 = vmatprep.subr.mxu0 0.0
        %v2835 = vand.u32 %v382, 4294901760
        %2836 = vmatpush1.msra.mxu0 %v2835
        %2837 = vmatprep.subr.mxu0 0.0
        %v2838 = vand.u32 %v383, 4294901760
        %2839 = vmatpush1.msra.mxu0 %v2838
        %2840 = vmatprep.subr.mxu0 0.0
        %v2841 = vand.u32 %v384, 4294901760
        %2842 = vmatpush1.msra.mxu0 %v2841
        %2843 = vmatprep.subr.mxu0 0.0
        %v2844 = vand.u32 %v385, 4294901760
        %2845 = vmatpush1.msra.mxu0 %v2844
        %2846 = vmatprep.subr.mxu0 0.0
        %v2847 = vand.u32 %v386, 4294901760
        %2848 = vmatpush1.msra.mxu0 %v2847
        %v2849 = vand.u32 %v280, 4294901760
        %v2850 = vsub.f32 %v280, %v2849
        %v2851 = vand.u32 %v2850, 4294901760
        %2852 = vmatprep.mubr.f32.mxu0 %v2851
        %v2853 = vand.u32 %v279, 4294901760
        %v2854 = vsub.f32 %v279, %v2853
        %v2855 = vand.u32 %v2854, 4294901760
        %2856 = vmatmul.mubr.f32.gmra.mrb[0].mxu0 %v2855
        %v2857 = vpop.f32.mrb[0].mxu0
        %v2858 = vadd.f32 %v2750, %v2857
        %v2859 = vpop.f32.mrb[0].mxu0
        %2860 = vdwg.mxu0
        %2861 = vmatprep.subr.mxu0 0.0
        %v2862 = vand.u32 %v355, 4294901760
        %v2863 = vsub.f32 %v355, %v2862
        %v2864 = vand.u32 %v2863, 4294901760
        %2865 = vmatpush1.msra.mxu0 %v2864
        %2866 = vmatprep.subr.mxu0 0.0
        %v2867 = vand.u32 %v356, 4294901760
        %v2868 = vsub.f32 %v356, %v2867
        %v2869 = vand.u32 %v2868, 4294901760
        %2870 = vmatpush1.msra.mxu0 %v2869
        %2871 = vmatprep.subr.mxu0 0.0
        %v2872 = vand.u32 %v357, 4294901760
        %v2873 = vsub.f32 %v357, %v2872
        %v2874 = vand.u32 %v2873, 4294901760
        %2875 = vmatpush1.msra.mxu0 %v2874
        %2876 = vmatprep.subr.mxu0 0.0
        %v2877 = vand.u32 %v358, 4294901760
        %v2878 = vsub.f32 %v358, %v2877
        %v2879 = vand.u32 %v2878, 4294901760
        %2880 = vmatpush1.msra.mxu0 %v2879
        %2881 = vmatprep.subr.mxu0 0.0
        %v2882 = vand.u32 %v359, 4294901760
        %v2883 = vsub.f32 %v359, %v2882
        %v2884 = vand.u32 %v2883, 4294901760
        %2885 = vmatpush1.msra.mxu0 %v2884
        %2886 = vmatprep.subr.mxu0 0.0
        %v2887 = vand.u32 %v360, 4294901760
        %v2888 = vsub.f32 %v360, %v2887
        %v2889 = vand.u32 %v2888, 4294901760
        %2890 = vmatpush1.msra.mxu0 %v2889
        %2891 = vmatprep.subr.mxu0 0.0
        %v2892 = vand.u32 %v361, 4294901760
        %v2893 = vsub.f32 %v361, %v2892
        %v2894 = vand.u32 %v2893, 4294901760
        %2895 = vmatpush1.msra.mxu0 %v2894
        %2896 = vmatprep.subr.mxu0 0.0
        %v2897 = vand.u32 %v362, 4294901760
        %v2898 = vsub.f32 %v362, %v2897
        %v2899 = vand.u32 %v2898, 4294901760
        %2900 = vmatpush1.msra.mxu0 %v2899
        %2901 = vmatprep.subr.mxu0 0.0
        %v2902 = vand.u32 %v363, 4294901760
        %v2903 = vsub.f32 %v363, %v2902
        %v2904 = vand.u32 %v2903, 4294901760
        %2905 = vmatpush1.msra.mxu0 %v2904
        %2906 = vmatprep.subr.mxu0 0.0
        %v2907 = vand.u32 %v364, 4294901760
        %v2908 = vsub.f32 %v364, %v2907
        %v2909 = vand.u32 %v2908, 4294901760
        %2910 = vmatpush1.msra.mxu0 %v2909
        %2911 = vmatprep.subr.mxu0 0.0
        %v2912 = vand.u32 %v365, 4294901760
        %v2913 = vsub.f32 %v365, %v2912
        %v2914 = vand.u32 %v2913, 4294901760
        %2915 = vmatpush1.msra.mxu0 %v2914
        %2916 = vmatprep.subr.mxu0 0.0
        %v2917 = vand.u32 %v366, 4294901760
        %v2918 = vsub.f32 %v366, %v2917
        %v2919 = vand.u32 %v2918, 4294901760
        %2920 = vmatpush1.msra.mxu0 %v2919
        %2921 = vmatprep.subr.mxu0 0.0
        %v2922 = vand.u32 %v367, 4294901760
        %v2923 = vsub.f32 %v367, %v2922
        %v2924 = vand.u32 %v2923, 4294901760
        %2925 = vmatpush1.msra.mxu0 %v2924
        %2926 = vmatprep.subr.mxu0 0.0
        %v2927 = vand.u32 %v368, 4294901760
        %v2928 = vsub.f32 %v368, %v2927
        %v2929 = vand.u32 %v2928, 4294901760
        %2930 = vmatpush1.msra.mxu0 %v2929
        %2931 = vmatprep.subr.mxu0 0.0
        %v2932 = vand.u32 %v369, 4294901760
        %v2933 = vsub.f32 %v369, %v2932
        %v2934 = vand.u32 %v2933, 4294901760
        %2935 = vmatpush1.msra.mxu0 %v2934
        %2936 = vmatprep.subr.mxu0 0.0
        %v2937 = vand.u32 %v370, 4294901760
        %v2938 = vsub.f32 %v370, %v2937
        %v2939 = vand.u32 %v2938, 4294901760
        %2940 = vmatpush1.msra.mxu0 %v2939
        %2941 = vmatprep.subr.mxu0 0.0
        %v2942 = vand.u32 %v371, 4294901760
        %v2943 = vsub.f32 %v371, %v2942
        %v2944 = vand.u32 %v2943, 4294901760
        %2945 = vmatpush1.msra.mxu0 %v2944
        %2946 = vmatprep.subr.mxu0 0.0
        %v2947 = vand.u32 %v372, 4294901760
        %v2948 = vsub.f32 %v372, %v2947
        %v2949 = vand.u32 %v2948, 4294901760
        %2950 = vmatpush1.msra.mxu0 %v2949
        %2951 = vmatprep.subr.mxu0 0.0
        %v2952 = vand.u32 %v373, 4294901760
        %v2953 = vsub.f32 %v373, %v2952
        %v2954 = vand.u32 %v2953, 4294901760
        %2955 = vmatpush1.msra.mxu0 %v2954
        %2956 = vmatprep.subr.mxu0 0.0
        %v2957 = vand.u32 %v374, 4294901760
        %v2958 = vsub.f32 %v374, %v2957
        %v2959 = vand.u32 %v2958, 4294901760
        %2960 = vmatpush1.msra.mxu0 %v2959
        %2961 = vmatprep.subr.mxu0 0.0
        %v2962 = vand.u32 %v375, 4294901760
        %v2963 = vsub.f32 %v375, %v2962
        %v2964 = vand.u32 %v2963, 4294901760
        %2965 = vmatpush1.msra.mxu0 %v2964
        %2966 = vmatprep.subr.mxu0 0.0
        %v2967 = vand.u32 %v376, 4294901760
        %v2968 = vsub.f32 %v376, %v2967
        %v2969 = vand.u32 %v2968, 4294901760
        %2970 = vmatpush1.msra.mxu0 %v2969
        %2971 = vmatprep.subr.mxu0 0.0
        %v2972 = vand.u32 %v377, 4294901760
        %v2973 = vsub.f32 %v377, %v2972
        %v2974 = vand.u32 %v2973, 4294901760
        %2975 = vmatpush1.msra.mxu0 %v2974
        %2976 = vmatprep.subr.mxu0 0.0
        %v2977 = vand.u32 %v378, 4294901760
        %v2978 = vsub.f32 %v378, %v2977
        %v2979 = vand.u32 %v2978, 4294901760
        %2980 = vmatpush1.msra.mxu0 %v2979
        %2981 = vmatprep.subr.mxu0 0.0
        %v2982 = vand.u32 %v379, 4294901760
        %v2983 = vsub.f32 %v379, %v2982
        %v2984 = vand.u32 %v2983, 4294901760
        %2985 = vmatpush1.msra.mxu0 %v2984
        %2986 = vmatprep.subr.mxu0 0.0
        %v2987 = vand.u32 %v380, 4294901760
        %v2988 = vsub.f32 %v380, %v2987
        %v2989 = vand.u32 %v2988, 4294901760
        %2990 = vmatpush1.msra.mxu0 %v2989
        %2991 = vmatprep.subr.mxu0 0.0
        %v2992 = vand.u32 %v381, 4294901760
        %v2993 = vsub.f32 %v381, %v2992
        %v2994 = vand.u32 %v2993, 4294901760
        %2995 = vmatpush1.msra.mxu0 %v2994
        %2996 = vmatprep.subr.mxu0 0.0
        %v2997 = vand.u32 %v382, 4294901760
        %v2998 = vsub.f32 %v382, %v2997
        %v2999 = vand.u32 %v2998, 4294901760
        %3000 = vmatpush1.msra.mxu0 %v2999
        %3001 = vmatprep.subr.mxu0 0.0
        %v3002 = vand.u32 %v383, 4294901760
        %v3003 = vsub.f32 %v383, %v3002
        %v3004 = vand.u32 %v3003, 4294901760
        %3005 = vmatpush1.msra.mxu0 %v3004
        %3006 = vmatprep.subr.mxu0 0.0
        %v3007 = vand.u32 %v384, 4294901760
        %v3008 = vsub.f32 %v384, %v3007
        %v3009 = vand.u32 %v3008, 4294901760
        %3010 = vmatpush1.msra.mxu0 %v3009
        %3011 = vmatprep.subr.mxu0 0.0
        %v3012 = vand.u32 %v385, 4294901760
        %v3013 = vsub.f32 %v385, %v3012
        %v3014 = vand.u32 %v3013, 4294901760
        %3015 = vmatpush1.msra.mxu0 %v3014
        %3016 = vmatprep.subr.mxu0 0.0
        %v3017 = vand.u32 %v386, 4294901760
        %v3018 = vsub.f32 %v386, %v3017
        %v3019 = vand.u32 %v3018, 4294901760
        %3020 = vmatpush1.msra.mxu0 %v3019
        %v3021 = vand.u32 %v280, 4294901760
        %3022 = vmatprep.mubr.f32.mxu0 %v3021
        %v3023 = vand.u32 %v279, 4294901760
        %3024 = vmatmul.mubr.f32.gmra.mrb[0].mxu0 %v3023
        %v3025 = vpop.f32.mrb[0].mxu0
        %v3026 = vadd.f32 %v2858, %v3025
        %v3027 = vpop.f32.mrb[0].mxu0
        %3028 = vdwg.mxu0
        %3029 = vmatprep.subr.mxu0 0.0
        %v3030 = vand.u32 %v355, 4294901760
        %3031 = vmatpush1.msra.mxu0 %v3030
        %3032 = vmatprep.subr.mxu0 0.0
        %v3033 = vand.u32 %v356, 4294901760
        %3034 = vmatpush1.msra.mxu0 %v3033
        %3035 = vmatprep.subr.mxu0 0.0
        %v3036 = vand.u32 %v357, 4294901760
        %3037 = vmatpush1.msra.mxu0 %v3036
        %3038 = vmatprep.subr.mxu0 0.0
        %v3039 = vand.u32 %v358, 4294901760
        %3040 = vmatpush1.msra.mxu0 %v3039
        %3041 = vmatprep.subr.mxu0 0.0
        %v3042 = vand.u32 %v359, 4294901760
        %3043 = vmatpush1.msra.mxu0 %v3042
        %3044 = vmatprep.subr.mxu0 0.0
        %v3045 = vand.u32 %v360, 4294901760
        %3046 = vmatpush1.msra.mxu0 %v3045
        %3047 = vmatprep.subr.mxu0 0.0
        %v3048 = vand.u32 %v361, 4294901760
        %3049 = vmatpush1.msra.mxu0 %v3048
        %3050 = vmatprep.subr.mxu0 0.0
        %v3051 = vand.u32 %v362, 4294901760
        %3052 = vmatpush1.msra.mxu0 %v3051
        %3053 = vmatprep.subr.mxu0 0.0
        %v3054 = vand.u32 %v363, 4294901760
        %3055 = vmatpush1.msra.mxu0 %v3054
        %3056 = vmatprep.subr.mxu0 0.0
        %v3057 = vand.u32 %v364, 4294901760
        %3058 = vmatpush1.msra.mxu0 %v3057
        %3059 = vmatprep.subr.mxu0 0.0
        %v3060 = vand.u32 %v365, 4294901760
        %3061 = vmatpush1.msra.mxu0 %v3060
        %3062 = vmatprep.subr.mxu0 0.0
        %v3063 = vand.u32 %v366, 4294901760
        %3064 = vmatpush1.msra.mxu0 %v3063
        %3065 = vmatprep.subr.mxu0 0.0
        %v3066 = vand.u32 %v367, 4294901760
        %3067 = vmatpush1.msra.mxu0 %v3066
        %3068 = vmatprep.subr.mxu0 0.0
        %v3069 = vand.u32 %v368, 4294901760
        %3070 = vmatpush1.msra.mxu0 %v3069
        %3071 = vmatprep.subr.mxu0 0.0
        %v3072 = vand.u32 %v369, 4294901760
        %3073 = vmatpush1.msra.mxu0 %v3072
        %3074 = vmatprep.subr.mxu0 0.0
        %v3075 = vand.u32 %v370, 4294901760
        %3076 = vmatpush1.msra.mxu0 %v3075
        %3077 = vmatprep.subr.mxu0 0.0
        %v3078 = vand.u32 %v371, 4294901760
        %3079 = vmatpush1.msra.mxu0 %v3078
        %3080 = vmatprep.subr.mxu0 0.0
        %v3081 = vand.u32 %v372, 4294901760
        %3082 = vmatpush1.msra.mxu0 %v3081
        %3083 = vmatprep.subr.mxu0 0.0
        %v3084 = vand.u32 %v373, 4294901760
        %3085 = vmatpush1.msra.mxu0 %v3084
        %3086 = vmatprep.subr.mxu0 0.0
        %v3087 = vand.u32 %v374, 4294901760
        %3088 = vmatpush1.msra.mxu0 %v3087
        %3089 = vmatprep.subr.mxu0 0.0
        %v3090 = vand.u32 %v375, 4294901760
        %3091 = vmatpush1.msra.mxu0 %v3090
        %3092 = vmatprep.subr.mxu0 0.0
        %v3093 = vand.u32 %v376, 4294901760
        %3094 = vmatpush1.msra.mxu0 %v3093
        %3095 = vmatprep.subr.mxu0 0.0
        %v3096 = vand.u32 %v377, 4294901760
        %3097 = vmatpush1.msra.mxu0 %v3096
        %3098 = vmatprep.subr.mxu0 0.0
        %v3099 = vand.u32 %v378, 4294901760
        %3100 = vmatpush1.msra.mxu0 %v3099
        %3101 = vmatprep.subr.mxu0 0.0
        %v3102 = vand.u32 %v379, 4294901760
        %3103 = vmatpush1.msra.mxu0 %v3102
        %3104 = vmatprep.subr.mxu0 0.0
        %v3105 = vand.u32 %v380, 4294901760
        %3106 = vmatpush1.msra.mxu0 %v3105
        %3107 = vmatprep.subr.mxu0 0.0
        %v3108 = vand.u32 %v381, 4294901760
        %3109 = vmatpush1.msra.mxu0 %v3108
        %3110 = vmatprep.subr.mxu0 0.0
        %v3111 = vand.u32 %v382, 4294901760
        %3112 = vmatpush1.msra.mxu0 %v3111
        %3113 = vmatprep.subr.mxu0 0.0
        %v3114 = vand.u32 %v383, 4294901760
        %3115 = vmatpush1.msra.mxu0 %v3114
        %3116 = vmatprep.subr.mxu0 0.0
        %v3117 = vand.u32 %v384, 4294901760
        %3118 = vmatpush1.msra.mxu0 %v3117
        %3119 = vmatprep.subr.mxu0 0.0
        %v3120 = vand.u32 %v385, 4294901760
        %3121 = vmatpush1.msra.mxu0 %v3120
        %3122 = vmatprep.subr.mxu0 0.0
        %v3123 = vand.u32 %v386, 4294901760
        %3124 = vmatpush1.msra.mxu0 %v3123
        %v3125 = vand.u32 %v280, 4294901760
        %3126 = vmatprep.mubr.f32.mxu0 %v3125
        %v3127 = vand.u32 %v279, 4294901760
        %3128 = vmatmul.mubr.f32.gmra.mrb[0].mxu0 %v3127
        %v3129 = vpop.f32.mrb[0].mxu0
        %v3130 = vadd.f32 %v3026, %v3129
        %v3131 = vpop.f32.mrb[0].mxu0
        %3132 = vdwg.mxu0
        %3133 = vmatprep.subr.mxu0 0.0
        %v3134 = vand.u32 %v387, 4294901760
        %3135 = vmatpush1.msra.mxu0 %v3134
        %3136 = vmatprep.subr.mxu0 0.0
        %v3137 = vand.u32 %v388, 4294901760
        %3138 = vmatpush1.msra.mxu0 %v3137
        %3139 = vmatprep.subr.mxu0 0.0
        %v3140 = vand.u32 %v389, 4294901760
        %3141 = vmatpush1.msra.mxu0 %v3140
        %3142 = vmatprep.subr.mxu0 0.0
        %v3143 = vand.u32 %v390, 4294901760
        %3144 = vmatpush1.msra.mxu0 %v3143
        %3145 = vmatprep.subr.mxu0 0.0
        %v3146 = vand.u32 %v391, 4294901760
        %3147 = vmatpush1.msra.mxu0 %v3146
        %3148 = vmatprep.subr.mxu0 0.0
        %v3149 = vand.u32 %v392, 4294901760
        %3150 = vmatpush1.msra.mxu0 %v3149
        %3151 = vmatprep.subr.mxu0 0.0
        %v3152 = vand.u32 %v393, 4294901760
        %3153 = vmatpush1.msra.mxu0 %v3152
        %3154 = vmatprep.subr.mxu0 0.0
        %v3155 = vand.u32 %v394, 4294901760
        %3156 = vmatpush1.msra.mxu0 %v3155
        %3157 = vmatprep.subr.mxu0 0.0
        %v3158 = vand.u32 %v395, 4294901760
        %3159 = vmatpush1.msra.mxu0 %v3158
        %3160 = vmatprep.subr.mxu0 0.0
        %v3161 = vand.u32 %v396, 4294901760
        %3162 = vmatpush1.msra.mxu0 %v3161
        %3163 = vmatprep.subr.mxu0 0.0
        %v3164 = vand.u32 %v397, 4294901760
        %3165 = vmatpush1.msra.mxu0 %v3164
        %3166 = vmatprep.subr.mxu0 0.0
        %v3167 = vand.u32 %v398, 4294901760
        %3168 = vmatpush1.msra.mxu0 %v3167
        %3169 = vmatprep.subr.mxu0 0.0
        %v3170 = vand.u32 %v399, 4294901760
        %3171 = vmatpush1.msra.mxu0 %v3170
        %3172 = vmatprep.subr.mxu0 0.0
        %v3173 = vand.u32 %v400, 4294901760
        %3174 = vmatpush1.msra.mxu0 %v3173
        %3175 = vmatprep.subr.mxu0 0.0
        %v3176 = vand.u32 %v401, 4294901760
        %3177 = vmatpush1.msra.mxu0 %v3176
        %3178 = vmatprep.subr.mxu0 0.0
        %v3179 = vand.u32 %v402, 4294901760
        %3180 = vmatpush1.msra.mxu0 %v3179
        %3181 = vmatprep.subr.mxu0 0.0
        %v3182 = vand.u32 %v403, 4294901760
        %3183 = vmatpush1.msra.mxu0 %v3182
        %3184 = vmatprep.subr.mxu0 0.0
        %v3185 = vand.u32 %v404, 4294901760
        %3186 = vmatpush1.msra.mxu0 %v3185
        %3187 = vmatprep.subr.mxu0 0.0
        %v3188 = vand.u32 %v405, 4294901760
        %3189 = vmatpush1.msra.mxu0 %v3188
        %3190 = vmatprep.subr.mxu0 0.0
        %v3191 = vand.u32 %v406, 4294901760
        %3192 = vmatpush1.msra.mxu0 %v3191
        %3193 = vmatprep.subr.mxu0 0.0
        %v3194 = vand.u32 %v407, 4294901760
        %3195 = vmatpush1.msra.mxu0 %v3194
        %3196 = vmatprep.subr.mxu0 0.0
        %v3197 = vand.u32 %v408, 4294901760
        %3198 = vmatpush1.msra.mxu0 %v3197
        %3199 = vmatprep.subr.mxu0 0.0
        %v3200 = vand.u32 %v409, 4294901760
        %3201 = vmatpush1.msra.mxu0 %v3200
        %3202 = vmatprep.subr.mxu0 0.0
        %v3203 = vand.u32 %v410, 4294901760
        %3204 = vmatpush1.msra.mxu0 %v3203
        %3205 = vmatprep.subr.mxu0 0.0
        %v3206 = vand.u32 %v411, 4294901760
        %3207 = vmatpush1.msra.mxu0 %v3206
        %3208 = vmatprep.subr.mxu0 0.0
        %v3209 = vand.u32 %v412, 4294901760
        %3210 = vmatpush1.msra.mxu0 %v3209
        %3211 = vmatprep.subr.mxu0 0.0
        %v3212 = vand.u32 %v413, 4294901760
        %3213 = vmatpush1.msra.mxu0 %v3212
        %3214 = vmatprep.subr.mxu0 0.0
        %v3215 = vand.u32 %v414, 4294901760
        %3216 = vmatpush1.msra.mxu0 %v3215
        %3217 = vmatprep.subr.mxu0 0.0
        %v3218 = vand.u32 %v415, 4294901760
        %3219 = vmatpush1.msra.mxu0 %v3218
        %3220 = vmatprep.subr.mxu0 0.0
        %v3221 = vand.u32 %v416, 4294901760
        %3222 = vmatpush1.msra.mxu0 %v3221
        %3223 = vmatprep.subr.mxu0 0.0
        %v3224 = vand.u32 %v417, 4294901760
        %3225 = vmatpush1.msra.mxu0 %v3224
        %3226 = vmatprep.subr.mxu0 0.0
        %v3227 = vand.u32 %v418, 4294901760
        %3228 = vmatpush1.msra.mxu0 %v3227
        %v3229 = vand.u32 %v282, 4294901760
        %v3230 = vsub.f32 %v282, %v3229
        %v3231 = vand.u32 %v3230, 4294901760
        %v3232 = vsub.f32 %v3230, %v3231
        %v3233 = vand.u32 %v3232, 4294901760
        %3234 = vmatprep.mubr.f32.mxu0 %v3233
        %v3235 = vand.u32 %v281, 4294901760
        %v3236 = vsub.f32 %v281, %v3235
        %v3237 = vand.u32 %v3236, 4294901760
        %v3238 = vsub.f32 %v3236, %v3237
        %v3239 = vand.u32 %v3238, 4294901760
        %3240 = vmatmul.mubr.f32.gmra.mrb[0].mxu0 %v3239
        %v3241 = vpop.f32.mrb[0].mxu0
        %v3242 = vadd.f32 %v3130, %v3241
        %v3243 = vpop.f32.mrb[0].mxu0
        %3244 = vdwg.mxu0
        %3245 = vmatprep.subr.mxu0 0.0
        %v3246 = vand.u32 %v387, 4294901760
        %v3247 = vsub.f32 %v387, %v3246
        %v3248 = vand.u32 %v3247, 4294901760
        %v3249 = vsub.f32 %v3247, %v3248
        %v3250 = vand.u32 %v3249, 4294901760
        %3251 = vmatpush1.msra.mxu0 %v3250
        %3252 = vmatprep.subr.mxu0 0.0
        %v3253 = vand.u32 %v388, 4294901760
        %v3254 = vsub.f32 %v388, %v3253
        %v3255 = vand.u32 %v3254, 4294901760
        %v3256 = vsub.f32 %v3254, %v3255
        %v3257 = vand.u32 %v3256, 4294901760
        %3258 = vmatpush1.msra.mxu0 %v3257
        %3259 = vmatprep.subr.mxu0 0.0
        %v3260 = vand.u32 %v389, 4294901760
        %v3261 = vsub.f32 %v389, %v3260
        %v3262 = vand.u32 %v3261, 4294901760
        %v3263 = vsub.f32 %v3261, %v3262
        %v3264 = vand.u32 %v3263, 4294901760
        %3265 = vmatpush1.msra.mxu0 %v3264
        %3266 = vmatprep.subr.mxu0 0.0
        %v3267 = vand.u32 %v390, 4294901760
        %v3268 = vsub.f32 %v390, %v3267
        %v3269 = vand.u32 %v3268, 4294901760
        %v3270 = vsub.f32 %v3268, %v3269
        %v3271 = vand.u32 %v3270, 4294901760
        %3272 = vmatpush1.msra.mxu0 %v3271
        %3273 = vmatprep.subr.mxu0 0.0
        %v3274 = vand.u32 %v391, 4294901760
        %v3275 = vsub.f32 %v391, %v3274
        %v3276 = vand.u32 %v3275, 4294901760
        %v3277 = vsub.f32 %v3275, %v3276
        %v3278 = vand.u32 %v3277, 4294901760
        %3279 = vmatpush1.msra.mxu0 %v3278
        %3280 = vmatprep.subr.mxu0 0.0
        %v3281 = vand.u32 %v392, 4294901760
        %v3282 = vsub.f32 %v392, %v3281
        %v3283 = vand.u32 %v3282, 4294901760
        %v3284 = vsub.f32 %v3282, %v3283
        %v3285 = vand.u32 %v3284, 4294901760
        %3286 = vmatpush1.msra.mxu0 %v3285
        %3287 = vmatprep.subr.mxu0 0.0
        %v3288 = vand.u32 %v393, 4294901760
        %v3289 = vsub.f32 %v393, %v3288
        %v3290 = vand.u32 %v3289, 4294901760
        %v3291 = vsub.f32 %v3289, %v3290
        %v3292 = vand.u32 %v3291, 4294901760
        %3293 = vmatpush1.msra.mxu0 %v3292
        %3294 = vmatprep.subr.mxu0 0.0
        %v3295 = vand.u32 %v394, 4294901760
        %v3296 = vsub.f32 %v394, %v3295
        %v3297 = vand.u32 %v3296, 4294901760
        %v3298 = vsub.f32 %v3296, %v3297
        %v3299 = vand.u32 %v3298, 4294901760
        %3300 = vmatpush1.msra.mxu0 %v3299
        %3301 = vmatprep.subr.mxu0 0.0
        %v3302 = vand.u32 %v395, 4294901760
        %v3303 = vsub.f32 %v395, %v3302
        %v3304 = vand.u32 %v3303, 4294901760
        %v3305 = vsub.f32 %v3303, %v3304
        %v3306 = vand.u32 %v3305, 4294901760
        %3307 = vmatpush1.msra.mxu0 %v3306
        %3308 = vmatprep.subr.mxu0 0.0
        %v3309 = vand.u32 %v396, 4294901760
        %v3310 = vsub.f32 %v396, %v3309
        %v3311 = vand.u32 %v3310, 4294901760
        %v3312 = vsub.f32 %v3310, %v3311
        %v3313 = vand.u32 %v3312, 4294901760
        %3314 = vmatpush1.msra.mxu0 %v3313
        %3315 = vmatprep.subr.mxu0 0.0
        %v3316 = vand.u32 %v397, 4294901760
        %v3317 = vsub.f32 %v397, %v3316
        %v3318 = vand.u32 %v3317, 4294901760
        %v3319 = vsub.f32 %v3317, %v3318
        %v3320 = vand.u32 %v3319, 4294901760
        %3321 = vmatpush1.msra.mxu0 %v3320
        %3322 = vmatprep.subr.mxu0 0.0
        %v3323 = vand.u32 %v398, 4294901760
        %v3324 = vsub.f32 %v398, %v3323
        %v3325 = vand.u32 %v3324, 4294901760
        %v3326 = vsub.f32 %v3324, %v3325
        %v3327 = vand.u32 %v3326, 4294901760
        %3328 = vmatpush1.msra.mxu0 %v3327
        %3329 = vmatprep.subr.mxu0 0.0
        %v3330 = vand.u32 %v399, 4294901760
        %v3331 = vsub.f32 %v399, %v3330
        %v3332 = vand.u32 %v3331, 4294901760
        %v3333 = vsub.f32 %v3331, %v3332
        %v3334 = vand.u32 %v3333, 4294901760
        %3335 = vmatpush1.msra.mxu0 %v3334
        %3336 = vmatprep.subr.mxu0 0.0
        %v3337 = vand.u32 %v400, 4294901760
        %v3338 = vsub.f32 %v400, %v3337
        %v3339 = vand.u32 %v3338, 4294901760
        %v3340 = vsub.f32 %v3338, %v3339
        %v3341 = vand.u32 %v3340, 4294901760
        %3342 = vmatpush1.msra.mxu0 %v3341
        %3343 = vmatprep.subr.mxu0 0.0
        %v3344 = vand.u32 %v401, 4294901760
        %v3345 = vsub.f32 %v401, %v3344
        %v3346 = vand.u32 %v3345, 4294901760
        %v3347 = vsub.f32 %v3345, %v3346
        %v3348 = vand.u32 %v3347, 4294901760
        %3349 = vmatpush1.msra.mxu0 %v3348
        %3350 = vmatprep.subr.mxu0 0.0
        %v3351 = vand.u32 %v402, 4294901760
        %v3352 = vsub.f32 %v402, %v3351
        %v3353 = vand.u32 %v3352, 4294901760
        %v3354 = vsub.f32 %v3352, %v3353
        %v3355 = vand.u32 %v3354, 4294901760
        %3356 = vmatpush1.msra.mxu0 %v3355
        %3357 = vmatprep.subr.mxu0 0.0
        %v3358 = vand.u32 %v403, 4294901760
        %v3359 = vsub.f32 %v403, %v3358
        %v3360 = vand.u32 %v3359, 4294901760
        %v3361 = vsub.f32 %v3359, %v3360
        %v3362 = vand.u32 %v3361, 4294901760
        %3363 = vmatpush1.msra.mxu0 %v3362
        %3364 = vmatprep.subr.mxu0 0.0
        %v3365 = vand.u32 %v404, 4294901760
        %v3366 = vsub.f32 %v404, %v3365
        %v3367 = vand.u32 %v3366, 4294901760
        %v3368 = vsub.f32 %v3366, %v3367
        %v3369 = vand.u32 %v3368, 4294901760
        %3370 = vmatpush1.msra.mxu0 %v3369
        %3371 = vmatprep.subr.mxu0 0.0
        %v3372 = vand.u32 %v405, 4294901760
        %v3373 = vsub.f32 %v405, %v3372
        %v3374 = vand.u32 %v3373, 4294901760
        %v3375 = vsub.f32 %v3373, %v3374
        %v3376 = vand.u32 %v3375, 4294901760
        %3377 = vmatpush1.msra.mxu0 %v3376
        %3378 = vmatprep.subr.mxu0 0.0
        %v3379 = vand.u32 %v406, 4294901760
        %v3380 = vsub.f32 %v406, %v3379
        %v3381 = vand.u32 %v3380, 4294901760
        %v3382 = vsub.f32 %v3380, %v3381
        %v3383 = vand.u32 %v3382, 4294901760
        %3384 = vmatpush1.msra.mxu0 %v3383
        %3385 = vmatprep.subr.mxu0 0.0
        %v3386 = vand.u32 %v407, 4294901760
        %v3387 = vsub.f32 %v407, %v3386
        %v3388 = vand.u32 %v3387, 4294901760
        %v3389 = vsub.f32 %v3387, %v3388
        %v3390 = vand.u32 %v3389, 4294901760
        %3391 = vmatpush1.msra.mxu0 %v3390
        %3392 = vmatprep.subr.mxu0 0.0
        %v3393 = vand.u32 %v408, 4294901760
        %v3394 = vsub.f32 %v408, %v3393
        %v3395 = vand.u32 %v3394, 4294901760
        %v3396 = vsub.f32 %v3394, %v3395
        %v3397 = vand.u32 %v3396, 4294901760
        %3398 = vmatpush1.msra.mxu0 %v3397
        %3399 = vmatprep.subr.mxu0 0.0
        %v3400 = vand.u32 %v409, 4294901760
        %v3401 = vsub.f32 %v409, %v3400
        %v3402 = vand.u32 %v3401, 4294901760
        %v3403 = vsub.f32 %v3401, %v3402
        %v3404 = vand.u32 %v3403, 4294901760
        %3405 = vmatpush1.msra.mxu0 %v3404
        %3406 = vmatprep.subr.mxu0 0.0
        %v3407 = vand.u32 %v410, 4294901760
        %v3408 = vsub.f32 %v410, %v3407
        %v3409 = vand.u32 %v3408, 4294901760
        %v3410 = vsub.f32 %v3408, %v3409
        %v3411 = vand.u32 %v3410, 4294901760
        %3412 = vmatpush1.msra.mxu0 %v3411
        %3413 = vmatprep.subr.mxu0 0.0
        %v3414 = vand.u32 %v411, 4294901760
        %v3415 = vsub.f32 %v411, %v3414
        %v3416 = vand.u32 %v3415, 4294901760
        %v3417 = vsub.f32 %v3415, %v3416
        %v3418 = vand.u32 %v3417, 4294901760
        %3419 = vmatpush1.msra.mxu0 %v3418
        %3420 = vmatprep.subr.mxu0 0.0
        %v3421 = vand.u32 %v412, 4294901760
        %v3422 = vsub.f32 %v412, %v3421
        %v3423 = vand.u32 %v3422, 4294901760
        %v3424 = vsub.f32 %v3422, %v3423
        %v3425 = vand.u32 %v3424, 4294901760
        %3426 = vmatpush1.msra.mxu0 %v3425
        %3427 = vmatprep.subr.mxu0 0.0
        %v3428 = vand.u32 %v413, 4294901760
        %v3429 = vsub.f32 %v413, %v3428
        %v3430 = vand.u32 %v3429, 4294901760
        %v3431 = vsub.f32 %v3429, %v3430
        %v3432 = vand.u32 %v3431, 4294901760
        %3433 = vmatpush1.msra.mxu0 %v3432
        %3434 = vmatprep.subr.mxu0 0.0
        %v3435 = vand.u32 %v414, 4294901760
        %v3436 = vsub.f32 %v414, %v3435
        %v3437 = vand.u32 %v3436, 4294901760
        %v3438 = vsub.f32 %v3436, %v3437
        %v3439 = vand.u32 %v3438, 4294901760
        %3440 = vmatpush1.msra.mxu0 %v3439
        %3441 = vmatprep.subr.mxu0 0.0
        %v3442 = vand.u32 %v415, 4294901760
        %v3443 = vsub.f32 %v415, %v3442
        %v3444 = vand.u32 %v3443, 4294901760
        %v3445 = vsub.f32 %v3443, %v3444
        %v3446 = vand.u32 %v3445, 4294901760
        %3447 = vmatpush1.msra.mxu0 %v3446
        %3448 = vmatprep.subr.mxu0 0.0
        %v3449 = vand.u32 %v416, 4294901760
        %v3450 = vsub.f32 %v416, %v3449
        %v3451 = vand.u32 %v3450, 4294901760
        %v3452 = vsub.f32 %v3450, %v3451
        %v3453 = vand.u32 %v3452, 4294901760
        %3454 = vmatpush1.msra.mxu0 %v3453
        %3455 = vmatprep.subr.mxu0 0.0
        %v3456 = vand.u32 %v417, 4294901760
        %v3457 = vsub.f32 %v417, %v3456
        %v3458 = vand.u32 %v3457, 4294901760
        %v3459 = vsub.f32 %v3457, %v3458
        %v3460 = vand.u32 %v3459, 4294901760
        %3461 = vmatpush1.msra.mxu0 %v3460
        %3462 = vmatprep.subr.mxu0 0.0
        %v3463 = vand.u32 %v418, 4294901760
        %v3464 = vsub.f32 %v418, %v3463
        %v3465 = vand.u32 %v3464, 4294901760
        %v3466 = vsub.f32 %v3464, %v3465
        %v3467 = vand.u32 %v3466, 4294901760
        %3468 = vmatpush1.msra.mxu0 %v3467
        %v3469 = vand.u32 %v282, 4294901760
        %3470 = vmatprep.mubr.f32.mxu0 %v3469
        %v3471 = vand.u32 %v281, 4294901760
        %3472 = vmatmul.mubr.f32.gmra.mrb[0].mxu0 %v3471
        %v3473 = vpop.f32.mrb[0].mxu0
        %v3474 = vadd.f32 %v3242, %v3473
        %v3475 = vpop.f32.mrb[0].mxu0
        %3476 = vdwg.mxu0
        %3477 = vmatprep.subr.mxu0 0.0
        %v3478 = vand.u32 %v387, 4294901760
        %v3479 = vsub.f32 %v387, %v3478
        %3480 = vmatpush1.msra.mxu0 %v3479
        %3481 = vmatprep.subr.mxu0 0.0
        %v3482 = vand.u32 %v388, 4294901760
        %v3483 = vsub.f32 %v388, %v3482
        %3484 = vmatpush1.msra.mxu0 %v3483
        %3485 = vmatprep.subr.mxu0 0.0
        %v3486 = vand.u32 %v389, 4294901760
        %v3487 = vsub.f32 %v389, %v3486
        %3488 = vmatpush1.msra.mxu0 %v3487
        %3489 = vmatprep.subr.mxu0 0.0
        %v3490 = vand.u32 %v390, 4294901760
        %v3491 = vsub.f32 %v390, %v3490
        %3492 = vmatpush1.msra.mxu0 %v3491
        %3493 = vmatprep.subr.mxu0 0.0
        %v3494 = vand.u32 %v391, 4294901760
        %v3495 = vsub.f32 %v391, %v3494
        %3496 = vmatpush1.msra.mxu0 %v3495
        %3497 = vmatprep.subr.mxu0 0.0
        %v3498 = vand.u32 %v392, 4294901760
        %v3499 = vsub.f32 %v392, %v3498
        %3500 = vmatpush1.msra.mxu0 %v3499
        %3501 = vmatprep.subr.mxu0 0.0
        %v3502 = vand.u32 %v393, 4294901760
        %v3503 = vsub.f32 %v393, %v3502
        %3504 = vmatpush1.msra.mxu0 %v3503
        %3505 = vmatprep.subr.mxu0 0.0
        %v3506 = vand.u32 %v394, 4294901760
        %v3507 = vsub.f32 %v394, %v3506
        %3508 = vmatpush1.msra.mxu0 %v3507
        %3509 = vmatprep.subr.mxu0 0.0
        %v3510 = vand.u32 %v395, 4294901760
        %v3511 = vsub.f32 %v395, %v3510
        %3512 = vmatpush1.msra.mxu0 %v3511
        %3513 = vmatprep.subr.mxu0 0.0
        %v3514 = vand.u32 %v396, 4294901760
        %v3515 = vsub.f32 %v396, %v3514
        %3516 = vmatpush1.msra.mxu0 %v3515
        %3517 = vmatprep.subr.mxu0 0.0
        %v3518 = vand.u32 %v397, 4294901760
        %v3519 = vsub.f32 %v397, %v3518
        %3520 = vmatpush1.msra.mxu0 %v3519
        %3521 = vmatprep.subr.mxu0 0.0
        %v3522 = vand.u32 %v398, 4294901760
        %v3523 = vsub.f32 %v398, %v3522
        %3524 = vmatpush1.msra.mxu0 %v3523
        %3525 = vmatprep.subr.mxu0 0.0
        %v3526 = vand.u32 %v399, 4294901760
        %v3527 = vsub.f32 %v399, %v3526
        %3528 = vmatpush1.msra.mxu0 %v3527
        %3529 = vmatprep.subr.mxu0 0.0
        %v3530 = vand.u32 %v400, 4294901760
        %v3531 = vsub.f32 %v400, %v3530
        %3532 = vmatpush1.msra.mxu0 %v3531
        %3533 = vmatprep.subr.mxu0 0.0
        %v3534 = vand.u32 %v401, 4294901760
        %v3535 = vsub.f32 %v401, %v3534
        %3536 = vmatpush1.msra.mxu0 %v3535
        %3537 = vmatprep.subr.mxu0 0.0
        %v3538 = vand.u32 %v402, 4294901760
        %v3539 = vsub.f32 %v402, %v3538
        %3540 = vmatpush1.msra.mxu0 %v3539
        %3541 = vmatprep.subr.mxu0 0.0
        %v3542 = vand.u32 %v403, 4294901760
        %v3543 = vsub.f32 %v403, %v3542
        %3544 = vmatpush1.msra.mxu0 %v3543
        %3545 = vmatprep.subr.mxu0 0.0
        %v3546 = vand.u32 %v404, 4294901760
        %v3547 = vsub.f32 %v404, %v3546
        %3548 = vmatpush1.msra.mxu0 %v3547
        %3549 = vmatprep.subr.mxu0 0.0
        %v3550 = vand.u32 %v405, 4294901760
        %v3551 = vsub.f32 %v405, %v3550
        %3552 = vmatpush1.msra.mxu0 %v3551
        %3553 = vmatprep.subr.mxu0 0.0
        %v3554 = vand.u32 %v406, 4294901760
        %v3555 = vsub.f32 %v406, %v3554
        %3556 = vmatpush1.msra.mxu0 %v3555
        %3557 = vmatprep.subr.mxu0 0.0
        %v3558 = vand.u32 %v407, 4294901760
        %v3559 = vsub.f32 %v407, %v3558
        %3560 = vmatpush1.msra.mxu0 %v3559
        %3561 = vmatprep.subr.mxu0 0.0
        %v3562 = vand.u32 %v408, 4294901760
        %v3563 = vsub.f32 %v408, %v3562
        %3564 = vmatpush1.msra.mxu0 %v3563
        %3565 = vmatprep.subr.mxu0 0.0
        %v3566 = vand.u32 %v409, 4294901760
        %v3567 = vsub.f32 %v409, %v3566
        %3568 = vmatpush1.msra.mxu0 %v3567
        %3569 = vmatprep.subr.mxu0 0.0
        %v3570 = vand.u32 %v410, 4294901760
        %v3571 = vsub.f32 %v410, %v3570
        %3572 = vmatpush1.msra.mxu0 %v3571
        %3573 = vmatprep.subr.mxu0 0.0
        %v3574 = vand.u32 %v411, 4294901760
        %v3575 = vsub.f32 %v411, %v3574
        %3576 = vmatpush1.msra.mxu0 %v3575
        %3577 = vmatprep.subr.mxu0 0.0
        %v3578 = vand.u32 %v412, 4294901760
        %v3579 = vsub.f32 %v412, %v3578
        %3580 = vmatpush1.msra.mxu0 %v3579
        %3581 = vmatprep.subr.mxu0 0.0
        %v3582 = vand.u32 %v413, 4294901760
        %v3583 = vsub.f32 %v413, %v3582
        %3584 = vmatpush1.msra.mxu0 %v3583
        %3585 = vmatprep.subr.mxu0 0.0
        %v3586 = vand.u32 %v414, 4294901760
        %v3587 = vsub.f32 %v414, %v3586
        %3588 = vmatpush1.msra.mxu0 %v3587
        %3589 = vmatprep.subr.mxu0 0.0
        %v3590 = vand.u32 %v415, 4294901760
        %v3591 = vsub.f32 %v415, %v3590
        %3592 = vmatpush1.msra.mxu0 %v3591
        %3593 = vmatprep.subr.mxu0 0.0
        %v3594 = vand.u32 %v416, 4294901760
        %v3595 = vsub.f32 %v416, %v3594
        %3596 = vmatpush1.msra.mxu0 %v3595
        %3597 = vmatprep.subr.mxu0 0.0
        %v3598 = vand.u32 %v417, 4294901760
        %v3599 = vsub.f32 %v417, %v3598
        %3600 = vmatpush1.msra.mxu0 %v3599
        %3601 = vmatprep.subr.mxu0 0.0
        %v3602 = vand.u32 %v418, 4294901760
        %v3603 = vsub.f32 %v418, %v3602
        %3604 = vmatpush1.msra.mxu0 %v3603
        %v3605 = vand.u32 %v282, 4294901760
        %v3606 = vsub.f32 %v282, %v3605
        %3607 = vmatprep.mubr.f32.mxu0 %v3606
        %v3608 = vand.u32 %v281, 4294901760
        %v3609 = vsub.f32 %v281, %v3608
        %3610 = vmatmul.mubr.f32.gmra.mrb[0].mxu0 %v3609
        %v3611 = vpop.f32.mrb[0].mxu0
        %v3612 = vadd.f32 %v3474, %v3611
        %v3613 = vpop.f32.mrb[0].mxu0
        %3614 = vdwg.mxu0
        %3615 = vmatprep.subr.mxu0 0.0
        %v3616 = vand.u32 %v387, 4294901760
        %3617 = vmatpush1.msra.mxu0 %v3616
        %3618 = vmatprep.subr.mxu0 0.0
        %v3619 = vand.u32 %v388, 4294901760
        %3620 = vmatpush1.msra.mxu0 %v3619
        %3621 = vmatprep.subr.mxu0 0.0
        %v3622 = vand.u32 %v389, 4294901760
        %3623 = vmatpush1.msra.mxu0 %v3622
        %3624 = vmatprep.subr.mxu0 0.0
        %v3625 = vand.u32 %v390, 4294901760
        %3626 = vmatpush1.msra.mxu0 %v3625
        %3627 = vmatprep.subr.mxu0 0.0
        %v3628 = vand.u32 %v391, 4294901760
        %3629 = vmatpush1.msra.mxu0 %v3628
        %3630 = vmatprep.subr.mxu0 0.0
        %v3631 = vand.u32 %v392, 4294901760
        %3632 = vmatpush1.msra.mxu0 %v3631
        %3633 = vmatprep.subr.mxu0 0.0
        %v3634 = vand.u32 %v393, 4294901760
        %3635 = vmatpush1.msra.mxu0 %v3634
        %3636 = vmatprep.subr.mxu0 0.0
        %v3637 = vand.u32 %v394, 4294901760
        %3638 = vmatpush1.msra.mxu0 %v3637
        %3639 = vmatprep.subr.mxu0 0.0
        %v3640 = vand.u32 %v395, 4294901760
        %3641 = vmatpush1.msra.mxu0 %v3640
        %3642 = vmatprep.subr.mxu0 0.0
        %v3643 = vand.u32 %v396, 4294901760
        %3644 = vmatpush1.msra.mxu0 %v3643
        %3645 = vmatprep.subr.mxu0 0.0
        %v3646 = vand.u32 %v397, 4294901760
        %3647 = vmatpush1.msra.mxu0 %v3646
        %3648 = vmatprep.subr.mxu0 0.0
        %v3649 = vand.u32 %v398, 4294901760
        %3650 = vmatpush1.msra.mxu0 %v3649
        %3651 = vmatprep.subr.mxu0 0.0
        %v3652 = vand.u32 %v399, 4294901760
        %3653 = vmatpush1.msra.mxu0 %v3652
        %3654 = vmatprep.subr.mxu0 0.0
        %v3655 = vand.u32 %v400, 4294901760
        %3656 = vmatpush1.msra.mxu0 %v3655
        %3657 = vmatprep.subr.mxu0 0.0
        %v3658 = vand.u32 %v401, 4294901760
        %3659 = vmatpush1.msra.mxu0 %v3658
        %3660 = vmatprep.subr.mxu0 0.0
        %v3661 = vand.u32 %v402, 4294901760
        %3662 = vmatpush1.msra.mxu0 %v3661
        %3663 = vmatprep.subr.mxu0 0.0
        %v3664 = vand.u32 %v403, 4294901760
        %3665 = vmatpush1.msra.mxu0 %v3664
        %3666 = vmatprep.subr.mxu0 0.0
        %v3667 = vand.u32 %v404, 4294901760
        %3668 = vmatpush1.msra.mxu0 %v3667
        %3669 = vmatprep.subr.mxu0 0.0
        %v3670 = vand.u32 %v405, 4294901760
        %3671 = vmatpush1.msra.mxu0 %v3670
        %3672 = vmatprep.subr.mxu0 0.0
        %v3673 = vand.u32 %v406, 4294901760
        %3674 = vmatpush1.msra.mxu0 %v3673
        %3675 = vmatprep.subr.mxu0 0.0
        %v3676 = vand.u32 %v407, 4294901760
        %3677 = vmatpush1.msra.mxu0 %v3676
        %3678 = vmatprep.subr.mxu0 0.0
        %v3679 = vand.u32 %v408, 4294901760
        %3680 = vmatpush1.msra.mxu0 %v3679
        %3681 = vmatprep.subr.mxu0 0.0
        %v3682 = vand.u32 %v409, 4294901760
        %3683 = vmatpush1.msra.mxu0 %v3682
        %3684 = vmatprep.subr.mxu0 0.0
        %v3685 = vand.u32 %v410, 4294901760
        %3686 = vmatpush1.msra.mxu0 %v3685
        %3687 = vmatprep.subr.mxu0 0.0
        %v3688 = vand.u32 %v411, 4294901760
        %3689 = vmatpush1.msra.mxu0 %v3688
        %3690 = vmatprep.subr.mxu0 0.0
        %v3691 = vand.u32 %v412, 4294901760
        %3692 = vmatpush1.msra.mxu0 %v3691
        %3693 = vmatprep.subr.mxu0 0.0
        %v3694 = vand.u32 %v413, 4294901760
        %3695 = vmatpush1.msra.mxu0 %v3694
        %3696 = vmatprep.subr.mxu0 0.0
        %v3697 = vand.u32 %v414, 4294901760
        %3698 = vmatpush1.msra.mxu0 %v3697
        %3699 = vmatprep.subr.mxu0 0.0
        %v3700 = vand.u32 %v415, 4294901760
        %3701 = vmatpush1.msra.mxu0 %v3700
        %3702 = vmatprep.subr.mxu0 0.0
        %v3703 = vand.u32 %v416, 4294901760
        %3704 = vmatpush1.msra.mxu0 %v3703
        %3705 = vmatprep.subr.mxu0 0.0
        %v3706 = vand.u32 %v417, 4294901760
        %3707 = vmatpush1.msra.mxu0 %v3706
        %3708 = vmatprep.subr.mxu0 0.0
        %v3709 = vand.u32 %v418, 4294901760
        %3710 = vmatpush1.msra.mxu0 %v3709
        %v3711 = vand.u32 %v282, 4294901760
        %v3712 = vsub.f32 %v282, %v3711
        %v3713 = vand.u32 %v3712, 4294901760
        %3714 = vmatprep.mubr.f32.mxu0 %v3713
        %v3715 = vand.u32 %v281, 4294901760
        %v3716 = vsub.f32 %v281, %v3715
        %v3717 = vand.u32 %v3716, 4294901760
        %3718 = vmatmul.mubr.f32.gmra.mrb[0].mxu0 %v3717
        %v3719 = vpop.f32.mrb[0].mxu0
        %v3720 = vadd.f32 %v3612, %v3719
        %v3721 = vpop.f32.mrb[0].mxu0
        %3722 = vdwg.mxu0
        %3723 = vmatprep.subr.mxu0 0.0
        %v3724 = vand.u32 %v387, 4294901760
        %v3725 = vsub.f32 %v387, %v3724
        %v3726 = vand.u32 %v3725, 4294901760
        %3727 = vmatpush1.msra.mxu0 %v3726
        %3728 = vmatprep.subr.mxu0 0.0
        %v3729 = vand.u32 %v388, 4294901760
        %v3730 = vsub.f32 %v388, %v3729
        %v3731 = vand.u32 %v3730, 4294901760
        %3732 = vmatpush1.msra.mxu0 %v3731
        %3733 = vmatprep.subr.mxu0 0.0
        %v3734 = vand.u32 %v389, 4294901760
        %v3735 = vsub.f32 %v389, %v3734
        %v3736 = vand.u32 %v3735, 4294901760
        %3737 = vmatpush1.msra.mxu0 %v3736
        %3738 = vmatprep.subr.mxu0 0.0
        %v3739 = vand.u32 %v390, 4294901760
        %v3740 = vsub.f32 %v390, %v3739
        %v3741 = vand.u32 %v3740, 4294901760
        %3742 = vmatpush1.msra.mxu0 %v3741
        %3743 = vmatprep.subr.mxu0 0.0
        %v3744 = vand.u32 %v391, 4294901760
        %v3745 = vsub.f32 %v391, %v3744
        %v3746 = vand.u32 %v3745, 4294901760
        %3747 = vmatpush1.msra.mxu0 %v3746
        %3748 = vmatprep.subr.mxu0 0.0
        %v3749 = vand.u32 %v392, 4294901760
        %v3750 = vsub.f32 %v392, %v3749
        %v3751 = vand.u32 %v3750, 4294901760
        %3752 = vmatpush1.msra.mxu0 %v3751
        %3753 = vmatprep.subr.mxu0 0.0
        %v3754 = vand.u32 %v393, 4294901760
        %v3755 = vsub.f32 %v393, %v3754
        %v3756 = vand.u32 %v3755, 4294901760
        %3757 = vmatpush1.msra.mxu0 %v3756
        %3758 = vmatprep.subr.mxu0 0.0
        %v3759 = vand.u32 %v394, 4294901760
        %v3760 = vsub.f32 %v394, %v3759
        %v3761 = vand.u32 %v3760, 4294901760
        %3762 = vmatpush1.msra.mxu0 %v3761
        %3763 = vmatprep.subr.mxu0 0.0
        %v3764 = vand.u32 %v395, 4294901760
        %v3765 = vsub.f32 %v395, %v3764
        %v3766 = vand.u32 %v3765, 4294901760
        %3767 = vmatpush1.msra.mxu0 %v3766
        %3768 = vmatprep.subr.mxu0 0.0
        %v3769 = vand.u32 %v396, 4294901760
        %v3770 = vsub.f32 %v396, %v3769
        %v3771 = vand.u32 %v3770, 4294901760
        %3772 = vmatpush1.msra.mxu0 %v3771
        %3773 = vmatprep.subr.mxu0 0.0
        %v3774 = vand.u32 %v397, 4294901760
        %v3775 = vsub.f32 %v397, %v3774
        %v3776 = vand.u32 %v3775, 4294901760
        %3777 = vmatpush1.msra.mxu0 %v3776
        %3778 = vmatprep.subr.mxu0 0.0
        %v3779 = vand.u32 %v398, 4294901760
        %v3780 = vsub.f32 %v398, %v3779
        %v3781 = vand.u32 %v3780, 4294901760
        %3782 = vmatpush1.msra.mxu0 %v3781
        %3783 = vmatprep.subr.mxu0 0.0
        %v3784 = vand.u32 %v399, 4294901760
        %v3785 = vsub.f32 %v399, %v3784
        %v3786 = vand.u32 %v3785, 4294901760
        %3787 = vmatpush1.msra.mxu0 %v3786
        %3788 = vmatprep.subr.mxu0 0.0
        %v3789 = vand.u32 %v400, 4294901760
        %v3790 = vsub.f32 %v400, %v3789
        %v3791 = vand.u32 %v3790, 4294901760
        %3792 = vmatpush1.msra.mxu0 %v3791
        %3793 = vmatprep.subr.mxu0 0.0
        %v3794 = vand.u32 %v401, 4294901760
        %v3795 = vsub.f32 %v401, %v3794
        %v3796 = vand.u32 %v3795, 4294901760
        %3797 = vmatpush1.msra.mxu0 %v3796
        %3798 = vmatprep.subr.mxu0 0.0
        %v3799 = vand.u32 %v402, 4294901760
        %v3800 = vsub.f32 %v402, %v3799
        %v3801 = vand.u32 %v3800, 4294901760
        %3802 = vmatpush1.msra.mxu0 %v3801
        %3803 = vmatprep.subr.mxu0 0.0
        %v3804 = vand.u32 %v403, 4294901760
        %v3805 = vsub.f32 %v403, %v3804
        %v3806 = vand.u32 %v3805, 4294901760
        %3807 = vmatpush1.msra.mxu0 %v3806
        %3808 = vmatprep.subr.mxu0 0.0
        %v3809 = vand.u32 %v404, 4294901760
        %v3810 = vsub.f32 %v404, %v3809
        %v3811 = vand.u32 %v3810, 4294901760
        %3812 = vmatpush1.msra.mxu0 %v3811
        %3813 = vmatprep.subr.mxu0 0.0
        %v3814 = vand.u32 %v405, 4294901760
        %v3815 = vsub.f32 %v405, %v3814
        %v3816 = vand.u32 %v3815, 4294901760
        %3817 = vmatpush1.msra.mxu0 %v3816
        %3818 = vmatprep.subr.mxu0 0.0
        %v3819 = vand.u32 %v406, 4294901760
        %v3820 = vsub.f32 %v406, %v3819
        %v3821 = vand.u32 %v3820, 4294901760
        %3822 = vmatpush1.msra.mxu0 %v3821
        %3823 = vmatprep.subr.mxu0 0.0
        %v3824 = vand.u32 %v407, 4294901760
        %v3825 = vsub.f32 %v407, %v3824
        %v3826 = vand.u32 %v3825, 4294901760
        %3827 = vmatpush1.msra.mxu0 %v3826
        %3828 = vmatprep.subr.mxu0 0.0
        %v3829 = vand.u32 %v408, 4294901760
        %v3830 = vsub.f32 %v408, %v3829
        %v3831 = vand.u32 %v3830, 4294901760
        %3832 = vmatpush1.msra.mxu0 %v3831
        %3833 = vmatprep.subr.mxu0 0.0
        %v3834 = vand.u32 %v409, 4294901760
        %v3835 = vsub.f32 %v409, %v3834
        %v3836 = vand.u32 %v3835, 4294901760
        %3837 = vmatpush1.msra.mxu0 %v3836
        %3838 = vmatprep.subr.mxu0 0.0
        %v3839 = vand.u32 %v410, 4294901760
        %v3840 = vsub.f32 %v410, %v3839
        %v3841 = vand.u32 %v3840, 4294901760
        %3842 = vmatpush1.msra.mxu0 %v3841
        %3843 = vmatprep.subr.mxu0 0.0
        %v3844 = vand.u32 %v411, 4294901760
        %v3845 = vsub.f32 %v411, %v3844
        %v3846 = vand.u32 %v3845, 4294901760
        %3847 = vmatpush1.msra.mxu0 %v3846
        %3848 = vmatprep.subr.mxu0 0.0
        %v3849 = vand.u32 %v412, 4294901760
        %v3850 = vsub.f32 %v412, %v3849
        %v3851 = vand.u32 %v3850, 4294901760
        %3852 = vmatpush1.msra.mxu0 %v3851
        %3853 = vmatprep.subr.mxu0 0.0
        %v3854 = vand.u32 %v413, 4294901760
        %v3855 = vsub.f32 %v413, %v3854
        %v3856 = vand.u32 %v3855, 4294901760
        %3857 = vmatpush1.msra.mxu0 %v3856
        %3858 = vmatprep.subr.mxu0 0.0
        %v3859 = vand.u32 %v414, 4294901760
        %v3860 = vsub.f32 %v414, %v3859
        %v3861 = vand.u32 %v3860, 4294901760
        %3862 = vmatpush1.msra.mxu0 %v3861
        %3863 = vmatprep.subr.mxu0 0.0
        %v3864 = vand.u32 %v415, 4294901760
        %v3865 = vsub.f32 %v415, %v3864
        %v3866 = vand.u32 %v3865, 4294901760
        %3867 = vmatpush1.msra.mxu0 %v3866
        %3868 = vmatprep.subr.mxu0 0.0
        %v3869 = vand.u32 %v416, 4294901760
        %v3870 = vsub.f32 %v416, %v3869
        %v3871 = vand.u32 %v3870, 4294901760
        %3872 = vmatpush1.msra.mxu0 %v3871
        %3873 = vmatprep.subr.mxu0 0.0
        %v3874 = vand.u32 %v417, 4294901760
        %v3875 = vsub.f32 %v417, %v3874
        %v3876 = vand.u32 %v3875, 4294901760
        %3877 = vmatpush1.msra.mxu0 %v3876
        %3878 = vmatprep.subr.mxu0 0.0
        %v3879 = vand.u32 %v418, 4294901760
        %v3880 = vsub.f32 %v418, %v3879
        %v3881 = vand.u32 %v3880, 4294901760
        %3882 = vmatpush1.msra.mxu0 %v3881
        %v3883 = vand.u32 %v282, 4294901760
        %3884 = vmatprep.mubr.f32.mxu0 %v3883
        %v3885 = vand.u32 %v281, 4294901760
        %3886 = vmatmul.mubr.f32.gmra.mrb[0].mxu0 %v3885
        %v3887 = vpop.f32.mrb[0].mxu0
        %v3888 = vadd.f32 %v3720, %v3887
        %v3889 = vpop.f32.mrb[0].mxu0
        %3890 = vdwg.mxu0
        %3891 = vmatprep.subr.mxu0 0.0
        %v3892 = vand.u32 %v387, 4294901760
        %3893 = vmatpush1.msra.mxu0 %v3892
        %3894 = vmatprep.subr.mxu0 0.0
        %v3895 = vand.u32 %v388, 4294901760
        %3896 = vmatpush1.msra.mxu0 %v3895
        %3897 = vmatprep.subr.mxu0 0.0
        %v3898 = vand.u32 %v389, 4294901760
        %3899 = vmatpush1.msra.mxu0 %v3898
        %3900 = vmatprep.subr.mxu0 0.0
        %v3901 = vand.u32 %v390, 4294901760
        %3902 = vmatpush1.msra.mxu0 %v3901
        %3903 = vmatprep.subr.mxu0 0.0
        %v3904 = vand.u32 %v391, 4294901760
        %3905 = vmatpush1.msra.mxu0 %v3904
        %3906 = vmatprep.subr.mxu0 0.0
        %v3907 = vand.u32 %v392, 4294901760
        %3908 = vmatpush1.msra.mxu0 %v3907
        %3909 = vmatprep.subr.mxu0 0.0
        %v3910 = vand.u32 %v393, 4294901760
        %3911 = vmatpush1.msra.mxu0 %v3910
        %3912 = vmatprep.subr.mxu0 0.0
        %v3913 = vand.u32 %v394, 4294901760
        %3914 = vmatpush1.msra.mxu0 %v3913
        %3915 = vmatprep.subr.mxu0 0.0
        %v3916 = vand.u32 %v395, 4294901760
        %3917 = vmatpush1.msra.mxu0 %v3916
        %3918 = vmatprep.subr.mxu0 0.0
        %v3919 = vand.u32 %v396, 4294901760
        %3920 = vmatpush1.msra.mxu0 %v3919
        %3921 = vmatprep.subr.mxu0 0.0
        %v3922 = vand.u32 %v397, 4294901760
        %3923 = vmatpush1.msra.mxu0 %v3922
        %3924 = vmatprep.subr.mxu0 0.0
        %v3925 = vand.u32 %v398, 4294901760
        %3926 = vmatpush1.msra.mxu0 %v3925
        %3927 = vmatprep.subr.mxu0 0.0
        %v3928 = vand.u32 %v399, 4294901760
        %3929 = vmatpush1.msra.mxu0 %v3928
        %3930 = vmatprep.subr.mxu0 0.0
        %v3931 = vand.u32 %v400, 4294901760
        %3932 = vmatpush1.msra.mxu0 %v3931
        %3933 = vmatprep.subr.mxu0 0.0
        %v3934 = vand.u32 %v401, 4294901760
        %3935 = vmatpush1.msra.mxu0 %v3934
        %3936 = vmatprep.subr.mxu0 0.0
        %v3937 = vand.u32 %v402, 4294901760
        %3938 = vmatpush1.msra.mxu0 %v3937
        %3939 = vmatprep.subr.mxu0 0.0
        %v3940 = vand.u32 %v403, 4294901760
        %3941 = vmatpush1.msra.mxu0 %v3940
        %3942 = vmatprep.subr.mxu0 0.0
        %v3943 = vand.u32 %v404, 4294901760
        %3944 = vmatpush1.msra.mxu0 %v3943
        %3945 = vmatprep.subr.mxu0 0.0
        %v3946 = vand.u32 %v405, 4294901760
        %3947 = vmatpush1.msra.mxu0 %v3946
        %3948 = vmatprep.subr.mxu0 0.0
        %v3949 = vand.u32 %v406, 4294901760
        %3950 = vmatpush1.msra.mxu0 %v3949
        %3951 = vmatprep.subr.mxu0 0.0
        %v3952 = vand.u32 %v407, 4294901760
        %3953 = vmatpush1.msra.mxu0 %v3952
        %3954 = vmatprep.subr.mxu0 0.0
        %v3955 = vand.u32 %v408, 4294901760
        %3956 = vmatpush1.msra.mxu0 %v3955
        %3957 = vmatprep.subr.mxu0 0.0
        %v3958 = vand.u32 %v409, 4294901760
        %3959 = vmatpush1.msra.mxu0 %v3958
        %3960 = vmatprep.subr.mxu0 0.0
        %v3961 = vand.u32 %v410, 4294901760
        %3962 = vmatpush1.msra.mxu0 %v3961
        %3963 = vmatprep.subr.mxu0 0.0
        %v3964 = vand.u32 %v411, 4294901760
        %3965 = vmatpush1.msra.mxu0 %v3964
        %3966 = vmatprep.subr.mxu0 0.0
        %v3967 = vand.u32 %v412, 4294901760
        %3968 = vmatpush1.msra.mxu0 %v3967
        %3969 = vmatprep.subr.mxu0 0.0
        %v3970 = vand.u32 %v413, 4294901760
        %3971 = vmatpush1.msra.mxu0 %v3970
        %3972 = vmatprep.subr.mxu0 0.0
        %v3973 = vand.u32 %v414, 4294901760
        %3974 = vmatpush1.msra.mxu0 %v3973
        %3975 = vmatprep.subr.mxu0 0.0
        %v3976 = vand.u32 %v415, 4294901760
        %3977 = vmatpush1.msra.mxu0 %v3976
        %3978 = vmatprep.subr.mxu0 0.0
        %v3979 = vand.u32 %v416, 4294901760
        %3980 = vmatpush1.msra.mxu0 %v3979
        %3981 = vmatprep.subr.mxu0 0.0
        %v3982 = vand.u32 %v417, 4294901760
        %3983 = vmatpush1.msra.mxu0 %v3982
        %3984 = vmatprep.subr.mxu0 0.0
        %v3985 = vand.u32 %v418, 4294901760
        %3986 = vmatpush1.msra.mxu0 %v3985
        %v3987 = vand.u32 %v282, 4294901760
        %3988 = vmatprep.mubr.f32.mxu0 %v3987
        %v3989 = vand.u32 %v281, 4294901760
        %3990 = vmatmul.mubr.f32.gmra.mrb[0].mxu0 %v3989
        %v3991 = vpop.f32.mrb[0].mxu0
        %v3992 = vadd.f32 %v3888, %v3991
        %v3993 = vpop.f32.mrb[0].mxu0
        %3994 = vdwg.mxu0
        %3995 = vmatprep.subr.mxu0 0.0
        %v3996 = vand.u32 %v419, 4294901760
        %3997 = vmatpush1.msra.mxu0 %v3996
        %3998 = vmatprep.subr.mxu0 0.0
        %v3999 = vand.u32 %v420, 4294901760
        %4000 = vmatpush1.msra.mxu0 %v3999
        %4001 = vmatprep.subr.mxu0 0.0
        %v4002 = vand.u32 %v421, 4294901760
        %4003 = vmatpush1.msra.mxu0 %v4002
        %4004 = vmatprep.subr.mxu0 0.0
        %v4005 = vand.u32 %v422, 4294901760
        %4006 = vmatpush1.msra.mxu0 %v4005
        %4007 = vmatprep.subr.mxu0 0.0
        %v4008 = vand.u32 %v423, 4294901760
        %4009 = vmatpush1.msra.mxu0 %v4008
        %4010 = vmatprep.subr.mxu0 0.0
        %v4011 = vand.u32 %v424, 4294901760
        %4012 = vmatpush1.msra.mxu0 %v4011
        %4013 = vmatprep.subr.mxu0 0.0
        %v4014 = vand.u32 %v425, 4294901760
        %4015 = vmatpush1.msra.mxu0 %v4014
        %4016 = vmatprep.subr.mxu0 0.0
        %v4017 = vand.u32 %v426, 4294901760
        %4018 = vmatpush1.msra.mxu0 %v4017
        %4019 = vmatprep.subr.mxu0 0.0
        %v4020 = vand.u32 %v427, 4294901760
        %4021 = vmatpush1.msra.mxu0 %v4020
        %4022 = vmatprep.subr.mxu0 0.0
        %v4023 = vand.u32 %v428, 4294901760
        %4024 = vmatpush1.msra.mxu0 %v4023
        %4025 = vmatprep.subr.mxu0 0.0
        %v4026 = vand.u32 %v429, 4294901760
        %4027 = vmatpush1.msra.mxu0 %v4026
        %4028 = vmatprep.subr.mxu0 0.0
        %v4029 = vand.u32 %v430, 4294901760
        %4030 = vmatpush1.msra.mxu0 %v4029
        %4031 = vmatprep.subr.mxu0 0.0
        %v4032 = vand.u32 %v431, 4294901760
        %4033 = vmatpush1.msra.mxu0 %v4032
        %4034 = vmatprep.subr.mxu0 0.0
        %v4035 = vand.u32 %v432, 4294901760
        %4036 = vmatpush1.msra.mxu0 %v4035
        %4037 = vmatprep.subr.mxu0 0.0
        %v4038 = vand.u32 %v433, 4294901760
        %4039 = vmatpush1.msra.mxu0 %v4038
        %4040 = vmatprep.subr.mxu0 0.0
        %v4041 = vand.u32 %v434, 4294901760
        %4042 = vmatpush1.msra.mxu0 %v4041
        %4043 = vmatprep.subr.mxu0 0.0
        %v4044 = vand.u32 %v435, 4294901760
        %4045 = vmatpush1.msra.mxu0 %v4044
        %4046 = vmatprep.subr.mxu0 0.0
        %v4047 = vand.u32 %v436, 4294901760
        %4048 = vmatpush1.msra.mxu0 %v4047
        %4049 = vmatprep.subr.mxu0 0.0
        %v4050 = vand.u32 %v437, 4294901760
        %4051 = vmatpush1.msra.mxu0 %v4050
        %4052 = vmatprep.subr.mxu0 0.0
        %v4053 = vand.u32 %v438, 4294901760
        %4054 = vmatpush1.msra.mxu0 %v4053
        %4055 = vmatprep.subr.mxu0 0.0
        %v4056 = vand.u32 %v439, 4294901760
        %4057 = vmatpush1.msra.mxu0 %v4056
        %4058 = vmatprep.subr.mxu0 0.0
        %v4059 = vand.u32 %v440, 4294901760
        %4060 = vmatpush1.msra.mxu0 %v4059
        %4061 = vmatprep.subr.mxu0 0.0
        %v4062 = vand.u32 %v441, 4294901760
        %4063 = vmatpush1.msra.mxu0 %v4062
        %4064 = vmatprep.subr.mxu0 0.0
        %v4065 = vand.u32 %v442, 4294901760
        %4066 = vmatpush1.msra.mxu0 %v4065
        %4067 = vmatprep.subr.mxu0 0.0
        %v4068 = vand.u32 %v443, 4294901760
        %4069 = vmatpush1.msra.mxu0 %v4068
        %4070 = vmatprep.subr.mxu0 0.0
        %v4071 = vand.u32 %v444, 4294901760
        %4072 = vmatpush1.msra.mxu0 %v4071
        %4073 = vmatprep.subr.mxu0 0.0
        %v4074 = vand.u32 %v445, 4294901760
        %4075 = vmatpush1.msra.mxu0 %v4074
        %4076 = vmatprep.subr.mxu0 0.0
        %v4077 = vand.u32 %v446, 4294901760
        %4078 = vmatpush1.msra.mxu0 %v4077
        %4079 = vmatprep.subr.mxu0 0.0
        %v4080 = vand.u32 %v447, 4294901760
        %4081 = vmatpush1.msra.mxu0 %v4080
        %4082 = vmatprep.subr.mxu0 0.0
        %v4083 = vand.u32 %v448, 4294901760
        %4084 = vmatpush1.msra.mxu0 %v4083
        %4085 = vmatprep.subr.mxu0 0.0
        %v4086 = vand.u32 %v449, 4294901760
        %4087 = vmatpush1.msra.mxu0 %v4086
        %4088 = vmatprep.subr.mxu0 0.0
        %v4089 = vand.u32 %v450, 4294901760
        %4090 = vmatpush1.msra.mxu0 %v4089
        %v4091 = vand.u32 %v284, 4294901760
        %v4092 = vsub.f32 %v284, %v4091
        %v4093 = vand.u32 %v4092, 4294901760
        %v4094 = vsub.f32 %v4092, %v4093
        %v4095 = vand.u32 %v4094, 4294901760
        %4096 = vmatprep.mubr.f32.mxu0 %v4095
        %v4097 = vand.u32 %v283, 4294901760
        %v4098 = vsub.f32 %v283, %v4097
        %v4099 = vand.u32 %v4098, 4294901760
        %v4100 = vsub.f32 %v4098, %v4099
        %v4101 = vand.u32 %v4100, 4294901760
        %4102 = vmatmul.mubr.f32.gmra.mrb[0].mxu0 %v4101
        %v4103 = vpop.f32.mrb[0].mxu0
        %v4104 = vadd.f32 %v3992, %v4103
        %v4105 = vpop.f32.mrb[0].mxu0
        %4106 = vdwg.mxu0
        %4107 = vmatprep.subr.mxu0 0.0
        %v4108 = vand.u32 %v419, 4294901760
        %v4109 = vsub.f32 %v419, %v4108
        %v4110 = vand.u32 %v4109, 4294901760
        %v4111 = vsub.f32 %v4109, %v4110
        %v4112 = vand.u32 %v4111, 4294901760
        %4113 = vmatpush1.msra.mxu0 %v4112
        %4114 = vmatprep.subr.mxu0 0.0
        %v4115 = vand.u32 %v420, 4294901760
        %v4116 = vsub.f32 %v420, %v4115
        %v4117 = vand.u32 %v4116, 4294901760
        %v4118 = vsub.f32 %v4116, %v4117
        %v4119 = vand.u32 %v4118, 4294901760
        %4120 = vmatpush1.msra.mxu0 %v4119
        %4121 = vmatprep.subr.mxu0 0.0
        %v4122 = vand.u32 %v421, 4294901760
        %v4123 = vsub.f32 %v421, %v4122
        %v4124 = vand.u32 %v4123, 4294901760
        %v4125 = vsub.f32 %v4123, %v4124
        %v4126 = vand.u32 %v4125, 4294901760
        %4127 = vmatpush1.msra.mxu0 %v4126
        %4128 = vmatprep.subr.mxu0 0.0
        %v4129 = vand.u32 %v422, 4294901760
        %v4130 = vsub.f32 %v422, %v4129
        %v4131 = vand.u32 %v4130, 4294901760
        %v4132 = vsub.f32 %v4130, %v4131
        %v4133 = vand.u32 %v4132, 4294901760
        %4134 = vmatpush1.msra.mxu0 %v4133
        %4135 = vmatprep.subr.mxu0 0.0
        %v4136 = vand.u32 %v423, 4294901760
        %v4137 = vsub.f32 %v423, %v4136
        %v4138 = vand.u32 %v4137, 4294901760
        %v4139 = vsub.f32 %v4137, %v4138
        %v4140 = vand.u32 %v4139, 4294901760
        %4141 = vmatpush1.msra.mxu0 %v4140
        %4142 = vmatprep.subr.mxu0 0.0
        %v4143 = vand.u32 %v424, 4294901760
        %v4144 = vsub.f32 %v424, %v4143
        %v4145 = vand.u32 %v4144, 4294901760
        %v4146 = vsub.f32 %v4144, %v4145
        %v4147 = vand.u32 %v4146, 4294901760
        %4148 = vmatpush1.msra.mxu0 %v4147
        %4149 = vmatprep.subr.mxu0 0.0
        %v4150 = vand.u32 %v425, 4294901760
        %v4151 = vsub.f32 %v425, %v4150
        %v4152 = vand.u32 %v4151, 4294901760
        %v4153 = vsub.f32 %v4151, %v4152
        %v4154 = vand.u32 %v4153, 4294901760
        %4155 = vmatpush1.msra.mxu0 %v4154
        %4156 = vmatprep.subr.mxu0 0.0
        %v4157 = vand.u32 %v426, 4294901760
        %v4158 = vsub.f32 %v426, %v4157
        %v4159 = vand.u32 %v4158, 4294901760
        %v4160 = vsub.f32 %v4158, %v4159
        %v4161 = vand.u32 %v4160, 4294901760
        %4162 = vmatpush1.msra.mxu0 %v4161
        %4163 = vmatprep.subr.mxu0 0.0
        %v4164 = vand.u32 %v427, 4294901760
        %v4165 = vsub.f32 %v427, %v4164
        %v4166 = vand.u32 %v4165, 4294901760
        %v4167 = vsub.f32 %v4165, %v4166
        %v4168 = vand.u32 %v4167, 4294901760
        %4169 = vmatpush1.msra.mxu0 %v4168
        %4170 = vmatprep.subr.mxu0 0.0
        %v4171 = vand.u32 %v428, 4294901760
        %v4172 = vsub.f32 %v428, %v4171
        %v4173 = vand.u32 %v4172, 4294901760
        %v4174 = vsub.f32 %v4172, %v4173
        %v4175 = vand.u32 %v4174, 4294901760
        %4176 = vmatpush1.msra.mxu0 %v4175
        %4177 = vmatprep.subr.mxu0 0.0
        %v4178 = vand.u32 %v429, 4294901760
        %v4179 = vsub.f32 %v429, %v4178
        %v4180 = vand.u32 %v4179, 4294901760
        %v4181 = vsub.f32 %v4179, %v4180
        %v4182 = vand.u32 %v4181, 4294901760
        %4183 = vmatpush1.msra.mxu0 %v4182
        %4184 = vmatprep.subr.mxu0 0.0
        %v4185 = vand.u32 %v430, 4294901760
        %v4186 = vsub.f32 %v430, %v4185
        %v4187 = vand.u32 %v4186, 4294901760
        %v4188 = vsub.f32 %v4186, %v4187
        %v4189 = vand.u32 %v4188, 4294901760
        %4190 = vmatpush1.msra.mxu0 %v4189
        %4191 = vmatprep.subr.mxu0 0.0
        %v4192 = vand.u32 %v431, 4294901760
        %v4193 = vsub.f32 %v431, %v4192
        %v4194 = vand.u32 %v4193, 4294901760
        %v4195 = vsub.f32 %v4193, %v4194
        %v4196 = vand.u32 %v4195, 4294901760
        %4197 = vmatpush1.msra.mxu0 %v4196
        %4198 = vmatprep.subr.mxu0 0.0
        %v4199 = vand.u32 %v432, 4294901760
        %v4200 = vsub.f32 %v432, %v4199
        %v4201 = vand.u32 %v4200, 4294901760
        %v4202 = vsub.f32 %v4200, %v4201
        %v4203 = vand.u32 %v4202, 4294901760
        %4204 = vmatpush1.msra.mxu0 %v4203
        %4205 = vmatprep.subr.mxu0 0.0
        %v4206 = vand.u32 %v433, 4294901760
        %v4207 = vsub.f32 %v433, %v4206
        %v4208 = vand.u32 %v4207, 4294901760
        %v4209 = vsub.f32 %v4207, %v4208
        %v4210 = vand.u32 %v4209, 4294901760
        %4211 = vmatpush1.msra.mxu0 %v4210
        %4212 = vmatprep.subr.mxu0 0.0
        %v4213 = vand.u32 %v434, 4294901760
        %v4214 = vsub.f32 %v434, %v4213
        %v4215 = vand.u32 %v4214, 4294901760
        %v4216 = vsub.f32 %v4214, %v4215
        %v4217 = vand.u32 %v4216, 4294901760
        %4218 = vmatpush1.msra.mxu0 %v4217
        %4219 = vmatprep.subr.mxu0 0.0
        %v4220 = vand.u32 %v435, 4294901760
        %v4221 = vsub.f32 %v435, %v4220
        %v4222 = vand.u32 %v4221, 4294901760
        %v4223 = vsub.f32 %v4221, %v4222
        %v4224 = vand.u32 %v4223, 4294901760
        %4225 = vmatpush1.msra.mxu0 %v4224
        %4226 = vmatprep.subr.mxu0 0.0
        %v4227 = vand.u32 %v436, 4294901760
        %v4228 = vsub.f32 %v436, %v4227
        %v4229 = vand.u32 %v4228, 4294901760
        %v4230 = vsub.f32 %v4228, %v4229
        %v4231 = vand.u32 %v4230, 4294901760
        %4232 = vmatpush1.msra.mxu0 %v4231
        %4233 = vmatprep.subr.mxu0 0.0
        %v4234 = vand.u32 %v437, 4294901760
        %v4235 = vsub.f32 %v437, %v4234
        %v4236 = vand.u32 %v4235, 4294901760
        %v4237 = vsub.f32 %v4235, %v4236
        %v4238 = vand.u32 %v4237, 4294901760
        %4239 = vmatpush1.msra.mxu0 %v4238
        %4240 = vmatprep.subr.mxu0 0.0
        %v4241 = vand.u32 %v438, 4294901760
        %v4242 = vsub.f32 %v438, %v4241
        %v4243 = vand.u32 %v4242, 4294901760
        %v4244 = vsub.f32 %v4242, %v4243
        %v4245 = vand.u32 %v4244, 4294901760
        %4246 = vmatpush1.msra.mxu0 %v4245
        %4247 = vmatprep.subr.mxu0 0.0
        %v4248 = vand.u32 %v439, 4294901760
        %v4249 = vsub.f32 %v439, %v4248
        %v4250 = vand.u32 %v4249, 4294901760
        %v4251 = vsub.f32 %v4249, %v4250
        %v4252 = vand.u32 %v4251, 4294901760
        %4253 = vmatpush1.msra.mxu0 %v4252
        %4254 = vmatprep.subr.mxu0 0.0
        %v4255 = vand.u32 %v440, 4294901760
        %v4256 = vsub.f32 %v440, %v4255
        %v4257 = vand.u32 %v4256, 4294901760
        %v4258 = vsub.f32 %v4256, %v4257
        %v4259 = vand.u32 %v4258, 4294901760
        %4260 = vmatpush1.msra.mxu0 %v4259
        %4261 = vmatprep.subr.mxu0 0.0
        %v4262 = vand.u32 %v441, 4294901760
        %v4263 = vsub.f32 %v441, %v4262
        %v4264 = vand.u32 %v4263, 4294901760
        %v4265 = vsub.f32 %v4263, %v4264
        %v4266 = vand.u32 %v4265, 4294901760
        %4267 = vmatpush1.msra.mxu0 %v4266
        %4268 = vmatprep.subr.mxu0 0.0
        %v4269 = vand.u32 %v442, 4294901760
        %v4270 = vsub.f32 %v442, %v4269
        %v4271 = vand.u32 %v4270, 4294901760
        %v4272 = vsub.f32 %v4270, %v4271
        %v4273 = vand.u32 %v4272, 4294901760
        %4274 = vmatpush1.msra.mxu0 %v4273
        %4275 = vmatprep.subr.mxu0 0.0
        %v4276 = vand.u32 %v443, 4294901760
        %v4277 = vsub.f32 %v443, %v4276
        %v4278 = vand.u32 %v4277, 4294901760
        %v4279 = vsub.f32 %v4277, %v4278
        %v4280 = vand.u32 %v4279, 4294901760
        %4281 = vmatpush1.msra.mxu0 %v4280
        %4282 = vmatprep.subr.mxu0 0.0
        %v4283 = vand.u32 %v444, 4294901760
        %v4284 = vsub.f32 %v444, %v4283
        %v4285 = vand.u32 %v4284, 4294901760
        %v4286 = vsub.f32 %v4284, %v4285
        %v4287 = vand.u32 %v4286, 4294901760
        %4288 = vmatpush1.msra.mxu0 %v4287
        %4289 = vmatprep.subr.mxu0 0.0
        %v4290 = vand.u32 %v445, 4294901760
        %v4291 = vsub.f32 %v445, %v4290
        %v4292 = vand.u32 %v4291, 4294901760
        %v4293 = vsub.f32 %v4291, %v4292
        %v4294 = vand.u32 %v4293, 4294901760
        %4295 = vmatpush1.msra.mxu0 %v4294
        %4296 = vmatprep.subr.mxu0 0.0
        %v4297 = vand.u32 %v446, 4294901760
        %v4298 = vsub.f32 %v446, %v4297
        %v4299 = vand.u32 %v4298, 4294901760
        %v4300 = vsub.f32 %v4298, %v4299
        %v4301 = vand.u32 %v4300, 4294901760
        %4302 = vmatpush1.msra.mxu0 %v4301
        %4303 = vmatprep.subr.mxu0 0.0
        %v4304 = vand.u32 %v447, 4294901760
        %v4305 = vsub.f32 %v447, %v4304
        %v4306 = vand.u32 %v4305, 4294901760
        %v4307 = vsub.f32 %v4305, %v4306
        %v4308 = vand.u32 %v4307, 4294901760
        %4309 = vmatpush1.msra.mxu0 %v4308
        %4310 = vmatprep.subr.mxu0 0.0
        %v4311 = vand.u32 %v448, 4294901760
        %v4312 = vsub.f32 %v448, %v4311
        %v4313 = vand.u32 %v4312, 4294901760
        %v4314 = vsub.f32 %v4312, %v4313
        %v4315 = vand.u32 %v4314, 4294901760
        %4316 = vmatpush1.msra.mxu0 %v4315
        %4317 = vmatprep.subr.mxu0 0.0
        %v4318 = vand.u32 %v449, 4294901760
        %v4319 = vsub.f32 %v449, %v4318
        %v4320 = vand.u32 %v4319, 4294901760
        %v4321 = vsub.f32 %v4319, %v4320
        %v4322 = vand.u32 %v4321, 4294901760
        %4323 = vmatpush1.msra.mxu0 %v4322
        %4324 = vmatprep.subr.mxu0 0.0
        %v4325 = vand.u32 %v450, 4294901760
        %v4326 = vsub.f32 %v450, %v4325
        %v4327 = vand.u32 %v4326, 4294901760
        %v4328 = vsub.f32 %v4326, %v4327
        %v4329 = vand.u32 %v4328, 4294901760
        %4330 = vmatpush1.msra.mxu0 %v4329
        %v4331 = vand.u32 %v284, 4294901760
        %4332 = vmatprep.mubr.f32.mxu0 %v4331
        %v4333 = vand.u32 %v283, 4294901760
        %4334 = vmatmul.mubr.f32.gmra.mrb[0].mxu0 %v4333
        %v4335 = vpop.f32.mrb[0].mxu0
        %v4336 = vadd.f32 %v4104, %v4335
        %v4337 = vpop.f32.mrb[0].mxu0
        %4338 = vdwg.mxu0
        %4339 = vmatprep.subr.mxu0 0.0
        %v4340 = vand.u32 %v419, 4294901760
        %v4341 = vsub.f32 %v419, %v4340
        %4342 = vmatpush1.msra.mxu0 %v4341
        %4343 = vmatprep.subr.mxu0 0.0
        %v4344 = vand.u32 %v420, 4294901760
        %v4345 = vsub.f32 %v420, %v4344
        %4346 = vmatpush1.msra.mxu0 %v4345
        %4347 = vmatprep.subr.mxu0 0.0
        %v4348 = vand.u32 %v421, 4294901760
        %v4349 = vsub.f32 %v421, %v4348
        %4350 = vmatpush1.msra.mxu0 %v4349
        %4351 = vmatprep.subr.mxu0 0.0
        %v4352 = vand.u32 %v422, 4294901760
        %v4353 = vsub.f32 %v422, %v4352
        %4354 = vmatpush1.msra.mxu0 %v4353
        %4355 = vmatprep.subr.mxu0 0.0
        %v4356 = vand.u32 %v423, 4294901760
        %v4357 = vsub.f32 %v423, %v4356
        %4358 = vmatpush1.msra.mxu0 %v4357
        %4359 = vmatprep.subr.mxu0 0.0
        %v4360 = vand.u32 %v424, 4294901760
        %v4361 = vsub.f32 %v424, %v4360
        %4362 = vmatpush1.msra.mxu0 %v4361
        %4363 = vmatprep.subr.mxu0 0.0
        %v4364 = vand.u32 %v425, 4294901760
        %v4365 = vsub.f32 %v425, %v4364
        %4366 = vmatpush1.msra.mxu0 %v4365
        %4367 = vmatprep.subr.mxu0 0.0
        %v4368 = vand.u32 %v426, 4294901760
        %v4369 = vsub.f32 %v426, %v4368
        %4370 = vmatpush1.msra.mxu0 %v4369
        %4371 = vmatprep.subr.mxu0 0.0
        %v4372 = vand.u32 %v427, 4294901760
        %v4373 = vsub.f32 %v427, %v4372
        %4374 = vmatpush1.msra.mxu0 %v4373
        %4375 = vmatprep.subr.mxu0 0.0
        %v4376 = vand.u32 %v428, 4294901760
        %v4377 = vsub.f32 %v428, %v4376
        %4378 = vmatpush1.msra.mxu0 %v4377
        %4379 = vmatprep.subr.mxu0 0.0
        %v4380 = vand.u32 %v429, 4294901760
        %v4381 = vsub.f32 %v429, %v4380
        %4382 = vmatpush1.msra.mxu0 %v4381
        %4383 = vmatprep.subr.mxu0 0.0
        %v4384 = vand.u32 %v430, 4294901760
        %v4385 = vsub.f32 %v430, %v4384
        %4386 = vmatpush1.msra.mxu0 %v4385
        %4387 = vmatprep.subr.mxu0 0.0
        %v4388 = vand.u32 %v431, 4294901760
        %v4389 = vsub.f32 %v431, %v4388
        %4390 = vmatpush1.msra.mxu0 %v4389
        %4391 = vmatprep.subr.mxu0 0.0
        %v4392 = vand.u32 %v432, 4294901760
        %v4393 = vsub.f32 %v432, %v4392
        %4394 = vmatpush1.msra.mxu0 %v4393
        %4395 = vmatprep.subr.mxu0 0.0
        %v4396 = vand.u32 %v433, 4294901760
        %v4397 = vsub.f32 %v433, %v4396
        %4398 = vmatpush1.msra.mxu0 %v4397
        %4399 = vmatprep.subr.mxu0 0.0
        %v4400 = vand.u32 %v434, 4294901760
        %v4401 = vsub.f32 %v434, %v4400
        %4402 = vmatpush1.msra.mxu0 %v4401
        %4403 = vmatprep.subr.mxu0 0.0
        %v4404 = vand.u32 %v435, 4294901760
        %v4405 = vsub.f32 %v435, %v4404
        %4406 = vmatpush1.msra.mxu0 %v4405
        %4407 = vmatprep.subr.mxu0 0.0
        %v4408 = vand.u32 %v436, 4294901760
        %v4409 = vsub.f32 %v436, %v4408
        %4410 = vmatpush1.msra.mxu0 %v4409
        %4411 = vmatprep.subr.mxu0 0.0
        %v4412 = vand.u32 %v437, 4294901760
        %v4413 = vsub.f32 %v437, %v4412
        %4414 = vmatpush1.msra.mxu0 %v4413
        %4415 = vmatprep.subr.mxu0 0.0
        %v4416 = vand.u32 %v438, 4294901760
        %v4417 = vsub.f32 %v438, %v4416
        %4418 = vmatpush1.msra.mxu0 %v4417
        %4419 = vmatprep.subr.mxu0 0.0
        %v4420 = vand.u32 %v439, 4294901760
        %v4421 = vsub.f32 %v439, %v4420
        %4422 = vmatpush1.msra.mxu0 %v4421
        %4423 = vmatprep.subr.mxu0 0.0
        %v4424 = vand.u32 %v440, 4294901760
        %v4425 = vsub.f32 %v440, %v4424
        %4426 = vmatpush1.msra.mxu0 %v4425
        %4427 = vmatprep.subr.mxu0 0.0
        %v4428 = vand.u32 %v441, 4294901760
        %v4429 = vsub.f32 %v441, %v4428
        %4430 = vmatpush1.msra.mxu0 %v4429
        %4431 = vmatprep.subr.mxu0 0.0
        %v4432 = vand.u32 %v442, 4294901760
        %v4433 = vsub.f32 %v442, %v4432
        %4434 = vmatpush1.msra.mxu0 %v4433
        %4435 = vmatprep.subr.mxu0 0.0
        %v4436 = vand.u32 %v443, 4294901760
        %v4437 = vsub.f32 %v443, %v4436
        %4438 = vmatpush1.msra.mxu0 %v4437
        %4439 = vmatprep.subr.mxu0 0.0
        %v4440 = vand.u32 %v444, 4294901760
        %v4441 = vsub.f32 %v444, %v4440
        %4442 = vmatpush1.msra.mxu0 %v4441
        %4443 = vmatprep.subr.mxu0 0.0
        %v4444 = vand.u32 %v445, 4294901760
        %v4445 = vsub.f32 %v445, %v4444
        %4446 = vmatpush1.msra.mxu0 %v4445
        %4447 = vmatprep.subr.mxu0 0.0
        %v4448 = vand.u32 %v446, 4294901760
        %v4449 = vsub.f32 %v446, %v4448
        %4450 = vmatpush1.msra.mxu0 %v4449
        %4451 = vmatprep.subr.mxu0 0.0
        %v4452 = vand.u32 %v447, 4294901760
        %v4453 = vsub.f32 %v447, %v4452
        %4454 = vmatpush1.msra.mxu0 %v4453
        %4455 = vmatprep.subr.mxu0 0.0
        %v4456 = vand.u32 %v448, 4294901760
        %v4457 = vsub.f32 %v448, %v4456
        %4458 = vmatpush1.msra.mxu0 %v4457
        %4459 = vmatprep.subr.mxu0 0.0
        %v4460 = vand.u32 %v449, 4294901760
        %v4461 = vsub.f32 %v449, %v4460
        %4462 = vmatpush1.msra.mxu0 %v4461
        %4463 = vmatprep.subr.mxu0 0.0
        %v4464 = vand.u32 %v450, 4294901760
        %v4465 = vsub.f32 %v450, %v4464
        %4466 = vmatpush1.msra.mxu0 %v4465
        %v4467 = vand.u32 %v284, 4294901760
        %v4468 = vsub.f32 %v284, %v4467
        %4469 = vmatprep.mubr.f32.mxu0 %v4468
        %v4470 = vand.u32 %v283, 4294901760
        %v4471 = vsub.f32 %v283, %v4470
        %4472 = vmatmul.mubr.f32.gmra.mrb[0].mxu0 %v4471
        %v4473 = vpop.f32.mrb[0].mxu0
        %v4474 = vadd.f32 %v4336, %v4473
        %v4475 = vpop.f32.mrb[0].mxu0
        %4476 = vdwg.mxu0
        %4477 = vmatprep.subr.mxu0 0.0
        %v4478 = vand.u32 %v419, 4294901760
        %4479 = vmatpush1.msra.mxu0 %v4478
        %4480 = vmatprep.subr.mxu0 0.0
        %v4481 = vand.u32 %v420, 4294901760
        %4482 = vmatpush1.msra.mxu0 %v4481
        %4483 = vmatprep.subr.mxu0 0.0
        %v4484 = vand.u32 %v421, 4294901760
        %4485 = vmatpush1.msra.mxu0 %v4484
        %4486 = vmatprep.subr.mxu0 0.0
        %v4487 = vand.u32 %v422, 4294901760
        %4488 = vmatpush1.msra.mxu0 %v4487
        %4489 = vmatprep.subr.mxu0 0.0
        %v4490 = vand.u32 %v423, 4294901760
        %4491 = vmatpush1.msra.mxu0 %v4490
        %4492 = vmatprep.subr.mxu0 0.0
        %v4493 = vand.u32 %v424, 4294901760
        %4494 = vmatpush1.msra.mxu0 %v4493
        %4495 = vmatprep.subr.mxu0 0.0
        %v4496 = vand.u32 %v425, 4294901760
        %4497 = vmatpush1.msra.mxu0 %v4496
        %4498 = vmatprep.subr.mxu0 0.0
        %v4499 = vand.u32 %v426, 4294901760
        %4500 = vmatpush1.msra.mxu0 %v4499
        %4501 = vmatprep.subr.mxu0 0.0
        %v4502 = vand.u32 %v427, 4294901760
        %4503 = vmatpush1.msra.mxu0 %v4502
        %4504 = vmatprep.subr.mxu0 0.0
        %v4505 = vand.u32 %v428, 4294901760
        %4506 = vmatpush1.msra.mxu0 %v4505
        %4507 = vmatprep.subr.mxu0 0.0
        %v4508 = vand.u32 %v429, 4294901760
        %4509 = vmatpush1.msra.mxu0 %v4508
        %4510 = vmatprep.subr.mxu0 0.0
        %v4511 = vand.u32 %v430, 4294901760
        %4512 = vmatpush1.msra.mxu0 %v4511
        %4513 = vmatprep.subr.mxu0 0.0
        %v4514 = vand.u32 %v431, 4294901760
        %4515 = vmatpush1.msra.mxu0 %v4514
        %4516 = vmatprep.subr.mxu0 0.0
        %v4517 = vand.u32 %v432, 4294901760
        %4518 = vmatpush1.msra.mxu0 %v4517
        %4519 = vmatprep.subr.mxu0 0.0
        %v4520 = vand.u32 %v433, 4294901760
        %4521 = vmatpush1.msra.mxu0 %v4520
        %4522 = vmatprep.subr.mxu0 0.0
        %v4523 = vand.u32 %v434, 4294901760
        %4524 = vmatpush1.msra.mxu0 %v4523
        %4525 = vmatprep.subr.mxu0 0.0
        %v4526 = vand.u32 %v435, 4294901760
        %4527 = vmatpush1.msra.mxu0 %v4526
        %4528 = vmatprep.subr.mxu0 0.0
        %v4529 = vand.u32 %v436, 4294901760
        %4530 = vmatpush1.msra.mxu0 %v4529
        %4531 = vmatprep.subr.mxu0 0.0
        %v4532 = vand.u32 %v437, 4294901760
        %4533 = vmatpush1.msra.mxu0 %v4532
        %4534 = vmatprep.subr.mxu0 0.0
        %v4535 = vand.u32 %v438, 4294901760
        %4536 = vmatpush1.msra.mxu0 %v4535
        %4537 = vmatprep.subr.mxu0 0.0
        %v4538 = vand.u32 %v439, 4294901760
        %4539 = vmatpush1.msra.mxu0 %v4538
        %4540 = vmatprep.subr.mxu0 0.0
        %v4541 = vand.u32 %v440, 4294901760
        %4542 = vmatpush1.msra.mxu0 %v4541
        %4543 = vmatprep.subr.mxu0 0.0
        %v4544 = vand.u32 %v441, 4294901760
        %4545 = vmatpush1.msra.mxu0 %v4544
        %4546 = vmatprep.subr.mxu0 0.0
        %v4547 = vand.u32 %v442, 4294901760
        %4548 = vmatpush1.msra.mxu0 %v4547
        %4549 = vmatprep.subr.mxu0 0.0
        %v4550 = vand.u32 %v443, 4294901760
        %4551 = vmatpush1.msra.mxu0 %v4550
        %4552 = vmatprep.subr.mxu0 0.0
        %v4553 = vand.u32 %v444, 4294901760
        %4554 = vmatpush1.msra.mxu0 %v4553
        %4555 = vmatprep.subr.mxu0 0.0
        %v4556 = vand.u32 %v445, 4294901760
        %4557 = vmatpush1.msra.mxu0 %v4556
        %4558 = vmatprep.subr.mxu0 0.0
        %v4559 = vand.u32 %v446, 4294901760
        %4560 = vmatpush1.msra.mxu0 %v4559
        %4561 = vmatprep.subr.mxu0 0.0
        %v4562 = vand.u32 %v447, 4294901760
        %4563 = vmatpush1.msra.mxu0 %v4562
        %4564 = vmatprep.subr.mxu0 0.0
        %v4565 = vand.u32 %v448, 4294901760
        %4566 = vmatpush1.msra.mxu0 %v4565
        %4567 = vmatprep.subr.mxu0 0.0
        %v4568 = vand.u32 %v449, 4294901760
        %4569 = vmatpush1.msra.mxu0 %v4568
        %4570 = vmatprep.subr.mxu0 0.0
        %v4571 = vand.u32 %v450, 4294901760
        %4572 = vmatpush1.msra.mxu0 %v4571
        %v4573 = vand.u32 %v284, 4294901760
        %v4574 = vsub.f32 %v284, %v4573
        %v4575 = vand.u32 %v4574, 4294901760
        %4576 = vmatprep.mubr.f32.mxu0 %v4575
        %v4577 = vand.u32 %v283, 4294901760
        %v4578 = vsub.f32 %v283, %v4577
        %v4579 = vand.u32 %v4578, 4294901760
        %4580 = vmatmul.mubr.f32.gmra.mrb[0].mxu0 %v4579
        %v4581 = vpop.f32.mrb[0].mxu0
        %v4582 = vadd.f32 %v4474, %v4581
        %v4583 = vpop.f32.mrb[0].mxu0
        %4584 = vdwg.mxu0
        %4585 = vmatprep.subr.mxu0 0.0
        %v4586 = vand.u32 %v419, 4294901760
        %v4587 = vsub.f32 %v419, %v4586
        %v4588 = vand.u32 %v4587, 4294901760
        %4589 = vmatpush1.msra.mxu0 %v4588
        %4590 = vmatprep.subr.mxu0 0.0
        %v4591 = vand.u32 %v420, 4294901760
        %v4592 = vsub.f32 %v420, %v4591
        %v4593 = vand.u32 %v4592, 4294901760
        %4594 = vmatpush1.msra.mxu0 %v4593
        %4595 = vmatprep.subr.mxu0 0.0
        %v4596 = vand.u32 %v421, 4294901760
        %v4597 = vsub.f32 %v421, %v4596
        %v4598 = vand.u32 %v4597, 4294901760
        %4599 = vmatpush1.msra.mxu0 %v4598
        %4600 = vmatprep.subr.mxu0 0.0
        %v4601 = vand.u32 %v422, 4294901760
        %v4602 = vsub.f32 %v422, %v4601
        %v4603 = vand.u32 %v4602, 4294901760
        %4604 = vmatpush1.msra.mxu0 %v4603
        %4605 = vmatprep.subr.mxu0 0.0
        %v4606 = vand.u32 %v423, 4294901760
        %v4607 = vsub.f32 %v423, %v4606
        %v4608 = vand.u32 %v4607, 4294901760
        %4609 = vmatpush1.msra.mxu0 %v4608
        %4610 = vmatprep.subr.mxu0 0.0
        %v4611 = vand.u32 %v424, 4294901760
        %v4612 = vsub.f32 %v424, %v4611
        %v4613 = vand.u32 %v4612, 4294901760
        %4614 = vmatpush1.msra.mxu0 %v4613
        %4615 = vmatprep.subr.mxu0 0.0
        %v4616 = vand.u32 %v425, 4294901760
        %v4617 = vsub.f32 %v425, %v4616
        %v4618 = vand.u32 %v4617, 4294901760
        %4619 = vmatpush1.msra.mxu0 %v4618
        %4620 = vmatprep.subr.mxu0 0.0
        %v4621 = vand.u32 %v426, 4294901760
        %v4622 = vsub.f32 %v426, %v4621
        %v4623 = vand.u32 %v4622, 4294901760
        %4624 = vmatpush1.msra.mxu0 %v4623
        %4625 = vmatprep.subr.mxu0 0.0
        %v4626 = vand.u32 %v427, 4294901760
        %v4627 = vsub.f32 %v427, %v4626
        %v4628 = vand.u32 %v4627, 4294901760
        %4629 = vmatpush1.msra.mxu0 %v4628
        %4630 = vmatprep.subr.mxu0 0.0
        %v4631 = vand.u32 %v428, 4294901760
        %v4632 = vsub.f32 %v428, %v4631
        %v4633 = vand.u32 %v4632, 4294901760
        %4634 = vmatpush1.msra.mxu0 %v4633
        %4635 = vmatprep.subr.mxu0 0.0
        %v4636 = vand.u32 %v429, 4294901760
        %v4637 = vsub.f32 %v429, %v4636
        %v4638 = vand.u32 %v4637, 4294901760
        %4639 = vmatpush1.msra.mxu0 %v4638
        %4640 = vmatprep.subr.mxu0 0.0
        %v4641 = vand.u32 %v430, 4294901760
        %v4642 = vsub.f32 %v430, %v4641
        %v4643 = vand.u32 %v4642, 4294901760
        %4644 = vmatpush1.msra.mxu0 %v4643
        %4645 = vmatprep.subr.mxu0 0.0
        %v4646 = vand.u32 %v431, 4294901760
        %v4647 = vsub.f32 %v431, %v4646
        %v4648 = vand.u32 %v4647, 4294901760
        %4649 = vmatpush1.msra.mxu0 %v4648
        %4650 = vmatprep.subr.mxu0 0.0
        %v4651 = vand.u32 %v432, 4294901760
        %v4652 = vsub.f32 %v432, %v4651
        %v4653 = vand.u32 %v4652, 4294901760
        %4654 = vmatpush1.msra.mxu0 %v4653
        %4655 = vmatprep.subr.mxu0 0.0
        %v4656 = vand.u32 %v433, 4294901760
        %v4657 = vsub.f32 %v433, %v4656
        %v4658 = vand.u32 %v4657, 4294901760
        %4659 = vmatpush1.msra.mxu0 %v4658
        %4660 = vmatprep.subr.mxu0 0.0
        %v4661 = vand.u32 %v434, 4294901760
        %v4662 = vsub.f32 %v434, %v4661
        %v4663 = vand.u32 %v4662, 4294901760
        %4664 = vmatpush1.msra.mxu0 %v4663
        %4665 = vmatprep.subr.mxu0 0.0
        %v4666 = vand.u32 %v435, 4294901760
        %v4667 = vsub.f32 %v435, %v4666
        %v4668 = vand.u32 %v4667, 4294901760
        %4669 = vmatpush1.msra.mxu0 %v4668
        %4670 = vmatprep.subr.mxu0 0.0
        %v4671 = vand.u32 %v436, 4294901760
        %v4672 = vsub.f32 %v436, %v4671
        %v4673 = vand.u32 %v4672, 4294901760
        %4674 = vmatpush1.msra.mxu0 %v4673
        %4675 = vmatprep.subr.mxu0 0.0
        %v4676 = vand.u32 %v437, 4294901760
        %v4677 = vsub.f32 %v437, %v4676
        %v4678 = vand.u32 %v4677, 4294901760
        %4679 = vmatpush1.msra.mxu0 %v4678
        %4680 = vmatprep.subr.mxu0 0.0
        %v4681 = vand.u32 %v438, 4294901760
        %v4682 = vsub.f32 %v438, %v4681
        %v4683 = vand.u32 %v4682, 4294901760
        %4684 = vmatpush1.msra.mxu0 %v4683
        %4685 = vmatprep.subr.mxu0 0.0
        %v4686 = vand.u32 %v439, 4294901760
        %v4687 = vsub.f32 %v439, %v4686
        %v4688 = vand.u32 %v4687, 4294901760
        %4689 = vmatpush1.msra.mxu0 %v4688
        %4690 = vmatprep.subr.mxu0 0.0
        %v4691 = vand.u32 %v440, 4294901760
        %v4692 = vsub.f32 %v440, %v4691
        %v4693 = vand.u32 %v4692, 4294901760
        %4694 = vmatpush1.msra.mxu0 %v4693
        %4695 = vmatprep.subr.mxu0 0.0
        %v4696 = vand.u32 %v441, 4294901760
        %v4697 = vsub.f32 %v441, %v4696
        %v4698 = vand.u32 %v4697, 4294901760
        %4699 = vmatpush1.msra.mxu0 %v4698
        %4700 = vmatprep.subr.mxu0 0.0
        %v4701 = vand.u32 %v442, 4294901760
        %v4702 = vsub.f32 %v442, %v4701
        %v4703 = vand.u32 %v4702, 4294901760
        %4704 = vmatpush1.msra.mxu0 %v4703
        %4705 = vmatprep.subr.mxu0 0.0
        %v4706 = vand.u32 %v443, 4294901760
        %v4707 = vsub.f32 %v443, %v4706
        %v4708 = vand.u32 %v4707, 4294901760
        %4709 = vmatpush1.msra.mxu0 %v4708
        %4710 = vmatprep.subr.mxu0 0.0
        %v4711 = vand.u32 %v444, 4294901760
        %v4712 = vsub.f32 %v444, %v4711
        %v4713 = vand.u32 %v4712, 4294901760
        %4714 = vmatpush1.msra.mxu0 %v4713
        %4715 = vmatprep.subr.mxu0 0.0
        %v4716 = vand.u32 %v445, 4294901760
        %v4717 = vsub.f32 %v445, %v4716
        %v4718 = vand.u32 %v4717, 4294901760
        %4719 = vmatpush1.msra.mxu0 %v4718
        %4720 = vmatprep.subr.mxu0 0.0
        %v4721 = vand.u32 %v446, 4294901760
        %v4722 = vsub.f32 %v446, %v4721
        %v4723 = vand.u32 %v4722, 4294901760
        %4724 = vmatpush1.msra.mxu0 %v4723
        %4725 = vmatprep.subr.mxu0 0.0
        %v4726 = vand.u32 %v447, 4294901760
        %v4727 = vsub.f32 %v447, %v4726
        %v4728 = vand.u32 %v4727, 4294901760
        %4729 = vmatpush1.msra.mxu0 %v4728
        %4730 = vmatprep.subr.mxu0 0.0
        %v4731 = vand.u32 %v448, 4294901760
        %v4732 = vsub.f32 %v448, %v4731
        %v4733 = vand.u32 %v4732, 4294901760
        %4734 = vmatpush1.msra.mxu0 %v4733
        %4735 = vmatprep.subr.mxu0 0.0
        %v4736 = vand.u32 %v449, 4294901760
        %v4737 = vsub.f32 %v449, %v4736
        %v4738 = vand.u32 %v4737, 4294901760
        %4739 = vmatpush1.msra.mxu0 %v4738
        %4740 = vmatprep.subr.mxu0 0.0
        %v4741 = vand.u32 %v450, 4294901760
        %v4742 = vsub.f32 %v450, %v4741
        %v4743 = vand.u32 %v4742, 4294901760
        %4744 = vmatpush1.msra.mxu0 %v4743
        %v4745 = vand.u32 %v284, 4294901760
        %4746 = vmatprep.mubr.f32.mxu0 %v4745
        %v4747 = vand.u32 %v283, 4294901760
        %4748 = vmatmul.mubr.f32.gmra.mrb[0].mxu0 %v4747
        %v4749 = vpop.f32.mrb[0].mxu0
        %v4750 = vadd.f32 %v4582, %v4749
        %v4751 = vpop.f32.mrb[0].mxu0
        %4752 = vdwg.mxu0
        %4753 = vmatprep.subr.mxu0 0.0
        %v4754 = vand.u32 %v419, 4294901760
        %4755 = vmatpush1.msra.mxu0 %v4754
        %4756 = vmatprep.subr.mxu0 0.0
        %v4757 = vand.u32 %v420, 4294901760
        %4758 = vmatpush1.msra.mxu0 %v4757
        %4759 = vmatprep.subr.mxu0 0.0
        %v4760 = vand.u32 %v421, 4294901760
        %4761 = vmatpush1.msra.mxu0 %v4760
        %4762 = vmatprep.subr.mxu0 0.0
        %v4763 = vand.u32 %v422, 4294901760
        %4764 = vmatpush1.msra.mxu0 %v4763
        %4765 = vmatprep.subr.mxu0 0.0
        %v4766 = vand.u32 %v423, 4294901760
        %4767 = vmatpush1.msra.mxu0 %v4766
        %4768 = vmatprep.subr.mxu0 0.0
        %v4769 = vand.u32 %v424, 4294901760
        %4770 = vmatpush1.msra.mxu0 %v4769
        %4771 = vmatprep.subr.mxu0 0.0
        %v4772 = vand.u32 %v425, 4294901760
        %4773 = vmatpush1.msra.mxu0 %v4772
        %4774 = vmatprep.subr.mxu0 0.0
        %v4775 = vand.u32 %v426, 4294901760
        %4776 = vmatpush1.msra.mxu0 %v4775
        %4777 = vmatprep.subr.mxu0 0.0
        %v4778 = vand.u32 %v427, 4294901760
        %4779 = vmatpush1.msra.mxu0 %v4778
        %4780 = vmatprep.subr.mxu0 0.0
        %v4781 = vand.u32 %v428, 4294901760
        %4782 = vmatpush1.msra.mxu0 %v4781
        %4783 = vmatprep.subr.mxu0 0.0
        %v4784 = vand.u32 %v429, 4294901760
        %4785 = vmatpush1.msra.mxu0 %v4784
        %4786 = vmatprep.subr.mxu0 0.0
        %v4787 = vand.u32 %v430, 4294901760
        %4788 = vmatpush1.msra.mxu0 %v4787
        %4789 = vmatprep.subr.mxu0 0.0
        %v4790 = vand.u32 %v431, 4294901760
        %4791 = vmatpush1.msra.mxu0 %v4790
        %4792 = vmatprep.subr.mxu0 0.0
        %v4793 = vand.u32 %v432, 4294901760
        %4794 = vmatpush1.msra.mxu0 %v4793
        %4795 = vmatprep.subr.mxu0 0.0
        %v4796 = vand.u32 %v433, 4294901760
        %4797 = vmatpush1.msra.mxu0 %v4796
        %4798 = vmatprep.subr.mxu0 0.0
        %v4799 = vand.u32 %v434, 4294901760
        %4800 = vmatpush1.msra.mxu0 %v4799
        %4801 = vmatprep.subr.mxu0 0.0
        %v4802 = vand.u32 %v435, 4294901760
        %4803 = vmatpush1.msra.mxu0 %v4802
        %4804 = vmatprep.subr.mxu0 0.0
        %v4805 = vand.u32 %v436, 4294901760
        %4806 = vmatpush1.msra.mxu0 %v4805
        %4807 = vmatprep.subr.mxu0 0.0
        %v4808 = vand.u32 %v437, 4294901760
        %4809 = vmatpush1.msra.mxu0 %v4808
        %4810 = vmatprep.subr.mxu0 0.0
        %v4811 = vand.u32 %v438, 4294901760
        %4812 = vmatpush1.msra.mxu0 %v4811
        %4813 = vmatprep.subr.mxu0 0.0
        %v4814 = vand.u32 %v439, 4294901760
        %4815 = vmatpush1.msra.mxu0 %v4814
        %4816 = vmatprep.subr.mxu0 0.0
        %v4817 = vand.u32 %v440, 4294901760
        %4818 = vmatpush1.msra.mxu0 %v4817
        %4819 = vmatprep.subr.mxu0 0.0
        %v4820 = vand.u32 %v441, 4294901760
        %4821 = vmatpush1.msra.mxu0 %v4820
        %4822 = vmatprep.subr.mxu0 0.0
        %v4823 = vand.u32 %v442, 4294901760
        %4824 = vmatpush1.msra.mxu0 %v4823
        %4825 = vmatprep.subr.mxu0 0.0
        %v4826 = vand.u32 %v443, 4294901760
        %4827 = vmatpush1.msra.mxu0 %v4826
        %4828 = vmatprep.subr.mxu0 0.0
        %v4829 = vand.u32 %v444, 4294901760
        %4830 = vmatpush1.msra.mxu0 %v4829
        %4831 = vmatprep.subr.mxu0 0.0
        %v4832 = vand.u32 %v445, 4294901760
        %4833 = vmatpush1.msra.mxu0 %v4832
        %4834 = vmatprep.subr.mxu0 0.0
        %v4835 = vand.u32 %v446, 4294901760
        %4836 = vmatpush1.msra.mxu0 %v4835
        %4837 = vmatprep.subr.mxu0 0.0
        %v4838 = vand.u32 %v447, 4294901760
        %4839 = vmatpush1.msra.mxu0 %v4838
        %4840 = vmatprep.subr.mxu0 0.0
        %v4841 = vand.u32 %v448, 4294901760
        %4842 = vmatpush1.msra.mxu0 %v4841
        %4843 = vmatprep.subr.mxu0 0.0
        %v4844 = vand.u32 %v449, 4294901760
        %4845 = vmatpush1.msra.mxu0 %v4844
        %4846 = vmatprep.subr.mxu0 0.0
        %v4847 = vand.u32 %v450, 4294901760
        %4848 = vmatpush1.msra.mxu0 %v4847
        %v4849 = vand.u32 %v284, 4294901760
        %4850 = vmatprep.mubr.f32.mxu0 %v4849
        %v4851 = vand.u32 %v283, 4294901760
        %4852 = vmatmul.mubr.f32.gmra.mrb[0].mxu0 %v4851
        %v4853 = vpop.f32.mrb[0].mxu0
        %v4854 = vadd.f32 %v4750, %v4853
        %v4855 = vpop.f32.mrb[0].mxu0
        %4856 = vdwg.mxu0
        %4857 = vmatprep.subr.mxu0 0.0
        %v4858 = vand.u32 %v451, 4294901760
        %4859 = vmatpush1.msra.mxu0 %v4858
        %4860 = vmatprep.subr.mxu0 0.0
        %v4861 = vand.u32 %v452, 4294901760
        %4862 = vmatpush1.msra.mxu0 %v4861
        %4863 = vmatprep.subr.mxu0 0.0
        %v4864 = vand.u32 %v453, 4294901760
        %4865 = vmatpush1.msra.mxu0 %v4864
        %4866 = vmatprep.subr.mxu0 0.0
        %v4867 = vand.u32 %v454, 4294901760
        %4868 = vmatpush1.msra.mxu0 %v4867
        %4869 = vmatprep.subr.mxu0 0.0
        %v4870 = vand.u32 %v455, 4294901760
        %4871 = vmatpush1.msra.mxu0 %v4870
        %4872 = vmatprep.subr.mxu0 0.0
        %v4873 = vand.u32 %v456, 4294901760
        %4874 = vmatpush1.msra.mxu0 %v4873
        %4875 = vmatprep.subr.mxu0 0.0
        %v4876 = vand.u32 %v457, 4294901760
        %4877 = vmatpush1.msra.mxu0 %v4876
        %4878 = vmatprep.subr.mxu0 0.0
        %v4879 = vand.u32 %v458, 4294901760
        %4880 = vmatpush1.msra.mxu0 %v4879
        %4881 = vmatprep.subr.mxu0 0.0
        %v4882 = vand.u32 %v459, 4294901760
        %4883 = vmatpush1.msra.mxu0 %v4882
        %4884 = vmatprep.subr.mxu0 0.0
        %v4885 = vand.u32 %v460, 4294901760
        %4886 = vmatpush1.msra.mxu0 %v4885
        %4887 = vmatprep.subr.mxu0 0.0
        %v4888 = vand.u32 %v461, 4294901760
        %4889 = vmatpush1.msra.mxu0 %v4888
        %4890 = vmatprep.subr.mxu0 0.0
        %v4891 = vand.u32 %v462, 4294901760
        %4892 = vmatpush1.msra.mxu0 %v4891
        %4893 = vmatprep.subr.mxu0 0.0
        %v4894 = vand.u32 %v463, 4294901760
        %4895 = vmatpush1.msra.mxu0 %v4894
        %4896 = vmatprep.subr.mxu0 0.0
        %v4897 = vand.u32 %v464, 4294901760
        %4898 = vmatpush1.msra.mxu0 %v4897
        %4899 = vmatprep.subr.mxu0 0.0
        %v4900 = vand.u32 %v465, 4294901760
        %4901 = vmatpush1.msra.mxu0 %v4900
        %4902 = vmatprep.subr.mxu0 0.0
        %v4903 = vand.u32 %v466, 4294901760
        %4904 = vmatpush1.msra.mxu0 %v4903
        %4905 = vmatprep.subr.mxu0 0.0
        %v4906 = vand.u32 %v467, 4294901760
        %4907 = vmatpush1.msra.mxu0 %v4906
        %4908 = vmatprep.subr.mxu0 0.0
        %v4909 = vand.u32 %v468, 4294901760
        %4910 = vmatpush1.msra.mxu0 %v4909
        %4911 = vmatprep.subr.mxu0 0.0
        %v4912 = vand.u32 %v469, 4294901760
        %4913 = vmatpush1.msra.mxu0 %v4912
        %4914 = vmatprep.subr.mxu0 0.0
        %v4915 = vand.u32 %v470, 4294901760
        %4916 = vmatpush1.msra.mxu0 %v4915
        %4917 = vmatprep.subr.mxu0 0.0
        %v4918 = vand.u32 %v471, 4294901760
        %4919 = vmatpush1.msra.mxu0 %v4918
        %4920 = vmatprep.subr.mxu0 0.0
        %v4921 = vand.u32 %v472, 4294901760
        %4922 = vmatpush1.msra.mxu0 %v4921
        %4923 = vmatprep.subr.mxu0 0.0
        %v4924 = vand.u32 %v473, 4294901760
        %4925 = vmatpush1.msra.mxu0 %v4924
        %4926 = vmatprep.subr.mxu0 0.0
        %v4927 = vand.u32 %v474, 4294901760
        %4928 = vmatpush1.msra.mxu0 %v4927
        %4929 = vmatprep.subr.mxu0 0.0
        %v4930 = vand.u32 %v475, 4294901760
        %4931 = vmatpush1.msra.mxu0 %v4930
        %4932 = vmatprep.subr.mxu0 0.0
        %v4933 = vand.u32 %v476, 4294901760
        %4934 = vmatpush1.msra.mxu0 %v4933
        %4935 = vmatprep.subr.mxu0 0.0
        %v4936 = vand.u32 %v477, 4294901760
        %4937 = vmatpush1.msra.mxu0 %v4936
        %4938 = vmatprep.subr.mxu0 0.0
        %v4939 = vand.u32 %v478, 4294901760
        %4940 = vmatpush1.msra.mxu0 %v4939
        %4941 = vmatprep.subr.mxu0 0.0
        %v4942 = vand.u32 %v479, 4294901760
        %4943 = vmatpush1.msra.mxu0 %v4942
        %4944 = vmatprep.subr.mxu0 0.0
        %v4945 = vand.u32 %v480, 4294901760
        %4946 = vmatpush1.msra.mxu0 %v4945
        %4947 = vmatprep.subr.mxu0 0.0
        %v4948 = vand.u32 %v481, 4294901760
        %4949 = vmatpush1.msra.mxu0 %v4948
        %4950 = vmatprep.subr.mxu0 0.0
        %v4951 = vand.u32 %v482, 4294901760
        %4952 = vmatpush1.msra.mxu0 %v4951
        %v4953 = vand.u32 %v286, 4294901760
        %v4954 = vsub.f32 %v286, %v4953
        %v4955 = vand.u32 %v4954, 4294901760
        %v4956 = vsub.f32 %v4954, %v4955
        %v4957 = vand.u32 %v4956, 4294901760
        %4958 = vmatprep.mubr.f32.mxu0 %v4957
        %v4959 = vand.u32 %v285, 4294901760
        %v4960 = vsub.f32 %v285, %v4959
        %v4961 = vand.u32 %v4960, 4294901760
        %v4962 = vsub.f32 %v4960, %v4961
        %v4963 = vand.u32 %v4962, 4294901760
        %4964 = vmatmul.mubr.f32.gmra.mrb[0].mxu0 %v4963
        %v4965 = vpop.f32.mrb[0].mxu0
        %v4966 = vadd.f32 %v4854, %v4965
        %v4967 = vpop.f32.mrb[0].mxu0
        %4968 = vdwg.mxu0
        %4969 = vmatprep.subr.mxu0 0.0
        %v4970 = vand.u32 %v451, 4294901760
        %v4971 = vsub.f32 %v451, %v4970
        %v4972 = vand.u32 %v4971, 4294901760
        %v4973 = vsub.f32 %v4971, %v4972
        %v4974 = vand.u32 %v4973, 4294901760
        %4975 = vmatpush1.msra.mxu0 %v4974
        %4976 = vmatprep.subr.mxu0 0.0
        %v4977 = vand.u32 %v452, 4294901760
        %v4978 = vsub.f32 %v452, %v4977
        %v4979 = vand.u32 %v4978, 4294901760
        %v4980 = vsub.f32 %v4978, %v4979
        %v4981 = vand.u32 %v4980, 4294901760
        %4982 = vmatpush1.msra.mxu0 %v4981
        %4983 = vmatprep.subr.mxu0 0.0
        %v4984 = vand.u32 %v453, 4294901760
        %v4985 = vsub.f32 %v453, %v4984
        %v4986 = vand.u32 %v4985, 4294901760
        %v4987 = vsub.f32 %v4985, %v4986
        %v4988 = vand.u32 %v4987, 4294901760
        %4989 = vmatpush1.msra.mxu0 %v4988
        %4990 = vmatprep.subr.mxu0 0.0
        %v4991 = vand.u32 %v454, 4294901760
        %v4992 = vsub.f32 %v454, %v4991
        %v4993 = vand.u32 %v4992, 4294901760
        %v4994 = vsub.f32 %v4992, %v4993
        %v4995 = vand.u32 %v4994, 4294901760
        %4996 = vmatpush1.msra.mxu0 %v4995
        %4997 = vmatprep.subr.mxu0 0.0
        %v4998 = vand.u32 %v455, 4294901760
        %v4999 = vsub.f32 %v455, %v4998
        %v5000 = vand.u32 %v4999, 4294901760
        %v5001 = vsub.f32 %v4999, %v5000
        %v5002 = vand.u32 %v5001, 4294901760
        %5003 = vmatpush1.msra.mxu0 %v5002
        %5004 = vmatprep.subr.mxu0 0.0
        %v5005 = vand.u32 %v456, 4294901760
        %v5006 = vsub.f32 %v456, %v5005
        %v5007 = vand.u32 %v5006, 4294901760
        %v5008 = vsub.f32 %v5006, %v5007
        %v5009 = vand.u32 %v5008, 4294901760
        %5010 = vmatpush1.msra.mxu0 %v5009
        %5011 = vmatprep.subr.mxu0 0.0
        %v5012 = vand.u32 %v457, 4294901760
        %v5013 = vsub.f32 %v457, %v5012
        %v5014 = vand.u32 %v5013, 4294901760
        %v5015 = vsub.f32 %v5013, %v5014
        %v5016 = vand.u32 %v5015, 4294901760
        %5017 = vmatpush1.msra.mxu0 %v5016
        %5018 = vmatprep.subr.mxu0 0.0
        %v5019 = vand.u32 %v458, 4294901760
        %v5020 = vsub.f32 %v458, %v5019
        %v5021 = vand.u32 %v5020, 4294901760
        %v5022 = vsub.f32 %v5020, %v5021
        %v5023 = vand.u32 %v5022, 4294901760
        %5024 = vmatpush1.msra.mxu0 %v5023
        %5025 = vmatprep.subr.mxu0 0.0
        %v5026 = vand.u32 %v459, 4294901760
        %v5027 = vsub.f32 %v459, %v5026
        %v5028 = vand.u32 %v5027, 4294901760
        %v5029 = vsub.f32 %v5027, %v5028
        %v5030 = vand.u32 %v5029, 4294901760
        %5031 = vmatpush1.msra.mxu0 %v5030
        %5032 = vmatprep.subr.mxu0 0.0
        %v5033 = vand.u32 %v460, 4294901760
        %v5034 = vsub.f32 %v460, %v5033
        %v5035 = vand.u32 %v5034, 4294901760
        %v5036 = vsub.f32 %v5034, %v5035
        %v5037 = vand.u32 %v5036, 4294901760
        %5038 = vmatpush1.msra.mxu0 %v5037
        %5039 = vmatprep.subr.mxu0 0.0
        %v5040 = vand.u32 %v461, 4294901760
        %v5041 = vsub.f32 %v461, %v5040
        %v5042 = vand.u32 %v5041, 4294901760
        %v5043 = vsub.f32 %v5041, %v5042
        %v5044 = vand.u32 %v5043, 4294901760
        %5045 = vmatpush1.msra.mxu0 %v5044
        %5046 = vmatprep.subr.mxu0 0.0
        %v5047 = vand.u32 %v462, 4294901760
        %v5048 = vsub.f32 %v462, %v5047
        %v5049 = vand.u32 %v5048, 4294901760
        %v5050 = vsub.f32 %v5048, %v5049
        %v5051 = vand.u32 %v5050, 4294901760
        %5052 = vmatpush1.msra.mxu0 %v5051
        %5053 = vmatprep.subr.mxu0 0.0
        %v5054 = vand.u32 %v463, 4294901760
        %v5055 = vsub.f32 %v463, %v5054
        %v5056 = vand.u32 %v5055, 4294901760
        %v5057 = vsub.f32 %v5055, %v5056
        %v5058 = vand.u32 %v5057, 4294901760
        %5059 = vmatpush1.msra.mxu0 %v5058
        %5060 = vmatprep.subr.mxu0 0.0
        %v5061 = vand.u32 %v464, 4294901760
        %v5062 = vsub.f32 %v464, %v5061
        %v5063 = vand.u32 %v5062, 4294901760
        %v5064 = vsub.f32 %v5062, %v5063
        %v5065 = vand.u32 %v5064, 4294901760
        %5066 = vmatpush1.msra.mxu0 %v5065
        %5067 = vmatprep.subr.mxu0 0.0
        %v5068 = vand.u32 %v465, 4294901760
        %v5069 = vsub.f32 %v465, %v5068
        %v5070 = vand.u32 %v5069, 4294901760
        %v5071 = vsub.f32 %v5069, %v5070
        %v5072 = vand.u32 %v5071, 4294901760
        %5073 = vmatpush1.msra.mxu0 %v5072
        %5074 = vmatprep.subr.mxu0 0.0
        %v5075 = vand.u32 %v466, 4294901760
        %v5076 = vsub.f32 %v466, %v5075
        %v5077 = vand.u32 %v5076, 4294901760
        %v5078 = vsub.f32 %v5076, %v5077
        %v5079 = vand.u32 %v5078, 4294901760
        %5080 = vmatpush1.msra.mxu0 %v5079
        %5081 = vmatprep.subr.mxu0 0.0
        %v5082 = vand.u32 %v467, 4294901760
        %v5083 = vsub.f32 %v467, %v5082
        %v5084 = vand.u32 %v5083, 4294901760
        %v5085 = vsub.f32 %v5083, %v5084
        %v5086 = vand.u32 %v5085, 4294901760
        %5087 = vmatpush1.msra.mxu0 %v5086
        %5088 = vmatprep.subr.mxu0 0.0
        %v5089 = vand.u32 %v468, 4294901760
        %v5090 = vsub.f32 %v468, %v5089
        %v5091 = vand.u32 %v5090, 4294901760
        %v5092 = vsub.f32 %v5090, %v5091
        %v5093 = vand.u32 %v5092, 4294901760
        %5094 = vmatpush1.msra.mxu0 %v5093
        %5095 = vmatprep.subr.mxu0 0.0
        %v5096 = vand.u32 %v469, 4294901760
        %v5097 = vsub.f32 %v469, %v5096
        %v5098 = vand.u32 %v5097, 4294901760
        %v5099 = vsub.f32 %v5097, %v5098
        %v5100 = vand.u32 %v5099, 4294901760
        %5101 = vmatpush1.msra.mxu0 %v5100
        %5102 = vmatprep.subr.mxu0 0.0
        %v5103 = vand.u32 %v470, 4294901760
        %v5104 = vsub.f32 %v470, %v5103
        %v5105 = vand.u32 %v5104, 4294901760
        %v5106 = vsub.f32 %v5104, %v5105
        %v5107 = vand.u32 %v5106, 4294901760
        %5108 = vmatpush1.msra.mxu0 %v5107
        %5109 = vmatprep.subr.mxu0 0.0
        %v5110 = vand.u32 %v471, 4294901760
        %v5111 = vsub.f32 %v471, %v5110
        %v5112 = vand.u32 %v5111, 4294901760
        %v5113 = vsub.f32 %v5111, %v5112
        %v5114 = vand.u32 %v5113, 4294901760
        %5115 = vmatpush1.msra.mxu0 %v5114
        %5116 = vmatprep.subr.mxu0 0.0
        %v5117 = vand.u32 %v472, 4294901760
        %v5118 = vsub.f32 %v472, %v5117
        %v5119 = vand.u32 %v5118, 4294901760
        %v5120 = vsub.f32 %v5118, %v5119
        %v5121 = vand.u32 %v5120, 4294901760
        %5122 = vmatpush1.msra.mxu0 %v5121
        %5123 = vmatprep.subr.mxu0 0.0
        %v5124 = vand.u32 %v473, 4294901760
        %v5125 = vsub.f32 %v473, %v5124
        %v5126 = vand.u32 %v5125, 4294901760
        %v5127 = vsub.f32 %v5125, %v5126
        %v5128 = vand.u32 %v5127, 4294901760
        %5129 = vmatpush1.msra.mxu0 %v5128
        %5130 = vmatprep.subr.mxu0 0.0
        %v5131 = vand.u32 %v474, 4294901760
        %v5132 = vsub.f32 %v474, %v5131
        %v5133 = vand.u32 %v5132, 4294901760
        %v5134 = vsub.f32 %v5132, %v5133
        %v5135 = vand.u32 %v5134, 4294901760
        %5136 = vmatpush1.msra.mxu0 %v5135
        %5137 = vmatprep.subr.mxu0 0.0
        %v5138 = vand.u32 %v475, 4294901760
        %v5139 = vsub.f32 %v475, %v5138
        %v5140 = vand.u32 %v5139, 4294901760
        %v5141 = vsub.f32 %v5139, %v5140
        %v5142 = vand.u32 %v5141, 4294901760
        %5143 = vmatpush1.msra.mxu0 %v5142
        %5144 = vmatprep.subr.mxu0 0.0
        %v5145 = vand.u32 %v476, 4294901760
        %v5146 = vsub.f32 %v476, %v5145
        %v5147 = vand.u32 %v5146, 4294901760
        %v5148 = vsub.f32 %v5146, %v5147
        %v5149 = vand.u32 %v5148, 4294901760
        %5150 = vmatpush1.msra.mxu0 %v5149
        %5151 = vmatprep.subr.mxu0 0.0
        %v5152 = vand.u32 %v477, 4294901760
        %v5153 = vsub.f32 %v477, %v5152
        %v5154 = vand.u32 %v5153, 4294901760
        %v5155 = vsub.f32 %v5153, %v5154
        %v5156 = vand.u32 %v5155, 4294901760
        %5157 = vmatpush1.msra.mxu0 %v5156
        %5158 = vmatprep.subr.mxu0 0.0
        %v5159 = vand.u32 %v478, 4294901760
        %v5160 = vsub.f32 %v478, %v5159
        %v5161 = vand.u32 %v5160, 4294901760
        %v5162 = vsub.f32 %v5160, %v5161
        %v5163 = vand.u32 %v5162, 4294901760
        %5164 = vmatpush1.msra.mxu0 %v5163
        %5165 = vmatprep.subr.mxu0 0.0
        %v5166 = vand.u32 %v479, 4294901760
        %v5167 = vsub.f32 %v479, %v5166
        %v5168 = vand.u32 %v5167, 4294901760
        %v5169 = vsub.f32 %v5167, %v5168
        %v5170 = vand.u32 %v5169, 4294901760
        %5171 = vmatpush1.msra.mxu0 %v5170
        %5172 = vmatprep.subr.mxu0 0.0
        %v5173 = vand.u32 %v480, 4294901760
        %v5174 = vsub.f32 %v480, %v5173
        %v5175 = vand.u32 %v5174, 4294901760
        %v5176 = vsub.f32 %v5174, %v5175
        %v5177 = vand.u32 %v5176, 4294901760
        %5178 = vmatpush1.msra.mxu0 %v5177
        %5179 = vmatprep.subr.mxu0 0.0
        %v5180 = vand.u32 %v481, 4294901760
        %v5181 = vsub.f32 %v481, %v5180
        %v5182 = vand.u32 %v5181, 4294901760
        %v5183 = vsub.f32 %v5181, %v5182
        %v5184 = vand.u32 %v5183, 4294901760
        %5185 = vmatpush1.msra.mxu0 %v5184
        %5186 = vmatprep.subr.mxu0 0.0
        %v5187 = vand.u32 %v482, 4294901760
        %v5188 = vsub.f32 %v482, %v5187
        %v5189 = vand.u32 %v5188, 4294901760
        %v5190 = vsub.f32 %v5188, %v5189
        %v5191 = vand.u32 %v5190, 4294901760
        %5192 = vmatpush1.msra.mxu0 %v5191
        %v5193 = vand.u32 %v286, 4294901760
        %5194 = vmatprep.mubr.f32.mxu0 %v5193
        %v5195 = vand.u32 %v285, 4294901760
        %5196 = vmatmul.mubr.f32.gmra.mrb[0].mxu0 %v5195
        %v5197 = vpop.f32.mrb[0].mxu0
        %v5198 = vadd.f32 %v4966, %v5197
        %v5199 = vpop.f32.mrb[0].mxu0
        %5200 = vdwg.mxu0
        %5201 = vmatprep.subr.mxu0 0.0
        %v5202 = vand.u32 %v451, 4294901760
        %v5203 = vsub.f32 %v451, %v5202
        %5204 = vmatpush1.msra.mxu0 %v5203
        %5205 = vmatprep.subr.mxu0 0.0
        %v5206 = vand.u32 %v452, 4294901760
        %v5207 = vsub.f32 %v452, %v5206
        %5208 = vmatpush1.msra.mxu0 %v5207
        %5209 = vmatprep.subr.mxu0 0.0
        %v5210 = vand.u32 %v453, 4294901760
        %v5211 = vsub.f32 %v453, %v5210
        %5212 = vmatpush1.msra.mxu0 %v5211
        %5213 = vmatprep.subr.mxu0 0.0
        %v5214 = vand.u32 %v454, 4294901760
        %v5215 = vsub.f32 %v454, %v5214
        %5216 = vmatpush1.msra.mxu0 %v5215
        %5217 = vmatprep.subr.mxu0 0.0
        %v5218 = vand.u32 %v455, 4294901760
        %v5219 = vsub.f32 %v455, %v5218
        %5220 = vmatpush1.msra.mxu0 %v5219
        %5221 = vmatprep.subr.mxu0 0.0
        %v5222 = vand.u32 %v456, 4294901760
        %v5223 = vsub.f32 %v456, %v5222
        %5224 = vmatpush1.msra.mxu0 %v5223
        %5225 = vmatprep.subr.mxu0 0.0
        %v5226 = vand.u32 %v457, 4294901760
        %v5227 = vsub.f32 %v457, %v5226
        %5228 = vmatpush1.msra.mxu0 %v5227
        %5229 = vmatprep.subr.mxu0 0.0
        %v5230 = vand.u32 %v458, 4294901760
        %v5231 = vsub.f32 %v458, %v5230
        %5232 = vmatpush1.msra.mxu0 %v5231
        %5233 = vmatprep.subr.mxu0 0.0
        %v5234 = vand.u32 %v459, 4294901760
        %v5235 = vsub.f32 %v459, %v5234
        %5236 = vmatpush1.msra.mxu0 %v5235
        %5237 = vmatprep.subr.mxu0 0.0
        %v5238 = vand.u32 %v460, 4294901760
        %v5239 = vsub.f32 %v460, %v5238
        %5240 = vmatpush1.msra.mxu0 %v5239
        %5241 = vmatprep.subr.mxu0 0.0
        %v5242 = vand.u32 %v461, 4294901760
        %v5243 = vsub.f32 %v461, %v5242
        %5244 = vmatpush1.msra.mxu0 %v5243
        %5245 = vmatprep.subr.mxu0 0.0
        %v5246 = vand.u32 %v462, 4294901760
        %v5247 = vsub.f32 %v462, %v5246
        %5248 = vmatpush1.msra.mxu0 %v5247
        %5249 = vmatprep.subr.mxu0 0.0
        %v5250 = vand.u32 %v463, 4294901760
        %v5251 = vsub.f32 %v463, %v5250
        %5252 = vmatpush1.msra.mxu0 %v5251
        %5253 = vmatprep.subr.mxu0 0.0
        %v5254 = vand.u32 %v464, 4294901760
        %v5255 = vsub.f32 %v464, %v5254
        %5256 = vmatpush1.msra.mxu0 %v5255
        %5257 = vmatprep.subr.mxu0 0.0
        %v5258 = vand.u32 %v465, 4294901760
        %v5259 = vsub.f32 %v465, %v5258
        %5260 = vmatpush1.msra.mxu0 %v5259
        %5261 = vmatprep.subr.mxu0 0.0
        %v5262 = vand.u32 %v466, 4294901760
        %v5263 = vsub.f32 %v466, %v5262
        %5264 = vmatpush1.msra.mxu0 %v5263
        %5265 = vmatprep.subr.mxu0 0.0
        %v5266 = vand.u32 %v467, 4294901760
        %v5267 = vsub.f32 %v467, %v5266
        %5268 = vmatpush1.msra.mxu0 %v5267
        %5269 = vmatprep.subr.mxu0 0.0
        %v5270 = vand.u32 %v468, 4294901760
        %v5271 = vsub.f32 %v468, %v5270
        %5272 = vmatpush1.msra.mxu0 %v5271
        %5273 = vmatprep.subr.mxu0 0.0
        %v5274 = vand.u32 %v469, 4294901760
        %v5275 = vsub.f32 %v469, %v5274
        %5276 = vmatpush1.msra.mxu0 %v5275
        %5277 = vmatprep.subr.mxu0 0.0
        %v5278 = vand.u32 %v470, 4294901760
        %v5279 = vsub.f32 %v470, %v5278
        %5280 = vmatpush1.msra.mxu0 %v5279
        %5281 = vmatprep.subr.mxu0 0.0
        %v5282 = vand.u32 %v471, 4294901760
        %v5283 = vsub.f32 %v471, %v5282
        %5284 = vmatpush1.msra.mxu0 %v5283
        %5285 = vmatprep.subr.mxu0 0.0
        %v5286 = vand.u32 %v472, 4294901760
        %v5287 = vsub.f32 %v472, %v5286
        %5288 = vmatpush1.msra.mxu0 %v5287
        %5289 = vmatprep.subr.mxu0 0.0
        %v5290 = vand.u32 %v473, 4294901760
        %v5291 = vsub.f32 %v473, %v5290
        %5292 = vmatpush1.msra.mxu0 %v5291
        %5293 = vmatprep.subr.mxu0 0.0
        %v5294 = vand.u32 %v474, 4294901760
        %v5295 = vsub.f32 %v474, %v5294
        %5296 = vmatpush1.msra.mxu0 %v5295
        %5297 = vmatprep.subr.mxu0 0.0
        %v5298 = vand.u32 %v475, 4294901760
        %v5299 = vsub.f32 %v475, %v5298
        %5300 = vmatpush1.msra.mxu0 %v5299
        %5301 = vmatprep.subr.mxu0 0.0
        %v5302 = vand.u32 %v476, 4294901760
        %v5303 = vsub.f32 %v476, %v5302
        %5304 = vmatpush1.msra.mxu0 %v5303
        %5305 = vmatprep.subr.mxu0 0.0
        %v5306 = vand.u32 %v477, 4294901760
        %v5307 = vsub.f32 %v477, %v5306
        %5308 = vmatpush1.msra.mxu0 %v5307
        %5309 = vmatprep.subr.mxu0 0.0
        %v5310 = vand.u32 %v478, 4294901760
        %v5311 = vsub.f32 %v478, %v5310
        %5312 = vmatpush1.msra.mxu0 %v5311
        %5313 = vmatprep.subr.mxu0 0.0
        %v5314 = vand.u32 %v479, 4294901760
        %v5315 = vsub.f32 %v479, %v5314
        %5316 = vmatpush1.msra.mxu0 %v5315
        %5317 = vmatprep.subr.mxu0 0.0
        %v5318 = vand.u32 %v480, 4294901760
        %v5319 = vsub.f32 %v480, %v5318
        %5320 = vmatpush1.msra.mxu0 %v5319
        %5321 = vmatprep.subr.mxu0 0.0
        %v5322 = vand.u32 %v481, 4294901760
        %v5323 = vsub.f32 %v481, %v5322
        %5324 = vmatpush1.msra.mxu0 %v5323
        %5325 = vmatprep.subr.mxu0 0.0
        %v5326 = vand.u32 %v482, 4294901760
        %v5327 = vsub.f32 %v482, %v5326
        %5328 = vmatpush1.msra.mxu0 %v5327
        %v5329 = vand.u32 %v286, 4294901760
        %v5330 = vsub.f32 %v286, %v5329
        %5331 = vmatprep.mubr.f32.mxu0 %v5330
        %v5332 = vand.u32 %v285, 4294901760
        %v5333 = vsub.f32 %v285, %v5332
        %5334 = vmatmul.mubr.f32.gmra.mrb[0].mxu0 %v5333
        %v5335 = vpop.f32.mrb[0].mxu0
        %v5336 = vadd.f32 %v5198, %v5335
        %v5337 = vpop.f32.mrb[0].mxu0
        %5338 = vdwg.mxu0
        %5339 = vmatprep.subr.mxu0 0.0
        %v5340 = vand.u32 %v451, 4294901760
        %5341 = vmatpush1.msra.mxu0 %v5340
        %5342 = vmatprep.subr.mxu0 0.0
        %v5343 = vand.u32 %v452, 4294901760
        %5344 = vmatpush1.msra.mxu0 %v5343
        %5345 = vmatprep.subr.mxu0 0.0
        %v5346 = vand.u32 %v453, 4294901760
        %5347 = vmatpush1.msra.mxu0 %v5346
        %5348 = vmatprep.subr.mxu0 0.0
        %v5349 = vand.u32 %v454, 4294901760
        %5350 = vmatpush1.msra.mxu0 %v5349
        %5351 = vmatprep.subr.mxu0 0.0
        %v5352 = vand.u32 %v455, 4294901760
        %5353 = vmatpush1.msra.mxu0 %v5352
        %5354 = vmatprep.subr.mxu0 0.0
        %v5355 = vand.u32 %v456, 4294901760
        %5356 = vmatpush1.msra.mxu0 %v5355
        %5357 = vmatprep.subr.mxu0 0.0
        %v5358 = vand.u32 %v457, 4294901760
        %5359 = vmatpush1.msra.mxu0 %v5358
        %5360 = vmatprep.subr.mxu0 0.0
        %v5361 = vand.u32 %v458, 4294901760
        %5362 = vmatpush1.msra.mxu0 %v5361
        %5363 = vmatprep.subr.mxu0 0.0
        %v5364 = vand.u32 %v459, 4294901760
        %5365 = vmatpush1.msra.mxu0 %v5364
        %5366 = vmatprep.subr.mxu0 0.0
        %v5367 = vand.u32 %v460, 4294901760
        %5368 = vmatpush1.msra.mxu0 %v5367
        %5369 = vmatprep.subr.mxu0 0.0
        %v5370 = vand.u32 %v461, 4294901760
        %5371 = vmatpush1.msra.mxu0 %v5370
        %5372 = vmatprep.subr.mxu0 0.0
        %v5373 = vand.u32 %v462, 4294901760
        %5374 = vmatpush1.msra.mxu0 %v5373
        %5375 = vmatprep.subr.mxu0 0.0
        %v5376 = vand.u32 %v463, 4294901760
        %5377 = vmatpush1.msra.mxu0 %v5376
        %5378 = vmatprep.subr.mxu0 0.0
        %v5379 = vand.u32 %v464, 4294901760
        %5380 = vmatpush1.msra.mxu0 %v5379
        %5381 = vmatprep.subr.mxu0 0.0
        %v5382 = vand.u32 %v465, 4294901760
        %5383 = vmatpush1.msra.mxu0 %v5382
        %5384 = vmatprep.subr.mxu0 0.0
        %v5385 = vand.u32 %v466, 4294901760
        %5386 = vmatpush1.msra.mxu0 %v5385
        %5387 = vmatprep.subr.mxu0 0.0
        %v5388 = vand.u32 %v467, 4294901760
        %5389 = vmatpush1.msra.mxu0 %v5388
        %5390 = vmatprep.subr.mxu0 0.0
        %v5391 = vand.u32 %v468, 4294901760
        %5392 = vmatpush1.msra.mxu0 %v5391
        %5393 = vmatprep.subr.mxu0 0.0
        %v5394 = vand.u32 %v469, 4294901760
        %5395 = vmatpush1.msra.mxu0 %v5394
        %5396 = vmatprep.subr.mxu0 0.0
        %v5397 = vand.u32 %v470, 4294901760
        %5398 = vmatpush1.msra.mxu0 %v5397
        %5399 = vmatprep.subr.mxu0 0.0
        %v5400 = vand.u32 %v471, 4294901760
        %5401 = vmatpush1.msra.mxu0 %v5400
        %5402 = vmatprep.subr.mxu0 0.0
        %v5403 = vand.u32 %v472, 4294901760
        %5404 = vmatpush1.msra.mxu0 %v5403
        %5405 = vmatprep.subr.mxu0 0.0
        %v5406 = vand.u32 %v473, 4294901760
        %5407 = vmatpush1.msra.mxu0 %v5406
        %5408 = vmatprep.subr.mxu0 0.0
        %v5409 = vand.u32 %v474, 4294901760
        %5410 = vmatpush1.msra.mxu0 %v5409
        %5411 = vmatprep.subr.mxu0 0.0
        %v5412 = vand.u32 %v475, 4294901760
        %5413 = vmatpush1.msra.mxu0 %v5412
        %5414 = vmatprep.subr.mxu0 0.0
        %v5415 = vand.u32 %v476, 4294901760
        %5416 = vmatpush1.msra.mxu0 %v5415
        %5417 = vmatprep.subr.mxu0 0.0
        %v5418 = vand.u32 %v477, 4294901760
        %5419 = vmatpush1.msra.mxu0 %v5418
        %5420 = vmatprep.subr.mxu0 0.0
        %v5421 = vand.u32 %v478, 4294901760
        %5422 = vmatpush1.msra.mxu0 %v5421
        %5423 = vmatprep.subr.mxu0 0.0
        %v5424 = vand.u32 %v479, 4294901760
        %5425 = vmatpush1.msra.mxu0 %v5424
        %5426 = vmatprep.subr.mxu0 0.0
        %v5427 = vand.u32 %v480, 4294901760
        %5428 = vmatpush1.msra.mxu0 %v5427
        %5429 = vmatprep.subr.mxu0 0.0
        %v5430 = vand.u32 %v481, 4294901760
        %5431 = vmatpush1.msra.mxu0 %v5430
        %5432 = vmatprep.subr.mxu0 0.0
        %v5433 = vand.u32 %v482, 4294901760
        %5434 = vmatpush1.msra.mxu0 %v5433
        %v5435 = vand.u32 %v286, 4294901760
        %v5436 = vsub.f32 %v286, %v5435
        %v5437 = vand.u32 %v5436, 4294901760
        %5438 = vmatprep.mubr.f32.mxu0 %v5437
        %v5439 = vand.u32 %v285, 4294901760
        %v5440 = vsub.f32 %v285, %v5439
        %v5441 = vand.u32 %v5440, 4294901760
        %5442 = vmatmul.mubr.f32.gmra.mrb[0].mxu0 %v5441
        %v5443 = vpop.f32.mrb[0].mxu0
        %v5444 = vadd.f32 %v5336, %v5443
        %v5445 = vpop.f32.mrb[0].mxu0
        %5446 = vdwg.mxu0
        %5447 = vmatprep.subr.mxu0 0.0
        %v5448 = vand.u32 %v451, 4294901760
        %v5449 = vsub.f32 %v451, %v5448
        %v5450 = vand.u32 %v5449, 4294901760
        %5451 = vmatpush1.msra.mxu0 %v5450
        %5452 = vmatprep.subr.mxu0 0.0
        %v5453 = vand.u32 %v452, 4294901760
        %v5454 = vsub.f32 %v452, %v5453
        %v5455 = vand.u32 %v5454, 4294901760
        %5456 = vmatpush1.msra.mxu0 %v5455
        %5457 = vmatprep.subr.mxu0 0.0
        %v5458 = vand.u32 %v453, 4294901760
        %v5459 = vsub.f32 %v453, %v5458
        %v5460 = vand.u32 %v5459, 4294901760
        %5461 = vmatpush1.msra.mxu0 %v5460
        %5462 = vmatprep.subr.mxu0 0.0
        %v5463 = vand.u32 %v454, 4294901760
        %v5464 = vsub.f32 %v454, %v5463
        %v5465 = vand.u32 %v5464, 4294901760
        %5466 = vmatpush1.msra.mxu0 %v5465
        %5467 = vmatprep.subr.mxu0 0.0
        %v5468 = vand.u32 %v455, 4294901760
        %v5469 = vsub.f32 %v455, %v5468
        %v5470 = vand.u32 %v5469, 4294901760
        %5471 = vmatpush1.msra.mxu0 %v5470
        %5472 = vmatprep.subr.mxu0 0.0
        %v5473 = vand.u32 %v456, 4294901760
        %v5474 = vsub.f32 %v456, %v5473
        %v5475 = vand.u32 %v5474, 4294901760
        %5476 = vmatpush1.msra.mxu0 %v5475
        %5477 = vmatprep.subr.mxu0 0.0
        %v5478 = vand.u32 %v457, 4294901760
        %v5479 = vsub.f32 %v457, %v5478
        %v5480 = vand.u32 %v5479, 4294901760
        %5481 = vmatpush1.msra.mxu0 %v5480
        %5482 = vmatprep.subr.mxu0 0.0
        %v5483 = vand.u32 %v458, 4294901760
        %v5484 = vsub.f32 %v458, %v5483
        %v5485 = vand.u32 %v5484, 4294901760
        %5486 = vmatpush1.msra.mxu0 %v5485
        %5487 = vmatprep.subr.mxu0 0.0
        %v5488 = vand.u32 %v459, 4294901760
        %v5489 = vsub.f32 %v459, %v5488
        %v5490 = vand.u32 %v5489, 4294901760
        %5491 = vmatpush1.msra.mxu0 %v5490
        %5492 = vmatprep.subr.mxu0 0.0
        %v5493 = vand.u32 %v460, 4294901760
        %v5494 = vsub.f32 %v460, %v5493
        %v5495 = vand.u32 %v5494, 4294901760
        %5496 = vmatpush1.msra.mxu0 %v5495
        %5497 = vmatprep.subr.mxu0 0.0
        %v5498 = vand.u32 %v461, 4294901760
        %v5499 = vsub.f32 %v461, %v5498
        %v5500 = vand.u32 %v5499, 4294901760
        %5501 = vmatpush1.msra.mxu0 %v5500
        %5502 = vmatprep.subr.mxu0 0.0
        %v5503 = vand.u32 %v462, 4294901760
        %v5504 = vsub.f32 %v462, %v5503
        %v5505 = vand.u32 %v5504, 4294901760
        %5506 = vmatpush1.msra.mxu0 %v5505
        %5507 = vmatprep.subr.mxu0 0.0
        %v5508 = vand.u32 %v463, 4294901760
        %v5509 = vsub.f32 %v463, %v5508
        %v5510 = vand.u32 %v5509, 4294901760
        %5511 = vmatpush1.msra.mxu0 %v5510
        %5512 = vmatprep.subr.mxu0 0.0
        %v5513 = vand.u32 %v464, 4294901760
        %v5514 = vsub.f32 %v464, %v5513
        %v5515 = vand.u32 %v5514, 4294901760
        %5516 = vmatpush1.msra.mxu0 %v5515
        %5517 = vmatprep.subr.mxu0 0.0
        %v5518 = vand.u32 %v465, 4294901760
        %v5519 = vsub.f32 %v465, %v5518
        %v5520 = vand.u32 %v5519, 4294901760
        %5521 = vmatpush1.msra.mxu0 %v5520
        %5522 = vmatprep.subr.mxu0 0.0
        %v5523 = vand.u32 %v466, 4294901760
        %v5524 = vsub.f32 %v466, %v5523
        %v5525 = vand.u32 %v5524, 4294901760
        %5526 = vmatpush1.msra.mxu0 %v5525
        %5527 = vmatprep.subr.mxu0 0.0
        %v5528 = vand.u32 %v467, 4294901760
        %v5529 = vsub.f32 %v467, %v5528
        %v5530 = vand.u32 %v5529, 4294901760
        %5531 = vmatpush1.msra.mxu0 %v5530
        %5532 = vmatprep.subr.mxu0 0.0
        %v5533 = vand.u32 %v468, 4294901760
        %v5534 = vsub.f32 %v468, %v5533
        %v5535 = vand.u32 %v5534, 4294901760
        %5536 = vmatpush1.msra.mxu0 %v5535
        %5537 = vmatprep.subr.mxu0 0.0
        %v5538 = vand.u32 %v469, 4294901760
        %v5539 = vsub.f32 %v469, %v5538
        %v5540 = vand.u32 %v5539, 4294901760
        %5541 = vmatpush1.msra.mxu0 %v5540
        %5542 = vmatprep.subr.mxu0 0.0
        %v5543 = vand.u32 %v470, 4294901760
        %v5544 = vsub.f32 %v470, %v5543
        %v5545 = vand.u32 %v5544, 4294901760
        %5546 = vmatpush1.msra.mxu0 %v5545
        %5547 = vmatprep.subr.mxu0 0.0
        %v5548 = vand.u32 %v471, 4294901760
        %v5549 = vsub.f32 %v471, %v5548
        %v5550 = vand.u32 %v5549, 4294901760
        %5551 = vmatpush1.msra.mxu0 %v5550
        %5552 = vmatprep.subr.mxu0 0.0
        %v5553 = vand.u32 %v472, 4294901760
        %v5554 = vsub.f32 %v472, %v5553
        %v5555 = vand.u32 %v5554, 4294901760
        %5556 = vmatpush1.msra.mxu0 %v5555
        %5557 = vmatprep.subr.mxu0 0.0
        %v5558 = vand.u32 %v473, 4294901760
        %v5559 = vsub.f32 %v473, %v5558
        %v5560 = vand.u32 %v5559, 4294901760
        %5561 = vmatpush1.msra.mxu0 %v5560
        %5562 = vmatprep.subr.mxu0 0.0
        %v5563 = vand.u32 %v474, 4294901760
        %v5564 = vsub.f32 %v474, %v5563
        %v5565 = vand.u32 %v5564, 4294901760
        %5566 = vmatpush1.msra.mxu0 %v5565
        %5567 = vmatprep.subr.mxu0 0.0
        %v5568 = vand.u32 %v475, 4294901760
        %v5569 = vsub.f32 %v475, %v5568
        %v5570 = vand.u32 %v5569, 4294901760
        %5571 = vmatpush1.msra.mxu0 %v5570
        %5572 = vmatprep.subr.mxu0 0.0
        %v5573 = vand.u32 %v476, 4294901760
        %v5574 = vsub.f32 %v476, %v5573
        %v5575 = vand.u32 %v5574, 4294901760
        %5576 = vmatpush1.msra.mxu0 %v5575
        %5577 = vmatprep.subr.mxu0 0.0
        %v5578 = vand.u32 %v477, 4294901760
        %v5579 = vsub.f32 %v477, %v5578
        %v5580 = vand.u32 %v5579, 4294901760
        %5581 = vmatpush1.msra.mxu0 %v5580
        %5582 = vmatprep.subr.mxu0 0.0
        %v5583 = vand.u32 %v478, 4294901760
        %v5584 = vsub.f32 %v478, %v5583
        %v5585 = vand.u32 %v5584, 4294901760
        %5586 = vmatpush1.msra.mxu0 %v5585
        %5587 = vmatprep.subr.mxu0 0.0
        %v5588 = vand.u32 %v479, 4294901760
        %v5589 = vsub.f32 %v479, %v5588
        %v5590 = vand.u32 %v5589, 4294901760
        %5591 = vmatpush1.msra.mxu0 %v5590
        %5592 = vmatprep.subr.mxu0 0.0
        %v5593 = vand.u32 %v480, 4294901760
        %v5594 = vsub.f32 %v480, %v5593
        %v5595 = vand.u32 %v5594, 4294901760
        %5596 = vmatpush1.msra.mxu0 %v5595
        %5597 = vmatprep.subr.mxu0 0.0
        %v5598 = vand.u32 %v481, 4294901760
        %v5599 = vsub.f32 %v481, %v5598
        %v5600 = vand.u32 %v5599, 4294901760
        %5601 = vmatpush1.msra.mxu0 %v5600
        %5602 = vmatprep.subr.mxu0 0.0
        %v5603 = vand.u32 %v482, 4294901760
        %v5604 = vsub.f32 %v482, %v5603
        %v5605 = vand.u32 %v5604, 4294901760
        %5606 = vmatpush1.msra.mxu0 %v5605
        %v5607 = vand.u32 %v286, 4294901760
        %5608 = vmatprep.mubr.f32.mxu0 %v5607
        %v5609 = vand.u32 %v285, 4294901760
        %5610 = vmatmul.mubr.f32.gmra.mrb[0].mxu0 %v5609
        %v5611 = vpop.f32.mrb[0].mxu0
        %v5612 = vadd.f32 %v5444, %v5611
        %v5613 = vpop.f32.mrb[0].mxu0
        %5614 = vdwg.mxu0
        %5615 = vmatprep.subr.mxu0 0.0
        %v5616 = vand.u32 %v451, 4294901760
        %5617 = vmatpush1.msra.mxu0 %v5616
        %5618 = vmatprep.subr.mxu0 0.0
        %v5619 = vand.u32 %v452, 4294901760
        %5620 = vmatpush1.msra.mxu0 %v5619
        %5621 = vmatprep.subr.mxu0 0.0
        %v5622 = vand.u32 %v453, 4294901760
        %5623 = vmatpush1.msra.mxu0 %v5622
        %5624 = vmatprep.subr.mxu0 0.0
        %v5625 = vand.u32 %v454, 4294901760
        %5626 = vmatpush1.msra.mxu0 %v5625
        %5627 = vmatprep.subr.mxu0 0.0
        %v5628 = vand.u32 %v455, 4294901760
        %5629 = vmatpush1.msra.mxu0 %v5628
        %5630 = vmatprep.subr.mxu0 0.0
        %v5631 = vand.u32 %v456, 4294901760
        %5632 = vmatpush1.msra.mxu0 %v5631
        %5633 = vmatprep.subr.mxu0 0.0
        %v5634 = vand.u32 %v457, 4294901760
        %5635 = vmatpush1.msra.mxu0 %v5634
        %5636 = vmatprep.subr.mxu0 0.0
        %v5637 = vand.u32 %v458, 4294901760
        %5638 = vmatpush1.msra.mxu0 %v5637
        %5639 = vmatprep.subr.mxu0 0.0
        %v5640 = vand.u32 %v459, 4294901760
        %5641 = vmatpush1.msra.mxu0 %v5640
        %5642 = vmatprep.subr.mxu0 0.0
        %v5643 = vand.u32 %v460, 4294901760
        %5644 = vmatpush1.msra.mxu0 %v5643
        %5645 = vmatprep.subr.mxu0 0.0
        %v5646 = vand.u32 %v461, 4294901760
        %5647 = vmatpush1.msra.mxu0 %v5646
        %5648 = vmatprep.subr.mxu0 0.0
        %v5649 = vand.u32 %v462, 4294901760
        %5650 = vmatpush1.msra.mxu0 %v5649
        %5651 = vmatprep.subr.mxu0 0.0
        %v5652 = vand.u32 %v463, 4294901760
        %5653 = vmatpush1.msra.mxu0 %v5652
        %5654 = vmatprep.subr.mxu0 0.0
        %v5655 = vand.u32 %v464, 4294901760
        %5656 = vmatpush1.msra.mxu0 %v5655
        %5657 = vmatprep.subr.mxu0 0.0
        %v5658 = vand.u32 %v465, 4294901760
        %5659 = vmatpush1.msra.mxu0 %v5658
        %5660 = vmatprep.subr.mxu0 0.0
        %v5661 = vand.u32 %v466, 4294901760
        %5662 = vmatpush1.msra.mxu0 %v5661
        %5663 = vmatprep.subr.mxu0 0.0
        %v5664 = vand.u32 %v467, 4294901760
        %5665 = vmatpush1.msra.mxu0 %v5664
        %5666 = vmatprep.subr.mxu0 0.0
        %v5667 = vand.u32 %v468, 4294901760
        %5668 = vmatpush1.msra.mxu0 %v5667
        %5669 = vmatprep.subr.mxu0 0.0
        %v5670 = vand.u32 %v469, 4294901760
        %5671 = vmatpush1.msra.mxu0 %v5670
        %5672 = vmatprep.subr.mxu0 0.0
        %v5673 = vand.u32 %v470, 4294901760
        %5674 = vmatpush1.msra.mxu0 %v5673
        %5675 = vmatprep.subr.mxu0 0.0
        %v5676 = vand.u32 %v471, 4294901760
        %5677 = vmatpush1.msra.mxu0 %v5676
        %5678 = vmatprep.subr.mxu0 0.0
        %v5679 = vand.u32 %v472, 4294901760
        %5680 = vmatpush1.msra.mxu0 %v5679
        %5681 = vmatprep.subr.mxu0 0.0
        %v5682 = vand.u32 %v473, 4294901760
        %5683 = vmatpush1.msra.mxu0 %v5682
        %5684 = vmatprep.subr.mxu0 0.0
        %v5685 = vand.u32 %v474, 4294901760
        %5686 = vmatpush1.msra.mxu0 %v5685
        %5687 = vmatprep.subr.mxu0 0.0
        %v5688 = vand.u32 %v475, 4294901760
        %5689 = vmatpush1.msra.mxu0 %v5688
        %5690 = vmatprep.subr.mxu0 0.0
        %v5691 = vand.u32 %v476, 4294901760
        %5692 = vmatpush1.msra.mxu0 %v5691
        %5693 = vmatprep.subr.mxu0 0.0
        %v5694 = vand.u32 %v477, 4294901760
        %5695 = vmatpush1.msra.mxu0 %v5694
        %5696 = vmatprep.subr.mxu0 0.0
        %v5697 = vand.u32 %v478, 4294901760
        %5698 = vmatpush1.msra.mxu0 %v5697
        %5699 = vmatprep.subr.mxu0 0.0
        %v5700 = vand.u32 %v479, 4294901760
        %5701 = vmatpush1.msra.mxu0 %v5700
        %5702 = vmatprep.subr.mxu0 0.0
        %v5703 = vand.u32 %v480, 4294901760
        %5704 = vmatpush1.msra.mxu0 %v5703
        %5705 = vmatprep.subr.mxu0 0.0
        %v5706 = vand.u32 %v481, 4294901760
        %5707 = vmatpush1.msra.mxu0 %v5706
        %5708 = vmatprep.subr.mxu0 0.0
        %v5709 = vand.u32 %v482, 4294901760
        %5710 = vmatpush1.msra.mxu0 %v5709
        %v5711 = vand.u32 %v286, 4294901760
        %5712 = vmatprep.mubr.f32.mxu0 %v5711
        %v5713 = vand.u32 %v285, 4294901760
        %5714 = vmatmul.mubr.f32.gmra.mrb[0].mxu0 %v5713
        %v5715 = vpop.f32.mrb[0].mxu0
        %v5716 = vadd.f32 %v5612, %v5715
        %v5717 = vpop.f32.mrb[0].mxu0
        %5718 = vdwg.mxu0
        %5719 = vmatprep.subr.mxu0 0.0
        %v5720 = vand.u32 %v483, 4294901760
        %5721 = vmatpush1.msra.mxu0 %v5720
        %5722 = vmatprep.subr.mxu0 0.0
        %v5723 = vand.u32 %v484, 4294901760
        %5724 = vmatpush1.msra.mxu0 %v5723
        %5725 = vmatprep.subr.mxu0 0.0
        %v5726 = vand.u32 %v485, 4294901760
        %5727 = vmatpush1.msra.mxu0 %v5726
        %5728 = vmatprep.subr.mxu0 0.0
        %v5729 = vand.u32 %v486, 4294901760
        %5730 = vmatpush1.msra.mxu0 %v5729
        %5731 = vmatprep.subr.mxu0 0.0
        %v5732 = vand.u32 %v487, 4294901760
        %5733 = vmatpush1.msra.mxu0 %v5732
        %5734 = vmatprep.subr.mxu0 0.0
        %v5735 = vand.u32 %v488, 4294901760
        %5736 = vmatpush1.msra.mxu0 %v5735
        %5737 = vmatprep.subr.mxu0 0.0
        %v5738 = vand.u32 %v489, 4294901760
        %5739 = vmatpush1.msra.mxu0 %v5738
        %5740 = vmatprep.subr.mxu0 0.0
        %v5741 = vand.u32 %v490, 4294901760
        %5742 = vmatpush1.msra.mxu0 %v5741
        %5743 = vmatprep.subr.mxu0 0.0
        %v5744 = vand.u32 %v491, 4294901760
        %5745 = vmatpush1.msra.mxu0 %v5744
        %5746 = vmatprep.subr.mxu0 0.0
        %v5747 = vand.u32 %v492, 4294901760
        %5748 = vmatpush1.msra.mxu0 %v5747
        %5749 = vmatprep.subr.mxu0 0.0
        %v5750 = vand.u32 %v493, 4294901760
        %5751 = vmatpush1.msra.mxu0 %v5750
        %5752 = vmatprep.subr.mxu0 0.0
        %v5753 = vand.u32 %v494, 4294901760
        %5754 = vmatpush1.msra.mxu0 %v5753
        %5755 = vmatprep.subr.mxu0 0.0
        %v5756 = vand.u32 %v495, 4294901760
        %5757 = vmatpush1.msra.mxu0 %v5756
        %5758 = vmatprep.subr.mxu0 0.0
        %v5759 = vand.u32 %v496, 4294901760
        %5760 = vmatpush1.msra.mxu0 %v5759
        %5761 = vmatprep.subr.mxu0 0.0
        %v5762 = vand.u32 %v497, 4294901760
        %5763 = vmatpush1.msra.mxu0 %v5762
        %5764 = vmatprep.subr.mxu0 0.0
        %v5765 = vand.u32 %v498, 4294901760
        %5766 = vmatpush1.msra.mxu0 %v5765
        %5767 = vmatprep.subr.mxu0 0.0
        %v5768 = vand.u32 %v499, 4294901760
        %5769 = vmatpush1.msra.mxu0 %v5768
        %5770 = vmatprep.subr.mxu0 0.0
        %v5771 = vand.u32 %v500, 4294901760
        %5772 = vmatpush1.msra.mxu0 %v5771
        %5773 = vmatprep.subr.mxu0 0.0
        %v5774 = vand.u32 %v501, 4294901760
        %5775 = vmatpush1.msra.mxu0 %v5774
        %5776 = vmatprep.subr.mxu0 0.0
        %v5777 = vand.u32 %v502, 4294901760
        %5778 = vmatpush1.msra.mxu0 %v5777
        %5779 = vmatprep.subr.mxu0 0.0
        %v5780 = vand.u32 %v503, 4294901760
        %5781 = vmatpush1.msra.mxu0 %v5780
        %5782 = vmatprep.subr.mxu0 0.0
        %v5783 = vand.u32 %v504, 4294901760
        %5784 = vmatpush1.msra.mxu0 %v5783
        %5785 = vmatprep.subr.mxu0 0.0
        %v5786 = vand.u32 %v505, 4294901760
        %5787 = vmatpush1.msra.mxu0 %v5786
        %5788 = vmatprep.subr.mxu0 0.0
        %v5789 = vand.u32 %v506, 4294901760
        %5790 = vmatpush1.msra.mxu0 %v5789
        %5791 = vmatprep.subr.mxu0 0.0
        %v5792 = vand.u32 %v507, 4294901760
        %5793 = vmatpush1.msra.mxu0 %v5792
        %5794 = vmatprep.subr.mxu0 0.0
        %v5795 = vand.u32 %v508, 4294901760
        %5796 = vmatpush1.msra.mxu0 %v5795
        %5797 = vmatprep.subr.mxu0 0.0
        %v5798 = vand.u32 %v509, 4294901760
        %5799 = vmatpush1.msra.mxu0 %v5798
        %5800 = vmatprep.subr.mxu0 0.0
        %v5801 = vand.u32 %v510, 4294901760
        %5802 = vmatpush1.msra.mxu0 %v5801
        %5803 = vmatprep.subr.mxu0 0.0
        %v5804 = vand.u32 %v511, 4294901760
        %5805 = vmatpush1.msra.mxu0 %v5804
        %5806 = vmatprep.subr.mxu0 0.0
        %v5807 = vand.u32 %v512, 4294901760
        %5808 = vmatpush1.msra.mxu0 %v5807
        %5809 = vmatprep.subr.mxu0 0.0
        %v5810 = vand.u32 %v513, 4294901760
        %5811 = vmatpush1.msra.mxu0 %v5810
        %5812 = vmatprep.subr.mxu0 0.0
        %v5813 = vand.u32 %v514, 4294901760
        %5814 = vmatpush1.msra.mxu0 %v5813
        %v5815 = vand.u32 %v288, 4294901760
        %v5816 = vsub.f32 %v288, %v5815
        %v5817 = vand.u32 %v5816, 4294901760
        %v5818 = vsub.f32 %v5816, %v5817
        %v5819 = vand.u32 %v5818, 4294901760
        %5820 = vmatprep.mubr.f32.mxu0 %v5819
        %v5821 = vand.u32 %v287, 4294901760
        %v5822 = vsub.f32 %v287, %v5821
        %v5823 = vand.u32 %v5822, 4294901760
        %v5824 = vsub.f32 %v5822, %v5823
        %v5825 = vand.u32 %v5824, 4294901760
        %5826 = vmatmul.mubr.f32.gmra.mrb[0].mxu0 %v5825
        %v5827 = vpop.f32.mrb[0].mxu0
        %v5828 = vadd.f32 %v5716, %v5827
        %v5829 = vpop.f32.mrb[0].mxu0
        %5830 = vdwg.mxu0
        %5831 = vmatprep.subr.mxu0 0.0
        %v5832 = vand.u32 %v483, 4294901760
        %v5833 = vsub.f32 %v483, %v5832
        %v5834 = vand.u32 %v5833, 4294901760
        %v5835 = vsub.f32 %v5833, %v5834
        %v5836 = vand.u32 %v5835, 4294901760
        %5837 = vmatpush1.msra.mxu0 %v5836
        %5838 = vmatprep.subr.mxu0 0.0
        %v5839 = vand.u32 %v484, 4294901760
        %v5840 = vsub.f32 %v484, %v5839
        %v5841 = vand.u32 %v5840, 4294901760
        %v5842 = vsub.f32 %v5840, %v5841
        %v5843 = vand.u32 %v5842, 4294901760
        %5844 = vmatpush1.msra.mxu0 %v5843
        %5845 = vmatprep.subr.mxu0 0.0
        %v5846 = vand.u32 %v485, 4294901760
        %v5847 = vsub.f32 %v485, %v5846
        %v5848 = vand.u32 %v5847, 4294901760
        %v5849 = vsub.f32 %v5847, %v5848
        %v5850 = vand.u32 %v5849, 4294901760
        %5851 = vmatpush1.msra.mxu0 %v5850
        %5852 = vmatprep.subr.mxu0 0.0
        %v5853 = vand.u32 %v486, 4294901760
        %v5854 = vsub.f32 %v486, %v5853
        %v5855 = vand.u32 %v5854, 4294901760
        %v5856 = vsub.f32 %v5854, %v5855
        %v5857 = vand.u32 %v5856, 4294901760
        %5858 = vmatpush1.msra.mxu0 %v5857
        %5859 = vmatprep.subr.mxu0 0.0
        %v5860 = vand.u32 %v487, 4294901760
        %v5861 = vsub.f32 %v487, %v5860
        %v5862 = vand.u32 %v5861, 4294901760
        %v5863 = vsub.f32 %v5861, %v5862
        %v5864 = vand.u32 %v5863, 4294901760
        %5865 = vmatpush1.msra.mxu0 %v5864
        %5866 = vmatprep.subr.mxu0 0.0
        %v5867 = vand.u32 %v488, 4294901760
        %v5868 = vsub.f32 %v488, %v5867
        %v5869 = vand.u32 %v5868, 4294901760
        %v5870 = vsub.f32 %v5868, %v5869
        %v5871 = vand.u32 %v5870, 4294901760
        %5872 = vmatpush1.msra.mxu0 %v5871
        %5873 = vmatprep.subr.mxu0 0.0
        %v5874 = vand.u32 %v489, 4294901760
        %v5875 = vsub.f32 %v489, %v5874
        %v5876 = vand.u32 %v5875, 4294901760
        %v5877 = vsub.f32 %v5875, %v5876
        %v5878 = vand.u32 %v5877, 4294901760
        %5879 = vmatpush1.msra.mxu0 %v5878
        %5880 = vmatprep.subr.mxu0 0.0
        %v5881 = vand.u32 %v490, 4294901760
        %v5882 = vsub.f32 %v490, %v5881
        %v5883 = vand.u32 %v5882, 4294901760
        %v5884 = vsub.f32 %v5882, %v5883
        %v5885 = vand.u32 %v5884, 4294901760
        %5886 = vmatpush1.msra.mxu0 %v5885
        %5887 = vmatprep.subr.mxu0 0.0
        %v5888 = vand.u32 %v491, 4294901760
        %v5889 = vsub.f32 %v491, %v5888
        %v5890 = vand.u32 %v5889, 4294901760
        %v5891 = vsub.f32 %v5889, %v5890
        %v5892 = vand.u32 %v5891, 4294901760
        %5893 = vmatpush1.msra.mxu0 %v5892
        %5894 = vmatprep.subr.mxu0 0.0
        %v5895 = vand.u32 %v492, 4294901760
        %v5896 = vsub.f32 %v492, %v5895
        %v5897 = vand.u32 %v5896, 4294901760
        %v5898 = vsub.f32 %v5896, %v5897
        %v5899 = vand.u32 %v5898, 4294901760
        %5900 = vmatpush1.msra.mxu0 %v5899
        %5901 = vmatprep.subr.mxu0 0.0
        %v5902 = vand.u32 %v493, 4294901760
        %v5903 = vsub.f32 %v493, %v5902
        %v5904 = vand.u32 %v5903, 4294901760
        %v5905 = vsub.f32 %v5903, %v5904
        %v5906 = vand.u32 %v5905, 4294901760
        %5907 = vmatpush1.msra.mxu0 %v5906
        %5908 = vmatprep.subr.mxu0 0.0
        %v5909 = vand.u32 %v494, 4294901760
        %v5910 = vsub.f32 %v494, %v5909
        %v5911 = vand.u32 %v5910, 4294901760
        %v5912 = vsub.f32 %v5910, %v5911
        %v5913 = vand.u32 %v5912, 4294901760
        %5914 = vmatpush1.msra.mxu0 %v5913
        %5915 = vmatprep.subr.mxu0 0.0
        %v5916 = vand.u32 %v495, 4294901760
        %v5917 = vsub.f32 %v495, %v5916
        %v5918 = vand.u32 %v5917, 4294901760
        %v5919 = vsub.f32 %v5917, %v5918
        %v5920 = vand.u32 %v5919, 4294901760
        %5921 = vmatpush1.msra.mxu0 %v5920
        %5922 = vmatprep.subr.mxu0 0.0
        %v5923 = vand.u32 %v496, 4294901760
        %v5924 = vsub.f32 %v496, %v5923
        %v5925 = vand.u32 %v5924, 4294901760
        %v5926 = vsub.f32 %v5924, %v5925
        %v5927 = vand.u32 %v5926, 4294901760
        %5928 = vmatpush1.msra.mxu0 %v5927
        %5929 = vmatprep.subr.mxu0 0.0
        %v5930 = vand.u32 %v497, 4294901760
        %v5931 = vsub.f32 %v497, %v5930
        %v5932 = vand.u32 %v5931, 4294901760
        %v5933 = vsub.f32 %v5931, %v5932
        %v5934 = vand.u32 %v5933, 4294901760
        %5935 = vmatpush1.msra.mxu0 %v5934
        %5936 = vmatprep.subr.mxu0 0.0
        %v5937 = vand.u32 %v498, 4294901760
        %v5938 = vsub.f32 %v498, %v5937
        %v5939 = vand.u32 %v5938, 4294901760
        %v5940 = vsub.f32 %v5938, %v5939
        %v5941 = vand.u32 %v5940, 4294901760
        %5942 = vmatpush1.msra.mxu0 %v5941
        %5943 = vmatprep.subr.mxu0 0.0
        %v5944 = vand.u32 %v499, 4294901760
        %v5945 = vsub.f32 %v499, %v5944
        %v5946 = vand.u32 %v5945, 4294901760
        %v5947 = vsub.f32 %v5945, %v5946
        %v5948 = vand.u32 %v5947, 4294901760
        %5949 = vmatpush1.msra.mxu0 %v5948
        %5950 = vmatprep.subr.mxu0 0.0
        %v5951 = vand.u32 %v500, 4294901760
        %v5952 = vsub.f32 %v500, %v5951
        %v5953 = vand.u32 %v5952, 4294901760
        %v5954 = vsub.f32 %v5952, %v5953
        %v5955 = vand.u32 %v5954, 4294901760
        %5956 = vmatpush1.msra.mxu0 %v5955
        %5957 = vmatprep.subr.mxu0 0.0
        %v5958 = vand.u32 %v501, 4294901760
        %v5959 = vsub.f32 %v501, %v5958
        %v5960 = vand.u32 %v5959, 4294901760
        %v5961 = vsub.f32 %v5959, %v5960
        %v5962 = vand.u32 %v5961, 4294901760
        %5963 = vmatpush1.msra.mxu0 %v5962
        %5964 = vmatprep.subr.mxu0 0.0
        %v5965 = vand.u32 %v502, 4294901760
        %v5966 = vsub.f32 %v502, %v5965
        %v5967 = vand.u32 %v5966, 4294901760
        %v5968 = vsub.f32 %v5966, %v5967
        %v5969 = vand.u32 %v5968, 4294901760
        %5970 = vmatpush1.msra.mxu0 %v5969
        %5971 = vmatprep.subr.mxu0 0.0
        %v5972 = vand.u32 %v503, 4294901760
        %v5973 = vsub.f32 %v503, %v5972
        %v5974 = vand.u32 %v5973, 4294901760
        %v5975 = vsub.f32 %v5973, %v5974
        %v5976 = vand.u32 %v5975, 4294901760
        %5977 = vmatpush1.msra.mxu0 %v5976
        %5978 = vmatprep.subr.mxu0 0.0
        %v5979 = vand.u32 %v504, 4294901760
        %v5980 = vsub.f32 %v504, %v5979
        %v5981 = vand.u32 %v5980, 4294901760
        %v5982 = vsub.f32 %v5980, %v5981
        %v5983 = vand.u32 %v5982, 4294901760
        %5984 = vmatpush1.msra.mxu0 %v5983
        %5985 = vmatprep.subr.mxu0 0.0
        %v5986 = vand.u32 %v505, 4294901760
        %v5987 = vsub.f32 %v505, %v5986
        %v5988 = vand.u32 %v5987, 4294901760
        %v5989 = vsub.f32 %v5987, %v5988
        %v5990 = vand.u32 %v5989, 4294901760
        %5991 = vmatpush1.msra.mxu0 %v5990
        %5992 = vmatprep.subr.mxu0 0.0
        %v5993 = vand.u32 %v506, 4294901760
        %v5994 = vsub.f32 %v506, %v5993
        %v5995 = vand.u32 %v5994, 4294901760
        %v5996 = vsub.f32 %v5994, %v5995
        %v5997 = vand.u32 %v5996, 4294901760
        %5998 = vmatpush1.msra.mxu0 %v5997
        %5999 = vmatprep.subr.mxu0 0.0
        %v6000 = vand.u32 %v507, 4294901760
        %v6001 = vsub.f32 %v507, %v6000
        %v6002 = vand.u32 %v6001, 4294901760
        %v6003 = vsub.f32 %v6001, %v6002
        %v6004 = vand.u32 %v6003, 4294901760
        %6005 = vmatpush1.msra.mxu0 %v6004
        %6006 = vmatprep.subr.mxu0 0.0
        %v6007 = vand.u32 %v508, 4294901760
        %v6008 = vsub.f32 %v508, %v6007
        %v6009 = vand.u32 %v6008, 4294901760
        %v6010 = vsub.f32 %v6008, %v6009
        %v6011 = vand.u32 %v6010, 4294901760
        %6012 = vmatpush1.msra.mxu0 %v6011
        %6013 = vmatprep.subr.mxu0 0.0
        %v6014 = vand.u32 %v509, 4294901760
        %v6015 = vsub.f32 %v509, %v6014
        %v6016 = vand.u32 %v6015, 4294901760
        %v6017 = vsub.f32 %v6015, %v6016
        %v6018 = vand.u32 %v6017, 4294901760
        %6019 = vmatpush1.msra.mxu0 %v6018
        %6020 = vmatprep.subr.mxu0 0.0
        %v6021 = vand.u32 %v510, 4294901760
        %v6022 = vsub.f32 %v510, %v6021
        %v6023 = vand.u32 %v6022, 4294901760
        %v6024 = vsub.f32 %v6022, %v6023
        %v6025 = vand.u32 %v6024, 4294901760
        %6026 = vmatpush1.msra.mxu0 %v6025
        %6027 = vmatprep.subr.mxu0 0.0
        %v6028 = vand.u32 %v511, 4294901760
        %v6029 = vsub.f32 %v511, %v6028
        %v6030 = vand.u32 %v6029, 4294901760
        %v6031 = vsub.f32 %v6029, %v6030
        %v6032 = vand.u32 %v6031, 4294901760
        %6033 = vmatpush1.msra.mxu0 %v6032
        %6034 = vmatprep.subr.mxu0 0.0
        %v6035 = vand.u32 %v512, 4294901760
        %v6036 = vsub.f32 %v512, %v6035
        %v6037 = vand.u32 %v6036, 4294901760
        %v6038 = vsub.f32 %v6036, %v6037
        %v6039 = vand.u32 %v6038, 4294901760
        %6040 = vmatpush1.msra.mxu0 %v6039
        %6041 = vmatprep.subr.mxu0 0.0
        %v6042 = vand.u32 %v513, 4294901760
        %v6043 = vsub.f32 %v513, %v6042
        %v6044 = vand.u32 %v6043, 4294901760
        %v6045 = vsub.f32 %v6043, %v6044
        %v6046 = vand.u32 %v6045, 4294901760
        %6047 = vmatpush1.msra.mxu0 %v6046
        %6048 = vmatprep.subr.mxu0 0.0
        %v6049 = vand.u32 %v514, 4294901760
        %v6050 = vsub.f32 %v514, %v6049
        %v6051 = vand.u32 %v6050, 4294901760
        %v6052 = vsub.f32 %v6050, %v6051
        %v6053 = vand.u32 %v6052, 4294901760
        %6054 = vmatpush1.msra.mxu0 %v6053
        %v6055 = vand.u32 %v288, 4294901760
        %6056 = vmatprep.mubr.f32.mxu0 %v6055
        %v6057 = vand.u32 %v287, 4294901760
        %6058 = vmatmul.mubr.f32.gmra.mrb[0].mxu0 %v6057
        %v6059 = vpop.f32.mrb[0].mxu0
        %v6060 = vadd.f32 %v5828, %v6059
        %v6061 = vpop.f32.mrb[0].mxu0
        %6062 = vdwg.mxu0
        %6063 = vmatprep.subr.mxu0 0.0
        %v6064 = vand.u32 %v483, 4294901760
        %v6065 = vsub.f32 %v483, %v6064
        %6066 = vmatpush1.msra.mxu0 %v6065
        %6067 = vmatprep.subr.mxu0 0.0
        %v6068 = vand.u32 %v484, 4294901760
        %v6069 = vsub.f32 %v484, %v6068
        %6070 = vmatpush1.msra.mxu0 %v6069
        %6071 = vmatprep.subr.mxu0 0.0
        %v6072 = vand.u32 %v485, 4294901760
        %v6073 = vsub.f32 %v485, %v6072
        %6074 = vmatpush1.msra.mxu0 %v6073
        %6075 = vmatprep.subr.mxu0 0.0
        %v6076 = vand.u32 %v486, 4294901760
        %v6077 = vsub.f32 %v486, %v6076
        %6078 = vmatpush1.msra.mxu0 %v6077
        %6079 = vmatprep.subr.mxu0 0.0
        %v6080 = vand.u32 %v487, 4294901760
        %v6081 = vsub.f32 %v487, %v6080
        %6082 = vmatpush1.msra.mxu0 %v6081
        %6083 = vmatprep.subr.mxu0 0.0
        %v6084 = vand.u32 %v488, 4294901760
        %v6085 = vsub.f32 %v488, %v6084
        %6086 = vmatpush1.msra.mxu0 %v6085
        %6087 = vmatprep.subr.mxu0 0.0
        %v6088 = vand.u32 %v489, 4294901760
        %v6089 = vsub.f32 %v489, %v6088
        %6090 = vmatpush1.msra.mxu0 %v6089
        %6091 = vmatprep.subr.mxu0 0.0
        %v6092 = vand.u32 %v490, 4294901760
        %v6093 = vsub.f32 %v490, %v6092
        %6094 = vmatpush1.msra.mxu0 %v6093
        %6095 = vmatprep.subr.mxu0 0.0
        %v6096 = vand.u32 %v491, 4294901760
        %v6097 = vsub.f32 %v491, %v6096
        %6098 = vmatpush1.msra.mxu0 %v6097
        %6099 = vmatprep.subr.mxu0 0.0
        %v6100 = vand.u32 %v492, 4294901760
        %v6101 = vsub.f32 %v492, %v6100
        %6102 = vmatpush1.msra.mxu0 %v6101
        %6103 = vmatprep.subr.mxu0 0.0
        %v6104 = vand.u32 %v493, 4294901760
        %v6105 = vsub.f32 %v493, %v6104
        %6106 = vmatpush1.msra.mxu0 %v6105
        %6107 = vmatprep.subr.mxu0 0.0
        %v6108 = vand.u32 %v494, 4294901760
        %v6109 = vsub.f32 %v494, %v6108
        %6110 = vmatpush1.msra.mxu0 %v6109
        %6111 = vmatprep.subr.mxu0 0.0
        %v6112 = vand.u32 %v495, 4294901760
        %v6113 = vsub.f32 %v495, %v6112
        %6114 = vmatpush1.msra.mxu0 %v6113
        %6115 = vmatprep.subr.mxu0 0.0
        %v6116 = vand.u32 %v496, 4294901760
        %v6117 = vsub.f32 %v496, %v6116
        %6118 = vmatpush1.msra.mxu0 %v6117
        %6119 = vmatprep.subr.mxu0 0.0
        %v6120 = vand.u32 %v497, 4294901760
        %v6121 = vsub.f32 %v497, %v6120
        %6122 = vmatpush1.msra.mxu0 %v6121
        %6123 = vmatprep.subr.mxu0 0.0
        %v6124 = vand.u32 %v498, 4294901760
        %v6125 = vsub.f32 %v498, %v6124
        %6126 = vmatpush1.msra.mxu0 %v6125
        %6127 = vmatprep.subr.mxu0 0.0
        %v6128 = vand.u32 %v499, 4294901760
        %v6129 = vsub.f32 %v499, %v6128
        %6130 = vmatpush1.msra.mxu0 %v6129
        %6131 = vmatprep.subr.mxu0 0.0
        %v6132 = vand.u32 %v500, 4294901760
        %v6133 = vsub.f32 %v500, %v6132
        %6134 = vmatpush1.msra.mxu0 %v6133
        %6135 = vmatprep.subr.mxu0 0.0
        %v6136 = vand.u32 %v501, 4294901760
        %v6137 = vsub.f32 %v501, %v6136
        %6138 = vmatpush1.msra.mxu0 %v6137
        %6139 = vmatprep.subr.mxu0 0.0
        %v6140 = vand.u32 %v502, 4294901760
        %v6141 = vsub.f32 %v502, %v6140
        %6142 = vmatpush1.msra.mxu0 %v6141
        %6143 = vmatprep.subr.mxu0 0.0
        %v6144 = vand.u32 %v503, 4294901760
        %v6145 = vsub.f32 %v503, %v6144
        %6146 = vmatpush1.msra.mxu0 %v6145
        %6147 = vmatprep.subr.mxu0 0.0
        %v6148 = vand.u32 %v504, 4294901760
        %v6149 = vsub.f32 %v504, %v6148
        %6150 = vmatpush1.msra.mxu0 %v6149
        %6151 = vmatprep.subr.mxu0 0.0
        %v6152 = vand.u32 %v505, 4294901760
        %v6153 = vsub.f32 %v505, %v6152
        %6154 = vmatpush1.msra.mxu0 %v6153
        %6155 = vmatprep.subr.mxu0 0.0
        %v6156 = vand.u32 %v506, 4294901760
        %v6157 = vsub.f32 %v506, %v6156
        %6158 = vmatpush1.msra.mxu0 %v6157
        %6159 = vmatprep.subr.mxu0 0.0
        %v6160 = vand.u32 %v507, 4294901760
        %v6161 = vsub.f32 %v507, %v6160
        %6162 = vmatpush1.msra.mxu0 %v6161
        %6163 = vmatprep.subr.mxu0 0.0
        %v6164 = vand.u32 %v508, 4294901760
        %v6165 = vsub.f32 %v508, %v6164
        %6166 = vmatpush1.msra.mxu0 %v6165
        %6167 = vmatprep.subr.mxu0 0.0
        %v6168 = vand.u32 %v509, 4294901760
        %v6169 = vsub.f32 %v509, %v6168
        %6170 = vmatpush1.msra.mxu0 %v6169
        %6171 = vmatprep.subr.mxu0 0.0
        %v6172 = vand.u32 %v510, 4294901760
        %v6173 = vsub.f32 %v510, %v6172
        %6174 = vmatpush1.msra.mxu0 %v6173
        %6175 = vmatprep.subr.mxu0 0.0
        %v6176 = vand.u32 %v511, 4294901760
        %v6177 = vsub.f32 %v511, %v6176
        %6178 = vmatpush1.msra.mxu0 %v6177
        %6179 = vmatprep.subr.mxu0 0.0
        %v6180 = vand.u32 %v512, 4294901760
        %v6181 = vsub.f32 %v512, %v6180
        %6182 = vmatpush1.msra.mxu0 %v6181
        %6183 = vmatprep.subr.mxu0 0.0
        %v6184 = vand.u32 %v513, 4294901760
        %v6185 = vsub.f32 %v513, %v6184
        %6186 = vmatpush1.msra.mxu0 %v6185
        %6187 = vmatprep.subr.mxu0 0.0
        %v6188 = vand.u32 %v514, 4294901760
        %v6189 = vsub.f32 %v514, %v6188
        %6190 = vmatpush1.msra.mxu0 %v6189
        %v6191 = vand.u32 %v288, 4294901760
        %v6192 = vsub.f32 %v288, %v6191
        %6193 = vmatprep.mubr.f32.mxu0 %v6192
        %v6194 = vand.u32 %v287, 4294901760
        %v6195 = vsub.f32 %v287, %v6194
        %6196 = vmatmul.mubr.f32.gmra.mrb[0].mxu0 %v6195
        %v6197 = vpop.f32.mrb[0].mxu0
        %v6198 = vadd.f32 %v6060, %v6197
        %v6199 = vpop.f32.mrb[0].mxu0
        %6200 = vdwg.mxu0
        %6201 = vmatprep.subr.mxu0 0.0
        %v6202 = vand.u32 %v483, 4294901760
        %6203 = vmatpush1.msra.mxu0 %v6202
        %6204 = vmatprep.subr.mxu0 0.0
        %v6205 = vand.u32 %v484, 4294901760
        %6206 = vmatpush1.msra.mxu0 %v6205
        %6207 = vmatprep.subr.mxu0 0.0
        %v6208 = vand.u32 %v485, 4294901760
        %6209 = vmatpush1.msra.mxu0 %v6208
        %6210 = vmatprep.subr.mxu0 0.0
        %v6211 = vand.u32 %v486, 4294901760
        %6212 = vmatpush1.msra.mxu0 %v6211
        %6213 = vmatprep.subr.mxu0 0.0
        %v6214 = vand.u32 %v487, 4294901760
        %6215 = vmatpush1.msra.mxu0 %v6214
        %6216 = vmatprep.subr.mxu0 0.0
        %v6217 = vand.u32 %v488, 4294901760
        %6218 = vmatpush1.msra.mxu0 %v6217
        %6219 = vmatprep.subr.mxu0 0.0
        %v6220 = vand.u32 %v489, 4294901760
        %6221 = vmatpush1.msra.mxu0 %v6220
        %6222 = vmatprep.subr.mxu0 0.0
        %v6223 = vand.u32 %v490, 4294901760
        %6224 = vmatpush1.msra.mxu0 %v6223
        %6225 = vmatprep.subr.mxu0 0.0
        %v6226 = vand.u32 %v491, 4294901760
        %6227 = vmatpush1.msra.mxu0 %v6226
        %6228 = vmatprep.subr.mxu0 0.0
        %v6229 = vand.u32 %v492, 4294901760
        %6230 = vmatpush1.msra.mxu0 %v6229
        %6231 = vmatprep.subr.mxu0 0.0
        %v6232 = vand.u32 %v493, 4294901760
        %6233 = vmatpush1.msra.mxu0 %v6232
        %6234 = vmatprep.subr.mxu0 0.0
        %v6235 = vand.u32 %v494, 4294901760
        %6236 = vmatpush1.msra.mxu0 %v6235
        %6237 = vmatprep.subr.mxu0 0.0
        %v6238 = vand.u32 %v495, 4294901760
        %6239 = vmatpush1.msra.mxu0 %v6238
        %6240 = vmatprep.subr.mxu0 0.0
        %v6241 = vand.u32 %v496, 4294901760
        %6242 = vmatpush1.msra.mxu0 %v6241
        %6243 = vmatprep.subr.mxu0 0.0
        %v6244 = vand.u32 %v497, 4294901760
        %6245 = vmatpush1.msra.mxu0 %v6244
        %6246 = vmatprep.subr.mxu0 0.0
        %v6247 = vand.u32 %v498, 4294901760
        %6248 = vmatpush1.msra.mxu0 %v6247
        %6249 = vmatprep.subr.mxu0 0.0
        %v6250 = vand.u32 %v499, 4294901760
        %6251 = vmatpush1.msra.mxu0 %v6250
        %6252 = vmatprep.subr.mxu0 0.0
        %v6253 = vand.u32 %v500, 4294901760
        %6254 = vmatpush1.msra.mxu0 %v6253
        %6255 = vmatprep.subr.mxu0 0.0
        %v6256 = vand.u32 %v501, 4294901760
        %6257 = vmatpush1.msra.mxu0 %v6256
        %6258 = vmatprep.subr.mxu0 0.0
        %v6259 = vand.u32 %v502, 4294901760
        %6260 = vmatpush1.msra.mxu0 %v6259
        %6261 = vmatprep.subr.mxu0 0.0
        %v6262 = vand.u32 %v503, 4294901760
        %6263 = vmatpush1.msra.mxu0 %v6262
        %6264 = vmatprep.subr.mxu0 0.0
        %v6265 = vand.u32 %v504, 4294901760
        %6266 = vmatpush1.msra.mxu0 %v6265
        %6267 = vmatprep.subr.mxu0 0.0
        %v6268 = vand.u32 %v505, 4294901760
        %6269 = vmatpush1.msra.mxu0 %v6268
        %6270 = vmatprep.subr.mxu0 0.0
        %v6271 = vand.u32 %v506, 4294901760
        %6272 = vmatpush1.msra.mxu0 %v6271
        %6273 = vmatprep.subr.mxu0 0.0
        %v6274 = vand.u32 %v507, 4294901760
        %6275 = vmatpush1.msra.mxu0 %v6274
        %6276 = vmatprep.subr.mxu0 0.0
        %v6277 = vand.u32 %v508, 4294901760
        %6278 = vmatpush1.msra.mxu0 %v6277
        %6279 = vmatprep.subr.mxu0 0.0
        %v6280 = vand.u32 %v509, 4294901760
        %6281 = vmatpush1.msra.mxu0 %v6280
        %6282 = vmatprep.subr.mxu0 0.0
        %v6283 = vand.u32 %v510, 4294901760
        %6284 = vmatpush1.msra.mxu0 %v6283
        %6285 = vmatprep.subr.mxu0 0.0
        %v6286 = vand.u32 %v511, 4294901760
        %6287 = vmatpush1.msra.mxu0 %v6286
        %6288 = vmatprep.subr.mxu0 0.0
        %v6289 = vand.u32 %v512, 4294901760
        %6290 = vmatpush1.msra.mxu0 %v6289
        %6291 = vmatprep.subr.mxu0 0.0
        %v6292 = vand.u32 %v513, 4294901760
        %6293 = vmatpush1.msra.mxu0 %v6292
        %6294 = vmatprep.subr.mxu0 0.0
        %v6295 = vand.u32 %v514, 4294901760
        %6296 = vmatpush1.msra.mxu0 %v6295
        %v6297 = vand.u32 %v288, 4294901760
        %v6298 = vsub.f32 %v288, %v6297
        %v6299 = vand.u32 %v6298, 4294901760
        %6300 = vmatprep.mubr.f32.mxu0 %v6299
        %v6301 = vand.u32 %v287, 4294901760
        %v6302 = vsub.f32 %v287, %v6301
        %v6303 = vand.u32 %v6302, 4294901760
        %6304 = vmatmul.mubr.f32.gmra.mrb[0].mxu0 %v6303
        %v6305 = vpop.f32.mrb[0].mxu0
        %v6306 = vadd.f32 %v6198, %v6305
        %v6307 = vpop.f32.mrb[0].mxu0
        %6308 = vdwg.mxu0
        %6309 = vmatprep.subr.mxu0 0.0
        %v6310 = vand.u32 %v483, 4294901760
        %v6311 = vsub.f32 %v483, %v6310
        %v6312 = vand.u32 %v6311, 4294901760
        %6313 = vmatpush1.msra.mxu0 %v6312
        %6314 = vmatprep.subr.mxu0 0.0
        %v6315 = vand.u32 %v484, 4294901760
        %v6316 = vsub.f32 %v484, %v6315
        %v6317 = vand.u32 %v6316, 4294901760
        %6318 = vmatpush1.msra.mxu0 %v6317
        %6319 = vmatprep.subr.mxu0 0.0
        %v6320 = vand.u32 %v485, 4294901760
        %v6321 = vsub.f32 %v485, %v6320
        %v6322 = vand.u32 %v6321, 4294901760
        %6323 = vmatpush1.msra.mxu0 %v6322
        %6324 = vmatprep.subr.mxu0 0.0
        %v6325 = vand.u32 %v486, 4294901760
        %v6326 = vsub.f32 %v486, %v6325
        %v6327 = vand.u32 %v6326, 4294901760
        %6328 = vmatpush1.msra.mxu0 %v6327
        %6329 = vmatprep.subr.mxu0 0.0
        %v6330 = vand.u32 %v487, 4294901760
        %v6331 = vsub.f32 %v487, %v6330
        %v6332 = vand.u32 %v6331, 4294901760
        %6333 = vmatpush1.msra.mxu0 %v6332
        %6334 = vmatprep.subr.mxu0 0.0
        %v6335 = vand.u32 %v488, 4294901760
        %v6336 = vsub.f32 %v488, %v6335
        %v6337 = vand.u32 %v6336, 4294901760
        %6338 = vmatpush1.msra.mxu0 %v6337
        %6339 = vmatprep.subr.mxu0 0.0
        %v6340 = vand.u32 %v489, 4294901760
        %v6341 = vsub.f32 %v489, %v6340
        %v6342 = vand.u32 %v6341, 4294901760
        %6343 = vmatpush1.msra.mxu0 %v6342
        %6344 = vmatprep.subr.mxu0 0.0
        %v6345 = vand.u32 %v490, 4294901760
        %v6346 = vsub.f32 %v490, %v6345
        %v6347 = vand.u32 %v6346, 4294901760
        %6348 = vmatpush1.msra.mxu0 %v6347
        %6349 = vmatprep.subr.mxu0 0.0
        %v6350 = vand.u32 %v491, 4294901760
        %v6351 = vsub.f32 %v491, %v6350
        %v6352 = vand.u32 %v6351, 4294901760
        %6353 = vmatpush1.msra.mxu0 %v6352
        %6354 = vmatprep.subr.mxu0 0.0
        %v6355 = vand.u32 %v492, 4294901760
        %v6356 = vsub.f32 %v492, %v6355
        %v6357 = vand.u32 %v6356, 4294901760
        %6358 = vmatpush1.msra.mxu0 %v6357
        %6359 = vmatprep.subr.mxu0 0.0
        %v6360 = vand.u32 %v493, 4294901760
        %v6361 = vsub.f32 %v493, %v6360
        %v6362 = vand.u32 %v6361, 4294901760
        %6363 = vmatpush1.msra.mxu0 %v6362
        %6364 = vmatprep.subr.mxu0 0.0
        %v6365 = vand.u32 %v494, 4294901760
        %v6366 = vsub.f32 %v494, %v6365
        %v6367 = vand.u32 %v6366, 4294901760
        %6368 = vmatpush1.msra.mxu0 %v6367
        %6369 = vmatprep.subr.mxu0 0.0
        %v6370 = vand.u32 %v495, 4294901760
        %v6371 = vsub.f32 %v495, %v6370
        %v6372 = vand.u32 %v6371, 4294901760
        %6373 = vmatpush1.msra.mxu0 %v6372
        %6374 = vmatprep.subr.mxu0 0.0
        %v6375 = vand.u32 %v496, 4294901760
        %v6376 = vsub.f32 %v496, %v6375
        %v6377 = vand.u32 %v6376, 4294901760
        %6378 = vmatpush1.msra.mxu0 %v6377
        %6379 = vmatprep.subr.mxu0 0.0
        %v6380 = vand.u32 %v497, 4294901760
        %v6381 = vsub.f32 %v497, %v6380
        %v6382 = vand.u32 %v6381, 4294901760
        %6383 = vmatpush1.msra.mxu0 %v6382
        %6384 = vmatprep.subr.mxu0 0.0
        %v6385 = vand.u32 %v498, 4294901760
        %v6386 = vsub.f32 %v498, %v6385
        %v6387 = vand.u32 %v6386, 4294901760
        %6388 = vmatpush1.msra.mxu0 %v6387
        %6389 = vmatprep.subr.mxu0 0.0
        %v6390 = vand.u32 %v499, 4294901760
        %v6391 = vsub.f32 %v499, %v6390
        %v6392 = vand.u32 %v6391, 4294901760
        %6393 = vmatpush1.msra.mxu0 %v6392
        %6394 = vmatprep.subr.mxu0 0.0
        %v6395 = vand.u32 %v500, 4294901760
        %v6396 = vsub.f32 %v500, %v6395
        %v6397 = vand.u32 %v6396, 4294901760
        %6398 = vmatpush1.msra.mxu0 %v6397
        %6399 = vmatprep.subr.mxu0 0.0
        %v6400 = vand.u32 %v501, 4294901760
        %v6401 = vsub.f32 %v501, %v6400
        %v6402 = vand.u32 %v6401, 4294901760
        %6403 = vmatpush1.msra.mxu0 %v6402
        %6404 = vmatprep.subr.mxu0 0.0
        %v6405 = vand.u32 %v502, 4294901760
        %v6406 = vsub.f32 %v502, %v6405
        %v6407 = vand.u32 %v6406, 4294901760
        %6408 = vmatpush1.msra.mxu0 %v6407
        %6409 = vmatprep.subr.mxu0 0.0
        %v6410 = vand.u32 %v503, 4294901760
        %v6411 = vsub.f32 %v503, %v6410
        %v6412 = vand.u32 %v6411, 4294901760
        %6413 = vmatpush1.msra.mxu0 %v6412
        %6414 = vmatprep.subr.mxu0 0.0
        %v6415 = vand.u32 %v504, 4294901760
        %v6416 = vsub.f32 %v504, %v6415
        %v6417 = vand.u32 %v6416, 4294901760
        %6418 = vmatpush1.msra.mxu0 %v6417
        %6419 = vmatprep.subr.mxu0 0.0
        %v6420 = vand.u32 %v505, 4294901760
        %v6421 = vsub.f32 %v505, %v6420
        %v6422 = vand.u32 %v6421, 4294901760
        %6423 = vmatpush1.msra.mxu0 %v6422
        %6424 = vmatprep.subr.mxu0 0.0
        %v6425 = vand.u32 %v506, 4294901760
        %v6426 = vsub.f32 %v506, %v6425
        %v6427 = vand.u32 %v6426, 4294901760
        %6428 = vmatpush1.msra.mxu0 %v6427
        %6429 = vmatprep.subr.mxu0 0.0
        %v6430 = vand.u32 %v507, 4294901760
        %v6431 = vsub.f32 %v507, %v6430
        %v6432 = vand.u32 %v6431, 4294901760
        %6433 = vmatpush1.msra.mxu0 %v6432
        %6434 = vmatprep.subr.mxu0 0.0
        %v6435 = vand.u32 %v508, 4294901760
        %v6436 = vsub.f32 %v508, %v6435
        %v6437 = vand.u32 %v6436, 4294901760
        %6438 = vmatpush1.msra.mxu0 %v6437
        %6439 = vmatprep.subr.mxu0 0.0
        %v6440 = vand.u32 %v509, 4294901760
        %v6441 = vsub.f32 %v509, %v6440
        %v6442 = vand.u32 %v6441, 4294901760
        %6443 = vmatpush1.msra.mxu0 %v6442
        %6444 = vmatprep.subr.mxu0 0.0
        %v6445 = vand.u32 %v510, 4294901760
        %v6446 = vsub.f32 %v510, %v6445
        %v6447 = vand.u32 %v6446, 4294901760
        %6448 = vmatpush1.msra.mxu0 %v6447
        %6449 = vmatprep.subr.mxu0 0.0
        %v6450 = vand.u32 %v511, 4294901760
        %v6451 = vsub.f32 %v511, %v6450
        %v6452 = vand.u32 %v6451, 4294901760
        %6453 = vmatpush1.msra.mxu0 %v6452
        %6454 = vmatprep.subr.mxu0 0.0
        %v6455 = vand.u32 %v512, 4294901760
        %v6456 = vsub.f32 %v512, %v6455
        %v6457 = vand.u32 %v6456, 4294901760
        %6458 = vmatpush1.msra.mxu0 %v6457
        %6459 = vmatprep.subr.mxu0 0.0
        %v6460 = vand.u32 %v513, 4294901760
        %v6461 = vsub.f32 %v513, %v6460
        %v6462 = vand.u32 %v6461, 4294901760
        %6463 = vmatpush1.msra.mxu0 %v6462
        %6464 = vmatprep.subr.mxu0 0.0
        %v6465 = vand.u32 %v514, 4294901760
        %v6466 = vsub.f32 %v514, %v6465
        %v6467 = vand.u32 %v6466, 4294901760
        %6468 = vmatpush1.msra.mxu0 %v6467
        %v6469 = vand.u32 %v288, 4294901760
        %6470 = vmatprep.mubr.f32.mxu0 %v6469
        %v6471 = vand.u32 %v287, 4294901760
        %6472 = vmatmul.mubr.f32.gmra.mrb[0].mxu0 %v6471
        %v6473 = vpop.f32.mrb[0].mxu0
        %v6474 = vadd.f32 %v6306, %v6473
        %v6475 = vpop.f32.mrb[0].mxu0
        %6476 = vdwg.mxu0
        %6477 = vmatprep.subr.mxu0 0.0
        %v6478 = vand.u32 %v483, 4294901760
        %6479 = vmatpush1.msra.mxu0 %v6478
        %6480 = vmatprep.subr.mxu0 0.0
        %v6481 = vand.u32 %v484, 4294901760
        %6482 = vmatpush1.msra.mxu0 %v6481
        %6483 = vmatprep.subr.mxu0 0.0
        %v6484 = vand.u32 %v485, 4294901760
        %6485 = vmatpush1.msra.mxu0 %v6484
        %6486 = vmatprep.subr.mxu0 0.0
        %v6487 = vand.u32 %v486, 4294901760
        %6488 = vmatpush1.msra.mxu0 %v6487
        %6489 = vmatprep.subr.mxu0 0.0
        %v6490 = vand.u32 %v487, 4294901760
        %6491 = vmatpush1.msra.mxu0 %v6490
        %6492 = vmatprep.subr.mxu0 0.0
        %v6493 = vand.u32 %v488, 4294901760
        %6494 = vmatpush1.msra.mxu0 %v6493
        %6495 = vmatprep.subr.mxu0 0.0
        %v6496 = vand.u32 %v489, 4294901760
        %6497 = vmatpush1.msra.mxu0 %v6496
        %6498 = vmatprep.subr.mxu0 0.0
        %v6499 = vand.u32 %v490, 4294901760
        %6500 = vmatpush1.msra.mxu0 %v6499
        %6501 = vmatprep.subr.mxu0 0.0
        %v6502 = vand.u32 %v491, 4294901760
        %6503 = vmatpush1.msra.mxu0 %v6502
        %6504 = vmatprep.subr.mxu0 0.0
        %v6505 = vand.u32 %v492, 4294901760
        %6506 = vmatpush1.msra.mxu0 %v6505
        %6507 = vmatprep.subr.mxu0 0.0
        %v6508 = vand.u32 %v493, 4294901760
        %6509 = vmatpush1.msra.mxu0 %v6508
        %6510 = vmatprep.subr.mxu0 0.0
        %v6511 = vand.u32 %v494, 4294901760
        %6512 = vmatpush1.msra.mxu0 %v6511
        %6513 = vmatprep.subr.mxu0 0.0
        %v6514 = vand.u32 %v495, 4294901760
        %6515 = vmatpush1.msra.mxu0 %v6514
        %6516 = vmatprep.subr.mxu0 0.0
        %v6517 = vand.u32 %v496, 4294901760
        %6518 = vmatpush1.msra.mxu0 %v6517
        %6519 = vmatprep.subr.mxu0 0.0
        %v6520 = vand.u32 %v497, 4294901760
        %6521 = vmatpush1.msra.mxu0 %v6520
        %6522 = vmatprep.subr.mxu0 0.0
        %v6523 = vand.u32 %v498, 4294901760
        %6524 = vmatpush1.msra.mxu0 %v6523
        %6525 = vmatprep.subr.mxu0 0.0
        %v6526 = vand.u32 %v499, 4294901760
        %6527 = vmatpush1.msra.mxu0 %v6526
        %6528 = vmatprep.subr.mxu0 0.0
        %v6529 = vand.u32 %v500, 4294901760
        %6530 = vmatpush1.msra.mxu0 %v6529
        %6531 = vmatprep.subr.mxu0 0.0
        %v6532 = vand.u32 %v501, 4294901760
        %6533 = vmatpush1.msra.mxu0 %v6532
        %6534 = vmatprep.subr.mxu0 0.0
        %v6535 = vand.u32 %v502, 4294901760
        %6536 = vmatpush1.msra.mxu0 %v6535
        %6537 = vmatprep.subr.mxu0 0.0
        %v6538 = vand.u32 %v503, 4294901760
        %6539 = vmatpush1.msra.mxu0 %v6538
        %6540 = vmatprep.subr.mxu0 0.0
        %v6541 = vand.u32 %v504, 4294901760
        %6542 = vmatpush1.msra.mxu0 %v6541
        %6543 = vmatprep.subr.mxu0 0.0
        %v6544 = vand.u32 %v505, 4294901760
        %6545 = vmatpush1.msra.mxu0 %v6544
        %6546 = vmatprep.subr.mxu0 0.0
        %v6547 = vand.u32 %v506, 4294901760
        %6548 = vmatpush1.msra.mxu0 %v6547
        %6549 = vmatprep.subr.mxu0 0.0
        %v6550 = vand.u32 %v507, 4294901760
        %6551 = vmatpush1.msra.mxu0 %v6550
        %6552 = vmatprep.subr.mxu0 0.0
        %v6553 = vand.u32 %v508, 4294901760
        %6554 = vmatpush1.msra.mxu0 %v6553
        %6555 = vmatprep.subr.mxu0 0.0
        %v6556 = vand.u32 %v509, 4294901760
        %6557 = vmatpush1.msra.mxu0 %v6556
        %6558 = vmatprep.subr.mxu0 0.0
        %v6559 = vand.u32 %v510, 4294901760
        %6560 = vmatpush1.msra.mxu0 %v6559
        %6561 = vmatprep.subr.mxu0 0.0
        %v6562 = vand.u32 %v511, 4294901760
        %6563 = vmatpush1.msra.mxu0 %v6562
        %6564 = vmatprep.subr.mxu0 0.0
        %v6565 = vand.u32 %v512, 4294901760
        %6566 = vmatpush1.msra.mxu0 %v6565
        %6567 = vmatprep.subr.mxu0 0.0
        %v6568 = vand.u32 %v513, 4294901760
        %6569 = vmatpush1.msra.mxu0 %v6568
        %6570 = vmatprep.subr.mxu0 0.0
        %v6571 = vand.u32 %v514, 4294901760
        %6572 = vmatpush1.msra.mxu0 %v6571
        %v6573 = vand.u32 %v288, 4294901760
        %6574 = vmatprep.mubr.f32.mxu0 %v6573
        %v6575 = vand.u32 %v287, 4294901760
        %6576 = vmatmul.mubr.f32.gmra.mrb[0].mxu0 %v6575
        %v6577 = vpop.f32.mrb[0].mxu0
        %v6578 = vadd.f32 %v6474, %v6577
        %v6579 = vpop.f32.mrb[0].mxu0
        %6580 = vdwg.mxu0
        %6581 = vmatprep.subr.mxu0 0.0
        %v6582 = vand.u32 %v515, 4294901760
        %6583 = vmatpush1.msra.mxu0 %v6582
        %6584 = vmatprep.subr.mxu0 0.0
        %v6585 = vand.u32 %v516, 4294901760
        %6586 = vmatpush1.msra.mxu0 %v6585
        %6587 = vmatprep.subr.mxu0 0.0
        %v6588 = vand.u32 %v517, 4294901760
        %6589 = vmatpush1.msra.mxu0 %v6588
        %6590 = vmatprep.subr.mxu0 0.0
        %v6591 = vand.u32 %v518, 4294901760
        %6592 = vmatpush1.msra.mxu0 %v6591
        %6593 = vmatprep.subr.mxu0 0.0
        %v6594 = vand.u32 %v519, 4294901760
        %6595 = vmatpush1.msra.mxu0 %v6594
        %6596 = vmatprep.subr.mxu0 0.0
        %v6597 = vand.u32 %v520, 4294901760
        %6598 = vmatpush1.msra.mxu0 %v6597
        %6599 = vmatprep.subr.mxu0 0.0
        %v6600 = vand.u32 %v521, 4294901760
        %6601 = vmatpush1.msra.mxu0 %v6600
        %6602 = vmatprep.subr.mxu0 0.0
        %v6603 = vand.u32 %v522, 4294901760
        %6604 = vmatpush1.msra.mxu0 %v6603
        %6605 = vmatprep.subr.mxu0 0.0
        %v6606 = vand.u32 %v523, 4294901760
        %6607 = vmatpush1.msra.mxu0 %v6606
        %6608 = vmatprep.subr.mxu0 0.0
        %v6609 = vand.u32 %v524, 4294901760
        %6610 = vmatpush1.msra.mxu0 %v6609
        %6611 = vmatprep.subr.mxu0 0.0
        %v6612 = vand.u32 %v525, 4294901760
        %6613 = vmatpush1.msra.mxu0 %v6612
        %6614 = vmatprep.subr.mxu0 0.0
        %v6615 = vand.u32 %v526, 4294901760
        %6616 = vmatpush1.msra.mxu0 %v6615
        %6617 = vmatprep.subr.mxu0 0.0
        %v6618 = vand.u32 %v527, 4294901760
        %6619 = vmatpush1.msra.mxu0 %v6618
        %6620 = vmatprep.subr.mxu0 0.0
        %v6621 = vand.u32 %v528, 4294901760
        %6622 = vmatpush1.msra.mxu0 %v6621
        %6623 = vmatprep.subr.mxu0 0.0
        %v6624 = vand.u32 %v529, 4294901760
        %6625 = vmatpush1.msra.mxu0 %v6624
        %6626 = vmatprep.subr.mxu0 0.0
        %v6627 = vand.u32 %v530, 4294901760
        %6628 = vmatpush1.msra.mxu0 %v6627
        %6629 = vmatprep.subr.mxu0 0.0
        %v6630 = vand.u32 %v531, 4294901760
        %6631 = vmatpush1.msra.mxu0 %v6630
        %6632 = vmatprep.subr.mxu0 0.0
        %v6633 = vand.u32 %v532, 4294901760
        %6634 = vmatpush1.msra.mxu0 %v6633
        %6635 = vmatprep.subr.mxu0 0.0
        %v6636 = vand.u32 %v533, 4294901760
        %6637 = vmatpush1.msra.mxu0 %v6636
        %6638 = vmatprep.subr.mxu0 0.0
        %v6639 = vand.u32 %v534, 4294901760
        %6640 = vmatpush1.msra.mxu0 %v6639
        %6641 = vmatprep.subr.mxu0 0.0
        %v6642 = vand.u32 %v535, 4294901760
        %6643 = vmatpush1.msra.mxu0 %v6642
        %6644 = vmatprep.subr.mxu0 0.0
        %v6645 = vand.u32 %v536, 4294901760
        %6646 = vmatpush1.msra.mxu0 %v6645
        %6647 = vmatprep.subr.mxu0 0.0
        %v6648 = vand.u32 %v537, 4294901760
        %6649 = vmatpush1.msra.mxu0 %v6648
        %6650 = vmatprep.subr.mxu0 0.0
        %v6651 = vand.u32 %v538, 4294901760
        %6652 = vmatpush1.msra.mxu0 %v6651
        %6653 = vmatprep.subr.mxu0 0.0
        %v6654 = vand.u32 %v539, 4294901760
        %6655 = vmatpush1.msra.mxu0 %v6654
        %6656 = vmatprep.subr.mxu0 0.0
        %v6657 = vand.u32 %v540, 4294901760
        %6658 = vmatpush1.msra.mxu0 %v6657
        %6659 = vmatprep.subr.mxu0 0.0
        %v6660 = vand.u32 %v541, 4294901760
        %6661 = vmatpush1.msra.mxu0 %v6660
        %6662 = vmatprep.subr.mxu0 0.0
        %v6663 = vand.u32 %v542, 4294901760
        %6664 = vmatpush1.msra.mxu0 %v6663
        %6665 = vmatprep.subr.mxu0 0.0
        %v6666 = vand.u32 %v543, 4294901760
        %6667 = vmatpush1.msra.mxu0 %v6666
        %6668 = vmatprep.subr.mxu0 0.0
        %v6669 = vand.u32 %v544, 4294901760
        %6670 = vmatpush1.msra.mxu0 %v6669
        %6671 = vmatprep.subr.mxu0 0.0
        %v6672 = vand.u32 %v545, 4294901760
        %6673 = vmatpush1.msra.mxu0 %v6672
        %6674 = vmatprep.subr.mxu0 0.0
        %v6675 = vand.u32 %v546, 4294901760
        %6676 = vmatpush1.msra.mxu0 %v6675
        %v6677 = vand.u32 %v290, 4294901760
        %v6678 = vsub.f32 %v290, %v6677
        %v6679 = vand.u32 %v6678, 4294901760
        %v6680 = vsub.f32 %v6678, %v6679
        %v6681 = vand.u32 %v6680, 4294901760
        %6682 = vmatprep.mubr.f32.mxu0 %v6681
        %v6683 = vand.u32 %v289, 4294901760
        %v6684 = vsub.f32 %v289, %v6683
        %v6685 = vand.u32 %v6684, 4294901760
        %v6686 = vsub.f32 %v6684, %v6685
        %v6687 = vand.u32 %v6686, 4294901760
        %6688 = vmatmul.mubr.f32.gmra.mrb[0].mxu0 %v6687
        %v6689 = vpop.f32.mrb[0].mxu0
        %v6690 = vadd.f32 %v6578, %v6689
        %v6691 = vpop.f32.mrb[0].mxu0
        %6692 = vdwg.mxu0
        %6693 = vmatprep.subr.mxu0 0.0
        %v6694 = vand.u32 %v515, 4294901760
        %v6695 = vsub.f32 %v515, %v6694
        %v6696 = vand.u32 %v6695, 4294901760
        %v6697 = vsub.f32 %v6695, %v6696
        %v6698 = vand.u32 %v6697, 4294901760
        %6699 = vmatpush1.msra.mxu0 %v6698
        %6700 = vmatprep.subr.mxu0 0.0
        %v6701 = vand.u32 %v516, 4294901760
        %v6702 = vsub.f32 %v516, %v6701
        %v6703 = vand.u32 %v6702, 4294901760
        %v6704 = vsub.f32 %v6702, %v6703
        %v6705 = vand.u32 %v6704, 4294901760
        %6706 = vmatpush1.msra.mxu0 %v6705
        %6707 = vmatprep.subr.mxu0 0.0
        %v6708 = vand.u32 %v517, 4294901760
        %v6709 = vsub.f32 %v517, %v6708
        %v6710 = vand.u32 %v6709, 4294901760
        %v6711 = vsub.f32 %v6709, %v6710
        %v6712 = vand.u32 %v6711, 4294901760
        %6713 = vmatpush1.msra.mxu0 %v6712
        %6714 = vmatprep.subr.mxu0 0.0
        %v6715 = vand.u32 %v518, 4294901760
        %v6716 = vsub.f32 %v518, %v6715
        %v6717 = vand.u32 %v6716, 4294901760
        %v6718 = vsub.f32 %v6716, %v6717
        %v6719 = vand.u32 %v6718, 4294901760
        %6720 = vmatpush1.msra.mxu0 %v6719
        %6721 = vmatprep.subr.mxu0 0.0
        %v6722 = vand.u32 %v519, 4294901760
        %v6723 = vsub.f32 %v519, %v6722
        %v6724 = vand.u32 %v6723, 4294901760
        %v6725 = vsub.f32 %v6723, %v6724
        %v6726 = vand.u32 %v6725, 4294901760
        %6727 = vmatpush1.msra.mxu0 %v6726
        %6728 = vmatprep.subr.mxu0 0.0
        %v6729 = vand.u32 %v520, 4294901760
        %v6730 = vsub.f32 %v520, %v6729
        %v6731 = vand.u32 %v6730, 4294901760
        %v6732 = vsub.f32 %v6730, %v6731
        %v6733 = vand.u32 %v6732, 4294901760
        %6734 = vmatpush1.msra.mxu0 %v6733
        %6735 = vmatprep.subr.mxu0 0.0
        %v6736 = vand.u32 %v521, 4294901760
        %v6737 = vsub.f32 %v521, %v6736
        %v6738 = vand.u32 %v6737, 4294901760
        %v6739 = vsub.f32 %v6737, %v6738
        %v6740 = vand.u32 %v6739, 4294901760
        %6741 = vmatpush1.msra.mxu0 %v6740
        %6742 = vmatprep.subr.mxu0 0.0
        %v6743 = vand.u32 %v522, 4294901760
        %v6744 = vsub.f32 %v522, %v6743
        %v6745 = vand.u32 %v6744, 4294901760
        %v6746 = vsub.f32 %v6744, %v6745
        %v6747 = vand.u32 %v6746, 4294901760
        %6748 = vmatpush1.msra.mxu0 %v6747
        %6749 = vmatprep.subr.mxu0 0.0
        %v6750 = vand.u32 %v523, 4294901760
        %v6751 = vsub.f32 %v523, %v6750
        %v6752 = vand.u32 %v6751, 4294901760
        %v6753 = vsub.f32 %v6751, %v6752
        %v6754 = vand.u32 %v6753, 4294901760
        %6755 = vmatpush1.msra.mxu0 %v6754
        %6756 = vmatprep.subr.mxu0 0.0
        %v6757 = vand.u32 %v524, 4294901760
        %v6758 = vsub.f32 %v524, %v6757
        %v6759 = vand.u32 %v6758, 4294901760
        %v6760 = vsub.f32 %v6758, %v6759
        %v6761 = vand.u32 %v6760, 4294901760
        %6762 = vmatpush1.msra.mxu0 %v6761
        %6763 = vmatprep.subr.mxu0 0.0
        %v6764 = vand.u32 %v525, 4294901760
        %v6765 = vsub.f32 %v525, %v6764
        %v6766 = vand.u32 %v6765, 4294901760
        %v6767 = vsub.f32 %v6765, %v6766
        %v6768 = vand.u32 %v6767, 4294901760
        %6769 = vmatpush1.msra.mxu0 %v6768
        %6770 = vmatprep.subr.mxu0 0.0
        %v6771 = vand.u32 %v526, 4294901760
        %v6772 = vsub.f32 %v526, %v6771
        %v6773 = vand.u32 %v6772, 4294901760
        %v6774 = vsub.f32 %v6772, %v6773
        %v6775 = vand.u32 %v6774, 4294901760
        %6776 = vmatpush1.msra.mxu0 %v6775
        %6777 = vmatprep.subr.mxu0 0.0
        %v6778 = vand.u32 %v527, 4294901760
        %v6779 = vsub.f32 %v527, %v6778
        %v6780 = vand.u32 %v6779, 4294901760
        %v6781 = vsub.f32 %v6779, %v6780
        %v6782 = vand.u32 %v6781, 4294901760
        %6783 = vmatpush1.msra.mxu0 %v6782
        %6784 = vmatprep.subr.mxu0 0.0
        %v6785 = vand.u32 %v528, 4294901760
        %v6786 = vsub.f32 %v528, %v6785
        %v6787 = vand.u32 %v6786, 4294901760
        %v6788 = vsub.f32 %v6786, %v6787
        %v6789 = vand.u32 %v6788, 4294901760
        %6790 = vmatpush1.msra.mxu0 %v6789
        %6791 = vmatprep.subr.mxu0 0.0
        %v6792 = vand.u32 %v529, 4294901760
        %v6793 = vsub.f32 %v529, %v6792
        %v6794 = vand.u32 %v6793, 4294901760
        %v6795 = vsub.f32 %v6793, %v6794
        %v6796 = vand.u32 %v6795, 4294901760
        %6797 = vmatpush1.msra.mxu0 %v6796
        %6798 = vmatprep.subr.mxu0 0.0
        %v6799 = vand.u32 %v530, 4294901760
        %v6800 = vsub.f32 %v530, %v6799
        %v6801 = vand.u32 %v6800, 4294901760
        %v6802 = vsub.f32 %v6800, %v6801
        %v6803 = vand.u32 %v6802, 4294901760
        %6804 = vmatpush1.msra.mxu0 %v6803
        %6805 = vmatprep.subr.mxu0 0.0
        %v6806 = vand.u32 %v531, 4294901760
        %v6807 = vsub.f32 %v531, %v6806
        %v6808 = vand.u32 %v6807, 4294901760
        %v6809 = vsub.f32 %v6807, %v6808
        %v6810 = vand.u32 %v6809, 4294901760
        %6811 = vmatpush1.msra.mxu0 %v6810
        %6812 = vmatprep.subr.mxu0 0.0
        %v6813 = vand.u32 %v532, 4294901760
        %v6814 = vsub.f32 %v532, %v6813
        %v6815 = vand.u32 %v6814, 4294901760
        %v6816 = vsub.f32 %v6814, %v6815
        %v6817 = vand.u32 %v6816, 4294901760
        %6818 = vmatpush1.msra.mxu0 %v6817
        %6819 = vmatprep.subr.mxu0 0.0
        %v6820 = vand.u32 %v533, 4294901760
        %v6821 = vsub.f32 %v533, %v6820
        %v6822 = vand.u32 %v6821, 4294901760
        %v6823 = vsub.f32 %v6821, %v6822
        %v6824 = vand.u32 %v6823, 4294901760
        %6825 = vmatpush1.msra.mxu0 %v6824
        %6826 = vmatprep.subr.mxu0 0.0
        %v6827 = vand.u32 %v534, 4294901760
        %v6828 = vsub.f32 %v534, %v6827
        %v6829 = vand.u32 %v6828, 4294901760
        %v6830 = vsub.f32 %v6828, %v6829
        %v6831 = vand.u32 %v6830, 4294901760
        %6832 = vmatpush1.msra.mxu0 %v6831
        %6833 = vmatprep.subr.mxu0 0.0
        %v6834 = vand.u32 %v535, 4294901760
        %v6835 = vsub.f32 %v535, %v6834
        %v6836 = vand.u32 %v6835, 4294901760
        %v6837 = vsub.f32 %v6835, %v6836
        %v6838 = vand.u32 %v6837, 4294901760
        %6839 = vmatpush1.msra.mxu0 %v6838
        %6840 = vmatprep.subr.mxu0 0.0
        %v6841 = vand.u32 %v536, 4294901760
        %v6842 = vsub.f32 %v536, %v6841
        %v6843 = vand.u32 %v6842, 4294901760
        %v6844 = vsub.f32 %v6842, %v6843
        %v6845 = vand.u32 %v6844, 4294901760
        %6846 = vmatpush1.msra.mxu0 %v6845
        %6847 = vmatprep.subr.mxu0 0.0
        %v6848 = vand.u32 %v537, 4294901760
        %v6849 = vsub.f32 %v537, %v6848
        %v6850 = vand.u32 %v6849, 4294901760
        %v6851 = vsub.f32 %v6849, %v6850
        %v6852 = vand.u32 %v6851, 4294901760
        %6853 = vmatpush1.msra.mxu0 %v6852
        %6854 = vmatprep.subr.mxu0 0.0
        %v6855 = vand.u32 %v538, 4294901760
        %v6856 = vsub.f32 %v538, %v6855
        %v6857 = vand.u32 %v6856, 4294901760
        %v6858 = vsub.f32 %v6856, %v6857
        %v6859 = vand.u32 %v6858, 4294901760
        %6860 = vmatpush1.msra.mxu0 %v6859
        %6861 = vmatprep.subr.mxu0 0.0
        %v6862 = vand.u32 %v539, 4294901760
        %v6863 = vsub.f32 %v539, %v6862
        %v6864 = vand.u32 %v6863, 4294901760
        %v6865 = vsub.f32 %v6863, %v6864
        %v6866 = vand.u32 %v6865, 4294901760
        %6867 = vmatpush1.msra.mxu0 %v6866
        %6868 = vmatprep.subr.mxu0 0.0
        %v6869 = vand.u32 %v540, 4294901760
        %v6870 = vsub.f32 %v540, %v6869
        %v6871 = vand.u32 %v6870, 4294901760
        %v6872 = vsub.f32 %v6870, %v6871
        %v6873 = vand.u32 %v6872, 4294901760
        %6874 = vmatpush1.msra.mxu0 %v6873
        %6875 = vmatprep.subr.mxu0 0.0
        %v6876 = vand.u32 %v541, 4294901760
        %v6877 = vsub.f32 %v541, %v6876
        %v6878 = vand.u32 %v6877, 4294901760
        %v6879 = vsub.f32 %v6877, %v6878
        %v6880 = vand.u32 %v6879, 4294901760
        %6881 = vmatpush1.msra.mxu0 %v6880
        %6882 = vmatprep.subr.mxu0 0.0
        %v6883 = vand.u32 %v542, 4294901760
        %v6884 = vsub.f32 %v542, %v6883
        %v6885 = vand.u32 %v6884, 4294901760
        %v6886 = vsub.f32 %v6884, %v6885
        %v6887 = vand.u32 %v6886, 4294901760
        %6888 = vmatpush1.msra.mxu0 %v6887
        %6889 = vmatprep.subr.mxu0 0.0
        %v6890 = vand.u32 %v543, 4294901760
        %v6891 = vsub.f32 %v543, %v6890
        %v6892 = vand.u32 %v6891, 4294901760
        %v6893 = vsub.f32 %v6891, %v6892
        %v6894 = vand.u32 %v6893, 4294901760
        %6895 = vmatpush1.msra.mxu0 %v6894
        %6896 = vmatprep.subr.mxu0 0.0
        %v6897 = vand.u32 %v544, 4294901760
        %v6898 = vsub.f32 %v544, %v6897
        %v6899 = vand.u32 %v6898, 4294901760
        %v6900 = vsub.f32 %v6898, %v6899
        %v6901 = vand.u32 %v6900, 4294901760
        %6902 = vmatpush1.msra.mxu0 %v6901
        %6903 = vmatprep.subr.mxu0 0.0
        %v6904 = vand.u32 %v545, 4294901760
        %v6905 = vsub.f32 %v545, %v6904
        %v6906 = vand.u32 %v6905, 4294901760
        %v6907 = vsub.f32 %v6905, %v6906
        %v6908 = vand.u32 %v6907, 4294901760
        %6909 = vmatpush1.msra.mxu0 %v6908
        %6910 = vmatprep.subr.mxu0 0.0
        %v6911 = vand.u32 %v546, 4294901760
        %v6912 = vsub.f32 %v546, %v6911
        %v6913 = vand.u32 %v6912, 4294901760
        %v6914 = vsub.f32 %v6912, %v6913
        %v6915 = vand.u32 %v6914, 4294901760
        %6916 = vmatpush1.msra.mxu0 %v6915
        %v6917 = vand.u32 %v290, 4294901760
        %6918 = vmatprep.mubr.f32.mxu0 %v6917
        %v6919 = vand.u32 %v289, 4294901760
        %6920 = vmatmul.mubr.f32.gmra.mrb[0].mxu0 %v6919
        %v6921 = vpop.f32.mrb[0].mxu0
        %v6922 = vadd.f32 %v6690, %v6921
        %v6923 = vpop.f32.mrb[0].mxu0
        %6924 = vdwg.mxu0
        %6925 = vmatprep.subr.mxu0 0.0
        %v6926 = vand.u32 %v515, 4294901760
        %v6927 = vsub.f32 %v515, %v6926
        %6928 = vmatpush1.msra.mxu0 %v6927
        %6929 = vmatprep.subr.mxu0 0.0
        %v6930 = vand.u32 %v516, 4294901760
        %v6931 = vsub.f32 %v516, %v6930
        %6932 = vmatpush1.msra.mxu0 %v6931
        %6933 = vmatprep.subr.mxu0 0.0
        %v6934 = vand.u32 %v517, 4294901760
        %v6935 = vsub.f32 %v517, %v6934
        %6936 = vmatpush1.msra.mxu0 %v6935
        %6937 = vmatprep.subr.mxu0 0.0
        %v6938 = vand.u32 %v518, 4294901760
        %v6939 = vsub.f32 %v518, %v6938
        %6940 = vmatpush1.msra.mxu0 %v6939
        %6941 = vmatprep.subr.mxu0 0.0
        %v6942 = vand.u32 %v519, 4294901760
        %v6943 = vsub.f32 %v519, %v6942
        %6944 = vmatpush1.msra.mxu0 %v6943
        %6945 = vmatprep.subr.mxu0 0.0
        %v6946 = vand.u32 %v520, 4294901760
        %v6947 = vsub.f32 %v520, %v6946
        %6948 = vmatpush1.msra.mxu0 %v6947
        %6949 = vmatprep.subr.mxu0 0.0
        %v6950 = vand.u32 %v521, 4294901760
        %v6951 = vsub.f32 %v521, %v6950
        %6952 = vmatpush1.msra.mxu0 %v6951
        %6953 = vmatprep.subr.mxu0 0.0
        %v6954 = vand.u32 %v522, 4294901760
        %v6955 = vsub.f32 %v522, %v6954
        %6956 = vmatpush1.msra.mxu0 %v6955
        %6957 = vmatprep.subr.mxu0 0.0
        %v6958 = vand.u32 %v523, 4294901760
        %v6959 = vsub.f32 %v523, %v6958
        %6960 = vmatpush1.msra.mxu0 %v6959
        %6961 = vmatprep.subr.mxu0 0.0
        %v6962 = vand.u32 %v524, 4294901760
        %v6963 = vsub.f32 %v524, %v6962
        %6964 = vmatpush1.msra.mxu0 %v6963
        %6965 = vmatprep.subr.mxu0 0.0
        %v6966 = vand.u32 %v525, 4294901760
        %v6967 = vsub.f32 %v525, %v6966
        %6968 = vmatpush1.msra.mxu0 %v6967
        %6969 = vmatprep.subr.mxu0 0.0
        %v6970 = vand.u32 %v526, 4294901760
        %v6971 = vsub.f32 %v526, %v6970
        %6972 = vmatpush1.msra.mxu0 %v6971
        %6973 = vmatprep.subr.mxu0 0.0
        %v6974 = vand.u32 %v527, 4294901760
        %v6975 = vsub.f32 %v527, %v6974
        %6976 = vmatpush1.msra.mxu0 %v6975
        %6977 = vmatprep.subr.mxu0 0.0
        %v6978 = vand.u32 %v528, 4294901760
        %v6979 = vsub.f32 %v528, %v6978
        %6980 = vmatpush1.msra.mxu0 %v6979
        %6981 = vmatprep.subr.mxu0 0.0
        %v6982 = vand.u32 %v529, 4294901760
        %v6983 = vsub.f32 %v529, %v6982
        %6984 = vmatpush1.msra.mxu0 %v6983
        %6985 = vmatprep.subr.mxu0 0.0
        %v6986 = vand.u32 %v530, 4294901760
        %v6987 = vsub.f32 %v530, %v6986
        %6988 = vmatpush1.msra.mxu0 %v6987
        %6989 = vmatprep.subr.mxu0 0.0
        %v6990 = vand.u32 %v531, 4294901760
        %v6991 = vsub.f32 %v531, %v6990
        %6992 = vmatpush1.msra.mxu0 %v6991
        %6993 = vmatprep.subr.mxu0 0.0
        %v6994 = vand.u32 %v532, 4294901760
        %v6995 = vsub.f32 %v532, %v6994
        %6996 = vmatpush1.msra.mxu0 %v6995
        %6997 = vmatprep.subr.mxu0 0.0
        %v6998 = vand.u32 %v533, 4294901760
        %v6999 = vsub.f32 %v533, %v6998
        %7000 = vmatpush1.msra.mxu0 %v6999
        %7001 = vmatprep.subr.mxu0 0.0
        %v7002 = vand.u32 %v534, 4294901760
        %v7003 = vsub.f32 %v534, %v7002
        %7004 = vmatpush1.msra.mxu0 %v7003
        %7005 = vmatprep.subr.mxu0 0.0
        %v7006 = vand.u32 %v535, 4294901760
        %v7007 = vsub.f32 %v535, %v7006
        %7008 = vmatpush1.msra.mxu0 %v7007
        %7009 = vmatprep.subr.mxu0 0.0
        %v7010 = vand.u32 %v536, 4294901760
        %v7011 = vsub.f32 %v536, %v7010
        %7012 = vmatpush1.msra.mxu0 %v7011
        %7013 = vmatprep.subr.mxu0 0.0
        %v7014 = vand.u32 %v537, 4294901760
        %v7015 = vsub.f32 %v537, %v7014
        %7016 = vmatpush1.msra.mxu0 %v7015
        %7017 = vmatprep.subr.mxu0 0.0
        %v7018 = vand.u32 %v538, 4294901760
        %v7019 = vsub.f32 %v538, %v7018
        %7020 = vmatpush1.msra.mxu0 %v7019
        %7021 = vmatprep.subr.mxu0 0.0
        %v7022 = vand.u32 %v539, 4294901760
        %v7023 = vsub.f32 %v539, %v7022
        %7024 = vmatpush1.msra.mxu0 %v7023
        %7025 = vmatprep.subr.mxu0 0.0
        %v7026 = vand.u32 %v540, 4294901760
        %v7027 = vsub.f32 %v540, %v7026
        %7028 = vmatpush1.msra.mxu0 %v7027
        %7029 = vmatprep.subr.mxu0 0.0
        %v7030 = vand.u32 %v541, 4294901760
        %v7031 = vsub.f32 %v541, %v7030
        %7032 = vmatpush1.msra.mxu0 %v7031
        %7033 = vmatprep.subr.mxu0 0.0
        %v7034 = vand.u32 %v542, 4294901760
        %v7035 = vsub.f32 %v542, %v7034
        %7036 = vmatpush1.msra.mxu0 %v7035
        %7037 = vmatprep.subr.mxu0 0.0
        %v7038 = vand.u32 %v543, 4294901760
        %v7039 = vsub.f32 %v543, %v7038
        %7040 = vmatpush1.msra.mxu0 %v7039
        %7041 = vmatprep.subr.mxu0 0.0
        %v7042 = vand.u32 %v544, 4294901760
        %v7043 = vsub.f32 %v544, %v7042
        %7044 = vmatpush1.msra.mxu0 %v7043
        %7045 = vmatprep.subr.mxu0 0.0
        %v7046 = vand.u32 %v545, 4294901760
        %v7047 = vsub.f32 %v545, %v7046
        %7048 = vmatpush1.msra.mxu0 %v7047
        %7049 = vmatprep.subr.mxu0 0.0
        %v7050 = vand.u32 %v546, 4294901760
        %v7051 = vsub.f32 %v546, %v7050
        %7052 = vmatpush1.msra.mxu0 %v7051
        %v7053 = vand.u32 %v290, 4294901760
        %v7054 = vsub.f32 %v290, %v7053
        %7055 = vmatprep.mubr.f32.mxu0 %v7054
        %v7056 = vand.u32 %v289, 4294901760
        %v7057 = vsub.f32 %v289, %v7056
        %7058 = vmatmul.mubr.f32.gmra.mrb[0].mxu0 %v7057
        %v7059 = vpop.f32.mrb[0].mxu0
        %v7060 = vadd.f32 %v6922, %v7059
        %v7061 = vpop.f32.mrb[0].mxu0
        %7062 = vdwg.mxu0
        %7063 = vmatprep.subr.mxu0 0.0
        %v7064 = vand.u32 %v515, 4294901760
        %7065 = vmatpush1.msra.mxu0 %v7064
        %7066 = vmatprep.subr.mxu0 0.0
        %v7067 = vand.u32 %v516, 4294901760
        %7068 = vmatpush1.msra.mxu0 %v7067
        %7069 = vmatprep.subr.mxu0 0.0
        %v7070 = vand.u32 %v517, 4294901760
        %7071 = vmatpush1.msra.mxu0 %v7070
        %7072 = vmatprep.subr.mxu0 0.0
        %v7073 = vand.u32 %v518, 4294901760
        %7074 = vmatpush1.msra.mxu0 %v7073
        %7075 = vmatprep.subr.mxu0 0.0
        %v7076 = vand.u32 %v519, 4294901760
        %7077 = vmatpush1.msra.mxu0 %v7076
        %7078 = vmatprep.subr.mxu0 0.0
        %v7079 = vand.u32 %v520, 4294901760
        %7080 = vmatpush1.msra.mxu0 %v7079
        %7081 = vmatprep.subr.mxu0 0.0
        %v7082 = vand.u32 %v521, 4294901760
        %7083 = vmatpush1.msra.mxu0 %v7082
        %7084 = vmatprep.subr.mxu0 0.0
        %v7085 = vand.u32 %v522, 4294901760
        %7086 = vmatpush1.msra.mxu0 %v7085
        %7087 = vmatprep.subr.mxu0 0.0
        %v7088 = vand.u32 %v523, 4294901760
        %7089 = vmatpush1.msra.mxu0 %v7088
        %7090 = vmatprep.subr.mxu0 0.0
        %v7091 = vand.u32 %v524, 4294901760
        %7092 = vmatpush1.msra.mxu0 %v7091
        %7093 = vmatprep.subr.mxu0 0.0
        %v7094 = vand.u32 %v525, 4294901760
        %7095 = vmatpush1.msra.mxu0 %v7094
        %7096 = vmatprep.subr.mxu0 0.0
        %v7097 = vand.u32 %v526, 4294901760
        %7098 = vmatpush1.msra.mxu0 %v7097
        %7099 = vmatprep.subr.mxu0 0.0
        %v7100 = vand.u32 %v527, 4294901760
        %7101 = vmatpush1.msra.mxu0 %v7100
        %7102 = vmatprep.subr.mxu0 0.0
        %v7103 = vand.u32 %v528, 4294901760
        %7104 = vmatpush1.msra.mxu0 %v7103
        %7105 = vmatprep.subr.mxu0 0.0
        %v7106 = vand.u32 %v529, 4294901760
        %7107 = vmatpush1.msra.mxu0 %v7106
        %7108 = vmatprep.subr.mxu0 0.0
        %v7109 = vand.u32 %v530, 4294901760
        %7110 = vmatpush1.msra.mxu0 %v7109
        %7111 = vmatprep.subr.mxu0 0.0
        %v7112 = vand.u32 %v531, 4294901760
        %7113 = vmatpush1.msra.mxu0 %v7112
        %7114 = vmatprep.subr.mxu0 0.0
        %v7115 = vand.u32 %v532, 4294901760
        %7116 = vmatpush1.msra.mxu0 %v7115
        %7117 = vmatprep.subr.mxu0 0.0
        %v7118 = vand.u32 %v533, 4294901760
        %7119 = vmatpush1.msra.mxu0 %v7118
        %7120 = vmatprep.subr.mxu0 0.0
        %v7121 = vand.u32 %v534, 4294901760
        %7122 = vmatpush1.msra.mxu0 %v7121
        %7123 = vmatprep.subr.mxu0 0.0
        %v7124 = vand.u32 %v535, 4294901760
        %7125 = vmatpush1.msra.mxu0 %v7124
        %7126 = vmatprep.subr.mxu0 0.0
        %v7127 = vand.u32 %v536, 4294901760
        %7128 = vmatpush1.msra.mxu0 %v7127
        %7129 = vmatprep.subr.mxu0 0.0
        %v7130 = vand.u32 %v537, 4294901760
        %7131 = vmatpush1.msra.mxu0 %v7130
        %7132 = vmatprep.subr.mxu0 0.0
        %v7133 = vand.u32 %v538, 4294901760
        %7134 = vmatpush1.msra.mxu0 %v7133
        %7135 = vmatprep.subr.mxu0 0.0
        %v7136 = vand.u32 %v539, 4294901760
        %7137 = vmatpush1.msra.mxu0 %v7136
        %7138 = vmatprep.subr.mxu0 0.0
        %v7139 = vand.u32 %v540, 4294901760
        %7140 = vmatpush1.msra.mxu0 %v7139
        %7141 = vmatprep.subr.mxu0 0.0
        %v7142 = vand.u32 %v541, 4294901760
        %7143 = vmatpush1.msra.mxu0 %v7142
        %7144 = vmatprep.subr.mxu0 0.0
        %v7145 = vand.u32 %v542, 4294901760
        %7146 = vmatpush1.msra.mxu0 %v7145
        %7147 = vmatprep.subr.mxu0 0.0
        %v7148 = vand.u32 %v543, 4294901760
        %7149 = vmatpush1.msra.mxu0 %v7148
        %7150 = vmatprep.subr.mxu0 0.0
        %v7151 = vand.u32 %v544, 4294901760
        %7152 = vmatpush1.msra.mxu0 %v7151
        %7153 = vmatprep.subr.mxu0 0.0
        %v7154 = vand.u32 %v545, 4294901760
        %7155 = vmatpush1.msra.mxu0 %v7154
        %7156 = vmatprep.subr.mxu0 0.0
        %v7157 = vand.u32 %v546, 4294901760
        %7158 = vmatpush1.msra.mxu0 %v7157
        %v7159 = vand.u32 %v290, 4294901760
        %v7160 = vsub.f32 %v290, %v7159
        %v7161 = vand.u32 %v7160, 4294901760
        %7162 = vmatprep.mubr.f32.mxu0 %v7161
        %v7163 = vand.u32 %v289, 4294901760
        %v7164 = vsub.f32 %v289, %v7163
        %v7165 = vand.u32 %v7164, 4294901760
        %7166 = vmatmul.mubr.f32.gmra.mrb[0].mxu0 %v7165
        %v7167 = vpop.f32.mrb[0].mxu0
        %v7168 = vadd.f32 %v7060, %v7167
        %v7169 = vpop.f32.mrb[0].mxu0
        %7170 = vdwg.mxu0
        %7171 = vmatprep.subr.mxu0 0.0
        %v7172 = vand.u32 %v515, 4294901760
        %v7173 = vsub.f32 %v515, %v7172
        %v7174 = vand.u32 %v7173, 4294901760
        %7175 = vmatpush1.msra.mxu0 %v7174
        %7176 = vmatprep.subr.mxu0 0.0
        %v7177 = vand.u32 %v516, 4294901760
        %v7178 = vsub.f32 %v516, %v7177
        %v7179 = vand.u32 %v7178, 4294901760
        %7180 = vmatpush1.msra.mxu0 %v7179
        %7181 = vmatprep.subr.mxu0 0.0
        %v7182 = vand.u32 %v517, 4294901760
        %v7183 = vsub.f32 %v517, %v7182
        %v7184 = vand.u32 %v7183, 4294901760
        %7185 = vmatpush1.msra.mxu0 %v7184
        %7186 = vmatprep.subr.mxu0 0.0
        %v7187 = vand.u32 %v518, 4294901760
        %v7188 = vsub.f32 %v518, %v7187
        %v7189 = vand.u32 %v7188, 4294901760
        %7190 = vmatpush1.msra.mxu0 %v7189
        %7191 = vmatprep.subr.mxu0 0.0
        %v7192 = vand.u32 %v519, 4294901760
        %v7193 = vsub.f32 %v519, %v7192
        %v7194 = vand.u32 %v7193, 4294901760
        %7195 = vmatpush1.msra.mxu0 %v7194
        %7196 = vmatprep.subr.mxu0 0.0
        %v7197 = vand.u32 %v520, 4294901760
        %v7198 = vsub.f32 %v520, %v7197
        %v7199 = vand.u32 %v7198, 4294901760
        %7200 = vmatpush1.msra.mxu0 %v7199
        %7201 = vmatprep.subr.mxu0 0.0
        %v7202 = vand.u32 %v521, 4294901760
        %v7203 = vsub.f32 %v521, %v7202
        %v7204 = vand.u32 %v7203, 4294901760
        %7205 = vmatpush1.msra.mxu0 %v7204
        %7206 = vmatprep.subr.mxu0 0.0
        %v7207 = vand.u32 %v522, 4294901760
        %v7208 = vsub.f32 %v522, %v7207
        %v7209 = vand.u32 %v7208, 4294901760
        %7210 = vmatpush1.msra.mxu0 %v7209
        %7211 = vmatprep.subr.mxu0 0.0
        %v7212 = vand.u32 %v523, 4294901760
        %v7213 = vsub.f32 %v523, %v7212
        %v7214 = vand.u32 %v7213, 4294901760
        %7215 = vmatpush1.msra.mxu0 %v7214
        %7216 = vmatprep.subr.mxu0 0.0
        %v7217 = vand.u32 %v524, 4294901760
        %v7218 = vsub.f32 %v524, %v7217
        %v7219 = vand.u32 %v7218, 4294901760
        %7220 = vmatpush1.msra.mxu0 %v7219
        %7221 = vmatprep.subr.mxu0 0.0
        %v7222 = vand.u32 %v525, 4294901760
        %v7223 = vsub.f32 %v525, %v7222
        %v7224 = vand.u32 %v7223, 4294901760
        %7225 = vmatpush1.msra.mxu0 %v7224
        %7226 = vmatprep.subr.mxu0 0.0
        %v7227 = vand.u32 %v526, 4294901760
        %v7228 = vsub.f32 %v526, %v7227
        %v7229 = vand.u32 %v7228, 4294901760
        %7230 = vmatpush1.msra.mxu0 %v7229
        %7231 = vmatprep.subr.mxu0 0.0
        %v7232 = vand.u32 %v527, 4294901760
        %v7233 = vsub.f32 %v527, %v7232
        %v7234 = vand.u32 %v7233, 4294901760
        %7235 = vmatpush1.msra.mxu0 %v7234
        %7236 = vmatprep.subr.mxu0 0.0
        %v7237 = vand.u32 %v528, 4294901760
        %v7238 = vsub.f32 %v528, %v7237
        %v7239 = vand.u32 %v7238, 4294901760
        %7240 = vmatpush1.msra.mxu0 %v7239
        %7241 = vmatprep.subr.mxu0 0.0
        %v7242 = vand.u32 %v529, 4294901760
        %v7243 = vsub.f32 %v529, %v7242
        %v7244 = vand.u32 %v7243, 4294901760
        %7245 = vmatpush1.msra.mxu0 %v7244
        %7246 = vmatprep.subr.mxu0 0.0
        %v7247 = vand.u32 %v530, 4294901760
        %v7248 = vsub.f32 %v530, %v7247
        %v7249 = vand.u32 %v7248, 4294901760
        %7250 = vmatpush1.msra.mxu0 %v7249
        %7251 = vmatprep.subr.mxu0 0.0
        %v7252 = vand.u32 %v531, 4294901760
        %v7253 = vsub.f32 %v531, %v7252
        %v7254 = vand.u32 %v7253, 4294901760
        %7255 = vmatpush1.msra.mxu0 %v7254
        %7256 = vmatprep.subr.mxu0 0.0
        %v7257 = vand.u32 %v532, 4294901760
        %v7258 = vsub.f32 %v532, %v7257
        %v7259 = vand.u32 %v7258, 4294901760
        %7260 = vmatpush1.msra.mxu0 %v7259
        %7261 = vmatprep.subr.mxu0 0.0
        %v7262 = vand.u32 %v533, 4294901760
        %v7263 = vsub.f32 %v533, %v7262
        %v7264 = vand.u32 %v7263, 4294901760
        %7265 = vmatpush1.msra.mxu0 %v7264
        %7266 = vmatprep.subr.mxu0 0.0
        %v7267 = vand.u32 %v534, 4294901760
        %v7268 = vsub.f32 %v534, %v7267
        %v7269 = vand.u32 %v7268, 4294901760
        %7270 = vmatpush1.msra.mxu0 %v7269
        %7271 = vmatprep.subr.mxu0 0.0
        %v7272 = vand.u32 %v535, 4294901760
        %v7273 = vsub.f32 %v535, %v7272
        %v7274 = vand.u32 %v7273, 4294901760
        %7275 = vmatpush1.msra.mxu0 %v7274
        %7276 = vmatprep.subr.mxu0 0.0
        %v7277 = vand.u32 %v536, 4294901760
        %v7278 = vsub.f32 %v536, %v7277
        %v7279 = vand.u32 %v7278, 4294901760
        %7280 = vmatpush1.msra.mxu0 %v7279
        %7281 = vmatprep.subr.mxu0 0.0
        %v7282 = vand.u32 %v537, 4294901760
        %v7283 = vsub.f32 %v537, %v7282
        %v7284 = vand.u32 %v7283, 4294901760
        %7285 = vmatpush1.msra.mxu0 %v7284
        %7286 = vmatprep.subr.mxu0 0.0
        %v7287 = vand.u32 %v538, 4294901760
        %v7288 = vsub.f32 %v538, %v7287
        %v7289 = vand.u32 %v7288, 4294901760
        %7290 = vmatpush1.msra.mxu0 %v7289
        %7291 = vmatprep.subr.mxu0 0.0
        %v7292 = vand.u32 %v539, 4294901760
        %v7293 = vsub.f32 %v539, %v7292
        %v7294 = vand.u32 %v7293, 4294901760
        %7295 = vmatpush1.msra.mxu0 %v7294
        %7296 = vmatprep.subr.mxu0 0.0
        %v7297 = vand.u32 %v540, 4294901760
        %v7298 = vsub.f32 %v540, %v7297
        %v7299 = vand.u32 %v7298, 4294901760
        %7300 = vmatpush1.msra.mxu0 %v7299
        %7301 = vmatprep.subr.mxu0 0.0
        %v7302 = vand.u32 %v541, 4294901760
        %v7303 = vsub.f32 %v541, %v7302
        %v7304 = vand.u32 %v7303, 4294901760
        %7305 = vmatpush1.msra.mxu0 %v7304
        %7306 = vmatprep.subr.mxu0 0.0
        %v7307 = vand.u32 %v542, 4294901760
        %v7308 = vsub.f32 %v542, %v7307
        %v7309 = vand.u32 %v7308, 4294901760
        %7310 = vmatpush1.msra.mxu0 %v7309
        %7311 = vmatprep.subr.mxu0 0.0
        %v7312 = vand.u32 %v543, 4294901760
        %v7313 = vsub.f32 %v543, %v7312
        %v7314 = vand.u32 %v7313, 4294901760
        %7315 = vmatpush1.msra.mxu0 %v7314
        %7316 = vmatprep.subr.mxu0 0.0
        %v7317 = vand.u32 %v544, 4294901760
        %v7318 = vsub.f32 %v544, %v7317
        %v7319 = vand.u32 %v7318, 4294901760
        %7320 = vmatpush1.msra.mxu0 %v7319
        %7321 = vmatprep.subr.mxu0 0.0
        %v7322 = vand.u32 %v545, 4294901760
        %v7323 = vsub.f32 %v545, %v7322
        %v7324 = vand.u32 %v7323, 4294901760
        %7325 = vmatpush1.msra.mxu0 %v7324
        %7326 = vmatprep.subr.mxu0 0.0
        %v7327 = vand.u32 %v546, 4294901760
        %v7328 = vsub.f32 %v546, %v7327
        %v7329 = vand.u32 %v7328, 4294901760
        %7330 = vmatpush1.msra.mxu0 %v7329
        %v7331 = vand.u32 %v290, 4294901760
        %7332 = vmatprep.mubr.f32.mxu0 %v7331
        %v7333 = vand.u32 %v289, 4294901760
        %7334 = vmatmul.mubr.f32.gmra.mrb[0].mxu0 %v7333
        %v7335 = vpop.f32.mrb[0].mxu0
        %v7336 = vadd.f32 %v7168, %v7335
        %v7337 = vpop.f32.mrb[0].mxu0
        %7338 = vdwg.mxu0
        %7339 = vmatprep.subr.mxu0 0.0
        %v7340 = vand.u32 %v515, 4294901760
        %7341 = vmatpush1.msra.mxu0 %v7340
        %7342 = vmatprep.subr.mxu0 0.0
        %v7343 = vand.u32 %v516, 4294901760
        %7344 = vmatpush1.msra.mxu0 %v7343
        %7345 = vmatprep.subr.mxu0 0.0
        %v7346 = vand.u32 %v517, 4294901760
        %7347 = vmatpush1.msra.mxu0 %v7346
        %7348 = vmatprep.subr.mxu0 0.0
        %v7349 = vand.u32 %v518, 4294901760
        %7350 = vmatpush1.msra.mxu0 %v7349
        %7351 = vmatprep.subr.mxu0 0.0
        %v7352 = vand.u32 %v519, 4294901760
        %7353 = vmatpush1.msra.mxu0 %v7352
        %7354 = vmatprep.subr.mxu0 0.0
        %v7355 = vand.u32 %v520, 4294901760
        %7356 = vmatpush1.msra.mxu0 %v7355
        %7357 = vmatprep.subr.mxu0 0.0
        %v7358 = vand.u32 %v521, 4294901760
        %7359 = vmatpush1.msra.mxu0 %v7358
        %7360 = vmatprep.subr.mxu0 0.0
        %v7361 = vand.u32 %v522, 4294901760
        %7362 = vmatpush1.msra.mxu0 %v7361
        %7363 = vmatprep.subr.mxu0 0.0
        %v7364 = vand.u32 %v523, 4294901760
        %7365 = vmatpush1.msra.mxu0 %v7364
        %7366 = vmatprep.subr.mxu0 0.0
        %v7367 = vand.u32 %v524, 4294901760
        %7368 = vmatpush1.msra.mxu0 %v7367
        %7369 = vmatprep.subr.mxu0 0.0
        %v7370 = vand.u32 %v525, 4294901760
        %7371 = vmatpush1.msra.mxu0 %v7370
        %7372 = vmatprep.subr.mxu0 0.0
        %v7373 = vand.u32 %v526, 4294901760
        %7374 = vmatpush1.msra.mxu0 %v7373
        %7375 = vmatprep.subr.mxu0 0.0
        %v7376 = vand.u32 %v527, 4294901760
        %7377 = vmatpush1.msra.mxu0 %v7376
        %7378 = vmatprep.subr.mxu0 0.0
        %v7379 = vand.u32 %v528, 4294901760
        %7380 = vmatpush1.msra.mxu0 %v7379
        %7381 = vmatprep.subr.mxu0 0.0
        %v7382 = vand.u32 %v529, 4294901760
        %7383 = vmatpush1.msra.mxu0 %v7382
        %7384 = vmatprep.subr.mxu0 0.0
        %v7385 = vand.u32 %v530, 4294901760
        %7386 = vmatpush1.msra.mxu0 %v7385
        %7387 = vmatprep.subr.mxu0 0.0
        %v7388 = vand.u32 %v531, 4294901760
        %7389 = vmatpush1.msra.mxu0 %v7388
        %7390 = vmatprep.subr.mxu0 0.0
        %v7391 = vand.u32 %v532, 4294901760
        %7392 = vmatpush1.msra.mxu0 %v7391
        %7393 = vmatprep.subr.mxu0 0.0
        %v7394 = vand.u32 %v533, 4294901760
        %7395 = vmatpush1.msra.mxu0 %v7394
        %7396 = vmatprep.subr.mxu0 0.0
        %v7397 = vand.u32 %v534, 4294901760
        %7398 = vmatpush1.msra.mxu0 %v7397
        %7399 = vmatprep.subr.mxu0 0.0
        %v7400 = vand.u32 %v535, 4294901760
        %7401 = vmatpush1.msra.mxu0 %v7400
        %7402 = vmatprep.subr.mxu0 0.0
        %v7403 = vand.u32 %v536, 4294901760
        %7404 = vmatpush1.msra.mxu0 %v7403
        %7405 = vmatprep.subr.mxu0 0.0
        %v7406 = vand.u32 %v537, 4294901760
        %7407 = vmatpush1.msra.mxu0 %v7406
        %7408 = vmatprep.subr.mxu0 0.0
        %v7409 = vand.u32 %v538, 4294901760
        %7410 = vmatpush1.msra.mxu0 %v7409
        %7411 = vmatprep.subr.mxu0 0.0
        %v7412 = vand.u32 %v539, 4294901760
        %7413 = vmatpush1.msra.mxu0 %v7412
        %7414 = vmatprep.subr.mxu0 0.0
        %v7415 = vand.u32 %v540, 4294901760
        %7416 = vmatpush1.msra.mxu0 %v7415
        %7417 = vmatprep.subr.mxu0 0.0
        %v7418 = vand.u32 %v541, 4294901760
        %7419 = vmatpush1.msra.mxu0 %v7418
        %7420 = vmatprep.subr.mxu0 0.0
        %v7421 = vand.u32 %v542, 4294901760
        %7422 = vmatpush1.msra.mxu0 %v7421
        %7423 = vmatprep.subr.mxu0 0.0
        %v7424 = vand.u32 %v543, 4294901760
        %7425 = vmatpush1.msra.mxu0 %v7424
        %7426 = vmatprep.subr.mxu0 0.0
        %v7427 = vand.u32 %v544, 4294901760
        %7428 = vmatpush1.msra.mxu0 %v7427
        %7429 = vmatprep.subr.mxu0 0.0
        %v7430 = vand.u32 %v545, 4294901760
        %7431 = vmatpush1.msra.mxu0 %v7430
        %7432 = vmatprep.subr.mxu0 0.0
        %v7433 = vand.u32 %v546, 4294901760
        %7434 = vmatpush1.msra.mxu0 %v7433
        %v7435 = vand.u32 %v290, 4294901760
        %7436 = vmatprep.mubr.f32.mxu0 %v7435
        %v7437 = vand.u32 %v289, 4294901760
        %7438 = vmatmul.mubr.f32.gmra.mrb[0].mxu0 %v7437
        %v7439 = vpop.f32.mrb[0].mxu0
        %v7440 = vadd.f32 %v7336, %v7439
        %v7441 = vpop.f32.mrb[0].mxu0
        %7442 = vdwg.mxu0
        %v7443 = vadd.f32 %v274, %v7440
        %7444 = vst [vmem:[#allocation2] sm:$0xff] %v7443
        %p7445 = scmp.eq.s32.totalorder %s28, 1
        // Predicated region
        $region49: #{tpu_custom_call.1} parent=31 // pred_check
          %p7446 = pneg %p7445
        $region50: #{tpu_custom_call.1} parent=31 // pred_check_branch
          %7448 = sbr.rel (%p7446) target = $region52
        $region51: #{tpu_custom_call.1} parent=31 // pred_region
          %v7449 = vld [vmem:[#allocation2] sm:$0xff]
          %v7450 = vld [vmem:[#allocation8] sm:$0x1]
          %v7452 = vlaneseq
          %v7453 = vshrl.u32 %v7452, 7
          %v7454 = vsub.s32 0, %v7453
          %v7455 = vrot.slane %v7450, %v7454
          %v7457 = vadd.f32 %v7449, %v7455
          %v7458 = vmax.f32 %v7457, 0.0
          %7459 = vst [vmem:[#allocation9] sm:$0xff] %v7458
        $region52: #{tpu_custom_call.1} parent=31 // pred_fallthru
          _
        // Predicated region
        $region53: #{tpu_custom_call.1} parent=31 // pred_check
          %p7460 = pneg %p142
        $region54: #{tpu_custom_call.1} parent=31 // pred_check_branch
          %7462 = sbr.rel (%p7460) target = $region56
        $region55: #{tpu_custom_call.1} parent=31 // pred_region
          %s7464 = ssub.s32 128, 128
          %7465 = vsyncadd [#allocation5], %s7464
          %s7466 = sadd.s32 %s27, %s26
          %s7467 = smul.addr %s7466, 128
          %s7468 = scalar_lea.hbm %s3, %s7467
          %s7470 = sshll.u32 [#allocation9], 4
          %s7471 = int_to_ptr.vmem [resolvable:$true] %s7470
          %7473 = dma.vmem_to_hbm [thread:$0]  %s7471, 128, %s7468, [#allocation5]
        $region56: #{tpu_custom_call.1} parent=31 // pred_fallthru
          _
        // Predicated region
        $region57: #{tpu_custom_call.1} parent=31 // pred_check
          %p7474 = pneg %p142
        $region58: #{tpu_custom_call.1} parent=31 // pred_check_branch
          %7476 = sbr.rel (%p7474) target = $region60
        $region59: #{tpu_custom_call.1} parent=31 // pred_region
          %7477 = dma.done [#allocation5], 128
        $region60: #{tpu_custom_call.1} parent=31 // pred_fallthru
          _
      $region32: #{tpu_custom_call.1} parent=5 // pred_fallthru
        _
      %p7478 = scmp.le.s32.totalorder 2, %s16
      // Predicated region
      $region61: #{tpu_custom_call.1} parent=5 // pred_check
        %p7479 = pneg %p7478
      $region62: #{tpu_custom_call.1} parent=5 // pred_check_branch
        %7481 = sbr.rel (%p7479) target = $region64
      $region63: #{tpu_custom_call.1} parent=5 // pred_region
        %s7482 = ssub.s32 %s16, 2
      $region64: #{tpu_custom_call.1} parent=5 // pred_fallthru
        _
    $region6: #{tpu_custom_call.1} parent=1 // loop_footer
      %s20 = sadd.s32 1, %s16
    $region7: #{tpu_custom_call.1} parent=1 // loop_footer_branch
      %15 = sbr.rel target = $region3
    $region8: #{tpu_custom_call.1} parent=1 // loop_exit
      _
    %7483 = vsyncpa [#allocation4], 1
    %s7484 = scalar_lea.sflag [#allocation4], 1
    %7485 = vsyncpa %s7484, 1
    %7486 = vsyncpa [#allocation7], 1
    %s7487 = scalar_lea.sflag [#allocation7], 1
    %7488 = vsyncpa %s7487, 1
    %7489 = vsyncpa [#allocation5], 1
    %s7490 = scalar_lea.sflag [#allocation5], 1
    %7491 = vsyncpa %s7490, 1

</llo_original>
